<compile_context>
chip_gen: v7x
topology: tpu7x:2x2x1
jax: 0.10.0
libtpu: 0.0.40
codegen_flags: <defaults>
</compile_context>

<pallas_src>
import functools

import jax
import jax.numpy as jnp
from jax.experimental import pallas as pl
from jax.experimental.pallas import tpu as pltpu

LANES = 128
_VMEM_LIMIT = 32 * 1024 * 1024


def _round_up(n, m):
    return ((n + m - 1) // m) * m


def _pick_tile(n, candidates=(256, 512, 128, 64, 32, 16, 8)):
    for t in candidates:
        if n % t == 0:
            return t
    return n


# ----------------------------- Pallas kernels ------------------------------

def _mm_act_kernel(a_ref, w_ref, o_ref, *, act):
    """Fused matmul + activation epilogue (no BatchNorm)."""
    acc = jnp.dot(a_ref[...], w_ref[...], preferred_element_type=jnp.float32)
    if act == "leaky":
        y = jnp.where(acc > 0, acc, 0.2 * acc)
    elif act == "sigmoid":
        y = 1.0 / (1.0 + jnp.exp(-acc))          # exact sigmoid on the final layer
    elif act == "relu":
        y = jnp.maximum(acc, 0.0)
    else:
        y = acc
    o_ref[...] = y.astype(o_ref.dtype)


def pallas_mm_act(a, w, act, out_dtype):
    """act(a @ w); a:(M,K) bf16, w:(K,Np) bf16.  M tiled + 'parallel' (megacore)."""
    M, K = a.shape
    Np = w.shape[1]
    tm = _pick_tile(M)
    return pl.pallas_call(
        functools.partial(_mm_act_kernel, act=act),
        out_shape=jax.ShapeDtypeStruct((M, Np), out_dtype),
        grid=(M // tm,),
        in_specs=[pl.BlockSpec((tm, K), lambda i: (i, 0)),
                  pl.BlockSpec((K, Np), lambda i: (0, 0))],
        out_specs=pl.BlockSpec((tm, Np), lambda i: (i, 0)),
        compiler_params=pltpu.CompilerParams(
            dimension_semantics=("parallel",),
            vmem_limit_bytes=_VMEM_LIMIT),
    )(a, w)


def _mm_bn_leaky_kernel(a_ref, w_ref, g_ref, b_ref, o_ref, *, groups):
    """Single-step matmul + training-mode BatchNorm + LeakyReLU(0.2).

    For sub-pixel ConvTranspose layers the output holds `groups`=4 parity copies of the
    channel axis (Np = groups*128); the batch statistics are folded across all groups
    (== stats over the full N*OH*OW output of the transposed conv).
    """
    acc = jnp.dot(a_ref[...], w_ref[...], preferred_element_type=jnp.float32)
    m = acc.shape[0]
    count = float(m * groups)

    total = jnp.zeros((1, LANES), jnp.float32)
    for g in range(groups):
        total = total + jnp.sum(acc[:, g * LANES:(g + 1) * LANES], axis=0, keepdims=True)
    mean = total * (1.0 / count)

    sq = jnp.zeros((1, LANES), jnp.float32)
    for g in range(groups):
        d = acc[:, g * LANES:(g + 1) * LANES] - mean
        sq = sq + jnp.sum(d * d, axis=0, keepdims=True)
    var = sq * (1.0 / count)                      # biased variance (training-mode BN)

    scale = jax.lax.rsqrt(var + 1e-5) * g_ref[...]
    for g in range(groups):
        yg = (acc[:, g * LANES:(g + 1) * LANES] - mean) * scale + b_ref[...]
        o_ref[:, g * LANES:(g + 1) * LANES] = jnp.where(yg > 0, yg, 0.2 * yg).astype(o_ref.dtype)


def pallas_mm_bn_leaky(a, w, gamma, beta, groups, out_dtype):
    """LeakyReLU(BN_train(a @ w)) in one grid step (K <= 512 at these shapes).
    # TODO(synk): for large batch*spatial, switch to an M-tiled two-pass BN (per-tile
    # sum / sum-of-squares, finalize pass) to keep VMEM under v7x's 64 MiB and shard
    # across both TensorCores."""
    M, K = a.shape
    Np = w.shape[1]
    return pl.pallas_call(
        functools.partial(_mm_bn_leaky_kernel, groups=groups),
        out_shape=jax.ShapeDtypeStruct((M, Np), out_dtype),
        grid=(1,),
        in_specs=[pl.BlockSpec((M, K), lambda i: (0, 0)),
                  pl.BlockSpec((K, Np), lambda i: (0, 0)),
                  pl.BlockSpec((1, LANES), lambda i: (0, 0)),
                  pl.BlockSpec((1, LANES), lambda i: (0, 0))],
        out_specs=pl.BlockSpec((M, Np), lambda i: (0, 0)),
        compiler_params=pltpu.CompilerParams(
            dimension_semantics=("arbitrary",),
            vmem_limit_bytes=_VMEM_LIMIT),
    )(a, w, gamma, beta)


def _tail_kernel(h_ref, w5_ref, g5_ref, b5_ref, w1_ref, b1_ref, w2_ref, b2_ref,
                 wd_ref, bd_ref, eps_ref, mu_ref, lv_ref, z_ref, hd_ref):
    """Fused e5 conv (as FC) + BN + LeakyReLU + fcE1 + fcE2 + reparameterize + fcD1+ReLU."""
    h = h_ref[...]                                                   # (N, 2*2*h4) f32
    e5 = jnp.dot(h, w5_ref[...], preferred_element_type=jnp.float32)  # (N, h5)
    mean = jnp.mean(e5, axis=0, keepdims=True)
    var = jnp.mean((e5 - mean) ** 2, axis=0, keepdims=True)           # biased var
    y = (e5 - mean) * jax.lax.rsqrt(var + 1e-5) * g5_ref[...] + b5_ref[...]
    y = jnp.where(y > 0, y, 0.2 * y)                                  # encoder output (N, fc1)

    mu = jnp.dot(y, w1_ref[...], preferred_element_type=jnp.float32) + b1_ref[...]
    lv = jnp.dot(y, w2_ref[...], preferred_element_type=jnp.float32) + b2_ref[...]
    z = eps_ref[...] * jnp.exp(lv) + mu           # std = exp(logvar), as in the torch source
    hd = jnp.dot(z, wd_ref[...], preferred_element_type=jnp.float32) + bd_ref[...]

    mu_ref[...] = mu
    lv_ref[...] = lv
    z_ref[...] = z
    hd_ref[...] = jnp.maximum(hd, 0.0)            # fcD1 ReLU


def pallas_tail(h, w5, g5, b5, w1, b1, w2, b2, wd, bd, eps):
    N = h.shape[0]
    fc2 = w1.shape[1]
    fc1 = wd.shape[1]
    f32 = jnp.float32

    def full(a):
        shp = a.shape
        return pl.BlockSpec(shp, lambda *_: (0,) * len(shp))

    args = (h, w5, g5, b5, w1, b1, w2, b2, wd, bd, eps)
    return pl.pallas_call(
        _tail_kernel,
        out_shape=(jax.ShapeDtypeStruct((N, fc2), f32),
                   jax.ShapeDtypeStruct((N, fc2), f32),
                   jax.ShapeDtypeStruct((N, fc2), f32),
                   jax.ShapeDtypeStruct((N, fc1), f32)),
        grid=(1,),
        in_specs=[full(a) for a in args],
        out_specs=(pl.BlockSpec((N, fc2), lambda i: (0, 0)),
                   pl.BlockSpec((N, fc2), lambda i: (0, 0)),
                   pl.BlockSpec((N, fc2), lambda i: (0, 0)),
                   pl.BlockSpec((N, fc1), lambda i: (0, 0))),
        compiler_params=pltpu.CompilerParams(
            dimension_semantics=("arbitrary",),
            vmem_limit_bytes=_VMEM_LIMIT),
    )(*args)


# ------------------------ XLA glue (layout / patch building) ------------------------
# TODO(synk): im2col / pixel-shuffle are still built in XLA and round-trip HBM; fusing
# the patch construction into the kernels (grid over taps + pl.ds windows) is the next
# memory-traffic lever once shapes grow.

def im2col(x_nhwc, k, stride, padding):
    """x: (N,H,W,C) -> patches (N*OH*OW, k*k*C), column order (kh, kw, c)."""
    N, H, W, C = x_nhwc.shape
    xp = jnp.pad(x_nhwc, ((0, 0), (padding, padding), (padding, padding), (0, 0)))
    OH = (H + 2 * padding - k) // stride + 1
    OW = (W + 2 * padding - k) // stride + 1
    cols = []
    for kh in range(k):
        for kw in range(k):
            cols.append(xp[:, kh:kh + stride * OH:stride, kw:kw + stride * OW:stride, :])
    patches = jnp.concatenate(cols, axis=-1)
    return patches.reshape(N * OH * OW, k * k * C), (N, OH, OW)


def im2col_3x3(x_nhwc):
    """3x3 / stride-1 / pad-1 patches on the UNdilated ConvTranspose input."""
    N, H, W, C = x_nhwc.shape
    xp = jnp.pad(x_nhwc, ((0, 0), (1, 1), (1, 1), (0, 0)))
    cols = [xp[:, dy:dy + H, dx:dx + W, :] for dy in range(3) for dx in range(3)]
    patches = jnp.concatenate(cols, axis=-1)
    return patches.reshape(N * H * W, 9 * C), (N, H, W)


# ------------------------ one-time weight repacking ------------------------

def conv_weight_to_2d(w_oihw, cin_pad):
    """Conv2d weight (O,I,kh,kw) -> (k*k*cin_pad, 128) bf16 matching im2col ordering."""
    O, I, kh, kw = w_oihw.shape
    w = jnp.transpose(w_oihw, (2, 3, 1, 0))                       # (kh, kw, I, O)
    w = jnp.pad(w, ((0, 0), (0, 0), (0, cin_pad - I), (0, LANES - O)))
    return w.reshape(kh * kw * cin_pad, LANES).astype(jnp.bfloat16)


def convT_weight_subpixel(w_iokk, cout_pad=LANES):
    """ConvTranspose2d weight (I,O,4,4), stride 2, padding 1 -> sub-pixel weight
    (9*I, 4*cout_pad) bf16.  Columns are grouped by output parity g = ry*2 + rx; rows
    follow the 3x3 im2col ordering (dy, dx, c) on the UNdilated input."""
    I, O, kh, kw = w_iokk.shape
    assert (kh, kw) == (4, 4)
    wp = jnp.transpose(w_iokk, (2, 3, 0, 1))                      # (ky, kx, I, O)
    # tap map dy -> ky per output parity (derived from y = 2*iy - 1 + ky)
    ymap = {0: {0: 3, 1: 1}, 1: {1: 2, 2: 0}}
    sub = jnp.zeros((3, 3, I, 2, 2, cout_pad), jnp.float32)
    for ry in (0, 1):
        for rx in (0, 1):
            for dy, ky in ymap[ry].items():
                for dx, kx in ymap[rx].items():
                    blk = jnp.pad(wp[ky, kx], ((0, 0), (0, cout_pad - O)))
                    sub = sub.at[dy, dx, :, ry, rx, :].set(blk)
    return sub.reshape(9 * I, 2 * 2 * cout_pad).astype(jnp.bfloat16)


def e5_fc_weight(w_oihw):
    """The e5 conv (4x4, stride 2, pad 1) on a 2x2 input with 1x1 output is exactly a
    linear layer: W_fc[(iy,ix,c), o] = W[o, c, iy+1, ix+1]."""
    O, I, kh, kw = w_oihw.shape
    assert (kh, kw) == (4, 4)
    w = jnp.transpose(w_oihw[:, :, 1:3, 1:3], (2, 3, 1, 0))       # (iy, ix, I, O)
    return w.reshape(2 * 2 * I, O).astype(jnp.float32)


def pad_bn(gamma, beta, c_pad=LANES):
    g = jnp.pad(gamma, (0, c_pad - gamma.shape[0]), constant_values=1.0)
    b = jnp.pad(beta, (0, c_pad - beta.shape[0]), constant_values=0.0)
    return g.reshape(1, c_pad).astype(jnp.float32), b.reshape(1, c_pad).astype(jnp.float32)


def prepare_params(params, *, nc, h1, h2, h3, h4, h5, fc1, fc2):
    """One-time repacking of the PyTorch-layout parameters (hoisted out of the forward)."""
    f32 = jnp.float32
    prep = {}
    # encoder convs: real-Cin K, 128-padded Cout.  e1 input channels padded 4 -> 8.
    prep["e1_w"] = conv_weight_to_2d(params["e1"], cin_pad=_round_up(nc, 8))
    prep["e2_w"] = conv_weight_to_2d(params["e2"], cin_pad=h1)
    prep["e3_w"] = conv_weight_to_2d(params["e3"], cin_pad=h2)
    prep["e4_w"] = conv_weight_to_2d(params["e4"], cin_pad=h3)
    for name in ("e2", "e3", "e4"):
        prep[name + "_g"], prep[name + "_b"] = pad_bn(*params["bn_" + name])
    # fused tail (e5 + fcE1 + fcE2 + fcD1), all f32 (tiny)
    prep["e5_w"] = e5_fc_weight(params["e5"])
    prep["e5_g"] = params["bn_e5"][0].reshape(1, h5).astype(f32)
    prep["e5_b"] = params["bn_e5"][1].reshape(1, h5).astype(f32)
    prep["fcE1_w"] = params["fcE1_w"].T.astype(f32)
    prep["fcE1_b"] = params["fcE1_b"].reshape(1, fc2).astype(f32)
    prep["fcE2_w"] = params["fcE2_w"].T.astype(f32)
    prep["fcE2_b"] = params["fcE2_b"].reshape(1, fc2).astype(f32)
    prep["fcD1_w"] = params["fcD1_w"].T.astype(f32)
    prep["fcD1_b"] = params["fcD1_b"].reshape(1, fc1).astype(f32)
    # decoder sub-pixel ConvTranspose weights
    for name in ("d1", "d2", "d3", "d4", "d5"):
        prep[name + "_w"] = convT_weight_subpixel(params[name])
    for name in ("d1", "d2", "d3", "d4"):
        prep[name + "_g"], prep[name + "_b"] = pad_bn(*params["bn_" + name])
    return prep


# ------------------------------- layer wrappers -------------------------------

def conv_layer(x_real, w2d, k, s, p, gamma=None, beta=None, act="leaky",
               out_dtype=jnp.bfloat16):
    patches, (N, OH, OW) = im2col(x_real, k, s, p)
    patches = patches.astype(jnp.bfloat16)
    if gamma is not None:
        out = pallas_mm_bn_leaky(patches, w2d, gamma, beta, groups=1, out_dtype=out_dtype)
    else:
        out = pallas_mm_act(patches, w2d, act, out_dtype)
    return out.reshape(N, OH, OW, LANES)


def deconv_layer(x_real, w2d, gamma=None, beta=None, act="leaky"):
    """Sub-pixel ConvTranspose2d (4x4, stride 2, pad 1): one matmul on the UNdilated
    input with a 4*128-wide output, then an XLA pixel-shuffle to (N, 2H, 2W, 128)."""
    N, H, W, _ = x_real.shape
    patches, _ = im2col_3x3(x_real)
    patches = patches.astype(jnp.bfloat16)
    if gamma is not None:
        out = pallas_mm_bn_leaky(patches, w2d, gamma, beta, groups=4,
                                 out_dtype=jnp.bfloat16)
    else:
        out = pallas_mm_act(patches, w2d, act, jnp.float32)
    out = out.reshape(N, H, W, 2, 2, LANES)
    out = out.transpose(0, 1, 3, 2, 4, 5).reshape(N, 2 * H, 2 * W, LANES)
    return out


# ----------------------------- model definition -----------------------------

def init_params(key, kernel, nc, h1, h2, h3, h4, h5, fc1, fc2):
    ks = jax.random.split(key, 16)
    sd = 0.05
    w = lambda k_, shape: jax.random.normal(k_, shape, jnp.float32) * sd
    bn = lambda c: (jnp.ones((c,), jnp.float32), jnp.zeros((c,), jnp.float32))
    return {
        # encoder Conv2d weights, PyTorch layout (O, I, k, k), bias=False
        "e1": w(ks[0], (h1, nc, kernel, kernel)),
        "e2": w(ks[1], (h2, h1, kernel, kernel)),
        "e3": w(ks[2], (h3, h2, kernel, kernel)),
        "e4": w(ks[3], (h4, h3, kernel, kernel)),
        "e5": w(ks[4], (h5, h4, kernel, kernel)),
        "bn_e2": bn(h2), "bn_e3": bn(h3), "bn_e4": bn(h4), "bn_e5": bn(h5),
        # Linear layers (PyTorch: weight (out,in), bias (out,))
        "fcE1_w": w(ks[5], (fc2, fc1)), "fcE1_b": w(ks[6], (fc2,)),
        "fcE2_w": w(ks[7], (fc2, fc1)), "fcE2_b": w(ks[8], (fc2,)),
        "fcD1_w": w(ks[9], (fc1, fc2)), "fcD1_b": w(ks[10], (fc1,)),
        # decoder ConvTranspose2d weights, PyTorch layout (I, O, k, k), bias=False
        "d1": w(ks[11], (h5, h4, kernel, kernel)),
        "d2": w(ks[12], (h4, h3, kernel, kernel)),
        "d3": w(ks[13], (h3, h2, kernel, kernel)),
        "d4": w(ks[14], (h2, h1, kernel, kernel)),
        "d5": w(ks[15], (h1, nc, kernel, kernel)),
        "bn_d1": bn(h4), "bn_d2": bn(h3), "bn_d3": bn(h2), "bn_d4": bn(h1),
    }


def cnn_vae_forward(prep, x_nchw, eps_key, *, kernel, stride, padding,
                    nc, h1, h2, h3, h4, h5, fc1, fc2):
    # The sub-pixel ConvTranspose path and the e5-as-FC tail assume the DCGAN config.
    assert (kernel, stride, padding) == (4, 2, 1)
    k, s, p = kernel, stride, padding

    x = jnp.transpose(x_nchw, (0, 2, 3, 1)).astype(jnp.bfloat16)      # NCHW -> NHWC, bf16
    cin0 = _round_up(nc, 8)
    if cin0 != nc:
        x = jnp.pad(x, ((0, 0), (0, 0), (0, 0), (0, cin0 - nc)))      # fill MXU K for e1

    # ---- encoder (outputs 128-lane padded, sliced to real channels between layers) ----
    h = conv_layer(x, prep["e1_w"], k, s, p, act="leaky")
    h = conv_layer(h[..., :h1], prep["e2_w"], k, s, p, prep["e2_g"], prep["e2_b"])
    h = conv_layer(h[..., :h2], prep["e3_w"], k, s, p, prep["e3_g"], prep["e3_b"])
    h = conv_layer(h[..., :h3], prep["e4_w"], k, s, p, prep["e4_g"], prep["e4_b"])

    N = h.shape[0]
    assert h.shape[1] == 2 and h.shape[2] == 2 and fc1 == h5          # 1x1 latent spatial
    h_tail = h[..., :h4].reshape(N, 2 * 2 * h4).astype(jnp.float32)

    # ---- fused tail: e5+BN+LeakyReLU, fcE1, fcE2, reparameterize, fcD1 + ReLU ----
    eps = jax.random.normal(eps_key, (N, fc2), jnp.float32)
    mu, logvar, z, hd = pallas_tail(
        h_tail, prep["e5_w"], prep["e5_g"], prep["e5_b"],
        prep["fcE1_w"], prep["fcE1_b"], prep["fcE2_w"], prep["fcE2_b"],
        prep["fcD1_w"], prep["fcD1_b"], eps)

    # ---- decoder (sub-pixel ConvTranspose) ----
    d = hd.reshape(N, 1, 1, h5).astype(jnp.bfloat16)                  # view(-1, h5, 1, 1)
    d = deconv_layer(d, prep["d1_w"], prep["d1_g"], prep["d1_b"])
    d = deconv_layer(d[..., :h4], prep["d2_w"], prep["d2_g"], prep["d2_b"])
    d = deconv_layer(d[..., :h3], prep["d3_w"], prep["d3_g"], prep["d3_b"])
    d = deconv_layer(d[..., :h2], prep["d4_w"], prep["d4_g"], prep["d4_b"])
    res = deconv_layer(d[..., :h1], prep["d5_w"], act="sigmoid")

    res = res[..., :nc]                                               # drop lane padding
    return jnp.transpose(res, (0, 3, 1, 2)), z, mu, logvar            # NHWC -> NCHW


# ------------------------------------ main -----------------------------------

if __name__ == "__main__":
    # DCGAN-style config: kernel=4, stride=2, padding=1; 32x32 input halves 5x to 1x1.
    kernel, stride, padding = 4, 2, 1
    nc, h1, h2, h3, h4, h5 = 4, 8, 16, 32, 32, 32
    fc1, fc2 = h5 * 1 * 1, 16
    batch, spatial = 2, 32

    root = jax.random.PRNGKey(0)
    k_param, k_x, k_eps = jax.random.split(root, 3)

    params = init_params(k_param, kernel, nc, h1, h2, h3, h4, h5, fc1, fc2)
    x = jax.random.normal(k_x, (batch, nc, spatial, spatial), jnp.float32)

    # one-time weight repacking, hoisted out of the per-step forward
    prep = prepare_params(params, nc=nc, h1=h1, h2=h2, h3=h3, h4=h4, h5=h5,
                          fc1=fc1, fc2=fc2)

    fwd = functools.partial(cnn_vae_forward, kernel=kernel, stride=stride, padding=padding,
                            nc=nc, h1=h1, h2=h2, h3=h3, h4=h4, h5=h5, fc1=fc1, fc2=fc2)

    res, z, mu, logvar = jax.jit(fwd)(prep, x, k_eps)
    jax.block_until_ready((res, z, mu, logvar))

    assert res.shape == (batch, nc, spatial, spatial)
    assert z.shape == (batch, fc2) and mu.shape == (batch, fc2) and logvar.shape == (batch, fc2)
    assert bool(jnp.all(jnp.isfinite(res)))
    assert bool(jnp.all((res >= 0.0) & (res <= 1.0)))

    print("KERNEL_OK")
</pallas_src>

<mosaic_0001>
module attributes {stable_mosaic.version = 11 : i64} {
  func.func @_mm_act_kernel(%arg0: i32, %arg1: memref<256x128xbf16, #tpu.memory_space<vmem>>, %arg2: memref<128x128xbf16, #tpu.memory_space<vmem>>, %arg3: memref<256x128xbf16, #tpu.memory_space<vmem>>) attributes {dimension_semantics = [#tpu.dimension_semantics<parallel>], iteration_bounds = array<i64: 2>, scalar_prefetch = 0 : i64, scratch_operands = 0 : i64, tpu.core_type = #tpu.core_type<tc>, window_params = [{transform_indices = @transform_0, window_bounds = array<i64: 256, 128>}, {pipeline_mode = #tpu.pipeline_mode<synchronous>, transform_indices = @transform_1, window_bounds = array<i64: 128, 128>}, {transform_indices = @transform_2, window_bounds = array<i64: 256, 128>}]} {
    %c0 = arith.constant 0 : index
    %c0_0 = arith.constant 0 : index
    %0 = vector.load %arg1[%c0, %c0_0] : memref<256x128xbf16, #tpu.memory_space<vmem>>, vector<256x128xbf16>
    %c0_1 = arith.constant 0 : index
    %c0_2 = arith.constant 0 : index
    %1 = vector.load %arg2[%c0_1, %c0_2] : memref<128x128xbf16, #tpu.memory_space<vmem>>, vector<128x128xbf16>
    %cst = arith.constant dense<0.000000e+00> : vector<256x128xf32>
    %2 = tpu.matmul %0, %1, %cst {dimension_numbers = #tpu.dot_dimension_numbers<[1], [0], [0], [1], [0, 0, 1, 1], [], []>} : vector<256x128xbf16>, vector<128x128xbf16>, vector<256x128xf32> -> vector<256x128xf32>
    %cst_3 = arith.constant 0.000000e+00 : f32
    %3 = vector.broadcast %cst_3 : f32 to vector<256x128xf32>
    %4 = arith.cmpf ogt, %2, %3 : vector<256x128xf32>
    %cst_4 = arith.constant 2.000000e-01 : f32
    %5 = vector.broadcast %cst_4 : f32 to vector<256x128xf32>
    %6 = arith.mulf %5, %2 : vector<256x128xf32>
    %7 = arith.select %4, %2, %6 : vector<256x128xi1>, vector<256x128xf32>
    %8 = arith.truncf %7 : vector<256x128xf32> to vector<256x128xbf16>
    %c0_5 = arith.constant 0 : index
    %c0_6 = arith.constant 0 : index
    %9 = vector.load %arg3[%c0_5, %c0_6] : memref<256x128xbf16, #tpu.memory_space<vmem>>, vector<256x128xbf16>
    tpu.vector_store %arg3[%c0_5, %c0_6], %8 {strides = array<i32>} : memref<256x128xbf16, #tpu.memory_space<vmem>>, vector<256x128xbf16>,
    return
  }
  func.func @transform_0(%arg0: i32) -> (i32, i32) {
    %c0_i32 = arith.constant 0 : i32
    %c0_i32_0 = arith.constant 0 : i32
    return %arg0, %c0_i32 : i32, i32
  }
  func.func @transform_1(%arg0: i32) -> (i32, i32) {
    %c0_i32 = arith.constant 0 : i32
    %c0_i32_0 = arith.constant 0 : i32
    %c0_i32_1 = arith.constant 0 : i32
    return %c0_i32, %c0_i32_0 : i32, i32
  }
  func.func @transform_2(%arg0: i32) -> (i32, i32) {
    %c0_i32 = arith.constant 0 : i32
    %c0_i32_0 = arith.constant 0 : i32
    return %arg0, %c0_i32 : i32, i32
  }
}

module attributes {stable_mosaic.version = 11 : i64} {
  func.func @_mm_bn_leaky_kernel(%arg0: i32, %arg1: memref<128x128xbf16, #tpu.memory_space<vmem>>, %arg2: memref<128x128xbf16, #tpu.memory_space<vmem>>, %arg3: memref<1x128xf32, #tpu.memory_space<vmem>>, %arg4: memref<1x128xf32, #tpu.memory_space<vmem>>, %arg5: memref<128x128xbf16, #tpu.memory_space<vmem>>) attributes {dimension_semantics = [#tpu.dimension_semantics<arbitrary>], iteration_bounds = array<i64: 1>, scalar_prefetch = 0 : i64, scratch_operands = 0 : i64, tpu.core_type = #tpu.core_type<tc>, window_params = [{pipeline_mode = #tpu.pipeline_mode<synchronous>, transform_indices = @transform_0, window_bounds = array<i64: 128, 128>}, {pipeline_mode = #tpu.pipeline_mode<synchronous>, transform_indices = @transform_1, window_bounds = array<i64: 128, 128>}, {pipeline_mode = #tpu.pipeline_mode<synchronous>, transform_indices = @transform_2, window_bounds = array<i64: 1, 128>}, {pipeline_mode = #tpu.pipeline_mode<synchronous>, transform_indices = @transform_3, window_bounds = array<i64: 1, 128>}, {pipeline_mode = #tpu.pipeline_mode<synchronous>, transform_indices = @transform_4, window_bounds = array<i64: 128, 128>}]} {
    %c0 = arith.constant 0 : index
    %c0_0 = arith.constant 0 : index
    %0 = vector.load %arg1[%c0, %c0_0] : memref<128x128xbf16, #tpu.memory_space<vmem>>, vector<128x128xbf16>
    %c0_1 = arith.constant 0 : index
    %c0_2 = arith.constant 0 : index
    %1 = vector.load %arg2[%c0_1, %c0_2] : memref<128x128xbf16, #tpu.memory_space<vmem>>, vector<128x128xbf16>
    %cst = arith.constant dense<0.000000e+00> : vector<128x128xf32>
    %2 = tpu.matmul %0, %1, %cst {dimension_numbers = #tpu.dot_dimension_numbers<[1], [0], [0], [1], [0, 0, 1, 1], [], []>} : vector<128x128xbf16>, vector<128x128xbf16>, vector<128x128xf32> -> vector<128x128xf32>
    %cst_3 = arith.constant 0.000000e+00 : f32
    %3 = vector.broadcast %cst_3 : f32 to vector<1x128xf32>
    %cst_4 = arith.constant dense<0.000000e+00> : vector<128xf32>
    %4 = vector.multi_reduction <add>, %2, %cst_4 [0] : vector<128x128xf32> to vector<128xf32>
    %5 = vector.shape_cast %4 : vector<128xf32> to vector<1x128xf32>
    %6 = arith.addf %3, %5 : vector<1x128xf32>
    %cst_5 = arith.constant 7.812500e-03 : f32
    %7 = vector.broadcast %cst_5 : f32 to vector<1x128xf32>
    %8 = arith.mulf %6, %7 : vector<1x128xf32>
    %cst_6 = arith.constant 0.000000e+00 : f32
    %9 = vector.broadcast %cst_6 : f32 to vector<1x128xf32>
    %10 = vector.broadcast %8 : vector<1x128xf32> to vector<128x128xf32>
    %11 = arith.subf %2, %10 : vector<128x128xf32>
    %12 = arith.mulf %11, %11 : vector<128x128xf32>
    %cst_7 = arith.constant dense<0.000000e+00> : vector<128xf32>
    %13 = vector.multi_reduction <add>, %12, %cst_7 [0] : vector<128x128xf32> to vector<128xf32>
    %14 = vector.shape_cast %13 : vector<128xf32> to vector<1x128xf32>
    %15 = arith.addf %9, %14 : vector<1x128xf32>
    %cst_8 = arith.constant 7.812500e-03 : f32
    %16 = vector.broadcast %cst_8 : f32 to vector<1x128xf32>
    %17 = arith.mulf %15, %16 : vector<1x128xf32>
    %cst_9 = arith.constant 9.99999974E-6 : f32
    %18 = vector.broadcast %cst_9 : f32 to vector<1x128xf32>
    %19 = arith.addf %17, %18 : vector<1x128xf32>
    %20 = math.rsqrt %19 : vector<1x128xf32>
    %c0_10 = arith.constant 0 : index
    %c0_11 = arith.constant 0 : index
    %21 = vector.load %arg3[%c0_10, %c0_11] : memref<1x128xf32, #tpu.memory_space<vmem>>, vector<1x128xf32>
    %22 = arith.mulf %20, %21 : vector<1x128xf32>
    %23 = vector.broadcast %8 : vector<1x128xf32> to vector<128x128xf32>
    %24 = arith.subf %2, %23 : vector<128x128xf32>
    %25 = vector.broadcast %22 : vector<1x128xf32> to vector<128x128xf32>
    %26 = arith.mulf %24, %25 : vector<128x128xf32>
    %c0_12 = arith.constant 0 : index
    %c0_13 = arith.constant 0 : index
    %27 = vector.load %arg4[%c0_12, %c0_13] : memref<1x128xf32, #tpu.memory_space<vmem>>, vector<1x128xf32>
    %28 = vector.broadcast %27 : vector<1x128xf32> to vector<128x128xf32>
    %29 = arith.addf %26, %28 : vector<128x128xf32>
    %cst_14 = arith.constant 0.000000e+00 : f32
    %30 = vector.broadcast %cst_14 : f32 to vector<128x128xf32>
    %31 = arith.cmpf ogt, %29, %30 : vector<128x128xf32>
    %cst_15 = arith.constant 2.000000e-01 : f32
    %32 = vector.broadcast %cst_15 : f32 to vector<128x128xf32>
    %33 = arith.mulf %32, %29 : vector<128x128xf32>
    %34 = arith.select %31, %29, %33 : vector<128x128xi1>, vector<128x128xf32>
    %35 = arith.truncf %34 : vector<128x128xf32> to vector<128x128xbf16>
    %c0_16 = arith.constant 0 : index
    %c0_17 = arith.constant 0 : index
    %36 = vector.load %arg5[%c0_16, %c0_17] : memref<128x128xbf16, #tpu.memory_space<vmem>>, vector<128x128xbf16>
    tpu.vector_store %arg5[%c0_16, %c0_17], %35 {strides = array<i32>} : memref<128x128xbf16, #tpu.memory_space<vmem>>, vector<128x128xbf16>,
    return
  }
  func.func @transform_0(%arg0: i32) -> (i32, i32) {
    %c0_i32 = arith.constant 0 : i32
    %c0_i32_0 = arith.constant 0 : i32
    %c0_i32_1 = arith.constant 0 : i32
    return %c0_i32, %c0_i32_0 : i32, i32
  }
  func.func @transform_1(%arg0: i32) -> (i32, i32) {
    %c0_i32 = arith.constant 0 : i32
    %c0_i32_0 = arith.constant 0 : i32
    %c0_i32_1 = arith.constant 0 : i32
    return %c0_i32, %c0_i32_0 : i32, i32
  }
  func.func @transform_2(%arg0: i32) -> (i32, i32) {
    %c0_i32 = arith.constant 0 : i32
    %c0_i32_0 = arith.constant 0 : i32
    %c0_i32_1 = arith.constant 0 : i32
    return %c0_i32, %c0_i32_0 : i32, i32
  }
  func.func @transform_3(%arg0: i32) -> (i32, i32) {
    %c0_i32 = arith.constant 0 : i32
    %c0_i32_0 = arith.constant 0 : i32
    %c0_i32_1 = arith.constant 0 : i32
    return %c0_i32, %c0_i32_0 : i32, i32
  }
  func.func @transform_4(%arg0: i32) -> (i32, i32) {
    %c0_i32 = arith.constant 0 : i32
    %c0_i32_0 = arith.constant 0 : i32
    %c0_i32_1 = arith.constant 0 : i32
    return %c0_i32, %c0_i32_0 : i32, i32
  }
}

module attributes {stable_mosaic.version = 11 : i64} {
  func.func @_mm_bn_leaky_kernel(%arg0: i32, %arg1: memref<32x256xbf16, #tpu.memory_space<vmem>>, %arg2: memref<256x128xbf16, #tpu.memory_space<vmem>>, %arg3: memref<1x128xf32, #tpu.memory_space<vmem>>, %arg4: memref<1x128xf32, #tpu.memory_space<vmem>>, %arg5: memref<32x128xbf16, #tpu.memory_space<vmem>>) attributes {dimension_semantics = [#tpu.dimension_semantics<arbitrary>], iteration_bounds = array<i64: 1>, scalar_prefetch = 0 : i64, scratch_operands = 0 : i64, tpu.core_type = #tpu.core_type<tc>, window_params = [{pipeline_mode = #tpu.pipeline_mode<synchronous>, transform_indices = @transform_0, window_bounds = array<i64: 32, 256>}, {pipeline_mode = #tpu.pipeline_mode<synchronous>, transform_indices = @transform_1, window_bounds = array<i64: 256, 128>}, {pipeline_mode = #tpu.pipeline_mode<synchronous>, transform_indices = @transform_2, window_bounds = array<i64: 1, 128>}, {pipeline_mode = #tpu.pipeline_mode<synchronous>, transform_indices = @transform_3, window_bounds = array<i64: 1, 128>}, {pipeline_mode = #tpu.pipeline_mode<synchronous>, transform_indices = @transform_4, window_bounds = array<i64: 32, 128>}]} {
    %c0 = arith.constant 0 : index
    %c0_0 = arith.constant 0 : index
    %0 = vector.load %arg1[%c0, %c0_0] : memref<32x256xbf16, #tpu.memory_space<vmem>>, vector<32x256xbf16>
    %c0_1 = arith.constant 0 : index
    %c0_2 = arith.constant 0 : index
    %1 = vector.load %arg2[%c0_1, %c0_2] : memref<256x128xbf16, #tpu.memory_space<vmem>>, vector<256x128xbf16>
    %cst = arith.constant dense<0.000000e+00> : vector<32x128xf32>
    %2 = tpu.matmul %0, %1, %cst {dimension_numbers = #tpu.dot_dimension_numbers<[1], [0], [0], [1], [0, 0, 1, 1], [], []>} : vector<32x256xbf16>, vector<256x128xbf16>, vector<32x128xf32> -> vector<32x128xf32>
    %cst_3 = arith.constant 0.000000e+00 : f32
    %3 = vector.broadcast %cst_3 : f32 to vector<1x128xf32>
    %cst_4 = arith.constant dense<0.000000e+00> : vector<128xf32>
    %4 = vector.multi_reduction <add>, %2, %cst_4 [0] : vector<32x128xf32> to vector<128xf32>
    %5 = vector.shape_cast %4 : vector<128xf32> to vector<1x128xf32>
    %6 = arith.addf %3, %5 : vector<1x128xf32>
    %cst_5 = arith.constant 3.125000e-02 : f32
    %7 = vector.broadcast %cst_5 : f32 to vector<1x128xf32>
    %8 = arith.mulf %6, %7 : vector<1x128xf32>
    %cst_6 = arith.constant 0.000000e+00 : f32
    %9 = vector.broadcast %cst_6 : f32 to vector<1x128xf32>
    %10 = vector.broadcast %8 : vector<1x128xf32> to vector<32x128xf32>
    %11 = arith.subf %2, %10 : vector<32x128xf32>
    %12 = arith.mulf %11, %11 : vector<32x128xf32>
    %cst_7 = arith.constant dense<0.000000e+00> : vector<128xf32>
    %13 = vector.multi_reduction <add>, %12, %cst_7 [0] : vector<32x128xf32> to vector<128xf32>
    %14 = vector.shape_cast %13 : vector<128xf32> to vector<1x128xf32>
    %15 = arith.addf %9, %14 : vector<1x128xf32>
    %cst_8 = arith.constant 3.125000e-02 : f32
    %16 = vector.broadcast %cst_8 : f32 to vector<1x128xf32>
    %17 = arith.mulf %15, %16 : vector<1x128xf32>
    %cst_9 = arith.constant 9.99999974E-6 : f32
    %18 = vector.broadcast %cst_9 : f32 to vector<1x128xf32>
    %19 = arith.addf %17, %18 : vector<1x128xf32>
    %20 = math.rsqrt %19 : vector<1x128xf32>
    %c0_10 = arith.constant 0 : index
    %c0_11 = arith.constant 0 : index
    %21 = vector.load %arg3[%c0_10, %c0_11] : memref<1x128xf32, #tpu.memory_space<vmem>>, vector<1x128xf32>
    %22 = arith.mulf %20, %21 : vector<1x128xf32>
    %23 = vector.broadcast %8 : vector<1x128xf32> to vector<32x128xf32>
    %24 = arith.subf %2, %23 : vector<32x128xf32>
    %25 = vector.broadcast %22 : vector<1x128xf32> to vector<32x128xf32>
    %26 = arith.mulf %24, %25 : vector<32x128xf32>
    %c0_12 = arith.constant 0 : index
    %c0_13 = arith.constant 0 : index
    %27 = vector.load %arg4[%c0_12, %c0_13] : memref<1x128xf32, #tpu.memory_space<vmem>>, vector<1x128xf32>
    %28 = vector.broadcast %27 : vector<1x128xf32> to vector<32x128xf32>
    %29 = arith.addf %26, %28 : vector<32x128xf32>
    %cst_14 = arith.constant 0.000000e+00 : f32
    %30 = vector.broadcast %cst_14 : f32 to vector<32x128xf32>
    %31 = arith.cmpf ogt, %29, %30 : vector<32x128xf32>
    %cst_15 = arith.constant 2.000000e-01 : f32
    %32 = vector.broadcast %cst_15 : f32 to vector<32x128xf32>
    %33 = arith.mulf %32, %29 : vector<32x128xf32>
    %34 = arith.select %31, %29, %33 : vector<32x128xi1>, vector<32x128xf32>
    %35 = arith.truncf %34 : vector<32x128xf32> to vector<32x128xbf16>
    %c0_16 = arith.constant 0 : index
    %c0_17 = arith.constant 0 : index
    %36 = vector.load %arg5[%c0_16, %c0_17] : memref<32x128xbf16, #tpu.memory_space<vmem>>, vector<32x128xbf16>
    tpu.vector_store %arg5[%c0_16, %c0_17], %35 {strides = array<i32>} : memref<32x128xbf16, #tpu.memory_space<vmem>>, vector<32x128xbf16>,
    return
  }
  func.func @transform_0(%arg0: i32) -> (i32, i32) {
    %c0_i32 = arith.constant 0 : i32
    %c0_i32_0 = arith.constant 0 : i32
    %c0_i32_1 = arith.constant 0 : i32
    return %c0_i32, %c0_i32_0 : i32, i32
  }
  func.func @transform_1(%arg0: i32) -> (i32, i32) {
    %c0_i32 = arith.constant 0 : i32
    %c0_i32_0 = arith.constant 0 : i32
    %c0_i32_1 = arith.constant 0 : i32
    return %c0_i32, %c0_i32_0 : i32, i32
  }
  func.func @transform_2(%arg0: i32) -> (i32, i32) {
    %c0_i32 = arith.constant 0 : i32
    %c0_i32_0 = arith.constant 0 : i32
    %c0_i32_1 = arith.constant 0 : i32
    return %c0_i32, %c0_i32_0 : i32, i32
  }
  func.func @transform_3(%arg0: i32) -> (i32, i32) {
    %c0_i32 = arith.constant 0 : i32
    %c0_i32_0 = arith.constant 0 : i32
    %c0_i32_1 = arith.constant 0 : i32
    return %c0_i32, %c0_i32_0 : i32, i32
  }
  func.func @transform_4(%arg0: i32) -> (i32, i32) {
    %c0_i32 = arith.constant 0 : i32
    %c0_i32_0 = arith.constant 0 : i32
    %c0_i32_1 = arith.constant 0 : i32
    return %c0_i32, %c0_i32_0 : i32, i32
  }
}

module attributes {stable_mosaic.version = 11 : i64} {
  func.func @_mm_bn_leaky_kernel(%arg0: i32, %arg1: memref<8x512xbf16, #tpu.memory_space<vmem>>, %arg2: memref<512x128xbf16, #tpu.memory_space<vmem>>, %arg3: memref<1x128xf32, #tpu.memory_space<vmem>>, %arg4: memref<1x128xf32, #tpu.memory_space<vmem>>, %arg5: memref<8x128xbf16, #tpu.memory_space<vmem>>) attributes {dimension_semantics = [#tpu.dimension_semantics<arbitrary>], iteration_bounds = array<i64: 1>, scalar_prefetch = 0 : i64, scratch_operands = 0 : i64, tpu.core_type = #tpu.core_type<tc>, window_params = [{pipeline_mode = #tpu.pipeline_mode<synchronous>, transform_indices = @transform_0, window_bounds = array<i64: 8, 512>}, {pipeline_mode = #tpu.pipeline_mode<synchronous>, transform_indices = @transform_1, window_bounds = array<i64: 512, 128>}, {pipeline_mode = #tpu.pipeline_mode<synchronous>, transform_indices = @transform_2, window_bounds = array<i64: 1, 128>}, {pipeline_mode = #tpu.pipeline_mode<synchronous>, transform_indices = @transform_3, window_bounds = array<i64: 1, 128>}, {pipeline_mode = #tpu.pipeline_mode<synchronous>, transform_indices = @transform_4, window_bounds = array<i64: 8, 128>}]} {
    %c0 = arith.constant 0 : index
    %c0_0 = arith.constant 0 : index
    %0 = vector.load %arg1[%c0, %c0_0] : memref<8x512xbf16, #tpu.memory_space<vmem>>, vector<8x512xbf16>
    %c0_1 = arith.constant 0 : index
    %c0_2 = arith.constant 0 : index
    %1 = vector.load %arg2[%c0_1, %c0_2] : memref<512x128xbf16, #tpu.memory_space<vmem>>, vector<512x128xbf16>
    %cst = arith.constant dense<0.000000e+00> : vector<8x128xf32>
    %2 = tpu.matmul %0, %1, %cst {dimension_numbers = #tpu.dot_dimension_numbers<[1], [0], [0], [1], [0, 0, 1, 1], [], []>} : vector<8x512xbf16>, vector<512x128xbf16>, vector<8x128xf32> -> vector<8x128xf32>
    %cst_3 = arith.constant 0.000000e+00 : f32
    %3 = vector.broadcast %cst_3 : f32 to vector<1x128xf32>
    %cst_4 = arith.constant dense<0.000000e+00> : vector<128xf32>
    %4 = vector.multi_reduction <add>, %2, %cst_4 [0] : vector<8x128xf32> to vector<128xf32>
    %5 = vector.shape_cast %4 : vector<128xf32> to vector<1x128xf32>
    %6 = arith.addf %3, %5 : vector<1x128xf32>
    %cst_5 = arith.constant 1.250000e-01 : f32
    %7 = vector.broadcast %cst_5 : f32 to vector<1x128xf32>
    %8 = arith.mulf %6, %7 : vector<1x128xf32>
    %cst_6 = arith.constant 0.000000e+00 : f32
    %9 = vector.broadcast %cst_6 : f32 to vector<1x128xf32>
    %10 = vector.broadcast %8 : vector<1x128xf32> to vector<8x128xf32>
    %11 = arith.subf %2, %10 : vector<8x128xf32>
    %12 = arith.mulf %11, %11 : vector<8x128xf32>
    %cst_7 = arith.constant dense<0.000000e+00> : vector<128xf32>
    %13 = vector.multi_reduction <add>, %12, %cst_7 [0] : vector<8x128xf32> to vector<128xf32>
    %14 = vector.shape_cast %13 : vector<128xf32> to vector<1x128xf32>
    %15 = arith.addf %9, %14 : vector<1x128xf32>
    %cst_8 = arith.constant 1.250000e-01 : f32
    %16 = vector.broadcast %cst_8 : f32 to vector<1x128xf32>
    %17 = arith.mulf %15, %16 : vector<1x128xf32>
    %cst_9 = arith.constant 9.99999974E-6 : f32
    %18 = vector.broadcast %cst_9 : f32 to vector<1x128xf32>
    %19 = arith.addf %17, %18 : vector<1x128xf32>
    %20 = math.rsqrt %19 : vector<1x128xf32>
    %c0_10 = arith.constant 0 : index
    %c0_11 = arith.constant 0 : index
    %21 = vector.load %arg3[%c0_10, %c0_11] : memref<1x128xf32, #tpu.memory_space<vmem>>, vector<1x128xf32>
    %22 = arith.mulf %20, %21 : vector<1x128xf32>
    %23 = vector.broadcast %8 : vector<1x128xf32> to vector<8x128xf32>
    %24 = arith.subf %2, %23 : vector<8x128xf32>
    %25 = vector.broadcast %22 : vector<1x128xf32> to vector<8x128xf32>
    %26 = arith.mulf %24, %25 : vector<8x128xf32>
    %c0_12 = arith.constant 0 : index
    %c0_13 = arith.constant 0 : index
    %27 = vector.load %arg4[%c0_12, %c0_13] : memref<1x128xf32, #tpu.memory_space<vmem>>, vector<1x128xf32>
    %28 = vector.broadcast %27 : vector<1x128xf32> to vector<8x128xf32>
    %29 = arith.addf %26, %28 : vector<8x128xf32>
    %cst_14 = arith.constant 0.000000e+00 : f32
    %30 = vector.broadcast %cst_14 : f32 to vector<8x128xf32>
    %31 = arith.cmpf ogt, %29, %30 : vector<8x128xf32>
    %cst_15 = arith.constant 2.000000e-01 : f32
    %32 = vector.broadcast %cst_15 : f32 to vector<8x128xf32>
    %33 = arith.mulf %32, %29 : vector<8x128xf32>
    %34 = arith.select %31, %29, %33 : vector<8x128xi1>, vector<8x128xf32>
    %35 = arith.truncf %34 : vector<8x128xf32> to vector<8x128xbf16>
    %c0_16 = arith.constant 0 : index
    %c0_17 = arith.constant 0 : index
    %36 = vector.load %arg5[%c0_16, %c0_17] : memref<8x128xbf16, #tpu.memory_space<vmem>>, vector<8x128xbf16>
    tpu.vector_store %arg5[%c0_16, %c0_17], %35 {strides = array<i32>} : memref<8x128xbf16, #tpu.memory_space<vmem>>, vector<8x128xbf16>,
    return
  }
  func.func @transform_0(%arg0: i32) -> (i32, i32) {
    %c0_i32 = arith.constant 0 : i32
    %c0_i32_0 = arith.constant 0 : i32
    %c0_i32_1 = arith.constant 0 : i32
    return %c0_i32, %c0_i32_0 : i32, i32
  }
  func.func @transform_1(%arg0: i32) -> (i32, i32) {
    %c0_i32 = arith.constant 0 : i32
    %c0_i32_0 = arith.constant 0 : i32
    %c0_i32_1 = arith.constant 0 : i32
    return %c0_i32, %c0_i32_0 : i32, i32
  }
  func.func @transform_2(%arg0: i32) -> (i32, i32) {
    %c0_i32 = arith.constant 0 : i32
    %c0_i32_0 = arith.constant 0 : i32
    %c0_i32_1 = arith.constant 0 : i32
    return %c0_i32, %c0_i32_0 : i32, i32
  }
  func.func @transform_3(%arg0: i32) -> (i32, i32) {
    %c0_i32 = arith.constant 0 : i32
    %c0_i32_0 = arith.constant 0 : i32
    %c0_i32_1 = arith.constant 0 : i32
    return %c0_i32, %c0_i32_0 : i32, i32
  }
  func.func @transform_4(%arg0: i32) -> (i32, i32) {
    %c0_i32 = arith.constant 0 : i32
    %c0_i32_0 = arith.constant 0 : i32
    %c0_i32_1 = arith.constant 0 : i32
    return %c0_i32, %c0_i32_0 : i32, i32
  }
}

module attributes {stable_mosaic.version = 11 : i64} {
  func.func @_tail_kernel(%arg0: i32, %arg1: memref<2x128xf32, #tpu.memory_space<vmem>>, %arg2: memref<128x32xf32, #tpu.memory_space<vmem>>, %arg3: memref<1x32xf32, #tpu.memory_space<vmem>>, %arg4: memref<1x32xf32, #tpu.memory_space<vmem>>, %arg5: memref<32x16xf32, #tpu.memory_space<vmem>>, %arg6: memref<1x16xf32, #tpu.memory_space<vmem>>, %arg7: memref<32x16xf32, #tpu.memory_space<vmem>>, %arg8: memref<1x16xf32, #tpu.memory_space<vmem>>, %arg9: memref<16x32xf32, #tpu.memory_space<vmem>>, %arg10: memref<1x32xf32, #tpu.memory_space<vmem>>, %arg11: memref<2x16xf32, #tpu.memory_space<vmem>>, %arg12: memref<2x16xf32, #tpu.memory_space<vmem>>, %arg13: memref<2x16xf32, #tpu.memory_space<vmem>>, %arg14: memref<2x16xf32, #tpu.memory_space<vmem>>, %arg15: memref<2x32xf32, #tpu.memory_space<vmem>>) attributes {dimension_semantics = [#tpu.dimension_semantics<arbitrary>], iteration_bounds = array<i64: 1>, scalar_prefetch = 0 : i64, scratch_operands = 0 : i64, tpu.core_type = #tpu.core_type<tc>, window_params = [{pipeline_mode = #tpu.pipeline_mode<synchronous>, transform_indices = @transform_0, window_bounds = array<i64: 2, 128>}, {pipeline_mode = #tpu.pipeline_mode<synchronous>, transform_indices = @transform_1, window_bounds = array<i64: 128, 32>}, {pipeline_mode = #tpu.pipeline_mode<synchronous>, transform_indices = @transform_2, window_bounds = array<i64: 1, 32>}, {pipeline_mode = #tpu.pipeline_mode<synchronous>, transform_indices = @transform_3, window_bounds = array<i64: 1, 32>}, {pipeline_mode = #tpu.pipeline_mode<synchronous>, transform_indices = @transform_4, window_bounds = array<i64: 32, 16>}, {pipeline_mode = #tpu.pipeline_mode<synchronous>, transform_indices = @transform_5, window_bounds = array<i64: 1, 16>}, {pipeline_mode = #tpu.pipeline_mode<synchronous>, transform_indices = @transform_6, window_bounds = array<i64: 32, 16>}, {pipeline_mode = #tpu.pipeline_mode<synchronous>, transform_indices = @transform_7, window_bounds = array<i64: 1, 16>}, {pipeline_mode = #tpu.pipeline_mode<synchronous>, transform_indices = @transform_8, window_bounds = array<i64: 16, 32>}, {pipeline_mode = #tpu.pipeline_mode<synchronous>, transform_indices = @transform_9, window_bounds = array<i64: 1, 32>}, {pipeline_mode = #tpu.pipeline_mode<synchronous>, transform_indices = @transform_10, window_bounds = array<i64: 2, 16>}, {pipeline_mode = #tpu.pipeline_mode<synchronous>, transform_indices = @transform_11, window_bounds = array<i64: 2, 16>}, {pipeline_mode = #tpu.pipeline_mode<synchronous>, transform_indices = @transform_12, window_bounds = array<i64: 2, 16>}, {pipeline_mode = #tpu.pipeline_mode<synchronous>, transform_indices = @transform_13, window_bounds = array<i64: 2, 16>}, {pipeline_mode = #tpu.pipeline_mode<synchronous>, transform_indices = @transform_14, window_bounds = array<i64: 2, 32>}]} {
    %c0 = arith.constant 0 : index
    %c0_0 = arith.constant 0 : index
    %0 = vector.load %arg1[%c0, %c0_0] : memref<2x128xf32, #tpu.memory_space<vmem>>, vector<2x128xf32>
    %c0_1 = arith.constant 0 : index
    %c0_2 = arith.constant 0 : index
    %1 = vector.load %arg2[%c0_1, %c0_2] : memref<128x32xf32, #tpu.memory_space<vmem>>, vector<128x32xf32>
    %cst = arith.constant dense<0.000000e+00> : vector<2x32xf32>
    %2 = tpu.matmul %0, %1, %cst {dimension_numbers = #tpu.dot_dimension_numbers<[1], [0], [0], [1], [0, 0, 1, 1], [], []>} : vector<2x128xf32>, vector<128x32xf32>, vector<2x32xf32> -> vector<2x32xf32>
    %cst_3 = arith.constant dense<0.000000e+00> : vector<32xf32>
    %3 = vector.multi_reduction <add>, %2, %cst_3 [0] : vector<2x32xf32> to vector<32xf32>
    %4 = vector.shape_cast %3 : vector<32xf32> to vector<1x32xf32>
    %cst_4 = arith.constant 2.000000e+00 : f32
    %5 = vector.broadcast %cst_4 : f32 to vector<1x32xf32>
    %6 = arith.divf %4, %5 : vector<1x32xf32>
    %7 = vector.broadcast %6 : vector<1x32xf32> to vector<2x32xf32>
    %8 = arith.subf %2, %7 : vector<2x32xf32>
    %9 = arith.mulf %8, %8 : vector<2x32xf32>
    %cst_5 = arith.constant dense<0.000000e+00> : vector<32xf32>
    %10 = vector.multi_reduction <add>, %9, %cst_5 [0] : vector<2x32xf32> to vector<32xf32>
    %11 = vector.shape_cast %10 : vector<32xf32> to vector<1x32xf32>
    %cst_6 = arith.constant 2.000000e+00 : f32
    %12 = vector.broadcast %cst_6 : f32 to vector<1x32xf32>
    %13 = arith.divf %11, %12 : vector<1x32xf32>
    %14 = vector.broadcast %6 : vector<1x32xf32> to vector<2x32xf32>
    %15 = arith.subf %2, %14 : vector<2x32xf32>
    %cst_7 = arith.constant 9.99999974E-6 : f32
    %16 = vector.broadcast %cst_7 : f32 to vector<1x32xf32>
    %17 = arith.addf %13, %16 : vector<1x32xf32>
    %18 = math.rsqrt %17 : vector<1x32xf32>
    %19 = vector.broadcast %18 : vector<1x32xf32> to vector<2x32xf32>
    %20 = arith.mulf %15, %19 : vector<2x32xf32>
    %c0_8 = arith.constant 0 : index
    %c0_9 = arith.constant 0 : index
    %21 = vector.load %arg3[%c0_8, %c0_9] : memref<1x32xf32, #tpu.memory_space<vmem>>, vector<1x32xf32>
    %22 = vector.broadcast %21 : vector<1x32xf32> to vector<2x32xf32>
    %23 = arith.mulf %20, %22 : vector<2x32xf32>
    %c0_10 = arith.constant 0 : index
    %c0_11 = arith.constant 0 : index
    %24 = vector.load %arg4[%c0_10, %c0_11] : memref<1x32xf32, #tpu.memory_space<vmem>>, vector<1x32xf32>
    %25 = vector.broadcast %24 : vector<1x32xf32> to vector<2x32xf32>
    %26 = arith.addf %23, %25 : vector<2x32xf32>
    %cst_12 = arith.constant 0.000000e+00 : f32
    %27 = vector.broadcast %cst_12 : f32 to vector<2x32xf32>
    %28 = arith.cmpf ogt, %26, %27 : vector<2x32xf32>
    %cst_13 = arith.constant 2.000000e-01 : f32
    %29 = vector.broadcast %cst_13 : f32 to vector<2x32xf32>
    %30 = arith.mulf %29, %26 : vector<2x32xf32>
    %31 = arith.select %28, %26, %30 : vector<2x32xi1>, vector<2x32xf32>
    %c0_14 = arith.constant 0 : index
    %c0_15 = arith.constant 0 : index
    %32 = vector.load %arg5[%c0_14, %c0_15] : memref<32x16xf32, #tpu.memory_space<vmem>>, vector<32x16xf32>
    %cst_16 = arith.constant dense<0.000000e+00> : vector<2x16xf32>
    %33 = tpu.matmul %31, %32, %cst_16 {dimension_numbers = #tpu.dot_dimension_numbers<[1], [0], [0], [1], [0, 0, 1, 1], [], []>} : vector<2x32xf32>, vector<32x16xf32>, vector<2x16xf32> -> vector<2x16xf32>
    %c0_17 = arith.constant 0 : index
    %c0_18 = arith.constant 0 : index
    %34 = vector.load %arg6[%c0_17, %c0_18] : memref<1x16xf32, #tpu.memory_space<vmem>>, vector<1x16xf32>
    %35 = vector.broadcast %34 : vector<1x16xf32> to vector<2x16xf32>
    %36 = arith.addf %33, %35 : vector<2x16xf32>
    %c0_19 = arith.constant 0 : index
    %c0_20 = arith.constant 0 : index
    %37 = vector.load %arg7[%c0_19, %c0_20] : memref<32x16xf32, #tpu.memory_space<vmem>>, vector<32x16xf32>
    %cst_21 = arith.constant dense<0.000000e+00> : vector<2x16xf32>
    %38 = tpu.matmul %31, %37, %cst_21 {dimension_numbers = #tpu.dot_dimension_numbers<[1], [0], [0], [1], [0, 0, 1, 1], [], []>} : vector<2x32xf32>, vector<32x16xf32>, vector<2x16xf32> -> vector<2x16xf32>
    %c0_22 = arith.constant 0 : index
    %c0_23 = arith.constant 0 : index
    %39 = vector.load %arg8[%c0_22, %c0_23] : memref<1x16xf32, #tpu.memory_space<vmem>>, vector<1x16xf32>
    %40 = vector.broadcast %39 : vector<1x16xf32> to vector<2x16xf32>
    %41 = arith.addf %38, %40 : vector<2x16xf32>
    %c0_24 = arith.constant 0 : index
    %c0_25 = arith.constant 0 : index
    %42 = vector.load %arg11[%c0_24, %c0_25] : memref<2x16xf32, #tpu.memory_space<vmem>>, vector<2x16xf32>
    %43 = math.exp %41 : vector<2x16xf32>
    %44 = arith.mulf %42, %43 : vector<2x16xf32>
    %45 = arith.addf %44, %36 : vector<2x16xf32>
    %c0_26 = arith.constant 0 : index
    %c0_27 = arith.constant 0 : index
    %46 = vector.load %arg9[%c0_26, %c0_27] : memref<16x32xf32, #tpu.memory_space<vmem>>, vector<16x32xf32>
    %cst_28 = arith.constant dense<0.000000e+00> : vector<2x32xf32>
    %47 = tpu.matmul %45, %46, %cst_28 {dimension_numbers = #tpu.dot_dimension_numbers<[1], [0], [0], [1], [0, 0, 1, 1], [], []>} : vector<2x16xf32>, vector<16x32xf32>, vector<2x32xf32> -> vector<2x32xf32>
    %c0_29 = arith.constant 0 : index
    %c0_30 = arith.constant 0 : index
    %48 = vector.load %arg10[%c0_29, %c0_30] : memref<1x32xf32, #tpu.memory_space<vmem>>, vector<1x32xf32>
    %49 = vector.broadcast %48 : vector<1x32xf32> to vector<2x32xf32>
    %50 = arith.addf %47, %49 : vector<2x32xf32>
    %c0_31 = arith.constant 0 : index
    %c0_32 = arith.constant 0 : index
    %51 = vector.load %arg12[%c0_31, %c0_32] : memref<2x16xf32, #tpu.memory_space<vmem>>, vector<2x16xf32>
    tpu.vector_store %arg12[%c0_31, %c0_32], %36 {strides = array<i32>} : memref<2x16xf32, #tpu.memory_space<vmem>>, vector<2x16xf32>,
    %c0_33 = arith.constant 0 : index
    %c0_34 = arith.constant 0 : index
    %52 = vector.load %arg13[%c0_33, %c0_34] : memref<2x16xf32, #tpu.memory_space<vmem>>, vector<2x16xf32>
    tpu.vector_store %arg13[%c0_33, %c0_34], %41 {strides = array<i32>} : memref<2x16xf32, #tpu.memory_space<vmem>>, vector<2x16xf32>,
    %c0_35 = arith.constant 0 : index
    %c0_36 = arith.constant 0 : index
    %53 = vector.load %arg14[%c0_35, %c0_36] : memref<2x16xf32, #tpu.memory_space<vmem>>, vector<2x16xf32>
    tpu.vector_store %arg14[%c0_35, %c0_36], %45 {strides = array<i32>} : memref<2x16xf32, #tpu.memory_space<vmem>>, vector<2x16xf32>,
    %cst_37 = arith.constant 0.000000e+00 : f32
    %54 = vector.broadcast %cst_37 : f32 to vector<2x32xf32>
    %55 = arith.maximumf %50, %54 : vector<2x32xf32>
    %c0_38 = arith.constant 0 : index
    %c0_39 = arith.constant 0 : index
    %56 = vector.load %arg15[%c0_38, %c0_39] : memref<2x32xf32, #tpu.memory_space<vmem>>, vector<2x32xf32>
    tpu.vector_store %arg15[%c0_38, %c0_39], %55 {strides = array<i32>} : memref<2x32xf32, #tpu.memory_space<vmem>>, vector<2x32xf32>,
    return
  }
  func.func @transform_0(%arg0: i32) -> (i32, i32) {
    %c0_i32 = arith.constant 0 : i32
    %c0_i32_0 = arith.constant 0 : i32
    %c0_i32_1 = arith.constant 0 : i32
    return %c0_i32, %c0_i32_0 : i32, i32
  }
  func.func @transform_1(%arg0: i32) -> (i32, i32) {
    %c0_i32 = arith.constant 0 : i32
    %c0_i32_0 = arith.constant 0 : i32
    %c0_i32_1 = arith.constant 0 : i32
    return %c0_i32, %c0_i32_0 : i32, i32
  }
  func.func @transform_2(%arg0: i32) -> (i32, i32) {
    %c0_i32 = arith.constant 0 : i32
    %c0_i32_0 = arith.constant 0 : i32
    %c0_i32_1 = arith.constant 0 : i32
    return %c0_i32, %c0_i32_0 : i32, i32
  }
  func.func @transform_3(%arg0: i32) -> (i32, i32) {
    %c0_i32 = arith.constant 0 : i32
    %c0_i32_0 = arith.constant 0 : i32
    %c0_i32_1 = arith.constant 0 : i32
    return %c0_i32, %c0_i32_0 : i32, i32
  }
  func.func @transform_4(%arg0: i32) -> (i32, i32) {
    %c0_i32 = arith.constant 0 : i32
    %c0_i32_0 = arith.constant 0 : i32
    %c0_i32_1 = arith.constant 0 : i32
    return %c0_i32, %c0_i32_0 : i32, i32
  }
  func.func @transform_5(%arg0: i32) -> (i32, i32) {
    %c0_i32 = arith.constant 0 : i32
    %c0_i32_0 = arith.constant 0 : i32
    %c0_i32_1 = arith.constant 0 : i32
    return %c0_i32, %c0_i32_0 : i32, i32
  }
  func.func @transform_6(%arg0: i32) -> (i32, i32) {
    %c0_i32 = arith.constant 0 : i32
    %c0_i32_0 = arith.constant 0 : i32
    %c0_i32_1 = arith.constant 0 : i32
    return %c0_i32, %c0_i32_0 : i32, i32
  }
  func.func @transform_7(%arg0: i32) -> (i32, i32) {
    %c0_i32 = arith.constant 0 : i32
    %c0_i32_0 = arith.constant 0 : i32
    %c0_i32_1 = arith.constant 0 : i32
    return %c0_i32, %c0_i32_0 : i32, i32
  }
  func.func @transform_8(%arg0: i32) -> (i32, i32) {
    %c0_i32 = arith.constant 0 : i32
    %c0_i32_0 = arith.constant 0 : i32
    %c0_i32_1 = arith.constant 0 : i32
    return %c0_i32, %c0_i32_0 : i32, i32
  }
  func.func @transform_9(%arg0: i32) -> (i32, i32) {
    %c0_i32 = arith.constant 0 : i32
    %c0_i32_0 = arith.constant 0 : i32
    %c0_i32_1 = arith.constant 0 : i32
    return %c0_i32, %c0_i32_0 : i32, i32
  }
  func.func @transform_10(%arg0: i32) -> (i32, i32) {
    %c0_i32 = arith.constant 0 : i32
    %c0_i32_0 = arith.constant 0 : i32
    %c0_i32_1 = arith.constant 0 : i32
    return %c0_i32, %c0_i32_0 : i32, i32
  }
  func.func @transform_11(%arg0: i32) -> (i32, i32) {
    %c0_i32 = arith.constant 0 : i32
    %c0_i32_0 = arith.constant 0 : i32
    %c0_i32_1 = arith.constant 0 : i32
    return %c0_i32, %c0_i32_0 : i32, i32
  }
  func.func @transform_12(%arg0: i32) -> (i32, i32) {
    %c0_i32 = arith.constant 0 : i32
    %c0_i32_0 = arith.constant 0 : i32
    %c0_i32_1 = arith.constant 0 : i32
    return %c0_i32, %c0_i32_0 : i32, i32
  }
  func.func @transform_13(%arg0: i32) -> (i32, i32) {
    %c0_i32 = arith.constant 0 : i32
    %c0_i32_0 = arith.constant 0 : i32
    %c0_i32_1 = arith.constant 0 : i32
    return %c0_i32, %c0_i32_0 : i32, i32
  }
  func.func @transform_14(%arg0: i32) -> (i32, i32) {
    %c0_i32 = arith.constant 0 : i32
    %c0_i32_0 = arith.constant 0 : i32
    %c0_i32_1 = arith.constant 0 : i32
    return %c0_i32, %c0_i32_0 : i32, i32
  }
}

module attributes {stable_mosaic.version = 11 : i64} {
  func.func @_mm_bn_leaky_kernel(%arg0: i32, %arg1: memref<2x288xbf16, #tpu.memory_space<vmem>>, %arg2: memref<288x512xbf16, #tpu.memory_space<vmem>>, %arg3: memref<1x128xf32, #tpu.memory_space<vmem>>, %arg4: memref<1x128xf32, #tpu.memory_space<vmem>>, %arg5: memref<2x512xbf16, #tpu.memory_space<vmem>>) attributes {dimension_semantics = [#tpu.dimension_semantics<arbitrary>], iteration_bounds = array<i64: 1>, scalar_prefetch = 0 : i64, scratch_operands = 0 : i64, tpu.core_type = #tpu.core_type<tc>, window_params = [{pipeline_mode = #tpu.pipeline_mode<synchronous>, transform_indices = @transform_0, window_bounds = array<i64: 2, 288>}, {pipeline_mode = #tpu.pipeline_mode<synchronous>, transform_indices = @transform_1, window_bounds = array<i64: 288, 512>}, {pipeline_mode = #tpu.pipeline_mode<synchronous>, transform_indices = @transform_2, window_bounds = array<i64: 1, 128>}, {pipeline_mode = #tpu.pipeline_mode<synchronous>, transform_indices = @transform_3, window_bounds = array<i64: 1, 128>}, {pipeline_mode = #tpu.pipeline_mode<synchronous>, transform_indices = @transform_4, window_bounds = array<i64: 2, 512>}]} {
    %c0 = arith.constant 0 : index
    %c0_0 = arith.constant 0 : index
    %0 = vector.load %arg1[%c0, %c0_0] : memref<2x288xbf16, #tpu.memory_space<vmem>>, vector<2x288xbf16>
    %c0_1 = arith.constant 0 : index
    %c0_2 = arith.constant 0 : index
    %1 = vector.load %arg2[%c0_1, %c0_2] : memref<288x512xbf16, #tpu.memory_space<vmem>>, vector<288x512xbf16>
    %cst = arith.constant dense<0.000000e+00> : vector<2x512xf32>
    %2 = tpu.matmul %0, %1, %cst {dimension_numbers = #tpu.dot_dimension_numbers<[1], [0], [0], [1], [0, 0, 1, 1], [], []>} : vector<2x288xbf16>, vector<288x512xbf16>, vector<2x512xf32> -> vector<2x512xf32>
    %cst_3 = arith.constant 0.000000e+00 : f32
    %3 = vector.broadcast %cst_3 : f32 to vector<1x128xf32>
    %4 = vector.extract_strided_slice %2 {offsets = [0, 0], sizes = [2, 128], strides = [1, 1]} : vector<2x512xf32> to vector<2x128xf32>
    %cst_4 = arith.constant dense<0.000000e+00> : vector<128xf32>
    %5 = vector.multi_reduction <add>, %4, %cst_4 [0] : vector<2x128xf32> to vector<128xf32>
    %6 = vector.shape_cast %5 : vector<128xf32> to vector<1x128xf32>
    %7 = arith.addf %3, %6 : vector<1x128xf32>
    %8 = vector.extract_strided_slice %2 {offsets = [0, 128], sizes = [2, 128], strides = [1, 1]} : vector<2x512xf32> to vector<2x128xf32>
    %cst_5 = arith.constant dense<0.000000e+00> : vector<128xf32>
    %9 = vector.multi_reduction <add>, %8, %cst_5 [0] : vector<2x128xf32> to vector<128xf32>
    %10 = vector.shape_cast %9 : vector<128xf32> to vector<1x128xf32>
    %11 = arith.addf %7, %10 : vector<1x128xf32>
    %12 = vector.extract_strided_slice %2 {offsets = [0, 256], sizes = [2, 128], strides = [1, 1]} : vector<2x512xf32> to vector<2x128xf32>
    %cst_6 = arith.constant dense<0.000000e+00> : vector<128xf32>
    %13 = vector.multi_reduction <add>, %12, %cst_6 [0] : vector<2x128xf32> to vector<128xf32>
    %14 = vector.shape_cast %13 : vector<128xf32> to vector<1x128xf32>
    %15 = arith.addf %11, %14 : vector<1x128xf32>
    %16 = vector.extract_strided_slice %2 {offsets = [0, 384], sizes = [2, 128], strides = [1, 1]} : vector<2x512xf32> to vector<2x128xf32>
    %cst_7 = arith.constant dense<0.000000e+00> : vector<128xf32>
    %17 = vector.multi_reduction <add>, %16, %cst_7 [0] : vector<2x128xf32> to vector<128xf32>
    %18 = vector.shape_cast %17 : vector<128xf32> to vector<1x128xf32>
    %19 = arith.addf %15, %18 : vector<1x128xf32>
    %cst_8 = arith.constant 1.250000e-01 : f32
    %20 = vector.broadcast %cst_8 : f32 to vector<1x128xf32>
    %21 = arith.mulf %19, %20 : vector<1x128xf32>
    %cst_9 = arith.constant 0.000000e+00 : f32
    %22 = vector.broadcast %cst_9 : f32 to vector<1x128xf32>
    %23 = vector.extract_strided_slice %2 {offsets = [0, 0], sizes = [2, 128], strides = [1, 1]} : vector<2x512xf32> to vector<2x128xf32>
    %24 = vector.broadcast %21 : vector<1x128xf32> to vector<2x128xf32>
    %25 = arith.subf %23, %24 : vector<2x128xf32>
    %26 = arith.mulf %25, %25 : vector<2x128xf32>
    %cst_10 = arith.constant dense<0.000000e+00> : vector<128xf32>
    %27 = vector.multi_reduction <add>, %26, %cst_10 [0] : vector<2x128xf32> to vector<128xf32>
    %28 = vector.shape_cast %27 : vector<128xf32> to vector<1x128xf32>
    %29 = arith.addf %22, %28 : vector<1x128xf32>
    %30 = vector.extract_strided_slice %2 {offsets = [0, 128], sizes = [2, 128], strides = [1, 1]} : vector<2x512xf32> to vector<2x128xf32>
    %31 = vector.broadcast %21 : vector<1x128xf32> to vector<2x128xf32>
    %32 = arith.subf %30, %31 : vector<2x128xf32>
    %33 = arith.mulf %32, %32 : vector<2x128xf32>
    %cst_11 = arith.constant dense<0.000000e+00> : vector<128xf32>
    %34 = vector.multi_reduction <add>, %33, %cst_11 [0] : vector<2x128xf32> to vector<128xf32>
    %35 = vector.shape_cast %34 : vector<128xf32> to vector<1x128xf32>
    %36 = arith.addf %29, %35 : vector<1x128xf32>
    %37 = vector.extract_strided_slice %2 {offsets = [0, 256], sizes = [2, 128], strides = [1, 1]} : vector<2x512xf32> to vector<2x128xf32>
    %38 = vector.broadcast %21 : vector<1x128xf32> to vector<2x128xf32>
    %39 = arith.subf %37, %38 : vector<2x128xf32>
    %40 = arith.mulf %39, %39 : vector<2x128xf32>
    %cst_12 = arith.constant dense<0.000000e+00> : vector<128xf32>
    %41 = vector.multi_reduction <add>, %40, %cst_12 [0] : vector<2x128xf32> to vector<128xf32>
    %42 = vector.shape_cast %41 : vector<128xf32> to vector<1x128xf32>
    %43 = arith.addf %36, %42 : vector<1x128xf32>
    %44 = vector.extract_strided_slice %2 {offsets = [0, 384], sizes = [2, 128], strides = [1, 1]} : vector<2x512xf32> to vector<2x128xf32>
    %45 = vector.broadcast %21 : vector<1x128xf32> to vector<2x128xf32>
    %46 = arith.subf %44, %45 : vector<2x128xf32>
    %47 = arith.mulf %46, %46 : vector<2x128xf32>
    %cst_13 = arith.constant dense<0.000000e+00> : vector<128xf32>
    %48 = vector.multi_reduction <add>, %47, %cst_13 [0] : vector<2x128xf32> to vector<128xf32>
    %49 = vector.shape_cast %48 : vector<128xf32> to vector<1x128xf32>
    %50 = arith.addf %43, %49 : vector<1x128xf32>
    %cst_14 = arith.constant 1.250000e-01 : f32
    %51 = vector.broadcast %cst_14 : f32 to vector<1x128xf32>
    %52 = arith.mulf %50, %51 : vector<1x128xf32>
    %cst_15 = arith.constant 9.99999974E-6 : f32
    %53 = vector.broadcast %cst_15 : f32 to vector<1x128xf32>
    %54 = arith.addf %52, %53 : vector<1x128xf32>
    %55 = math.rsqrt %54 : vector<1x128xf32>
    %c0_16 = arith.constant 0 : index
    %c0_17 = arith.constant 0 : index
    %56 = vector.load %arg3[%c0_16, %c0_17] : memref<1x128xf32, #tpu.memory_space<vmem>>, vector<1x128xf32>
    %57 = arith.mulf %55, %56 : vector<1x128xf32>
    %58 = vector.extract_strided_slice %2 {offsets = [0, 0], sizes = [2, 128], strides = [1, 1]} : vector<2x512xf32> to vector<2x128xf32>
    %59 = vector.broadcast %21 : vector<1x128xf32> to vector<2x128xf32>
    %60 = arith.subf %58, %59 : vector<2x128xf32>
    %61 = vector.broadcast %57 : vector<1x128xf32> to vector<2x128xf32>
    %62 = arith.mulf %60, %61 : vector<2x128xf32>
    %c0_18 = arith.constant 0 : index
    %c0_19 = arith.constant 0 : index
    %63 = vector.load %arg4[%c0_18, %c0_19] : memref<1x128xf32, #tpu.memory_space<vmem>>, vector<1x128xf32>
    %64 = vector.broadcast %63 : vector<1x128xf32> to vector<2x128xf32>
    %65 = arith.addf %62, %64 : vector<2x128xf32>
    %cst_20 = arith.constant 0.000000e+00 : f32
    %66 = vector.broadcast %cst_20 : f32 to vector<2x128xf32>
    %67 = arith.cmpf ogt, %65, %66 : vector<2x128xf32>
    %cst_21 = arith.constant 2.000000e-01 : f32
    %68 = vector.broadcast %cst_21 : f32 to vector<2x128xf32>
    %69 = arith.mulf %68, %65 : vector<2x128xf32>
    %70 = arith.select %67, %65, %69 : vector<2x128xi1>, vector<2x128xf32>
    %71 = arith.truncf %70 : vector<2x128xf32> to vector<2x128xbf16>
    %c0_22 = arith.constant 0 : index
    %c0_23 = arith.constant 0 : index
    %72 = vector.load %arg5[%c0_22, %c0_23] : memref<2x512xbf16, #tpu.memory_space<vmem>>, vector<2x128xbf16>
    tpu.vector_store %arg5[%c0_22, %c0_23], %71 {strides = array<i32>} : memref<2x512xbf16, #tpu.memory_space<vmem>>, vector<2x128xbf16>,
    %73 = vector.extract_strided_slice %2 {offsets = [0, 128], sizes = [2, 128], strides = [1, 1]} : vector<2x512xf32> to vector<2x128xf32>
    %74 = vector.broadcast %21 : vector<1x128xf32> to vector<2x128xf32>
    %75 = arith.subf %73, %74 : vector<2x128xf32>
    %76 = vector.broadcast %57 : vector<1x128xf32> to vector<2x128xf32>
    %77 = arith.mulf %75, %76 : vector<2x128xf32>
    %c0_24 = arith.constant 0 : index
    %c0_25 = arith.constant 0 : index
    %78 = vector.load %arg4[%c0_24, %c0_25] : memref<1x128xf32, #tpu.memory_space<vmem>>, vector<1x128xf32>
    %79 = vector.broadcast %78 : vector<1x128xf32> to vector<2x128xf32>
    %80 = arith.addf %77, %79 : vector<2x128xf32>
    %cst_26 = arith.constant 0.000000e+00 : f32
    %81 = vector.broadcast %cst_26 : f32 to vector<2x128xf32>
    %82 = arith.cmpf ogt, %80, %81 : vector<2x128xf32>
    %cst_27 = arith.constant 2.000000e-01 : f32
    %83 = vector.broadcast %cst_27 : f32 to vector<2x128xf32>
    %84 = arith.mulf %83, %80 : vector<2x128xf32>
    %85 = arith.select %82, %80, %84 : vector<2x128xi1>, vector<2x128xf32>
    %86 = arith.truncf %85 : vector<2x128xf32> to vector<2x128xbf16>
    %c0_28 = arith.constant 0 : index
    %c128 = arith.constant 128 : index
    %87 = vector.load %arg5[%c0_28, %c128] : memref<2x512xbf16, #tpu.memory_space<vmem>>, vector<2x128xbf16>
    tpu.vector_store %arg5[%c0_28, %c128], %86 {strides = array<i32>} : memref<2x512xbf16, #tpu.memory_space<vmem>>, vector<2x128xbf16>,
    %88 = vector.extract_strided_slice %2 {offsets = [0, 256], sizes = [2, 128], strides = [1, 1]} : vector<2x512xf32> to vector<2x128xf32>
    %89 = vector.broadcast %21 : vector<1x128xf32> to vector<2x128xf32>
    %90 = arith.subf %88, %89 : vector<2x128xf32>
    %91 = vector.broadcast %57 : vector<1x128xf32> to vector<2x128xf32>
    %92 = arith.mulf %90, %91 : vector<2x128xf32>
    %c0_29 = arith.constant 0 : index
    %c0_30 = arith.constant 0 : index
    %93 = vector.load %arg4[%c0_29, %c0_30] : memref<1x128xf32, #tpu.memory_space<vmem>>, vector<1x128xf32>
    %94 = vector.broadcast %93 : vector<1x128xf32> to vector<2x128xf32>
    %95 = arith.addf %92, %94 : vector<2x128xf32>
    %cst_31 = arith.constant 0.000000e+00 : f32
    %96 = vector.broadcast %cst_31 : f32 to vector<2x128xf32>
    %97 = arith.cmpf ogt, %95, %96 : vector<2x128xf32>
    %cst_32 = arith.constant 2.000000e-01 : f32
    %98 = vector.broadcast %cst_32 : f32 to vector<2x128xf32>
    %99 = arith.mulf %98, %95 : vector<2x128xf32>
    %100 = arith.select %97, %95, %99 : vector<2x128xi1>, vector<2x128xf32>
    %101 = arith.truncf %100 : vector<2x128xf32> to vector<2x128xbf16>
    %c0_33 = arith.constant 0 : index
    %c256 = arith.constant 256 : index
    %102 = vector.load %arg5[%c0_33, %c256] : memref<2x512xbf16, #tpu.memory_space<vmem>>, vector<2x128xbf16>
    tpu.vector_store %arg5[%c0_33, %c256], %101 {strides = array<i32>} : memref<2x512xbf16, #tpu.memory_space<vmem>>, vector<2x128xbf16>,
    %103 = vector.extract_strided_slice %2 {offsets = [0, 384], sizes = [2, 128], strides = [1, 1]} : vector<2x512xf32> to vector<2x128xf32>
    %104 = vector.broadcast %21 : vector<1x128xf32> to vector<2x128xf32>
    %105 = arith.subf %103, %104 : vector<2x128xf32>
    %106 = vector.broadcast %57 : vector<1x128xf32> to vector<2x128xf32>
    %107 = arith.mulf %105, %106 : vector<2x128xf32>
    %c0_34 = arith.constant 0 : index
    %c0_35 = arith.constant 0 : index
    %108 = vector.load %arg4[%c0_34, %c0_35] : memref<1x128xf32, #tpu.memory_space<vmem>>, vector<1x128xf32>
    %109 = vector.broadcast %108 : vector<1x128xf32> to vector<2x128xf32>
    %110 = arith.addf %107, %109 : vector<2x128xf32>
    %cst_36 = arith.constant 0.000000e+00 : f32
    %111 = vector.broadcast %cst_36 : f32 to vector<2x128xf32>
    %112 = arith.cmpf ogt, %110, %111 : vector<2x128xf32>
    %cst_37 = arith.constant 2.000000e-01 : f32
    %113 = vector.broadcast %cst_37 : f32 to vector<2x128xf32>
    %114 = arith.mulf %113, %110 : vector<2x128xf32>
    %115 = arith.select %112, %110, %114 : vector<2x128xi1>, vector<2x128xf32>
    %116 = arith.truncf %115 : vector<2x128xf32> to vector<2x128xbf16>
    %c0_38 = arith.constant 0 : index
    %c384 = arith.constant 384 : index
    %117 = vector.load %arg5[%c0_38, %c384] : memref<2x512xbf16, #tpu.memory_space<vmem>>, vector<2x128xbf16>
    tpu.vector_store %arg5[%c0_38, %c384], %116 {strides = array<i32>} : memref<2x512xbf16, #tpu.memory_space<vmem>>, vector<2x128xbf16>,
    return
  }
  func.func @transform_0(%arg0: i32) -> (i32, i32) {
    %c0_i32 = arith.constant 0 : i32
    %c0_i32_0 = arith.constant 0 : i32
    %c0_i32_1 = arith.constant 0 : i32
    return %c0_i32, %c0_i32_0 : i32, i32
  }
  func.func @transform_1(%arg0: i32) -> (i32, i32) {
    %c0_i32 = arith.constant 0 : i32
    %c0_i32_0 = arith.constant 0 : i32
    %c0_i32_1 = arith.constant 0 : i32
    return %c0_i32, %c0_i32_0 : i32, i32
  }
  func.func @transform_2(%arg0: i32) -> (i32, i32) {
    %c0_i32 = arith.constant 0 : i32
    %c0_i32_0 = arith.constant 0 : i32
    %c0_i32_1 = arith.constant 0 : i32
    return %c0_i32, %c0_i32_0 : i32, i32
  }
  func.func @transform_3(%arg0: i32) -> (i32, i32) {
    %c0_i32 = arith.constant 0 : i32
    %c0_i32_0 = arith.constant 0 : i32
    %c0_i32_1 = arith.constant 0 : i32
    return %c0_i32, %c0_i32_0 : i32, i32
  }
  func.func @transform_4(%arg0: i32) -> (i32, i32) {
    %c0_i32 = arith.constant 0 : i32
    %c0_i32_0 = arith.constant 0 : i32
    %c0_i32_1 = arith.constant 0 : i32
    return %c0_i32, %c0_i32_0 : i32, i32
  }
}

module attributes {stable_mosaic.version = 11 : i64} {
  func.func @_mm_bn_leaky_kernel(%arg0: i32, %arg1: memref<8x288xbf16, #tpu.memory_space<vmem>>, %arg2: memref<288x512xbf16, #tpu.memory_space<vmem>>, %arg3: memref<1x128xf32, #tpu.memory_space<vmem>>, %arg4: memref<1x128xf32, #tpu.memory_space<vmem>>, %arg5: memref<8x512xbf16, #tpu.memory_space<vmem>>) attributes {dimension_semantics = [#tpu.dimension_semantics<arbitrary>], iteration_bounds = array<i64: 1>, scalar_prefetch = 0 : i64, scratch_operands = 0 : i64, tpu.core_type = #tpu.core_type<tc>, window_params = [{pipeline_mode = #tpu.pipeline_mode<synchronous>, transform_indices = @transform_0, window_bounds = array<i64: 8, 288>}, {pipeline_mode = #tpu.pipeline_mode<synchronous>, transform_indices = @transform_1, window_bounds = array<i64: 288, 512>}, {pipeline_mode = #tpu.pipeline_mode<synchronous>, transform_indices = @transform_2, window_bounds = array<i64: 1, 128>}, {pipeline_mode = #tpu.pipeline_mode<synchronous>, transform_indices = @transform_3, window_bounds = array<i64: 1, 128>}, {pipeline_mode = #tpu.pipeline_mode<synchronous>, transform_indices = @transform_4, window_bounds = array<i64: 8, 512>}]} {
    %c0 = arith.constant 0 : index
    %c0_0 = arith.constant 0 : index
    %0 = vector.load %arg1[%c0, %c0_0] : memref<8x288xbf16, #tpu.memory_space<vmem>>, vector<8x288xbf16>
    %c0_1 = arith.constant 0 : index
    %c0_2 = arith.constant 0 : index
    %1 = vector.load %arg2[%c0_1, %c0_2] : memref<288x512xbf16, #tpu.memory_space<vmem>>, vector<288x512xbf16>
    %cst = arith.constant dense<0.000000e+00> : vector<8x512xf32>
    %2 = tpu.matmul %0, %1, %cst {dimension_numbers = #tpu.dot_dimension_numbers<[1], [0], [0], [1], [0, 0, 1, 1], [], []>} : vector<8x288xbf16>, vector<288x512xbf16>, vector<8x512xf32> -> vector<8x512xf32>
    %cst_3 = arith.constant 0.000000e+00 : f32
    %3 = vector.broadcast %cst_3 : f32 to vector<1x128xf32>
    %4 = vector.extract_strided_slice %2 {offsets = [0, 0], sizes = [8, 128], strides = [1, 1]} : vector<8x512xf32> to vector<8x128xf32>
    %cst_4 = arith.constant dense<0.000000e+00> : vector<128xf32>
    %5 = vector.multi_reduction <add>, %4, %cst_4 [0] : vector<8x128xf32> to vector<128xf32>
    %6 = vector.shape_cast %5 : vector<128xf32> to vector<1x128xf32>
    %7 = arith.addf %3, %6 : vector<1x128xf32>
    %8 = vector.extract_strided_slice %2 {offsets = [0, 128], sizes = [8, 128], strides = [1, 1]} : vector<8x512xf32> to vector<8x128xf32>
    %cst_5 = arith.constant dense<0.000000e+00> : vector<128xf32>
    %9 = vector.multi_reduction <add>, %8, %cst_5 [0] : vector<8x128xf32> to vector<128xf32>
    %10 = vector.shape_cast %9 : vector<128xf32> to vector<1x128xf32>
    %11 = arith.addf %7, %10 : vector<1x128xf32>
    %12 = vector.extract_strided_slice %2 {offsets = [0, 256], sizes = [8, 128], strides = [1, 1]} : vector<8x512xf32> to vector<8x128xf32>
    %cst_6 = arith.constant dense<0.000000e+00> : vector<128xf32>
    %13 = vector.multi_reduction <add>, %12, %cst_6 [0] : vector<8x128xf32> to vector<128xf32>
    %14 = vector.shape_cast %13 : vector<128xf32> to vector<1x128xf32>
    %15 = arith.addf %11, %14 : vector<1x128xf32>
    %16 = vector.extract_strided_slice %2 {offsets = [0, 384], sizes = [8, 128], strides = [1, 1]} : vector<8x512xf32> to vector<8x128xf32>
    %cst_7 = arith.constant dense<0.000000e+00> : vector<128xf32>
    %17 = vector.multi_reduction <add>, %16, %cst_7 [0] : vector<8x128xf32> to vector<128xf32>
    %18 = vector.shape_cast %17 : vector<128xf32> to vector<1x128xf32>
    %19 = arith.addf %15, %18 : vector<1x128xf32>
    %cst_8 = arith.constant 3.125000e-02 : f32
    %20 = vector.broadcast %cst_8 : f32 to vector<1x128xf32>
    %21 = arith.mulf %19, %20 : vector<1x128xf32>
    %cst_9 = arith.constant 0.000000e+00 : f32
    %22 = vector.broadcast %cst_9 : f32 to vector<1x128xf32>
    %23 = vector.extract_strided_slice %2 {offsets = [0, 0], sizes = [8, 128], strides = [1, 1]} : vector<8x512xf32> to vector<8x128xf32>
    %24 = vector.broadcast %21 : vector<1x128xf32> to vector<8x128xf32>
    %25 = arith.subf %23, %24 : vector<8x128xf32>
    %26 = arith.mulf %25, %25 : vector<8x128xf32>
    %cst_10 = arith.constant dense<0.000000e+00> : vector<128xf32>
    %27 = vector.multi_reduction <add>, %26, %cst_10 [0] : vector<8x128xf32> to vector<128xf32>
    %28 = vector.shape_cast %27 : vector<128xf32> to vector<1x128xf32>
    %29 = arith.addf %22, %28 : vector<1x128xf32>
    %30 = vector.extract_strided_slice %2 {offsets = [0, 128], sizes = [8, 128], strides = [1, 1]} : vector<8x512xf32> to vector<8x128xf32>
    %31 = vector.broadcast %21 : vector<1x128xf32> to vector<8x128xf32>
    %32 = arith.subf %30, %31 : vector<8x128xf32>
    %33 = arith.mulf %32, %32 : vector<8x128xf32>
    %cst_11 = arith.constant dense<0.000000e+00> : vector<128xf32>
    %34 = vector.multi_reduction <add>, %33, %cst_11 [0] : vector<8x128xf32> to vector<128xf32>
    %35 = vector.shape_cast %34 : vector<128xf32> to vector<1x128xf32>
    %36 = arith.addf %29, %35 : vector<1x128xf32>
    %37 = vector.extract_strided_slice %2 {offsets = [0, 256], sizes = [8, 128], strides = [1, 1]} : vector<8x512xf32> to vector<8x128xf32>
    %38 = vector.broadcast %21 : vector<1x128xf32> to vector<8x128xf32>
    %39 = arith.subf %37, %38 : vector<8x128xf32>
    %40 = arith.mulf %39, %39 : vector<8x128xf32>
    %cst_12 = arith.constant dense<0.000000e+00> : vector<128xf32>
    %41 = vector.multi_reduction <add>, %40, %cst_12 [0] : vector<8x128xf32> to vector<128xf32>
    %42 = vector.shape_cast %41 : vector<128xf32> to vector<1x128xf32>
    %43 = arith.addf %36, %42 : vector<1x128xf32>
    %44 = vector.extract_strided_slice %2 {offsets = [0, 384], sizes = [8, 128], strides = [1, 1]} : vector<8x512xf32> to vector<8x128xf32>
    %45 = vector.broadcast %21 : vector<1x128xf32> to vector<8x128xf32>
    %46 = arith.subf %44, %45 : vector<8x128xf32>
    %47 = arith.mulf %46, %46 : vector<8x128xf32>
    %cst_13 = arith.constant dense<0.000000e+00> : vector<128xf32>
    %48 = vector.multi_reduction <add>, %47, %cst_13 [0] : vector<8x128xf32> to vector<128xf32>
    %49 = vector.shape_cast %48 : vector<128xf32> to vector<1x128xf32>
    %50 = arith.addf %43, %49 : vector<1x128xf32>
    %cst_14 = arith.constant 3.125000e-02 : f32
    %51 = vector.broadcast %cst_14 : f32 to vector<1x128xf32>
    %52 = arith.mulf %50, %51 : vector<1x128xf32>
    %cst_15 = arith.constant 9.99999974E-6 : f32
    %53 = vector.broadcast %cst_15 : f32 to vector<1x128xf32>
    %54 = arith.addf %52, %53 : vector<1x128xf32>
    %55 = math.rsqrt %54 : vector<1x128xf32>
    %c0_16 = arith.constant 0 : index
    %c0_17 = arith.constant 0 : index
    %56 = vector.load %arg3[%c0_16, %c0_17] : memref<1x128xf32, #tpu.memory_space<vmem>>, vector<1x128xf32>
    %57 = arith.mulf %55, %56 : vector<1x128xf32>
    %58 = vector.extract_strided_slice %2 {offsets = [0, 0], sizes = [8, 128], strides = [1, 1]} : vector<8x512xf32> to vector<8x128xf32>
    %59 = vector.broadcast %21 : vector<1x128xf32> to vector<8x128xf32>
    %60 = arith.subf %58, %59 : vector<8x128xf32>
    %61 = vector.broadcast %57 : vector<1x128xf32> to vector<8x128xf32>
    %62 = arith.mulf %60, %61 : vector<8x128xf32>
    %c0_18 = arith.constant 0 : index
    %c0_19 = arith.constant 0 : index
    %63 = vector.load %arg4[%c0_18, %c0_19] : memref<1x128xf32, #tpu.memory_space<vmem>>, vector<1x128xf32>
    %64 = vector.broadcast %63 : vector<1x128xf32> to vector<8x128xf32>
    %65 = arith.addf %62, %64 : vector<8x128xf32>
    %cst_20 = arith.constant 0.000000e+00 : f32
    %66 = vector.broadcast %cst_20 : f32 to vector<8x128xf32>
    %67 = arith.cmpf ogt, %65, %66 : vector<8x128xf32>
    %cst_21 = arith.constant 2.000000e-01 : f32
    %68 = vector.broadcast %cst_21 : f32 to vector<8x128xf32>
    %69 = arith.mulf %68, %65 : vector<8x128xf32>
    %70 = arith.select %67, %65, %69 : vector<8x128xi1>, vector<8x128xf32>
    %71 = arith.truncf %70 : vector<8x128xf32> to vector<8x128xbf16>
    %c0_22 = arith.constant 0 : index
    %c0_23 = arith.constant 0 : index
    %72 = vector.load %arg5[%c0_22, %c0_23] : memref<8x512xbf16, #tpu.memory_space<vmem>>, vector<8x128xbf16>
    tpu.vector_store %arg5[%c0_22, %c0_23], %71 {strides = array<i32>} : memref<8x512xbf16, #tpu.memory_space<vmem>>, vector<8x128xbf16>,
    %73 = vector.extract_strided_slice %2 {offsets = [0, 128], sizes = [8, 128], strides = [1, 1]} : vector<8x512xf32> to vector<8x128xf32>
    %74 = vector.broadcast %21 : vector<1x128xf32> to vector<8x128xf32>
    %75 = arith.subf %73, %74 : vector<8x128xf32>
    %76 = vector.broadcast %57 : vector<1x128xf32> to vector<8x128xf32>
    %77 = arith.mulf %75, %76 : vector<8x128xf32>
    %c0_24 = arith.constant 0 : index
    %c0_25 = arith.constant 0 : index
    %78 = vector.load %arg4[%c0_24, %c0_25] : memref<1x128xf32, #tpu.memory_space<vmem>>, vector<1x128xf32>
    %79 = vector.broadcast %78 : vector<1x128xf32> to vector<8x128xf32>
    %80 = arith.addf %77, %79 : vector<8x128xf32>
    %cst_26 = arith.constant 0.000000e+00 : f32
    %81 = vector.broadcast %cst_26 : f32 to vector<8x128xf32>
    %82 = arith.cmpf ogt, %80, %81 : vector<8x128xf32>
    %cst_27 = arith.constant 2.000000e-01 : f32
    %83 = vector.broadcast %cst_27 : f32 to vector<8x128xf32>
    %84 = arith.mulf %83, %80 : vector<8x128xf32>
    %85 = arith.select %82, %80, %84 : vector<8x128xi1>, vector<8x128xf32>
    %86 = arith.truncf %85 : vector<8x128xf32> to vector<8x128xbf16>
    %c0_28 = arith.constant 0 : index
    %c128 = arith.constant 128 : index
    %87 = vector.load %arg5[%c0_28, %c128] : memref<8x512xbf16, #tpu.memory_space<vmem>>, vector<8x128xbf16>
    tpu.vector_store %arg5[%c0_28, %c128], %86 {strides = array<i32>} : memref<8x512xbf16, #tpu.memory_space<vmem>>, vector<8x128xbf16>,
    %88 = vector.extract_strided_slice %2 {offsets = [0, 256], sizes = [8, 128], strides = [1, 1]} : vector<8x512xf32> to vector<8x128xf32>
    %89 = vector.broadcast %21 : vector<1x128xf32> to vector<8x128xf32>
    %90 = arith.subf %88, %89 : vector<8x128xf32>
    %91 = vector.broadcast %57 : vector<1x128xf32> to vector<8x128xf32>
    %92 = arith.mulf %90, %91 : vector<8x128xf32>
    %c0_29 = arith.constant 0 : index
    %c0_30 = arith.constant 0 : index
    %93 = vector.load %arg4[%c0_29, %c0_30] : memref<1x128xf32, #tpu.memory_space<vmem>>, vector<1x128xf32>
    %94 = vector.broadcast %93 : vector<1x128xf32> to vector<8x128xf32>
    %95 = arith.addf %92, %94 : vector<8x128xf32>
    %cst_31 = arith.constant 0.000000e+00 : f32
    %96 = vector.broadcast %cst_31 : f32 to vector<8x128xf32>
    %97 = arith.cmpf ogt, %95, %96 : vector<8x128xf32>
    %cst_32 = arith.constant 2.000000e-01 : f32
    %98 = vector.broadcast %cst_32 : f32 to vector<8x128xf32>
    %99 = arith.mulf %98, %95 : vector<8x128xf32>
    %100 = arith.select %97, %95, %99 : vector<8x128xi1>, vector<8x128xf32>
    %101 = arith.truncf %100 : vector<8x128xf32> to vector<8x128xbf16>
    %c0_33 = arith.constant 0 : index
    %c256 = arith.constant 256 : index
    %102 = vector.load %arg5[%c0_33, %c256] : memref<8x512xbf16, #tpu.memory_space<vmem>>, vector<8x128xbf16>
    tpu.vector_store %arg5[%c0_33, %c256], %101 {strides = array<i32>} : memref<8x512xbf16, #tpu.memory_space<vmem>>, vector<8x128xbf16>,
    %103 = vector.extract_strided_slice %2 {offsets = [0, 384], sizes = [8, 128], strides = [1, 1]} : vector<8x512xf32> to vector<8x128xf32>
    %104 = vector.broadcast %21 : vector<1x128xf32> to vector<8x128xf32>
    %105 = arith.subf %103, %104 : vector<8x128xf32>
    %106 = vector.broadcast %57 : vector<1x128xf32> to vector<8x128xf32>
    %107 = arith.mulf %105, %106 : vector<8x128xf32>
    %c0_34 = arith.constant 0 : index
    %c0_35 = arith.constant 0 : index
    %108 = vector.load %arg4[%c0_34, %c0_35] : memref<1x128xf32, #tpu.memory_space<vmem>>, vector<1x128xf32>
    %109 = vector.broadcast %108 : vector<1x128xf32> to vector<8x128xf32>
    %110 = arith.addf %107, %109 : vector<8x128xf32>
    %cst_36 = arith.constant 0.000000e+00 : f32
    %111 = vector.broadcast %cst_36 : f32 to vector<8x128xf32>
    %112 = arith.cmpf ogt, %110, %111 : vector<8x128xf32>
    %cst_37 = arith.constant 2.000000e-01 : f32
    %113 = vector.broadcast %cst_37 : f32 to vector<8x128xf32>
    %114 = arith.mulf %113, %110 : vector<8x128xf32>
    %115 = arith.select %112, %110, %114 : vector<8x128xi1>, vector<8x128xf32>
    %116 = arith.truncf %115 : vector<8x128xf32> to vector<8x128xbf16>
    %c0_38 = arith.constant 0 : index
    %c384 = arith.constant 384 : index
    %117 = vector.load %arg5[%c0_38, %c384] : memref<8x512xbf16, #tpu.memory_space<vmem>>, vector<8x128xbf16>
    tpu.vector_store %arg5[%c0_38, %c384], %116 {strides = array<i32>} : memref<8x512xbf16, #tpu.memory_space<vmem>>, vector<8x128xbf16>,
    return
  }
  func.func @transform_0(%arg0: i32) -> (i32, i32) {
    %c0_i32 = arith.constant 0 : i32
    %c0_i32_0 = arith.constant 0 : i32
    %c0_i32_1 = arith.constant 0 : i32
    return %c0_i32, %c0_i32_0 : i32, i32
  }
  func.func @transform_1(%arg0: i32) -> (i32, i32) {
    %c0_i32 = arith.constant 0 : i32
    %c0_i32_0 = arith.constant 0 : i32
    %c0_i32_1 = arith.constant 0 : i32
    return %c0_i32, %c0_i32_0 : i32, i32
  }
  func.func @transform_2(%arg0: i32) -> (i32, i32) {
    %c0_i32 = arith.constant 0 : i32
    %c0_i32_0 = arith.constant 0 : i32
    %c0_i32_1 = arith.constant 0 : i32
    return %c0_i32, %c0_i32_0 : i32, i32
  }
  func.func @transform_3(%arg0: i32) -> (i32, i32) {
    %c0_i32 = arith.constant 0 : i32
    %c0_i32_0 = arith.constant 0 : i32
    %c0_i32_1 = arith.constant 0 : i32
    return %c0_i32, %c0_i32_0 : i32, i32
  }
  func.func @transform_4(%arg0: i32) -> (i32, i32) {
    %c0_i32 = arith.constant 0 : i32
    %c0_i32_0 = arith.constant 0 : i32
    %c0_i32_1 = arith.constant 0 : i32
    return %c0_i32, %c0_i32_0 : i32, i32
  }
}

module attributes {stable_mosaic.version = 11 : i64} {
  func.func @_mm_bn_leaky_kernel(%arg0: i32, %arg1: memref<32x288xbf16, #tpu.memory_space<vmem>>, %arg2: memref<288x512xbf16, #tpu.memory_space<vmem>>, %arg3: memref<1x128xf32, #tpu.memory_space<vmem>>, %arg4: memref<1x128xf32, #tpu.memory_space<vmem>>, %arg5: memref<32x512xbf16, #tpu.memory_space<vmem>>) attributes {dimension_semantics = [#tpu.dimension_semantics<arbitrary>], iteration_bounds = array<i64: 1>, scalar_prefetch = 0 : i64, scratch_operands = 0 : i64, tpu.core_type = #tpu.core_type<tc>, window_params = [{pipeline_mode = #tpu.pipeline_mode<synchronous>, transform_indices = @transform_0, window_bounds = array<i64: 32, 288>}, {pipeline_mode = #tpu.pipeline_mode<synchronous>, transform_indices = @transform_1, window_bounds = array<i64: 288, 512>}, {pipeline_mode = #tpu.pipeline_mode<synchronous>, transform_indices = @transform_2, window_bounds = array<i64: 1, 128>}, {pipeline_mode = #tpu.pipeline_mode<synchronous>, transform_indices = @transform_3, window_bounds = array<i64: 1, 128>}, {pipeline_mode = #tpu.pipeline_mode<synchronous>, transform_indices = @transform_4, window_bounds = array<i64: 32, 512>}]} {
    %c0 = arith.constant 0 : index
    %c0_0 = arith.constant 0 : index
    %0 = vector.load %arg1[%c0, %c0_0] : memref<32x288xbf16, #tpu.memory_space<vmem>>, vector<32x288xbf16>
    %c0_1 = arith.constant 0 : index
    %c0_2 = arith.constant 0 : index
    %1 = vector.load %arg2[%c0_1, %c0_2] : memref<288x512xbf16, #tpu.memory_space<vmem>>, vector<288x512xbf16>
    %cst = arith.constant dense<0.000000e+00> : vector<32x512xf32>
    %2 = tpu.matmul %0, %1, %cst {dimension_numbers = #tpu.dot_dimension_numbers<[1], [0], [0], [1], [0, 0, 1, 1], [], []>} : vector<32x288xbf16>, vector<288x512xbf16>, vector<32x512xf32> -> vector<32x512xf32>
    %cst_3 = arith.constant 0.000000e+00 : f32
    %3 = vector.broadcast %cst_3 : f32 to vector<1x128xf32>
    %4 = vector.extract_strided_slice %2 {offsets = [0, 0], sizes = [32, 128], strides = [1, 1]} : vector<32x512xf32> to vector<32x128xf32>
    %cst_4 = arith.constant dense<0.000000e+00> : vector<128xf32>
    %5 = vector.multi_reduction <add>, %4, %cst_4 [0] : vector<32x128xf32> to vector<128xf32>
    %6 = vector.shape_cast %5 : vector<128xf32> to vector<1x128xf32>
    %7 = arith.addf %3, %6 : vector<1x128xf32>
    %8 = vector.extract_strided_slice %2 {offsets = [0, 128], sizes = [32, 128], strides = [1, 1]} : vector<32x512xf32> to vector<32x128xf32>
    %cst_5 = arith.constant dense<0.000000e+00> : vector<128xf32>
    %9 = vector.multi_reduction <add>, %8, %cst_5 [0] : vector<32x128xf32> to vector<128xf32>
    %10 = vector.shape_cast %9 : vector<128xf32> to vector<1x128xf32>
    %11 = arith.addf %7, %10 : vector<1x128xf32>
    %12 = vector.extract_strided_slice %2 {offsets = [0, 256], sizes = [32, 128], strides = [1, 1]} : vector<32x512xf32> to vector<32x128xf32>
    %cst_6 = arith.constant dense<0.000000e+00> : vector<128xf32>
    %13 = vector.multi_reduction <add>, %12, %cst_6 [0] : vector<32x128xf32> to vector<128xf32>
    %14 = vector.shape_cast %13 : vector<128xf32> to vector<1x128xf32>
    %15 = arith.addf %11, %14 : vector<1x128xf32>
    %16 = vector.extract_strided_slice %2 {offsets = [0, 384], sizes = [32, 128], strides = [1, 1]} : vector<32x512xf32> to vector<32x128xf32>
    %cst_7 = arith.constant dense<0.000000e+00> : vector<128xf32>
    %17 = vector.multi_reduction <add>, %16, %cst_7 [0] : vector<32x128xf32> to vector<128xf32>
    %18 = vector.shape_cast %17 : vector<128xf32> to vector<1x128xf32>
    %19 = arith.addf %15, %18 : vector<1x128xf32>
    %cst_8 = arith.constant 7.812500e-03 : f32
    %20 = vector.broadcast %cst_8 : f32 to vector<1x128xf32>
    %21 = arith.mulf %19, %20 : vector<1x128xf32>
    %cst_9 = arith.constant 0.000000e+00 : f32
    %22 = vector.broadcast %cst_9 : f32 to vector<1x128xf32>
    %23 = vector.extract_strided_slice %2 {offsets = [0, 0], sizes = [32, 128], strides = [1, 1]} : vector<32x512xf32> to vector<32x128xf32>
    %24 = vector.broadcast %21 : vector<1x128xf32> to vector<32x128xf32>
    %25 = arith.subf %23, %24 : vector<32x128xf32>
    %26 = arith.mulf %25, %25 : vector<32x128xf32>
    %cst_10 = arith.constant dense<0.000000e+00> : vector<128xf32>
    %27 = vector.multi_reduction <add>, %26, %cst_10 [0] : vector<32x128xf32> to vector<128xf32>
    %28 = vector.shape_cast %27 : vector<128xf32> to vector<1x128xf32>
    %29 = arith.addf %22, %28 : vector<1x128xf32>
    %30 = vector.extract_strided_slice %2 {offsets = [0, 128], sizes = [32, 128], strides = [1, 1]} : vector<32x512xf32> to vector<32x128xf32>
    %31 = vector.broadcast %21 : vector<1x128xf32> to vector<32x128xf32>
    %32 = arith.subf %30, %31 : vector<32x128xf32>
    %33 = arith.mulf %32, %32 : vector<32x128xf32>
    %cst_11 = arith.constant dense<0.000000e+00> : vector<128xf32>
    %34 = vector.multi_reduction <add>, %33, %cst_11 [0] : vector<32x128xf32> to vector<128xf32>
    %35 = vector.shape_cast %34 : vector<128xf32> to vector<1x128xf32>
    %36 = arith.addf %29, %35 : vector<1x128xf32>
    %37 = vector.extract_strided_slice %2 {offsets = [0, 256], sizes = [32, 128], strides = [1, 1]} : vector<32x512xf32> to vector<32x128xf32>
    %38 = vector.broadcast %21 : vector<1x128xf32> to vector<32x128xf32>
    %39 = arith.subf %37, %38 : vector<32x128xf32>
    %40 = arith.mulf %39, %39 : vector<32x128xf32>
    %cst_12 = arith.constant dense<0.000000e+00> : vector<128xf32>
    %41 = vector.multi_reduction <add>, %40, %cst_12 [0] : vector<32x128xf32> to vector<128xf32>
    %42 = vector.shape_cast %41 : vector<128xf32> to vector<1x128xf32>
    %43 = arith.addf %36, %42 : vector<1x128xf32>
    %44 = vector.extract_strided_slice %2 {offsets = [0, 384], sizes = [32, 128], strides = [1, 1]} : vector<32x512xf32> to vector<32x128xf32>
    %45 = vector.broadcast %21 : vector<1x128xf32> to vector<32x128xf32>
    %46 = arith.subf %44, %45 : vector<32x128xf32>
    %47 = arith.mulf %46, %46 : vector<32x128xf32>
    %cst_13 = arith.constant dense<0.000000e+00> : vector<128xf32>
    %48 = vector.multi_reduction <add>, %47, %cst_13 [0] : vector<32x128xf32> to vector<128xf32>
    %49 = vector.shape_cast %48 : vector<128xf32> to vector<1x128xf32>
    %50 = arith.addf %43, %49 : vector<1x128xf32>
    %cst_14 = arith.constant 7.812500e-03 : f32
    %51 = vector.broadcast %cst_14 : f32 to vector<1x128xf32>
    %52 = arith.mulf %50, %51 : vector<1x128xf32>
    %cst_15 = arith.constant 9.99999974E-6 : f32
    %53 = vector.broadcast %cst_15 : f32 to vector<1x128xf32>
    %54 = arith.addf %52, %53 : vector<1x128xf32>
    %55 = math.rsqrt %54 : vector<1x128xf32>
    %c0_16 = arith.constant 0 : index
    %c0_17 = arith.constant 0 : index
    %56 = vector.load %arg3[%c0_16, %c0_17] : memref<1x128xf32, #tpu.memory_space<vmem>>, vector<1x128xf32>
    %57 = arith.mulf %55, %56 : vector<1x128xf32>
    %58 = vector.extract_strided_slice %2 {offsets = [0, 0], sizes = [32, 128], strides = [1, 1]} : vector<32x512xf32> to vector<32x128xf32>
    %59 = vector.broadcast %21 : vector<1x128xf32> to vector<32x128xf32>
    %60 = arith.subf %58, %59 : vector<32x128xf32>
    %61 = vector.broadcast %57 : vector<1x128xf32> to vector<32x128xf32>
    %62 = arith.mulf %60, %61 : vector<32x128xf32>
    %c0_18 = arith.constant 0 : index
    %c0_19 = arith.constant 0 : index
    %63 = vector.load %arg4[%c0_18, %c0_19] : memref<1x128xf32, #tpu.memory_space<vmem>>, vector<1x128xf32>
    %64 = vector.broadcast %63 : vector<1x128xf32> to vector<32x128xf32>
    %65 = arith.addf %62, %64 : vector<32x128xf32>
    %cst_20 = arith.constant 0.000000e+00 : f32
    %66 = vector.broadcast %cst_20 : f32 to vector<32x128xf32>
    %67 = arith.cmpf ogt, %65, %66 : vector<32x128xf32>
    %cst_21 = arith.constant 2.000000e-01 : f32
    %68 = vector.broadcast %cst_21 : f32 to vector<32x128xf32>
    %69 = arith.mulf %68, %65 : vector<32x128xf32>
    %70 = arith.select %67, %65, %69 : vector<32x128xi1>, vector<32x128xf32>
    %71 = arith.truncf %70 : vector<32x128xf32> to vector<32x128xbf16>
    %c0_22 = arith.constant 0 : index
    %c0_23 = arith.constant 0 : index
    %72 = vector.load %arg5[%c0_22, %c0_23] : memref<32x512xbf16, #tpu.memory_space<vmem>>, vector<32x128xbf16>
    tpu.vector_store %arg5[%c0_22, %c0_23], %71 {strides = array<i32>} : memref<32x512xbf16, #tpu.memory_space<vmem>>, vector<32x128xbf16>,
    %73 = vector.extract_strided_slice %2 {offsets = [0, 128], sizes = [32, 128], strides = [1, 1]} : vector<32x512xf32> to vector<32x128xf32>
    %74 = vector.broadcast %21 : vector<1x128xf32> to vector<32x128xf32>
    %75 = arith.subf %73, %74 : vector<32x128xf32>
    %76 = vector.broadcast %57 : vector<1x128xf32> to vector<32x128xf32>
    %77 = arith.mulf %75, %76 : vector<32x128xf32>
    %c0_24 = arith.constant 0 : index
    %c0_25 = arith.constant 0 : index
    %78 = vector.load %arg4[%c0_24, %c0_25] : memref<1x128xf32, #tpu.memory_space<vmem>>, vector<1x128xf32>
    %79 = vector.broadcast %78 : vector<1x128xf32> to vector<32x128xf32>
    %80 = arith.addf %77, %79 : vector<32x128xf32>
    %cst_26 = arith.constant 0.000000e+00 : f32
    %81 = vector.broadcast %cst_26 : f32 to vector<32x128xf32>
    %82 = arith.cmpf ogt, %80, %81 : vector<32x128xf32>
    %cst_27 = arith.constant 2.000000e-01 : f32
    %83 = vector.broadcast %cst_27 : f32 to vector<32x128xf32>
    %84 = arith.mulf %83, %80 : vector<32x128xf32>
    %85 = arith.select %82, %80, %84 : vector<32x128xi1>, vector<32x128xf32>
    %86 = arith.truncf %85 : vector<32x128xf32> to vector<32x128xbf16>
    %c0_28 = arith.constant 0 : index
    %c128 = arith.constant 128 : index
    %87 = vector.load %arg5[%c0_28, %c128] : memref<32x512xbf16, #tpu.memory_space<vmem>>, vector<32x128xbf16>
    tpu.vector_store %arg5[%c0_28, %c128], %86 {strides = array<i32>} : memref<32x512xbf16, #tpu.memory_space<vmem>>, vector<32x128xbf16>,
    %88 = vector.extract_strided_slice %2 {offsets = [0, 256], sizes = [32, 128], strides = [1, 1]} : vector<32x512xf32> to vector<32x128xf32>
    %89 = vector.broadcast %21 : vector<1x128xf32> to vector<32x128xf32>
    %90 = arith.subf %88, %89 : vector<32x128xf32>
    %91 = vector.broadcast %57 : vector<1x128xf32> to vector<32x128xf32>
    %92 = arith.mulf %90, %91 : vector<32x128xf32>
    %c0_29 = arith.constant 0 : index
    %c0_30 = arith.constant 0 : index
    %93 = vector.load %arg4[%c0_29, %c0_30] : memref<1x128xf32, #tpu.memory_space<vmem>>, vector<1x128xf32>
    %94 = vector.broadcast %93 : vector<1x128xf32> to vector<32x128xf32>
    %95 = arith.addf %92, %94 : vector<32x128xf32>
    %cst_31 = arith.constant 0.000000e+00 : f32
    %96 = vector.broadcast %cst_31 : f32 to vector<32x128xf32>
    %97 = arith.cmpf ogt, %95, %96 : vector<32x128xf32>
    %cst_32 = arith.constant 2.000000e-01 : f32
    %98 = vector.broadcast %cst_32 : f32 to vector<32x128xf32>
    %99 = arith.mulf %98, %95 : vector<32x128xf32>
    %100 = arith.select %97, %95, %99 : vector<32x128xi1>, vector<32x128xf32>
    %101 = arith.truncf %100 : vector<32x128xf32> to vector<32x128xbf16>
    %c0_33 = arith.constant 0 : index
    %c256 = arith.constant 256 : index
    %102 = vector.load %arg5[%c0_33, %c256] : memref<32x512xbf16, #tpu.memory_space<vmem>>, vector<32x128xbf16>
    tpu.vector_store %arg5[%c0_33, %c256], %101 {strides = array<i32>} : memref<32x512xbf16, #tpu.memory_space<vmem>>, vector<32x128xbf16>,
    %103 = vector.extract_strided_slice %2 {offsets = [0, 384], sizes = [32, 128], strides = [1, 1]} : vector<32x512xf32> to vector<32x128xf32>
    %104 = vector.broadcast %21 : vector<1x128xf32> to vector<32x128xf32>
    %105 = arith.subf %103, %104 : vector<32x128xf32>
    %106 = vector.broadcast %57 : vector<1x128xf32> to vector<32x128xf32>
    %107 = arith.mulf %105, %106 : vector<32x128xf32>
    %c0_34 = arith.constant 0 : index
    %c0_35 = arith.constant 0 : index
    %108 = vector.load %arg4[%c0_34, %c0_35] : memref<1x128xf32, #tpu.memory_space<vmem>>, vector<1x128xf32>
    %109 = vector.broadcast %108 : vector<1x128xf32> to vector<32x128xf32>
    %110 = arith.addf %107, %109 : vector<32x128xf32>
    %cst_36 = arith.constant 0.000000e+00 : f32
    %111 = vector.broadcast %cst_36 : f32 to vector<32x128xf32>
    %112 = arith.cmpf ogt, %110, %111 : vector<32x128xf32>
    %cst_37 = arith.constant 2.000000e-01 : f32
    %113 = vector.broadcast %cst_37 : f32 to vector<32x128xf32>
    %114 = arith.mulf %113, %110 : vector<32x128xf32>
    %115 = arith.select %112, %110, %114 : vector<32x128xi1>, vector<32x128xf32>
    %116 = arith.truncf %115 : vector<32x128xf32> to vector<32x128xbf16>
    %c0_38 = arith.constant 0 : index
    %c384 = arith.constant 384 : index
    %117 = vector.load %arg5[%c0_38, %c384] : memref<32x512xbf16, #tpu.memory_space<vmem>>, vector<32x128xbf16>
    tpu.vector_store %arg5[%c0_38, %c384], %116 {strides = array<i32>} : memref<32x512xbf16, #tpu.memory_space<vmem>>, vector<32x128xbf16>,
    return
  }
  func.func @transform_0(%arg0: i32) -> (i32, i32) {
    %c0_i32 = arith.constant 0 : i32
    %c0_i32_0 = arith.constant 0 : i32
    %c0_i32_1 = arith.constant 0 : i32
    return %c0_i32, %c0_i32_0 : i32, i32
  }
  func.func @transform_1(%arg0: i32) -> (i32, i32) {
    %c0_i32 = arith.constant 0 : i32
    %c0_i32_0 = arith.constant 0 : i32
    %c0_i32_1 = arith.constant 0 : i32
    return %c0_i32, %c0_i32_0 : i32, i32
  }
  func.func @transform_2(%arg0: i32) -> (i32, i32) {
    %c0_i32 = arith.constant 0 : i32
    %c0_i32_0 = arith.constant 0 : i32
    %c0_i32_1 = arith.constant 0 : i32
    return %c0_i32, %c0_i32_0 : i32, i32
  }
  func.func @transform_3(%arg0: i32) -> (i32, i32) {
    %c0_i32 = arith.constant 0 : i32
    %c0_i32_0 = arith.constant 0 : i32
    %c0_i32_1 = arith.constant 0 : i32
    return %c0_i32, %c0_i32_0 : i32, i32
  }
  func.func @transform_4(%arg0: i32) -> (i32, i32) {
    %c0_i32 = arith.constant 0 : i32
    %c0_i32_0 = arith.constant 0 : i32
    %c0_i32_1 = arith.constant 0 : i32
    return %c0_i32, %c0_i32_0 : i32, i32
  }
}

module attributes {stable_mosaic.version = 11 : i64} {
  func.func @_mm_bn_leaky_kernel(%arg0: i32, %arg1: memref<128x144xbf16, #tpu.memory_space<vmem>>, %arg2: memref<144x512xbf16, #tpu.memory_space<vmem>>, %arg3: memref<1x128xf32, #tpu.memory_space<vmem>>, %arg4: memref<1x128xf32, #tpu.memory_space<vmem>>, %arg5: memref<128x512xbf16, #tpu.memory_space<vmem>>) attributes {dimension_semantics = [#tpu.dimension_semantics<arbitrary>], iteration_bounds = array<i64: 1>, scalar_prefetch = 0 : i64, scratch_operands = 0 : i64, tpu.core_type = #tpu.core_type<tc>, window_params = [{pipeline_mode = #tpu.pipeline_mode<synchronous>, transform_indices = @transform_0, window_bounds = array<i64: 128, 144>}, {pipeline_mode = #tpu.pipeline_mode<synchronous>, transform_indices = @transform_1, window_bounds = array<i64: 144, 512>}, {pipeline_mode = #tpu.pipeline_mode<synchronous>, transform_indices = @transform_2, window_bounds = array<i64: 1, 128>}, {pipeline_mode = #tpu.pipeline_mode<synchronous>, transform_indices = @transform_3, window_bounds = array<i64: 1, 128>}, {pipeline_mode = #tpu.pipeline_mode<synchronous>, transform_indices = @transform_4, window_bounds = array<i64: 128, 512>}]} {
    %c0 = arith.constant 0 : index
    %c0_0 = arith.constant 0 : index
    %0 = vector.load %arg1[%c0, %c0_0] : memref<128x144xbf16, #tpu.memory_space<vmem>>, vector<128x144xbf16>
    %c0_1 = arith.constant 0 : index
    %c0_2 = arith.constant 0 : index
    %1 = vector.load %arg2[%c0_1, %c0_2] : memref<144x512xbf16, #tpu.memory_space<vmem>>, vector<144x512xbf16>
    %cst = arith.constant dense<0.000000e+00> : vector<128x512xf32>
    %2 = tpu.matmul %0, %1, %cst {dimension_numbers = #tpu.dot_dimension_numbers<[1], [0], [0], [1], [0, 0, 1, 1], [], []>} : vector<128x144xbf16>, vector<144x512xbf16>, vector<128x512xf32> -> vector<128x512xf32>
    %cst_3 = arith.constant 0.000000e+00 : f32
    %3 = vector.broadcast %cst_3 : f32 to vector<1x128xf32>
    %4 = vector.extract_strided_slice %2 {offsets = [0, 0], sizes = [128, 128], strides = [1, 1]} : vector<128x512xf32> to vector<128x128xf32>
    %cst_4 = arith.constant dense<0.000000e+00> : vector<128xf32>
    %5 = vector.multi_reduction <add>, %4, %cst_4 [0] : vector<128x128xf32> to vector<128xf32>
    %6 = vector.shape_cast %5 : vector<128xf32> to vector<1x128xf32>
    %7 = arith.addf %3, %6 : vector<1x128xf32>
    %8 = vector.extract_strided_slice %2 {offsets = [0, 128], sizes = [128, 128], strides = [1, 1]} : vector<128x512xf32> to vector<128x128xf32>
    %cst_5 = arith.constant dense<0.000000e+00> : vector<128xf32>
    %9 = vector.multi_reduction <add>, %8, %cst_5 [0] : vector<128x128xf32> to vector<128xf32>
    %10 = vector.shape_cast %9 : vector<128xf32> to vector<1x128xf32>
    %11 = arith.addf %7, %10 : vector<1x128xf32>
    %12 = vector.extract_strided_slice %2 {offsets = [0, 256], sizes = [128, 128], strides = [1, 1]} : vector<128x512xf32> to vector<128x128xf32>
    %cst_6 = arith.constant dense<0.000000e+00> : vector<128xf32>
    %13 = vector.multi_reduction <add>, %12, %cst_6 [0] : vector<128x128xf32> to vector<128xf32>
    %14 = vector.shape_cast %13 : vector<128xf32> to vector<1x128xf32>
    %15 = arith.addf %11, %14 : vector<1x128xf32>
    %16 = vector.extract_strided_slice %2 {offsets = [0, 384], sizes = [128, 128], strides = [1, 1]} : vector<128x512xf32> to vector<128x128xf32>
    %cst_7 = arith.constant dense<0.000000e+00> : vector<128xf32>
    %17 = vector.multi_reduction <add>, %16, %cst_7 [0] : vector<128x128xf32> to vector<128xf32>
    %18 = vector.shape_cast %17 : vector<128xf32> to vector<1x128xf32>
    %19 = arith.addf %15, %18 : vector<1x128xf32>
    %cst_8 = arith.constant 0.001953125 : f32
    %20 = vector.broadcast %cst_8 : f32 to vector<1x128xf32>
    %21 = arith.mulf %19, %20 : vector<1x128xf32>
    %cst_9 = arith.constant 0.000000e+00 : f32
    %22 = vector.broadcast %cst_9 : f32 to vector<1x128xf32>
    %23 = vector.extract_strided_slice %2 {offsets = [0, 0], sizes = [128, 128], strides = [1, 1]} : vector<128x512xf32> to vector<128x128xf32>
    %24 = vector.broadcast %21 : vector<1x128xf32> to vector<128x128xf32>
    %25 = arith.subf %23, %24 : vector<128x128xf32>
    %26 = arith.mulf %25, %25 : vector<128x128xf32>
    %cst_10 = arith.constant dense<0.000000e+00> : vector<128xf32>
    %27 = vector.multi_reduction <add>, %26, %cst_10 [0] : vector<128x128xf32> to vector<128xf32>
    %28 = vector.shape_cast %27 : vector<128xf32> to vector<1x128xf32>
    %29 = arith.addf %22, %28 : vector<1x128xf32>
    %30 = vector.extract_strided_slice %2 {offsets = [0, 128], sizes = [128, 128], strides = [1, 1]} : vector<128x512xf32> to vector<128x128xf32>
    %31 = vector.broadcast %21 : vector<1x128xf32> to vector<128x128xf32>
    %32 = arith.subf %30, %31 : vector<128x128xf32>
    %33 = arith.mulf %32, %32 : vector<128x128xf32>
    %cst_11 = arith.constant dense<0.000000e+00> : vector<128xf32>
    %34 = vector.multi_reduction <add>, %33, %cst_11 [0] : vector<128x128xf32> to vector<128xf32>
    %35 = vector.shape_cast %34 : vector<128xf32> to vector<1x128xf32>
    %36 = arith.addf %29, %35 : vector<1x128xf32>
    %37 = vector.extract_strided_slice %2 {offsets = [0, 256], sizes = [128, 128], strides = [1, 1]} : vector<128x512xf32> to vector<128x128xf32>
    %38 = vector.broadcast %21 : vector<1x128xf32> to vector<128x128xf32>
    %39 = arith.subf %37, %38 : vector<128x128xf32>
    %40 = arith.mulf %39, %39 : vector<128x128xf32>
    %cst_12 = arith.constant dense<0.000000e+00> : vector<128xf32>
    %41 = vector.multi_reduction <add>, %40, %cst_12 [0] : vector<128x128xf32> to vector<128xf32>
    %42 = vector.shape_cast %41 : vector<128xf32> to vector<1x128xf32>
    %43 = arith.addf %36, %42 : vector<1x128xf32>
    %44 = vector.extract_strided_slice %2 {offsets = [0, 384], sizes = [128, 128], strides = [1, 1]} : vector<128x512xf32> to vector<128x128xf32>
    %45 = vector.broadcast %21 : vector<1x128xf32> to vector<128x128xf32>
    %46 = arith.subf %44, %45 : vector<128x128xf32>
    %47 = arith.mulf %46, %46 : vector<128x128xf32>
    %cst_13 = arith.constant dense<0.000000e+00> : vector<128xf32>
    %48 = vector.multi_reduction <add>, %47, %cst_13 [0] : vector<128x128xf32> to vector<128xf32>
    %49 = vector.shape_cast %48 : vector<128xf32> to vector<1x128xf32>
    %50 = arith.addf %43, %49 : vector<1x128xf32>
    %cst_14 = arith.constant 0.001953125 : f32
    %51 = vector.broadcast %cst_14 : f32 to vector<1x128xf32>
    %52 = arith.mulf %50, %51 : vector<1x128xf32>
    %cst_15 = arith.constant 9.99999974E-6 : f32
    %53 = vector.broadcast %cst_15 : f32 to vector<1x128xf32>
    %54 = arith.addf %52, %53 : vector<1x128xf32>
    %55 = math.rsqrt %54 : vector<1x128xf32>
    %c0_16 = arith.constant 0 : index
    %c0_17 = arith.constant 0 : index
    %56 = vector.load %arg3[%c0_16, %c0_17] : memref<1x128xf32, #tpu.memory_space<vmem>>, vector<1x128xf32>
    %57 = arith.mulf %55, %56 : vector<1x128xf32>
    %58 = vector.extract_strided_slice %2 {offsets = [0, 0], sizes = [128, 128], strides = [1, 1]} : vector<128x512xf32> to vector<128x128xf32>
    %59 = vector.broadcast %21 : vector<1x128xf32> to vector<128x128xf32>
    %60 = arith.subf %58, %59 : vector<128x128xf32>
    %61 = vector.broadcast %57 : vector<1x128xf32> to vector<128x128xf32>
    %62 = arith.mulf %60, %61 : vector<128x128xf32>
    %c0_18 = arith.constant 0 : index
    %c0_19 = arith.constant 0 : index
    %63 = vector.load %arg4[%c0_18, %c0_19] : memref<1x128xf32, #tpu.memory_space<vmem>>, vector<1x128xf32>
    %64 = vector.broadcast %63 : vector<1x128xf32> to vector<128x128xf32>
    %65 = arith.addf %62, %64 : vector<128x128xf32>
    %cst_20 = arith.constant 0.000000e+00 : f32
    %66 = vector.broadcast %cst_20 : f32 to vector<128x128xf32>
    %67 = arith.cmpf ogt, %65, %66 : vector<128x128xf32>
    %cst_21 = arith.constant 2.000000e-01 : f32
    %68 = vector.broadcast %cst_21 : f32 to vector<128x128xf32>
    %69 = arith.mulf %68, %65 : vector<128x128xf32>
    %70 = arith.select %67, %65, %69 : vector<128x128xi1>, vector<128x128xf32>
    %71 = arith.truncf %70 : vector<128x128xf32> to vector<128x128xbf16>
    %c0_22 = arith.constant 0 : index
    %c0_23 = arith.constant 0 : index
    %72 = vector.load %arg5[%c0_22, %c0_23] : memref<128x512xbf16, #tpu.memory_space<vmem>>, vector<128x128xbf16>
    tpu.vector_store %arg5[%c0_22, %c0_23], %71 {strides = array<i32>} : memref<128x512xbf16, #tpu.memory_space<vmem>>, vector<128x128xbf16>,
    %73 = vector.extract_strided_slice %2 {offsets = [0, 128], sizes = [128, 128], strides = [1, 1]} : vector<128x512xf32> to vector<128x128xf32>
    %74 = vector.broadcast %21 : vector<1x128xf32> to vector<128x128xf32>
    %75 = arith.subf %73, %74 : vector<128x128xf32>
    %76 = vector.broadcast %57 : vector<1x128xf32> to vector<128x128xf32>
    %77 = arith.mulf %75, %76 : vector<128x128xf32>
    %c0_24 = arith.constant 0 : index
    %c0_25 = arith.constant 0 : index
    %78 = vector.load %arg4[%c0_24, %c0_25] : memref<1x128xf32, #tpu.memory_space<vmem>>, vector<1x128xf32>
    %79 = vector.broadcast %78 : vector<1x128xf32> to vector<128x128xf32>
    %80 = arith.addf %77, %79 : vector<128x128xf32>
    %cst_26 = arith.constant 0.000000e+00 : f32
    %81 = vector.broadcast %cst_26 : f32 to vector<128x128xf32>
    %82 = arith.cmpf ogt, %80, %81 : vector<128x128xf32>
    %cst_27 = arith.constant 2.000000e-01 : f32
    %83 = vector.broadcast %cst_27 : f32 to vector<128x128xf32>
    %84 = arith.mulf %83, %80 : vector<128x128xf32>
    %85 = arith.select %82, %80, %84 : vector<128x128xi1>, vector<128x128xf32>
    %86 = arith.truncf %85 : vector<128x128xf32> to vector<128x128xbf16>
    %c0_28 = arith.constant 0 : index
    %c128 = arith.constant 128 : index
    %87 = vector.load %arg5[%c0_28, %c128] : memref<128x512xbf16, #tpu.memory_space<vmem>>, vector<128x128xbf16>
    tpu.vector_store %arg5[%c0_28, %c128], %86 {strides = array<i32>} : memref<128x512xbf16, #tpu.memory_space<vmem>>, vector<128x128xbf16>,
    %88 = vector.extract_strided_slice %2 {offsets = [0, 256], sizes = [128, 128], strides = [1, 1]} : vector<128x512xf32> to vector<128x128xf32>
    %89 = vector.broadcast %21 : vector<1x128xf32> to vector<128x128xf32>
    %90 = arith.subf %88, %89 : vector<128x128xf32>
    %91 = vector.broadcast %57 : vector<1x128xf32> to vector<128x128xf32>
    %92 = arith.mulf %90, %91 : vector<128x128xf32>
    %c0_29 = arith.constant 0 : index
    %c0_30 = arith.constant 0 : index
    %93 = vector.load %arg4[%c0_29, %c0_30] : memref<1x128xf32, #tpu.memory_space<vmem>>, vector<1x128xf32>
    %94 = vector.broadcast %93 : vector<1x128xf32> to vector<128x128xf32>
    %95 = arith.addf %92, %94 : vector<128x128xf32>
    %cst_31 = arith.constant 0.000000e+00 : f32
    %96 = vector.broadcast %cst_31 : f32 to vector<128x128xf32>
    %97 = arith.cmpf ogt, %95, %96 : vector<128x128xf32>
    %cst_32 = arith.constant 2.000000e-01 : f32
    %98 = vector.broadcast %cst_32 : f32 to vector<128x128xf32>
    %99 = arith.mulf %98, %95 : vector<128x128xf32>
    %100 = arith.select %97, %95, %99 : vector<128x128xi1>, vector<128x128xf32>
    %101 = arith.truncf %100 : vector<128x128xf32> to vector<128x128xbf16>
    %c0_33 = arith.constant 0 : index
    %c256 = arith.constant 256 : index
    %102 = vector.load %arg5[%c0_33, %c256] : memref<128x512xbf16, #tpu.memory_space<vmem>>, vector<128x128xbf16>
    tpu.vector_store %arg5[%c0_33, %c256], %101 {strides = array<i32>} : memref<128x512xbf16, #tpu.memory_space<vmem>>, vector<128x128xbf16>,
    %103 = vector.extract_strided_slice %2 {offsets = [0, 384], sizes = [128, 128], strides = [1, 1]} : vector<128x512xf32> to vector<128x128xf32>
    %104 = vector.broadcast %21 : vector<1x128xf32> to vector<128x128xf32>
    %105 = arith.subf %103, %104 : vector<128x128xf32>
    %106 = vector.broadcast %57 : vector<1x128xf32> to vector<128x128xf32>
    %107 = arith.mulf %105, %106 : vector<128x128xf32>
    %c0_34 = arith.constant 0 : index
    %c0_35 = arith.constant 0 : index
    %108 = vector.load %arg4[%c0_34, %c0_35] : memref<1x128xf32, #tpu.memory_space<vmem>>, vector<1x128xf32>
    %109 = vector.broadcast %108 : vector<1x128xf32> to vector<128x128xf32>
    %110 = arith.addf %107, %109 : vector<128x128xf32>
    %cst_36 = arith.constant 0.000000e+00 : f32
    %111 = vector.broadcast %cst_36 : f32 to vector<128x128xf32>
    %112 = arith.cmpf ogt, %110, %111 : vector<128x128xf32>
    %cst_37 = arith.constant 2.000000e-01 : f32
    %113 = vector.broadcast %cst_37 : f32 to vector<128x128xf32>
    %114 = arith.mulf %113, %110 : vector<128x128xf32>
    %115 = arith.select %112, %110, %114 : vector<128x128xi1>, vector<128x128xf32>
    %116 = arith.truncf %115 : vector<128x128xf32> to vector<128x128xbf16>
    %c0_38 = arith.constant 0 : index
    %c384 = arith.constant 384 : index
    %117 = vector.load %arg5[%c0_38, %c384] : memref<128x512xbf16, #tpu.memory_space<vmem>>, vector<128x128xbf16>
    tpu.vector_store %arg5[%c0_38, %c384], %116 {strides = array<i32>} : memref<128x512xbf16, #tpu.memory_space<vmem>>, vector<128x128xbf16>,
    return
  }
  func.func @transform_0(%arg0: i32) -> (i32, i32) {
    %c0_i32 = arith.constant 0 : i32
    %c0_i32_0 = arith.constant 0 : i32
    %c0_i32_1 = arith.constant 0 : i32
    return %c0_i32, %c0_i32_0 : i32, i32
  }
  func.func @transform_1(%arg0: i32) -> (i32, i32) {
    %c0_i32 = arith.constant 0 : i32
    %c0_i32_0 = arith.constant 0 : i32
    %c0_i32_1 = arith.constant 0 : i32
    return %c0_i32, %c0_i32_0 : i32, i32
  }
  func.func @transform_2(%arg0: i32) -> (i32, i32) {
    %c0_i32 = arith.constant 0 : i32
    %c0_i32_0 = arith.constant 0 : i32
    %c0_i32_1 = arith.constant 0 : i32
    return %c0_i32, %c0_i32_0 : i32, i32
  }
  func.func @transform_3(%arg0: i32) -> (i32, i32) {
    %c0_i32 = arith.constant 0 : i32
    %c0_i32_0 = arith.constant 0 : i32
    %c0_i32_1 = arith.constant 0 : i32
    return %c0_i32, %c0_i32_0 : i32, i32
  }
  func.func @transform_4(%arg0: i32) -> (i32, i32) {
    %c0_i32 = arith.constant 0 : i32
    %c0_i32_0 = arith.constant 0 : i32
    %c0_i32_1 = arith.constant 0 : i32
    return %c0_i32, %c0_i32_0 : i32, i32
  }
}

module attributes {stable_mosaic.version = 11 : i64} {
  func.func @_mm_act_kernel(%arg0: i32, %arg1: memref<256x72xbf16, #tpu.memory_space<vmem>>, %arg2: memref<72x512xbf16, #tpu.memory_space<vmem>>, %arg3: memref<256x512xf32, #tpu.memory_space<vmem>>) attributes {dimension_semantics = [#tpu.dimension_semantics<parallel>], iteration_bounds = array<i64: 2>, scalar_prefetch = 0 : i64, scratch_operands = 0 : i64, tpu.core_type = #tpu.core_type<tc>, window_params = [{transform_indices = @transform_0, window_bounds = array<i64: 256, 72>}, {pipeline_mode = #tpu.pipeline_mode<synchronous>, transform_indices = @transform_1, window_bounds = array<i64: 72, 512>}, {transform_indices = @transform_2, window_bounds = array<i64: 256, 512>}]} {
    %c0 = arith.constant 0 : index
    %c0_0 = arith.constant 0 : index
    %0 = vector.load %arg1[%c0, %c0_0] : memref<256x72xbf16, #tpu.memory_space<vmem>>, vector<256x72xbf16>
    %c0_1 = arith.constant 0 : index
    %c0_2 = arith.constant 0 : index
    %1 = vector.load %arg2[%c0_1, %c0_2] : memref<72x512xbf16, #tpu.memory_space<vmem>>, vector<72x512xbf16>
    %cst = arith.constant dense<0.000000e+00> : vector<256x512xf32>
    %2 = tpu.matmul %0, %1, %cst {dimension_numbers = #tpu.dot_dimension_numbers<[1], [0], [0], [1], [0, 0, 1, 1], [], []>} : vector<256x72xbf16>, vector<72x512xbf16>, vector<256x512xf32> -> vector<256x512xf32>
    %cst_3 = arith.constant 0.000000e+00 : f32
    %3 = vector.broadcast %cst_3 : f32 to vector<256x512xf32>
    %4 = arith.subf %3, %2 : vector<256x512xf32>
    %5 = math.exp %4 : vector<256x512xf32>
    %cst_4 = arith.constant 1.000000e+00 : f32
    %6 = vector.broadcast %cst_4 : f32 to vector<256x512xf32>
    %7 = arith.addf %6, %5 : vector<256x512xf32>
    %cst_5 = arith.constant 1.000000e+00 : f32
    %8 = vector.broadcast %cst_5 : f32 to vector<256x512xf32>
    %9 = arith.divf %8, %7 : vector<256x512xf32>
    %c0_6 = arith.constant 0 : index
    %c0_7 = arith.constant 0 : index
    %10 = vector.load %arg3[%c0_6, %c0_7] : memref<256x512xf32, #tpu.memory_space<vmem>>, vector<256x512xf32>
    tpu.vector_store %arg3[%c0_6, %c0_7], %9 {strides = array<i32>} : memref<256x512xf32, #tpu.memory_space<vmem>>, vector<256x512xf32>,
    return
  }
  func.func @transform_0(%arg0: i32) -> (i32, i32) {
    %c0_i32 = arith.constant 0 : i32
    %c0_i32_0 = arith.constant 0 : i32
    return %arg0, %c0_i32 : i32, i32
  }
  func.func @transform_1(%arg0: i32) -> (i32, i32) {
    %c0_i32 = arith.constant 0 : i32
    %c0_i32_0 = arith.constant 0 : i32
    %c0_i32_1 = arith.constant 0 : i32
    return %c0_i32, %c0_i32_0 : i32, i32
  }
  func.func @transform_2(%arg0: i32) -> (i32, i32) {
    %c0_i32 = arith.constant 0 : i32
    %c0_i32_0 = arith.constant 0 : i32
    return %arg0, %c0_i32 : i32, i32
  }
}

</mosaic_0001>

<llo_original>
// kernel: cnn_vae_forward.10
$region0: #{cnn_vae_forward.10}
  #allocation0 [shape = 'u32[]', space=smem, size = 0x4, offset = 0x4, fixed_abs, tag = 'smem constant byte address 0x4 - core index']
  #allocation1 [shape = 'u32[144,128]{1,0:T(1,128)}', space=vmem, size = 0x12000, scoped, tag = 'internal scratch']
  %s0 = inlined_call_operand.vmem [shape: bf16[512,128], index: 0, kind: input, shape index: {}]
  %s1 = inlined_call_operand.vmem [shape: bf16[128,128], index: 1, kind: input, shape index: {}]
  %s2 = inlined_call_operand.vmem [shape: bf16[512,128], index: 2, kind: output, shape index: {}]
  %s3 = sld [smem:[#allocation0]]
  $region41: #{cnn_vae_forward.10} parent=0
    _
  %s5 = ssub.s32 1, %s3
  %s6 = scalar_select 0, %s5, %s3
  loop: start=0, step=1, limit=4
  $region2: #{cnn_vae_forward.10} parent=0 // loop_pre_header
    _
  $region3: #{cnn_vae_forward.10} parent=0 // loop_header
    %s8 = sphi 0, %s12
    %p9 = scmp.ge.s32.totalorder %s8, 4
    %s18 = sphi 0, %s20
    %s21 = sphi 0, %s18
    %s22 = sphi 0, %s21
    %s38 = sphi 0, %s22
    %s42 = sphi 0, %s42
    %s44 = sphi 0, %s42
    %s45 = sphi 0, %s44
    %s59 = sphi 0, %s45
    %s65 = sphi 0, %s67
    %s68 = sphi 0, %s65
    %s69 = sphi 0, %s68
    %s85 = sphi 0, %s69
  $region4: #{cnn_vae_forward.10} parent=0 // loop_header_branch
    %11 = sbr.rel (%p9) target = $region8
  $region5: #{cnn_vae_forward.10} parent=0 // loop_body
    %s13 = ssub.s32 %s8, 1
    %s14 = ssub.s32 %s8, 2
    %s15 = sadd.s32 %s8, 1
    %s16 = ssub.s32 %s8, %s15
    %p17 = scmp.eq.s32.totalorder %s16, 0
    %s19 = sadd.s32 %s18, 1
    %s20 = scalar_select %p17, %s18, %s19
    %p23 = pneg %p17
    %p24 = scmp.eq.s32.totalorder %s8, 1
    %p25 = por %p23, %p24
    %p26 = scmp.ne.s32.totalorder %s18, %s21
    %p27 = scmp.eq.s32.totalorder %s8, 0
    %p28 = por %p26, %p27
    %p29 = scmp.ne.s32.totalorder %s18, %s21
    %p30 = scmp.eq.s32.totalorder %s13, 1
    %p31 = por %p29, %p30
    %p32 = scmp.ne.s32.totalorder %s21, %s22
    %p33 = scmp.eq.s32.totalorder %s13, 0
    %p34 = por %p32, %p33
    %p35 = scmp.ne.s32.totalorder %s21, %s22
    %p36 = scmp.eq.s32.totalorder %s14, 1
    %p37 = por %p35, %p36
    %p39 = scmp.ne.s32.totalorder %s22, %s38
    %p40 = scmp.eq.s32.totalorder %s14, 0
    %p41 = por %p39, %p40
    %s43 = sadd.s32 %s42, 1
    %p46 = scmp.eq.s32.totalorder %s8, 1
    %p47 = scmp.ne.s32.totalorder %s42, %s44
    %p48 = scmp.eq.s32.totalorder %s8, 0
    %p49 = por %p47, %p48
    %p50 = scmp.ne.s32.totalorder %s42, %s44
    %p51 = scmp.eq.s32.totalorder %s13, 1
    %p52 = por %p50, %p51
    %p53 = scmp.ne.s32.totalorder %s44, %s45
    %p54 = scmp.eq.s32.totalorder %s13, 0
    %p55 = por %p53, %p54
    %p56 = scmp.ne.s32.totalorder %s44, %s45
    %p57 = scmp.eq.s32.totalorder %s14, 1
    %p58 = por %p56, %p57
    %p60 = scmp.ne.s32.totalorder %s45, %s59
    %p61 = scmp.eq.s32.totalorder %s14, 0
    %p62 = por %p60, %p61
    %s63 = ssub.s32 %s8, %s15
    %p64 = scmp.eq.s32.totalorder %s63, 0
    %s66 = sadd.s32 %s65, 1
    %s67 = scalar_select %p64, %s65, %s66
    %p70 = pneg %p64
    %p71 = scmp.eq.s32.totalorder %s8, 1
    %p72 = por %p70, %p71
    %p73 = scmp.ne.s32.totalorder %s65, %s68
    %p74 = scmp.eq.s32.totalorder %s8, 0
    %p75 = por %p73, %p74
    %p76 = scmp.ne.s32.totalorder %s65, %s68
    %p77 = scmp.eq.s32.totalorder %s13, 1
    %p78 = por %p76, %p77
    %p79 = scmp.ne.s32.totalorder %s68, %s69
    %p80 = scmp.eq.s32.totalorder %s13, 0
    %p81 = por %p79, %p80
    %p82 = scmp.ne.s32.totalorder %s68, %s69
    %p83 = scmp.eq.s32.totalorder %s14, 1
    %p84 = por %p82, %p83
    %p86 = scmp.ne.s32.totalorder %s69, %s85
    %p87 = scmp.eq.s32.totalorder %s14, 0
    %p88 = por %p86, %p87
    %p89 = scmp.le.s32.totalorder 1, %s8
    %p90 = scmp.lt.s32.totalorder %s8, 3
    %p91 = pnand %p89, %p90
    %p92 = pneg %p91
    // Predicated region
    $region9: #{cnn_vae_forward.10} parent=5 // pred_check
      _
    $region10: #{cnn_vae_forward.10} parent=5 // pred_check_branch
      %94 = sbr.rel (%p91) target = $region12
    $region11: #{cnn_vae_forward.10} parent=5 // pred_region
      %s95 = ssub.s32 %s8, 1
      // Predicated region
      $region13: #{cnn_vae_forward.10} parent=11 // pred_check
        %p96 = pneg %p55
      $region14: #{cnn_vae_forward.10} parent=11 // pred_check_branch
        %98 = sbr.rel (%p96) target = $region16
      $region15: #{cnn_vae_forward.10} parent=11 // pred_region
        _
      $region16: #{cnn_vae_forward.10} parent=11 // pred_fallthru
        _
    $region12: #{cnn_vae_forward.10} parent=5 // pred_fallthru
      _
    %p99 = scmp.lt.s32.totalorder %s8, 2
    // Predicated region
    $region17: #{cnn_vae_forward.10} parent=5 // pred_check
      %p100 = pneg %p99
    $region18: #{cnn_vae_forward.10} parent=5 // pred_check_branch
      %102 = sbr.rel (%p100) target = $region20
    $region19: #{cnn_vae_forward.10} parent=5 // pred_region
      // Predicated region
      $region21: #{cnn_vae_forward.10} parent=19 // pred_check
        %p103 = pneg %p28
      $region22: #{cnn_vae_forward.10} parent=19 // pred_check_branch
        %105 = sbr.rel (%p103) target = $region24
      $region23: #{cnn_vae_forward.10} parent=19 // pred_region
        %s106 = smul.u32 32, %s8
        %p107 = scmp.lt.s32.totalorder %s106, 63
        %s108 = scalar_select %p107, %s106, 63
        %s109 = smul.addr %s108, 4
        %s110 = scalar_lea.vmem %s0, %s109
        %s111 = smul.u32 32, %s8
      $region24: #{cnn_vae_forward.10} parent=19 // pred_fallthru
        _
    $region20: #{cnn_vae_forward.10} parent=5 // pred_fallthru
      _
    %p112 = scmp.le.s32.totalorder 1, %s8
    %p113 = scmp.lt.s32.totalorder %s8, 3
    %p114 = pnand %p112, %p113
    %p115 = pneg %p114
    // Predicated region
    $region25: #{cnn_vae_forward.10} parent=5 // pred_check
      _
    $region26: #{cnn_vae_forward.10} parent=5 // pred_check_branch
      %117 = sbr.rel (%p114) target = $region28
    $region27: #{cnn_vae_forward.10} parent=5 // pred_region
      %s118 = ssub.s32 %s8, 1
      %s119 = smul.u32 32, %s13
      %p120 = scmp.lt.s32.totalorder %s119, 63
      %s121 = scalar_select %p120, %s119, 63
      %s122 = smul.addr %s121, 4
      %s123 = scalar_lea.vmem %s0, %s122
      %p124 = pneg %p34
      %p125 = pneg %p31
      %p126 = pneg %p55
      %p127 = pneg %p52
      %p128 = pneg %p81
      %p129 = pneg %p78
      %s130 = smul.u32 32, %s13
      %p131 = scmp.lt.s32.totalorder %s130, 63
      %s132 = scalar_select %p131, %s130, 63
      %s133 = smul.addr %s132, 4
      %s134 = scalar_lea.vmem %s2, %s133
      %s135 = smul.u32 32, %s13
      %p136 = scmp.lt.s32.totalorder %s135, 63
      %s137 = scalar_select %p136, %s135, 63
      %s138 = smul.addr %s137, 4
      %s139 = scalar_lea.vmem %s0, %s138
      %s140 = smul.u32 32, %s13
      %s141 = smul.u32 32, %s13
      %p142 = scmp.lt.s32.totalorder %s141, 63
      %s143 = scalar_select %p142, %s141, 63
      %s144 = smul.addr %s143, 4
      %s145 = scalar_lea.vmem %s2, %s144
      %s146 = smul.u32 32, %s13
      %v148 = vld [vmem:[%s139] sm:$0xf]
      %v149 = vld [vmem:[%s139 + $0x4] sm:$0xf]
      %v150 = vld [vmem:[%s139 + $0x8] sm:$0xf]
      %v151 = vld [vmem:[%s139 + $0xc] sm:$0xf]
      %v152 = vld [vmem:[%s139 + $0x10] sm:$0xf]
      %v153 = vld [vmem:[%s139 + $0x14] sm:$0xf]
      %v154 = vld [vmem:[%s139 + $0x18] sm:$0xf]
      %v155 = vld [vmem:[%s139 + $0x1c] sm:$0xf]
      %v156 = vld [vmem:[%s139 + $0x20] sm:$0xf]
      %v157 = vld [vmem:[%s139 + $0x24] sm:$0xf]
      %v158 = vld [vmem:[%s139 + $0x28] sm:$0xf]
      %v159 = vld [vmem:[%s139 + $0x2c] sm:$0xf]
      %v160 = vld [vmem:[%s139 + $0x30] sm:$0xf]
      %v161 = vld [vmem:[%s139 + $0x34] sm:$0xf]
      %v162 = vld [vmem:[%s139 + $0x38] sm:$0xf]
      %v163 = vld [vmem:[%s139 + $0x3c] sm:$0xf]
      %v164 = vld [vmem:[%s139 + $0x40] sm:$0xf]
      %v165 = vld [vmem:[%s139 + $0x44] sm:$0xf]
      %v166 = vld [vmem:[%s139 + $0x48] sm:$0xf]
      %v167 = vld [vmem:[%s139 + $0x4c] sm:$0xf]
      %v168 = vld [vmem:[%s139 + $0x50] sm:$0xf]
      %v169 = vld [vmem:[%s139 + $0x54] sm:$0xf]
      %v170 = vld [vmem:[%s139 + $0x58] sm:$0xf]
      %v171 = vld [vmem:[%s139 + $0x5c] sm:$0xf]
      %v172 = vld [vmem:[%s139 + $0x60] sm:$0xf]
      %v173 = vld [vmem:[%s139 + $0x64] sm:$0xf]
      %v174 = vld [vmem:[%s139 + $0x68] sm:$0xf]
      %v175 = vld [vmem:[%s139 + $0x6c] sm:$0xf]
      %v176 = vld [vmem:[%s139 + $0x70] sm:$0xf]
      %v177 = vld [vmem:[%s139 + $0x74] sm:$0xf]
      %v178 = vld [vmem:[%s139 + $0x78] sm:$0xf]
      %v179 = vld [vmem:[%s139 + $0x7c] sm:$0xf]
      %v180 = vld [vmem:[%s1] sm:$0xf]
      %v181 = vld [vmem:[%s1 + $0x4] sm:$0xf]
      %v182 = vld [vmem:[%s1 + $0x8] sm:$0xf]
      %v183 = vld [vmem:[%s1 + $0xc] sm:$0xf]
      %v184 = vld [vmem:[%s1 + $0x10] sm:$0xf]
      %v185 = vld [vmem:[%s1 + $0x14] sm:$0xf]
      %v186 = vld [vmem:[%s1 + $0x18] sm:$0xf]
      %v187 = vld [vmem:[%s1 + $0x1c] sm:$0xf]
      %v188 = vld [vmem:[%s1 + $0x20] sm:$0xf]
      %v189 = vld [vmem:[%s1 + $0x24] sm:$0xf]
      %v190 = vld [vmem:[%s1 + $0x28] sm:$0xf]
      %v191 = vld [vmem:[%s1 + $0x2c] sm:$0xf]
      %v192 = vld [vmem:[%s1 + $0x30] sm:$0xf]
      %v193 = vld [vmem:[%s1 + $0x34] sm:$0xf]
      %v194 = vld [vmem:[%s1 + $0x38] sm:$0xf]
      %v195 = vld [vmem:[%s1 + $0x3c] sm:$0xf]
      %v228 = vunpack.c.l.b16 %v148
      %v229 = vunpack.c.l.b16 %v149
      %v230 = vunpack.c.l.b16 %v150
      %v231 = vunpack.c.l.b16 %v151
      %v232 = vunpack.c.l.b16 %v152
      %v233 = vunpack.c.l.b16 %v153
      %v234 = vunpack.c.l.b16 %v154
      %v235 = vunpack.c.l.b16 %v155
      %v236 = vunpack.c.l.b16 %v156
      %v237 = vunpack.c.l.b16 %v157
      %v238 = vunpack.c.l.b16 %v158
      %v239 = vunpack.c.l.b16 %v159
      %v240 = vunpack.c.l.b16 %v160
      %v241 = vunpack.c.l.b16 %v161
      %v242 = vunpack.c.l.b16 %v162
      %v243 = vunpack.c.l.b16 %v163
      %v244 = vunpack.c.l.b16 %v164
      %v245 = vunpack.c.l.b16 %v165
      %v246 = vunpack.c.l.b16 %v166
      %v247 = vunpack.c.l.b16 %v167
      %v248 = vunpack.c.l.b16 %v168
      %v249 = vunpack.c.l.b16 %v169
      %v250 = vunpack.c.l.b16 %v170
      %v251 = vunpack.c.l.b16 %v171
      %v252 = vunpack.c.l.b16 %v172
      %v253 = vunpack.c.l.b16 %v173
      %v254 = vunpack.c.l.b16 %v174
      %v255 = vunpack.c.l.b16 %v175
      %v256 = vunpack.c.l.b16 %v176
      %v257 = vunpack.c.l.b16 %v177
      %v258 = vunpack.c.l.b16 %v178
      %v259 = vunpack.c.l.b16 %v179
      %v260 = vpack.c.b16 %v229, %v228
      %v261 = vpack.c.b16 %v231, %v230
      %v262 = vpack.c.b16 %v233, %v232
      %v263 = vpack.c.b16 %v235, %v234
      %v264 = vpack.c.b16 %v237, %v236
      %v265 = vpack.c.b16 %v239, %v238
      %v266 = vpack.c.b16 %v241, %v240
      %v267 = vpack.c.b16 %v243, %v242
      %v268 = vpack.c.b16 %v245, %v244
      %v269 = vpack.c.b16 %v247, %v246
      %v270 = vpack.c.b16 %v249, %v248
      %v271 = vpack.c.b16 %v251, %v250
      %v272 = vpack.c.b16 %v253, %v252
      %v273 = vpack.c.b16 %v255, %v254
      %v274 = vpack.c.b16 %v257, %v256
      %v275 = vpack.c.b16 %v259, %v258
      %v308 = vunpack.c.l.b16 %v180
      %v309 = vunpack.c.l.b16 %v181
      %v310 = vunpack.c.l.b16 %v182
      %v311 = vunpack.c.l.b16 %v183
      %v312 = vunpack.c.l.b16 %v184
      %v313 = vunpack.c.l.b16 %v185
      %v314 = vunpack.c.l.b16 %v186
      %v315 = vunpack.c.l.b16 %v187
      %v316 = vunpack.c.l.b16 %v188
      %v317 = vunpack.c.l.b16 %v189
      %v318 = vunpack.c.l.b16 %v190
      %v319 = vunpack.c.l.b16 %v191
      %v320 = vunpack.c.l.b16 %v192
      %v321 = vunpack.c.l.b16 %v193
      %v322 = vunpack.c.l.b16 %v194
      %v323 = vunpack.c.l.b16 %v195
      %v324 = vpack.c.b16 %v309, %v308
      %v325 = vpack.c.b16 %v311, %v310
      %v326 = vpack.c.b16 %v313, %v312
      %v327 = vpack.c.b16 %v315, %v314
      %v328 = vpack.c.b16 %v317, %v316
      %v329 = vpack.c.b16 %v319, %v318
      %v330 = vpack.c.b16 %v321, %v320
      %v331 = vpack.c.b16 %v323, %v322
      %340 = vmatprep.subr.bf16.mxu0 0
      %341 = vmatpush1.bf16.msra.mxu0 %v324
      %342 = vmatprep.subr.bf16.mxu0 0
      %343 = vmatpush1.bf16.msra.mxu0 %v325
      %344 = vmatprep.subr.bf16.mxu0 0
      %345 = vmatpush1.bf16.msra.mxu0 %v326
      %346 = vmatprep.subr.bf16.mxu0 0
      %347 = vmatpush1.bf16.msra.mxu0 %v327
      %348 = vmatprep.subr.bf16.mxu0 0
      %349 = vmatpush1.bf16.msra.mxu0 %v328
      %350 = vmatprep.subr.bf16.mxu0 0
      %351 = vmatpush1.bf16.msra.mxu0 %v329
      %352 = vmatprep.subr.bf16.mxu0 0
      %353 = vmatpush1.bf16.msra.mxu0 %v330
      %354 = vmatprep.subr.bf16.mxu0 0
      %355 = vmatpush1.bf16.msra.mxu0 %v331
      %356 = vmatprep.subr.bf16.mxu0 0
      %357 = vmatpush1.bf16.msra.mxu0 0
      %358 = vmatprep.subr.bf16.mxu0 0
      %359 = vmatpush1.bf16.msra.mxu0 0
      %360 = vmatprep.subr.bf16.mxu0 0
      %361 = vmatpush1.bf16.msra.mxu0 0
      %362 = vmatprep.subr.bf16.mxu0 0
      %363 = vmatpush1.bf16.msra.mxu0 0
      %364 = vmatprep.subr.bf16.mxu0 0
      %365 = vmatpush1.bf16.msra.mxu0 0
      %366 = vmatprep.subr.bf16.mxu0 0
      %367 = vmatpush1.bf16.msra.mxu0 0
      %368 = vmatprep.subr.bf16.mxu0 0
      %369 = vmatpush1.bf16.msra.mxu0 0
      %370 = vmatprep.subr.bf16.mxu0 0
      %371 = vmatpush1.bf16.msra.mxu0 0
      %372 = vmatprep.mubr.bf16.mxu0 0
      %373 = vmatmul.mubr.bf16.gmra.mrb[0].mxu0 %v260
      %v374 = vpop.f32.mrb[0].mxu0
      %v375 = vadd.f32 0.0, %v374
      %v376 = vpop.f32.mrb[0].mxu0
      %v377 = vpop.f32.mrb[0].mxu0
      %v378 = vadd.f32 0.0, %v377
      %v379 = vpop.f32.mrb[0].mxu0
      %380 = vmatprep.mubr.bf16.mxu0 0
      %381 = vmatmul.mubr.bf16.gmra.mrb[0].mxu0 %v261
      %v382 = vpop.f32.mrb[0].mxu0
      %v383 = vadd.f32 0.0, %v382
      %v384 = vpop.f32.mrb[0].mxu0
      %v385 = vpop.f32.mrb[0].mxu0
      %v386 = vadd.f32 0.0, %v385
      %v387 = vpop.f32.mrb[0].mxu0
      %388 = vmatprep.mubr.bf16.mxu0 0
      %389 = vmatmul.mubr.bf16.gmra.mrb[0].mxu0 %v262
      %v390 = vpop.f32.mrb[0].mxu0
      %v391 = vadd.f32 0.0, %v390
      %v392 = vpop.f32.mrb[0].mxu0
      %v393 = vpop.f32.mrb[0].mxu0
      %v394 = vadd.f32 0.0, %v393
      %v395 = vpop.f32.mrb[0].mxu0
      %396 = vmatprep.mubr.bf16.mxu0 0
      %397 = vmatmul.mubr.bf16.gmra.mrb[0].mxu0 %v263
      %v398 = vpop.f32.mrb[0].mxu0
      %v399 = vadd.f32 0.0, %v398
      %v400 = vpop.f32.mrb[0].mxu0
      %v401 = vpop.f32.mrb[0].mxu0
      %v402 = vadd.f32 0.0, %v401
      %v403 = vpop.f32.mrb[0].mxu0
      %404 = vmatprep.mubr.bf16.mxu0 0
      %405 = vmatmul.mubr.bf16.gmra.mrb[0].mxu0 %v264
      %v406 = vpop.f32.mrb[0].mxu0
      %v407 = vadd.f32 0.0, %v406
      %v408 = vpop.f32.mrb[0].mxu0
      %v409 = vpop.f32.mrb[0].mxu0
      %v410 = vadd.f32 0.0, %v409
      %v411 = vpop.f32.mrb[0].mxu0
      %412 = vmatprep.mubr.bf16.mxu0 0
      %413 = vmatmul.mubr.bf16.gmra.mrb[0].mxu0 %v265
      %v414 = vpop.f32.mrb[0].mxu0
      %v415 = vadd.f32 0.0, %v414
      %v416 = vpop.f32.mrb[0].mxu0
      %v417 = vpop.f32.mrb[0].mxu0
      %v418 = vadd.f32 0.0, %v417
      %v419 = vpop.f32.mrb[0].mxu0
      %420 = vmatprep.mubr.bf16.mxu0 0
      %421 = vmatmul.mubr.bf16.gmra.mrb[0].mxu0 %v266
      %v422 = vpop.f32.mrb[0].mxu0
      %v423 = vadd.f32 0.0, %v422
      %v424 = vpop.f32.mrb[0].mxu0
      %v425 = vpop.f32.mrb[0].mxu0
      %v426 = vadd.f32 0.0, %v425
      %v427 = vpop.f32.mrb[0].mxu0
      %428 = vmatprep.mubr.bf16.mxu0 0
      %429 = vmatmul.mubr.bf16.gmra.mrb[0].mxu0 %v267
      %v430 = vpop.f32.mrb[0].mxu0
      %v431 = vadd.f32 0.0, %v430
      %v432 = vpop.f32.mrb[0].mxu0
      %v433 = vpop.f32.mrb[0].mxu0
      %v434 = vadd.f32 0.0, %v433
      %v435 = vpop.f32.mrb[0].mxu0
      %436 = vmatprep.mubr.bf16.mxu0 0
      %437 = vmatmul.mubr.bf16.gmra.mrb[0].mxu0 %v268
      %v438 = vpop.f32.mrb[0].mxu0
      %v439 = vadd.f32 0.0, %v438
      %v440 = vpop.f32.mrb[0].mxu0
      %v441 = vpop.f32.mrb[0].mxu0
      %v442 = vadd.f32 0.0, %v441
      %v443 = vpop.f32.mrb[0].mxu0
      %444 = vmatprep.mubr.bf16.mxu0 0
      %445 = vmatmul.mubr.bf16.gmra.mrb[0].mxu0 %v269
      %v446 = vpop.f32.mrb[0].mxu0
      %v447 = vadd.f32 0.0, %v446
      %v448 = vpop.f32.mrb[0].mxu0
      %v449 = vpop.f32.mrb[0].mxu0
      %v450 = vadd.f32 0.0, %v449
      %v451 = vpop.f32.mrb[0].mxu0
      %452 = vmatprep.mubr.bf16.mxu0 0
      %453 = vmatmul.mubr.bf16.gmra.mrb[0].mxu0 %v270
      %v454 = vpop.f32.mrb[0].mxu0
      %v455 = vadd.f32 0.0, %v454
      %v456 = vpop.f32.mrb[0].mxu0
      %v457 = vpop.f32.mrb[0].mxu0
      %v458 = vadd.f32 0.0, %v457
      %v459 = vpop.f32.mrb[0].mxu0
      %460 = vmatprep.mubr.bf16.mxu0 0
      %461 = vmatmul.mubr.bf16.gmra.mrb[0].mxu0 %v271
      %v462 = vpop.f32.mrb[0].mxu0
      %v463 = vadd.f32 0.0, %v462
      %v464 = vpop.f32.mrb[0].mxu0
      %v465 = vpop.f32.mrb[0].mxu0
      %v466 = vadd.f32 0.0, %v465
      %v467 = vpop.f32.mrb[0].mxu0
      %468 = vmatprep.mubr.bf16.mxu0 0
      %469 = vmatmul.mubr.bf16.gmra.mrb[0].mxu0 %v272
      %v470 = vpop.f32.mrb[0].mxu0
      %v471 = vadd.f32 0.0, %v470
      %v472 = vpop.f32.mrb[0].mxu0
      %v473 = vpop.f32.mrb[0].mxu0
      %v474 = vadd.f32 0.0, %v473
      %v475 = vpop.f32.mrb[0].mxu0
      %476 = vmatprep.mubr.bf16.mxu0 0
      %477 = vmatmul.mubr.bf16.gmra.mrb[0].mxu0 %v273
      %v478 = vpop.f32.mrb[0].mxu0
      %v479 = vadd.f32 0.0, %v478
      %v480 = vpop.f32.mrb[0].mxu0
      %v481 = vpop.f32.mrb[0].mxu0
      %v482 = vadd.f32 0.0, %v481
      %v483 = vpop.f32.mrb[0].mxu0
      %484 = vmatprep.mubr.bf16.mxu0 0
      %485 = vmatmul.mubr.bf16.gmra.mrb[0].mxu0 %v274
      %v486 = vpop.f32.mrb[0].mxu0
      %v487 = vadd.f32 0.0, %v486
      %v488 = vpop.f32.mrb[0].mxu0
      %v489 = vpop.f32.mrb[0].mxu0
      %v490 = vadd.f32 0.0, %v489
      %v491 = vpop.f32.mrb[0].mxu0
      %492 = vmatprep.mubr.bf16.mxu0 0
      %493 = vmatmul.mubr.bf16.gmra.mrb[0].mxu0 %v275
      %v494 = vpop.f32.mrb[0].mxu0
      %v495 = vadd.f32 0.0, %v494
      %v496 = vpop.f32.mrb[0].mxu0
      %v497 = vpop.f32.mrb[0].mxu0
      %v498 = vadd.f32 0.0, %v497
      %v499 = vpop.f32.mrb[0].mxu0
      %500 = vdwg.mxu0
      %vm501 = vcmp.gt.f32.partialorder %v375, 0.0
      %vm502 = vcmp.gt.f32.partialorder %v378, 0.0
      %vm503 = vcmp.gt.f32.partialorder %v383, 0.0
      %vm504 = vcmp.gt.f32.partialorder %v386, 0.0
      %vm505 = vcmp.gt.f32.partialorder %v391, 0.0
      %vm506 = vcmp.gt.f32.partialorder %v394, 0.0
      %vm507 = vcmp.gt.f32.partialorder %v399, 0.0
      %vm508 = vcmp.gt.f32.partialorder %v402, 0.0
      %vm509 = vcmp.gt.f32.partialorder %v407, 0.0
      %vm510 = vcmp.gt.f32.partialorder %v410, 0.0
      %vm511 = vcmp.gt.f32.partialorder %v415, 0.0
      %vm512 = vcmp.gt.f32.partialorder %v418, 0.0
      %vm513 = vcmp.gt.f32.partialorder %v423, 0.0
      %vm514 = vcmp.gt.f32.partialorder %v426, 0.0
      %vm515 = vcmp.gt.f32.partialorder %v431, 0.0
      %vm516 = vcmp.gt.f32.partialorder %v434, 0.0
      %vm517 = vcmp.gt.f32.partialorder %v439, 0.0
      %vm518 = vcmp.gt.f32.partialorder %v442, 0.0
      %vm519 = vcmp.gt.f32.partialorder %v447, 0.0
      %vm520 = vcmp.gt.f32.partialorder %v450, 0.0
      %vm521 = vcmp.gt.f32.partialorder %v455, 0.0
      %vm522 = vcmp.gt.f32.partialorder %v458, 0.0
      %vm523 = vcmp.gt.f32.partialorder %v463, 0.0
      %vm524 = vcmp.gt.f32.partialorder %v466, 0.0
      %vm525 = vcmp.gt.f32.partialorder %v471, 0.0
      %vm526 = vcmp.gt.f32.partialorder %v474, 0.0
      %vm527 = vcmp.gt.f32.partialorder %v479, 0.0
      %vm528 = vcmp.gt.f32.partialorder %v482, 0.0
      %vm529 = vcmp.gt.f32.partialorder %v487, 0.0
      %vm530 = vcmp.gt.f32.partialorder %v490, 0.0
      %vm531 = vcmp.gt.f32.partialorder %v495, 0.0
      %vm532 = vcmp.gt.f32.partialorder %v498, 0.0
      %v533 = vmul.f32 %v375, 0.2
      %v534 = vmul.f32 %v378, 0.2
      %v535 = vmul.f32 %v383, 0.2
      %v536 = vmul.f32 %v386, 0.2
      %v537 = vmul.f32 %v391, 0.2
      %v538 = vmul.f32 %v394, 0.2
      %v539 = vmul.f32 %v399, 0.2
      %v540 = vmul.f32 %v402, 0.2
      %v541 = vmul.f32 %v407, 0.2
      %v542 = vmul.f32 %v410, 0.2
      %v543 = vmul.f32 %v415, 0.2
      %v544 = vmul.f32 %v418, 0.2
      %v545 = vmul.f32 %v423, 0.2
      %v546 = vmul.f32 %v426, 0.2
      %v547 = vmul.f32 %v431, 0.2
      %v548 = vmul.f32 %v434, 0.2
      %v549 = vmul.f32 %v439, 0.2
      %v550 = vmul.f32 %v442, 0.2
      %v551 = vmul.f32 %v447, 0.2
      %v552 = vmul.f32 %v450, 0.2
      %v553 = vmul.f32 %v455, 0.2
      %v554 = vmul.f32 %v458, 0.2
      %v555 = vmul.f32 %v463, 0.2
      %v556 = vmul.f32 %v466, 0.2
      %v557 = vmul.f32 %v471, 0.2
      %v558 = vmul.f32 %v474, 0.2
      %v559 = vmul.f32 %v479, 0.2
      %v560 = vmul.f32 %v482, 0.2
      %v561 = vmul.f32 %v487, 0.2
      %v562 = vmul.f32 %v490, 0.2
      %v563 = vmul.f32 %v495, 0.2
      %v564 = vmul.f32 %v498, 0.2
      %v565 = vsel %vm501, %v375, %v533
      %v566 = vsel %vm502, %v378, %v534
      %v567 = vsel %vm503, %v383, %v535
      %v568 = vsel %vm504, %v386, %v536
      %v569 = vsel %vm505, %v391, %v537
      %v570 = vsel %vm506, %v394, %v538
      %v571 = vsel %vm507, %v399, %v539
      %v572 = vsel %vm508, %v402, %v540
      %v573 = vsel %vm509, %v407, %v541
      %v574 = vsel %vm510, %v410, %v542
      %v575 = vsel %vm511, %v415, %v543
      %v576 = vsel %vm512, %v418, %v544
      %v577 = vsel %vm513, %v423, %v545
      %v578 = vsel %vm514, %v426, %v546
      %v579 = vsel %vm515, %v431, %v547
      %v580 = vsel %vm516, %v434, %v548
      %v581 = vsel %vm517, %v439, %v549
      %v582 = vsel %vm518, %v442, %v550
      %v583 = vsel %vm519, %v447, %v551
      %v584 = vsel %vm520, %v450, %v552
      %v585 = vsel %vm521, %v455, %v553
      %v586 = vsel %vm522, %v458, %v554
      %v587 = vsel %vm523, %v463, %v555
      %v588 = vsel %vm524, %v466, %v556
      %v589 = vsel %vm525, %v471, %v557
      %v590 = vsel %vm526, %v474, %v558
      %v591 = vsel %vm527, %v479, %v559
      %v592 = vsel %vm528, %v482, %v560
      %v593 = vsel %vm529, %v487, %v561
      %v594 = vsel %vm530, %v490, %v562
      %v595 = vsel %vm531, %v495, %v563
      %v596 = vsel %vm532, %v498, %v564
      %v597 = vpack.c.bf16 %v566, %v565
      %v598 = vpack.c.bf16 %v568, %v567
      %v599 = vpack.c.bf16 %v570, %v569
      %v600 = vpack.c.bf16 %v572, %v571
      %v601 = vpack.c.bf16 %v574, %v573
      %v602 = vpack.c.bf16 %v576, %v575
      %v603 = vpack.c.bf16 %v578, %v577
      %v604 = vpack.c.bf16 %v580, %v579
      %v605 = vpack.c.bf16 %v582, %v581
      %v606 = vpack.c.bf16 %v584, %v583
      %v607 = vpack.c.bf16 %v586, %v585
      %v608 = vpack.c.bf16 %v588, %v587
      %v609 = vpack.c.bf16 %v590, %v589
      %v610 = vpack.c.bf16 %v592, %v591
      %v611 = vpack.c.bf16 %v594, %v593
      %v612 = vpack.c.bf16 %v596, %v595
      %v629 = vunpack.c.l.b16 %v597
      %v630 = vunpack.c.h.b16 %v597
      %v631 = vunpack.c.l.b16 %v598
      %v632 = vunpack.c.h.b16 %v598
      %v633 = vunpack.c.l.b16 %v599
      %v634 = vunpack.c.h.b16 %v599
      %v635 = vunpack.c.l.b16 %v600
      %v636 = vunpack.c.h.b16 %v600
      %v637 = vunpack.c.l.b16 %v601
      %v638 = vunpack.c.h.b16 %v601
      %v639 = vunpack.c.l.b16 %v602
      %v640 = vunpack.c.h.b16 %v602
      %v641 = vunpack.c.l.b16 %v603
      %v642 = vunpack.c.h.b16 %v603
      %v643 = vunpack.c.l.b16 %v604
      %v644 = vunpack.c.h.b16 %v604
      %v645 = vunpack.c.l.b16 %v605
      %v646 = vunpack.c.h.b16 %v605
      %v647 = vunpack.c.l.b16 %v606
      %v648 = vunpack.c.h.b16 %v606
      %v649 = vunpack.c.l.b16 %v607
      %v650 = vunpack.c.h.b16 %v607
      %v651 = vunpack.c.l.b16 %v608
      %v652 = vunpack.c.h.b16 %v608
      %v653 = vunpack.c.l.b16 %v609
      %v654 = vunpack.c.h.b16 %v609
      %v655 = vunpack.c.l.b16 %v610
      %v656 = vunpack.c.h.b16 %v610
      %v657 = vunpack.c.l.b16 %v611
      %v658 = vunpack.c.h.b16 %v611
      %v659 = vunpack.c.l.b16 %v612
      %v660 = vunpack.c.h.b16 %v612
      %v661 = vpack.c.b16 %v629, %v629
      %v662 = vpack.c.b16 %v630, %v630
      %v663 = vpack.c.b16 %v631, %v631
      %v664 = vpack.c.b16 %v632, %v632
      %v665 = vpack.c.b16 %v633, %v633
      %v666 = vpack.c.b16 %v634, %v634
      %v667 = vpack.c.b16 %v635, %v635
      %v668 = vpack.c.b16 %v636, %v636
      %v669 = vpack.c.b16 %v637, %v637
      %v670 = vpack.c.b16 %v638, %v638
      %v671 = vpack.c.b16 %v639, %v639
      %v672 = vpack.c.b16 %v640, %v640
      %v673 = vpack.c.b16 %v641, %v641
      %v674 = vpack.c.b16 %v642, %v642
      %v675 = vpack.c.b16 %v643, %v643
      %v676 = vpack.c.b16 %v644, %v644
      %v677 = vpack.c.b16 %v645, %v645
      %v678 = vpack.c.b16 %v646, %v646
      %v679 = vpack.c.b16 %v647, %v647
      %v680 = vpack.c.b16 %v648, %v648
      %v681 = vpack.c.b16 %v649, %v649
      %v682 = vpack.c.b16 %v650, %v650
      %v683 = vpack.c.b16 %v651, %v651
      %v684 = vpack.c.b16 %v652, %v652
      %v685 = vpack.c.b16 %v653, %v653
      %v686 = vpack.c.b16 %v654, %v654
      %v687 = vpack.c.b16 %v655, %v655
      %v688 = vpack.c.b16 %v656, %v656
      %v689 = vpack.c.b16 %v657, %v657
      %v690 = vpack.c.b16 %v658, %v658
      %v691 = vpack.c.b16 %v659, %v659
      %v692 = vpack.c.b16 %v660, %v660
      %725 = vst [vmem:[%s145] sm:$0xf] %v661
      %726 = vst [vmem:[%s145 + $0x4] sm:$0xf] %v662
      %727 = vst [vmem:[%s145 + $0x8] sm:$0xf] %v663
      %728 = vst [vmem:[%s145 + $0xc] sm:$0xf] %v664
      %729 = vst [vmem:[%s145 + $0x10] sm:$0xf] %v665
      %730 = vst [vmem:[%s145 + $0x14] sm:$0xf] %v666
      %731 = vst [vmem:[%s145 + $0x18] sm:$0xf] %v667
      %732 = vst [vmem:[%s145 + $0x1c] sm:$0xf] %v668
      %733 = vst [vmem:[%s145 + $0x20] sm:$0xf] %v669
      %734 = vst [vmem:[%s145 + $0x24] sm:$0xf] %v670
      %735 = vst [vmem:[%s145 + $0x28] sm:$0xf] %v671
      %736 = vst [vmem:[%s145 + $0x2c] sm:$0xf] %v672
      %737 = vst [vmem:[%s145 + $0x30] sm:$0xf] %v673
      %738 = vst [vmem:[%s145 + $0x34] sm:$0xf] %v674
      %739 = vst [vmem:[%s145 + $0x38] sm:$0xf] %v675
      %740 = vst [vmem:[%s145 + $0x3c] sm:$0xf] %v676
      %741 = vst [vmem:[%s145 + $0x40] sm:$0xf] %v677
      %742 = vst [vmem:[%s145 + $0x44] sm:$0xf] %v678
      %743 = vst [vmem:[%s145 + $0x48] sm:$0xf] %v679
      %744 = vst [vmem:[%s145 + $0x4c] sm:$0xf] %v680
      %745 = vst [vmem:[%s145 + $0x50] sm:$0xf] %v681
      %746 = vst [vmem:[%s145 + $0x54] sm:$0xf] %v682
      %747 = vst [vmem:[%s145 + $0x58] sm:$0xf] %v683
      %748 = vst [vmem:[%s145 + $0x5c] sm:$0xf] %v684
      %749 = vst [vmem:[%s145 + $0x60] sm:$0xf] %v685
      %750 = vst [vmem:[%s145 + $0x64] sm:$0xf] %v686
      %751 = vst [vmem:[%s145 + $0x68] sm:$0xf] %v687
      %752 = vst [vmem:[%s145 + $0x6c] sm:$0xf] %v688
      %753 = vst [vmem:[%s145 + $0x70] sm:$0xf] %v689
      %754 = vst [vmem:[%s145 + $0x74] sm:$0xf] %v690
      %755 = vst [vmem:[%s145 + $0x78] sm:$0xf] %v691
      %756 = vst [vmem:[%s145 + $0x7c] sm:$0xf] %v692
      %s757 = smul.u32 32, %s13
      %p758 = scmp.lt.s32.totalorder %s757, 63
      %s759 = scalar_select %p758, %s757, 63
      %s760 = smul.addr %s759, 4
      %s761 = scalar_lea.vmem %s2, %s760
      // Predicated region
      $region29: #{cnn_vae_forward.10} parent=27 // pred_check
        %p762 = pneg %p78
      $region30: #{cnn_vae_forward.10} parent=27 // pred_check_branch
        %764 = sbr.rel (%p762) target = $region32
      $region31: #{cnn_vae_forward.10} parent=27 // pred_region
        %s765 = smul.u32 32, %s13
      $region32: #{cnn_vae_forward.10} parent=27 // pred_fallthru
        _
    $region28: #{cnn_vae_forward.10} parent=5 // pred_fallthru
      _
    %p766 = scmp.le.s32.totalorder 2, %s8
    // Predicated region
    $region33: #{cnn_vae_forward.10} parent=5 // pred_check
      %p767 = pneg %p766
    $region34: #{cnn_vae_forward.10} parent=5 // pred_check_branch
      %769 = sbr.rel (%p767) target = $region36
    $region35: #{cnn_vae_forward.10} parent=5 // pred_region
      %s770 = ssub.s32 %s8, 2
      // Predicated region
      $region37: #{cnn_vae_forward.10} parent=35 // pred_check
        %p771 = pneg %p84
      $region38: #{cnn_vae_forward.10} parent=35 // pred_check_branch
        %773 = sbr.rel (%p771) target = $region40
      $region39: #{cnn_vae_forward.10} parent=35 // pred_region
        %s774 = smul.u32 32, %s14
        %p775 = scmp.lt.s32.totalorder %s774, 63
        %s776 = scalar_select %p775, %s774, 63
        %s777 = smul.addr %s776, 4
        %s778 = scalar_lea.vmem %s2, %s777
      $region40: #{cnn_vae_forward.10} parent=35 // pred_fallthru
        _
    $region36: #{cnn_vae_forward.10} parent=5 // pred_fallthru
      _
  $region6: #{cnn_vae_forward.10} parent=0 // loop_footer
    %s12 = sadd.s32 1, %s8
  $region7: #{cnn_vae_forward.10} parent=0 // loop_footer_branch
    %7 = sbr.rel target = $region3
  $region8: #{cnn_vae_forward.10} parent=0 // loop_exit
    _

// kernel: cnn_vae_forward.11
$region0: #{cnn_vae_forward.11}
  #allocation0 [shape = 'u32[]', space=smem, size = 0x4, offset = 0x4, fixed_abs, tag = 'smem constant byte address 0x4 - core index']
  #allocation1 [shape = 'u32[144,128]{1,0:T(1,128)}', space=vmem, size = 0x12000, scoped, tag = 'internal scratch']
  %s0 = inlined_call_operand.vmem [shape: bf16[128,128], index: 0, kind: input, shape index: {}]
  %s1 = inlined_call_operand.vmem [shape: bf16[128,128], index: 1, kind: input, shape index: {}]
  %s2 = inlined_call_operand.vmem [shape: f32[1,128], index: 2, kind: input, shape index: {}]
  %s3 = inlined_call_operand.vmem [shape: f32[1,128], index: 3, kind: input, shape index: {}]
  %s4 = inlined_call_operand.vmem [shape: bf16[128,128], index: 4, kind: output, shape index: {}]
  %s5 = sld [smem:[#allocation0]]
  $region26: #{cnn_vae_forward.11} parent=0
    _
  %s7 = ssub.s32 1, %s5
  %s8 = scalar_select 0, %s7, %s5
  // Predicated region
  $region2: #{cnn_vae_forward.11} parent=0 // pred_check
    _
  $region3: #{cnn_vae_forward.11} parent=0 // pred_check_branch
    %10 = sbr.rel (0) target = $region5
  $region4: #{cnn_vae_forward.11} parent=0 // pred_region
    _
  $region5: #{cnn_vae_forward.11} parent=0 // pred_fallthru
    _
  // Predicated region
  $region6: #{cnn_vae_forward.11} parent=0 // pred_check
    _
  $region7: #{cnn_vae_forward.11} parent=0 // pred_check_branch
    %12 = sbr.rel (0) target = $region9
  $region8: #{cnn_vae_forward.11} parent=0 // pred_region
    _
  $region9: #{cnn_vae_forward.11} parent=0 // pred_fallthru
    _
  // Predicated region
  $region10: #{cnn_vae_forward.11} parent=0 // pred_check
    _
  $region11: #{cnn_vae_forward.11} parent=0 // pred_check_branch
    %14 = sbr.rel (0) target = $region13
  $region12: #{cnn_vae_forward.11} parent=0 // pred_region
    _
  $region13: #{cnn_vae_forward.11} parent=0 // pred_fallthru
    _
  // Predicated region
  $region14: #{cnn_vae_forward.11} parent=0 // pred_check
    _
  $region15: #{cnn_vae_forward.11} parent=0 // pred_check_branch
    %16 = sbr.rel (0) target = $region17
  $region16: #{cnn_vae_forward.11} parent=0 // pred_region
    _
  $region17: #{cnn_vae_forward.11} parent=0 // pred_fallthru
    _
  %v18 = vld [vmem:[%s0] sm:$0xf]
  %v19 = vld [vmem:[%s0 + $0x4] sm:$0xf]
  %v20 = vld [vmem:[%s0 + $0x8] sm:$0xf]
  %v21 = vld [vmem:[%s0 + $0xc] sm:$0xf]
  %v22 = vld [vmem:[%s0 + $0x10] sm:$0xf]
  %v23 = vld [vmem:[%s0 + $0x14] sm:$0xf]
  %v24 = vld [vmem:[%s0 + $0x18] sm:$0xf]
  %v25 = vld [vmem:[%s0 + $0x1c] sm:$0xf]
  %v26 = vld [vmem:[%s0 + $0x20] sm:$0xf]
  %v27 = vld [vmem:[%s0 + $0x24] sm:$0xf]
  %v28 = vld [vmem:[%s0 + $0x28] sm:$0xf]
  %v29 = vld [vmem:[%s0 + $0x2c] sm:$0xf]
  %v30 = vld [vmem:[%s0 + $0x30] sm:$0xf]
  %v31 = vld [vmem:[%s0 + $0x34] sm:$0xf]
  %v32 = vld [vmem:[%s0 + $0x38] sm:$0xf]
  %v33 = vld [vmem:[%s0 + $0x3c] sm:$0xf]
  %v34 = vld [vmem:[%s1] sm:$0xf]
  %v35 = vld [vmem:[%s1 + $0x4] sm:$0xf]
  %v36 = vld [vmem:[%s1 + $0x8] sm:$0xf]
  %v37 = vld [vmem:[%s1 + $0xc] sm:$0xf]
  %v38 = vld [vmem:[%s1 + $0x10] sm:$0xf]
  %v39 = vld [vmem:[%s1 + $0x14] sm:$0xf]
  %v40 = vld [vmem:[%s1 + $0x18] sm:$0xf]
  %v41 = vld [vmem:[%s1 + $0x1c] sm:$0xf]
  %v42 = vld [vmem:[%s1 + $0x20] sm:$0xf]
  %v43 = vld [vmem:[%s1 + $0x24] sm:$0xf]
  %v44 = vld [vmem:[%s1 + $0x28] sm:$0xf]
  %v45 = vld [vmem:[%s1 + $0x2c] sm:$0xf]
  %v46 = vld [vmem:[%s1 + $0x30] sm:$0xf]
  %v47 = vld [vmem:[%s1 + $0x34] sm:$0xf]
  %v48 = vld [vmem:[%s1 + $0x38] sm:$0xf]
  %v49 = vld [vmem:[%s1 + $0x3c] sm:$0xf]
  %v66 = vunpack.c.l.b16 %v18
  %v67 = vunpack.c.l.b16 %v19
  %v68 = vunpack.c.l.b16 %v20
  %v69 = vunpack.c.l.b16 %v21
  %v70 = vunpack.c.l.b16 %v22
  %v71 = vunpack.c.l.b16 %v23
  %v72 = vunpack.c.l.b16 %v24
  %v73 = vunpack.c.l.b16 %v25
  %v74 = vunpack.c.l.b16 %v26
  %v75 = vunpack.c.l.b16 %v27
  %v76 = vunpack.c.l.b16 %v28
  %v77 = vunpack.c.l.b16 %v29
  %v78 = vunpack.c.l.b16 %v30
  %v79 = vunpack.c.l.b16 %v31
  %v80 = vunpack.c.l.b16 %v32
  %v81 = vunpack.c.l.b16 %v33
  %v82 = vpack.c.b16 %v67, %v66
  %v83 = vpack.c.b16 %v69, %v68
  %v84 = vpack.c.b16 %v71, %v70
  %v85 = vpack.c.b16 %v73, %v72
  %v86 = vpack.c.b16 %v75, %v74
  %v87 = vpack.c.b16 %v77, %v76
  %v88 = vpack.c.b16 %v79, %v78
  %v89 = vpack.c.b16 %v81, %v80
  %v114 = vunpack.c.l.b16 %v34
  %v115 = vunpack.c.l.b16 %v35
  %v116 = vunpack.c.l.b16 %v36
  %v117 = vunpack.c.l.b16 %v37
  %v118 = vunpack.c.l.b16 %v38
  %v119 = vunpack.c.l.b16 %v39
  %v120 = vunpack.c.l.b16 %v40
  %v121 = vunpack.c.l.b16 %v41
  %v122 = vunpack.c.l.b16 %v42
  %v123 = vunpack.c.l.b16 %v43
  %v124 = vunpack.c.l.b16 %v44
  %v125 = vunpack.c.l.b16 %v45
  %v126 = vunpack.c.l.b16 %v46
  %v127 = vunpack.c.l.b16 %v47
  %v128 = vunpack.c.l.b16 %v48
  %v129 = vunpack.c.l.b16 %v49
  %v130 = vpack.c.b16 %v115, %v114
  %v131 = vpack.c.b16 %v117, %v116
  %v132 = vpack.c.b16 %v119, %v118
  %v133 = vpack.c.b16 %v121, %v120
  %v134 = vpack.c.b16 %v123, %v122
  %v135 = vpack.c.b16 %v125, %v124
  %v136 = vpack.c.b16 %v127, %v126
  %v137 = vpack.c.b16 %v129, %v128
  %146 = vmatprep.subr.bf16.mxu0 0
  %147 = vmatpush1.bf16.msra.mxu0 %v130
  %148 = vmatprep.subr.bf16.mxu0 0
  %149 = vmatpush1.bf16.msra.mxu0 %v131
  %150 = vmatprep.subr.bf16.mxu0 0
  %151 = vmatpush1.bf16.msra.mxu0 %v132
  %152 = vmatprep.subr.bf16.mxu0 0
  %153 = vmatpush1.bf16.msra.mxu0 %v133
  %154 = vmatprep.subr.bf16.mxu0 0
  %155 = vmatpush1.bf16.msra.mxu0 %v134
  %156 = vmatprep.subr.bf16.mxu0 0
  %157 = vmatpush1.bf16.msra.mxu0 %v135
  %158 = vmatprep.subr.bf16.mxu0 0
  %159 = vmatpush1.bf16.msra.mxu0 %v136
  %160 = vmatprep.subr.bf16.mxu0 0
  %161 = vmatpush1.bf16.msra.mxu0 %v137
  %162 = vmatprep.subr.bf16.mxu0 0
  %163 = vmatpush1.bf16.msra.mxu0 0
  %164 = vmatprep.subr.bf16.mxu0 0
  %165 = vmatpush1.bf16.msra.mxu0 0
  %166 = vmatprep.subr.bf16.mxu0 0
  %167 = vmatpush1.bf16.msra.mxu0 0
  %168 = vmatprep.subr.bf16.mxu0 0
  %169 = vmatpush1.bf16.msra.mxu0 0
  %170 = vmatprep.subr.bf16.mxu0 0
  %171 = vmatpush1.bf16.msra.mxu0 0
  %172 = vmatprep.subr.bf16.mxu0 0
  %173 = vmatpush1.bf16.msra.mxu0 0
  %174 = vmatprep.subr.bf16.mxu0 0
  %175 = vmatpush1.bf16.msra.mxu0 0
  %176 = vmatprep.subr.bf16.mxu0 0
  %177 = vmatpush1.bf16.msra.mxu0 0
  %178 = vmatprep.mubr.bf16.mxu0 0
  %179 = vmatmul.mubr.bf16.gmra.mrb[0].mxu0 %v82
  %v180 = vpop.f32.mrb[0].mxu0
  %v181 = vadd.f32 0.0, %v180
  %v182 = vpop.f32.mrb[0].mxu0
  %v183 = vpop.f32.mrb[0].mxu0
  %v184 = vadd.f32 0.0, %v183
  %v185 = vpop.f32.mrb[0].mxu0
  %186 = vmatprep.mubr.bf16.mxu0 0
  %187 = vmatmul.mubr.bf16.gmra.mrb[0].mxu0 %v83
  %v188 = vpop.f32.mrb[0].mxu0
  %v189 = vadd.f32 0.0, %v188
  %v190 = vpop.f32.mrb[0].mxu0
  %v191 = vpop.f32.mrb[0].mxu0
  %v192 = vadd.f32 0.0, %v191
  %v193 = vpop.f32.mrb[0].mxu0
  %194 = vmatprep.mubr.bf16.mxu0 0
  %195 = vmatmul.mubr.bf16.gmra.mrb[0].mxu0 %v84
  %v196 = vpop.f32.mrb[0].mxu0
  %v197 = vadd.f32 0.0, %v196
  %v198 = vpop.f32.mrb[0].mxu0
  %v199 = vpop.f32.mrb[0].mxu0
  %v200 = vadd.f32 0.0, %v199
  %v201 = vpop.f32.mrb[0].mxu0
  %202 = vmatprep.mubr.bf16.mxu0 0
  %203 = vmatmul.mubr.bf16.gmra.mrb[0].mxu0 %v85
  %v204 = vpop.f32.mrb[0].mxu0
  %v205 = vadd.f32 0.0, %v204
  %v206 = vpop.f32.mrb[0].mxu0
  %v207 = vpop.f32.mrb[0].mxu0
  %v208 = vadd.f32 0.0, %v207
  %v209 = vpop.f32.mrb[0].mxu0
  %210 = vmatprep.mubr.bf16.mxu0 0
  %211 = vmatmul.mubr.bf16.gmra.mrb[0].mxu0 %v86
  %v212 = vpop.f32.mrb[0].mxu0
  %v213 = vadd.f32 0.0, %v212
  %v214 = vpop.f32.mrb[0].mxu0
  %v215 = vpop.f32.mrb[0].mxu0
  %v216 = vadd.f32 0.0, %v215
  %v217 = vpop.f32.mrb[0].mxu0
  %218 = vmatprep.mubr.bf16.mxu0 0
  %219 = vmatmul.mubr.bf16.gmra.mrb[0].mxu0 %v87
  %v220 = vpop.f32.mrb[0].mxu0
  %v221 = vadd.f32 0.0, %v220
  %v222 = vpop.f32.mrb[0].mxu0
  %v223 = vpop.f32.mrb[0].mxu0
  %v224 = vadd.f32 0.0, %v223
  %v225 = vpop.f32.mrb[0].mxu0
  %226 = vmatprep.mubr.bf16.mxu0 0
  %227 = vmatmul.mubr.bf16.gmra.mrb[0].mxu0 %v88
  %v228 = vpop.f32.mrb[0].mxu0
  %v229 = vadd.f32 0.0, %v228
  %v230 = vpop.f32.mrb[0].mxu0
  %v231 = vpop.f32.mrb[0].mxu0
  %v232 = vadd.f32 0.0, %v231
  %v233 = vpop.f32.mrb[0].mxu0
  %234 = vmatprep.mubr.bf16.mxu0 0
  %235 = vmatmul.mubr.bf16.gmra.mrb[0].mxu0 %v89
  %v236 = vpop.f32.mrb[0].mxu0
  %v237 = vadd.f32 0.0, %v236
  %v238 = vpop.f32.mrb[0].mxu0
  %v239 = vpop.f32.mrb[0].mxu0
  %v240 = vadd.f32 0.0, %v239
  %v241 = vpop.f32.mrb[0].mxu0
  %242 = vdwg.mxu0
  %v243 = vadd.f32 %v181, %v184
  %v244 = vadd.f32 %v243, %v189
  %v245 = vadd.f32 %v244, %v192
  %v246 = vadd.f32 %v245, %v197
  %v247 = vadd.f32 %v246, %v200
  %v248 = vadd.f32 %v247, %v205
  %v249 = vadd.f32 %v248, %v208
  %v250 = vadd.f32 %v249, %v213
  %v251 = vadd.f32 %v250, %v216
  %v252 = vadd.f32 %v251, %v221
  %v253 = vadd.f32 %v252, %v224
  %v254 = vadd.f32 %v253, %v229
  %v255 = vadd.f32 %v254, %v232
  %v256 = vadd.f32 %v255, %v237
  %v257 = vadd.f32 %v256, %v240
  %v258 = vrot.slane %v257, 4
  %v259 = vadd.f32 %v257, %v258
  %v260 = vrot.slane %v259, 2
  %v261 = vadd.f32 %v259, %v260
  %v262 = vrot.slane %v261, 1
  %v263 = vadd.f32 %v261, %v262
  %v264 = vadd.f32 %v263, 0.0
  %v265 = vmul.f32 %v264, 0.0078125
  %v266 = vsub.f32 %v181, %v265
  %v267 = vsub.f32 %v184, %v265
  %v268 = vsub.f32 %v189, %v265
  %v269 = vsub.f32 %v192, %v265
  %v270 = vsub.f32 %v197, %v265
  %v271 = vsub.f32 %v200, %v265
  %v272 = vsub.f32 %v205, %v265
  %v273 = vsub.f32 %v208, %v265
  %v274 = vsub.f32 %v213, %v265
  %v275 = vsub.f32 %v216, %v265
  %v276 = vsub.f32 %v221, %v265
  %v277 = vsub.f32 %v224, %v265
  %v278 = vsub.f32 %v229, %v265
  %v279 = vsub.f32 %v232, %v265
  %v280 = vsub.f32 %v237, %v265
  %v281 = vsub.f32 %v240, %v265
  %v282 = vmul.f32 %v266, %v266
  %v283 = vmul.f32 %v267, %v267
  %v284 = vmul.f32 %v268, %v268
  %v285 = vmul.f32 %v269, %v269
  %v286 = vmul.f32 %v270, %v270
  %v287 = vmul.f32 %v271, %v271
  %v288 = vmul.f32 %v272, %v272
  %v289 = vmul.f32 %v273, %v273
  %v290 = vmul.f32 %v274, %v274
  %v291 = vmul.f32 %v275, %v275
  %v292 = vmul.f32 %v276, %v276
  %v293 = vmul.f32 %v277, %v277
  %v294 = vmul.f32 %v278, %v278
  %v295 = vmul.f32 %v279, %v279
  %v296 = vmul.f32 %v280, %v280
  %v297 = vmul.f32 %v281, %v281
  %v298 = vadd.f32 %v282, %v283
  %v299 = vadd.f32 %v298, %v284
  %v300 = vadd.f32 %v299, %v285
  %v301 = vadd.f32 %v300, %v286
  %v302 = vadd.f32 %v301, %v287
  %v303 = vadd.f32 %v302, %v288
  %v304 = vadd.f32 %v303, %v289
  %v305 = vadd.f32 %v304, %v290
  %v306 = vadd.f32 %v305, %v291
  %v307 = vadd.f32 %v306, %v292
  %v308 = vadd.f32 %v307, %v293
  %v309 = vadd.f32 %v308, %v294
  %v310 = vadd.f32 %v309, %v295
  %v311 = vadd.f32 %v310, %v296
  %v312 = vadd.f32 %v311, %v297
  %v313 = vrot.slane %v312, 4
  %v314 = vadd.f32 %v312, %v313
  %v315 = vrot.slane %v314, 2
  %v316 = vadd.f32 %v314, %v315
  %v317 = vrot.slane %v316, 1
  %v318 = vadd.f32 %v316, %v317
  %v319 = vadd.f32 %v318, 0.0
  %v320 = vmul.f32 %v319, 0.0078125
  %v321 = vadd.f32 %v320, 1e-05
  %v322 = vrsqrt.pop %v321
  %v323 = vld [vmem:[%s2] sm:$0x1]
  %v324 = vmul.f32 %v322, %v323
  %v325 = vlaneseq
  %v326 = vshrl.u32 %v325, 7
  %v327 = vsub.s32 0, %v326
  %v328 = vrot.slane %v324, %v327
  %v329 = vmul.f32 %v266, %v328
  %v330 = vmul.f32 %v267, %v328
  %v331 = vmul.f32 %v268, %v328
  %v332 = vmul.f32 %v269, %v328
  %v333 = vmul.f32 %v270, %v328
  %v334 = vmul.f32 %v271, %v328
  %v335 = vmul.f32 %v272, %v328
  %v336 = vmul.f32 %v273, %v328
  %v337 = vmul.f32 %v274, %v328
  %v338 = vmul.f32 %v275, %v328
  %v339 = vmul.f32 %v276, %v328
  %v340 = vmul.f32 %v277, %v328
  %v341 = vmul.f32 %v278, %v328
  %v342 = vmul.f32 %v279, %v328
  %v343 = vmul.f32 %v280, %v328
  %v344 = vmul.f32 %v281, %v328
  %v345 = vld [vmem:[%s3] sm:$0x1]
  %v347 = vlaneseq
  %v348 = vshrl.u32 %v347, 7
  %v349 = vsub.s32 0, %v348
  %v350 = vrot.slane %v345, %v349
  %v352 = vadd.f32 %v329, %v350
  %v353 = vadd.f32 %v330, %v350
  %v354 = vadd.f32 %v331, %v350
  %v355 = vadd.f32 %v332, %v350
  %v356 = vadd.f32 %v333, %v350
  %v357 = vadd.f32 %v334, %v350
  %v358 = vadd.f32 %v335, %v350
  %v359 = vadd.f32 %v336, %v350
  %v360 = vadd.f32 %v337, %v350
  %v361 = vadd.f32 %v338, %v350
  %v362 = vadd.f32 %v339, %v350
  %v363 = vadd.f32 %v340, %v350
  %v364 = vadd.f32 %v341, %v350
  %v365 = vadd.f32 %v342, %v350
  %v366 = vadd.f32 %v343, %v350
  %v367 = vadd.f32 %v344, %v350
  %vm368 = vcmp.gt.f32.partialorder %v352, 0.0
  %vm369 = vcmp.gt.f32.partialorder %v353, 0.0
  %vm370 = vcmp.gt.f32.partialorder %v354, 0.0
  %vm371 = vcmp.gt.f32.partialorder %v355, 0.0
  %vm372 = vcmp.gt.f32.partialorder %v356, 0.0
  %vm373 = vcmp.gt.f32.partialorder %v357, 0.0
  %vm374 = vcmp.gt.f32.partialorder %v358, 0.0
  %vm375 = vcmp.gt.f32.partialorder %v359, 0.0
  %vm376 = vcmp.gt.f32.partialorder %v360, 0.0
  %vm377 = vcmp.gt.f32.partialorder %v361, 0.0
  %vm378 = vcmp.gt.f32.partialorder %v362, 0.0
  %vm379 = vcmp.gt.f32.partialorder %v363, 0.0
  %vm380 = vcmp.gt.f32.partialorder %v364, 0.0
  %vm381 = vcmp.gt.f32.partialorder %v365, 0.0
  %vm382 = vcmp.gt.f32.partialorder %v366, 0.0
  %vm383 = vcmp.gt.f32.partialorder %v367, 0.0
  %v384 = vmul.f32 %v352, 0.2
  %v385 = vmul.f32 %v353, 0.2
  %v386 = vmul.f32 %v354, 0.2
  %v387 = vmul.f32 %v355, 0.2
  %v388 = vmul.f32 %v356, 0.2
  %v389 = vmul.f32 %v357, 0.2
  %v390 = vmul.f32 %v358, 0.2
  %v391 = vmul.f32 %v359, 0.2
  %v392 = vmul.f32 %v360, 0.2
  %v393 = vmul.f32 %v361, 0.2
  %v394 = vmul.f32 %v362, 0.2
  %v395 = vmul.f32 %v363, 0.2
  %v396 = vmul.f32 %v364, 0.2
  %v397 = vmul.f32 %v365, 0.2
  %v398 = vmul.f32 %v366, 0.2
  %v399 = vmul.f32 %v367, 0.2
  %v400 = vsel %vm368, %v352, %v384
  %v401 = vsel %vm369, %v353, %v385
  %v402 = vsel %vm370, %v354, %v386
  %v403 = vsel %vm371, %v355, %v387
  %v404 = vsel %vm372, %v356, %v388
  %v405 = vsel %vm373, %v357, %v389
  %v406 = vsel %vm374, %v358, %v390
  %v407 = vsel %vm375, %v359, %v391
  %v408 = vsel %vm376, %v360, %v392
  %v409 = vsel %vm377, %v361, %v393
  %v410 = vsel %vm378, %v362, %v394
  %v411 = vsel %vm379, %v363, %v395
  %v412 = vsel %vm380, %v364, %v396
  %v413 = vsel %vm381, %v365, %v397
  %v414 = vsel %vm382, %v366, %v398
  %v415 = vsel %vm383, %v367, %v399
  %v416 = vpack.c.bf16 %v401, %v400
  %v417 = vpack.c.bf16 %v403, %v402
  %v418 = vpack.c.bf16 %v405, %v404
  %v419 = vpack.c.bf16 %v407, %v406
  %v420 = vpack.c.bf16 %v409, %v408
  %v421 = vpack.c.bf16 %v411, %v410
  %v422 = vpack.c.bf16 %v413, %v412
  %v423 = vpack.c.bf16 %v415, %v414
  %v432 = vunpack.c.l.b16 %v416
  %v433 = vunpack.c.h.b16 %v416
  %v434 = vunpack.c.l.b16 %v417
  %v435 = vunpack.c.h.b16 %v417
  %v436 = vunpack.c.l.b16 %v418
  %v437 = vunpack.c.h.b16 %v418
  %v438 = vunpack.c.l.b16 %v419
  %v439 = vunpack.c.h.b16 %v419
  %v440 = vunpack.c.l.b16 %v420
  %v441 = vunpack.c.h.b16 %v420
  %v442 = vunpack.c.l.b16 %v421
  %v443 = vunpack.c.h.b16 %v421
  %v444 = vunpack.c.l.b16 %v422
  %v445 = vunpack.c.h.b16 %v422
  %v446 = vunpack.c.l.b16 %v423
  %v447 = vunpack.c.h.b16 %v423
  %v448 = vpack.c.b16 %v432, %v432
  %v449 = vpack.c.b16 %v433, %v433
  %v450 = vpack.c.b16 %v434, %v434
  %v451 = vpack.c.b16 %v435, %v435
  %v452 = vpack.c.b16 %v436, %v436
  %v453 = vpack.c.b16 %v437, %v437
  %v454 = vpack.c.b16 %v438, %v438
  %v455 = vpack.c.b16 %v439, %v439
  %v456 = vpack.c.b16 %v440, %v440
  %v457 = vpack.c.b16 %v441, %v441
  %v458 = vpack.c.b16 %v442, %v442
  %v459 = vpack.c.b16 %v443, %v443
  %v460 = vpack.c.b16 %v444, %v444
  %v461 = vpack.c.b16 %v445, %v445
  %v462 = vpack.c.b16 %v446, %v446
  %v463 = vpack.c.b16 %v447, %v447
  %480 = vst [vmem:[%s4] sm:$0xf] %v448
  %481 = vst [vmem:[%s4 + $0x4] sm:$0xf] %v449
  %482 = vst [vmem:[%s4 + $0x8] sm:$0xf] %v450
  %483 = vst [vmem:[%s4 + $0xc] sm:$0xf] %v451
  %484 = vst [vmem:[%s4 + $0x10] sm:$0xf] %v452
  %485 = vst [vmem:[%s4 + $0x14] sm:$0xf] %v453
  %486 = vst [vmem:[%s4 + $0x18] sm:$0xf] %v454
  %487 = vst [vmem:[%s4 + $0x1c] sm:$0xf] %v455
  %488 = vst [vmem:[%s4 + $0x20] sm:$0xf] %v456
  %489 = vst [vmem:[%s4 + $0x24] sm:$0xf] %v457
  %490 = vst [vmem:[%s4 + $0x28] sm:$0xf] %v458
  %491 = vst [vmem:[%s4 + $0x2c] sm:$0xf] %v459
  %492 = vst [vmem:[%s4 + $0x30] sm:$0xf] %v460
  %493 = vst [vmem:[%s4 + $0x34] sm:$0xf] %v461
  %494 = vst [vmem:[%s4 + $0x38] sm:$0xf] %v462
  %495 = vst [vmem:[%s4 + $0x3c] sm:$0xf] %v463
  // Predicated region
  $region18: #{cnn_vae_forward.11} parent=0 // pred_check
    _
  $region19: #{cnn_vae_forward.11} parent=0 // pred_check_branch
    %497 = sbr.rel (0) target = $region21
  $region20: #{cnn_vae_forward.11} parent=0 // pred_region
    _
  $region21: #{cnn_vae_forward.11} parent=0 // pred_fallthru
    _
  // Predicated region
  $region22: #{cnn_vae_forward.11} parent=0 // pred_check
    _
  $region23: #{cnn_vae_forward.11} parent=0 // pred_check_branch
    %499 = sbr.rel (0) target = $region25
  $region24: #{cnn_vae_forward.11} parent=0 // pred_region
    _
  $region25: #{cnn_vae_forward.11} parent=0 // pred_fallthru
    _

// kernel: cnn_vae_forward.12
$region0: #{cnn_vae_forward.12}
  #allocation0 [shape = 'u32[]', space=smem, size = 0x4, offset = 0x4, fixed_abs, tag = 'smem constant byte address 0x4 - core index']
  #allocation1 [shape = 'u32[144,128]{1,0:T(1,128)}', space=vmem, size = 0x12000, scoped, tag = 'internal scratch']
  %s0 = inlined_call_operand.vmem [shape: bf16[32,256], index: 0, kind: input, shape index: {}]
  %s1 = inlined_call_operand.vmem [shape: bf16[256,128], index: 1, kind: input, shape index: {}]
  %s2 = inlined_call_operand.vmem [shape: f32[1,128], index: 2, kind: input, shape index: {}]
  %s3 = inlined_call_operand.vmem [shape: f32[1,128], index: 3, kind: input, shape index: {}]
  %s4 = inlined_call_operand.vmem [shape: bf16[32,128], index: 4, kind: output, shape index: {}]
  %s5 = sld [smem:[#allocation0]]
  $region26: #{cnn_vae_forward.12} parent=0
    _
  %s7 = ssub.s32 1, %s5
  %s8 = scalar_select 0, %s7, %s5
  // Predicated region
  $region2: #{cnn_vae_forward.12} parent=0 // pred_check
    _
  $region3: #{cnn_vae_forward.12} parent=0 // pred_check_branch
    %10 = sbr.rel (0) target = $region5
  $region4: #{cnn_vae_forward.12} parent=0 // pred_region
    _
  $region5: #{cnn_vae_forward.12} parent=0 // pred_fallthru
    _
  // Predicated region
  $region6: #{cnn_vae_forward.12} parent=0 // pred_check
    _
  $region7: #{cnn_vae_forward.12} parent=0 // pred_check_branch
    %12 = sbr.rel (0) target = $region9
  $region8: #{cnn_vae_forward.12} parent=0 // pred_region
    _
  $region9: #{cnn_vae_forward.12} parent=0 // pred_fallthru
    _
  // Predicated region
  $region10: #{cnn_vae_forward.12} parent=0 // pred_check
    _
  $region11: #{cnn_vae_forward.12} parent=0 // pred_check_branch
    %14 = sbr.rel (0) target = $region13
  $region12: #{cnn_vae_forward.12} parent=0 // pred_region
    _
  $region13: #{cnn_vae_forward.12} parent=0 // pred_fallthru
    _
  // Predicated region
  $region14: #{cnn_vae_forward.12} parent=0 // pred_check
    _
  $region15: #{cnn_vae_forward.12} parent=0 // pred_check_branch
    %16 = sbr.rel (0) target = $region17
  $region16: #{cnn_vae_forward.12} parent=0 // pred_region
    _
  $region17: #{cnn_vae_forward.12} parent=0 // pred_fallthru
    _
  %v18 = vld [vmem:[%s0] sm:$0xff]
  %v19 = vld [vmem:[%s0 + $0x8] sm:$0xff]
  %v20 = vld [vmem:[%s0 + $0x10] sm:$0xff]
  %v21 = vld [vmem:[%s0 + $0x18] sm:$0xff]
  %v22 = vld [vmem:[%s1] sm:$0xf]
  %v23 = vld [vmem:[%s1 + $0x4] sm:$0xf]
  %v24 = vld [vmem:[%s1 + $0x8] sm:$0xf]
  %v25 = vld [vmem:[%s1 + $0xc] sm:$0xf]
  %v26 = vld [vmem:[%s1 + $0x10] sm:$0xf]
  %v27 = vld [vmem:[%s1 + $0x14] sm:$0xf]
  %v28 = vld [vmem:[%s1 + $0x18] sm:$0xf]
  %v29 = vld [vmem:[%s1 + $0x1c] sm:$0xf]
  %v30 = vld [vmem:[%s1 + $0x20] sm:$0xf]
  %v31 = vld [vmem:[%s1 + $0x24] sm:$0xf]
  %v32 = vld [vmem:[%s1 + $0x28] sm:$0xf]
  %v33 = vld [vmem:[%s1 + $0x2c] sm:$0xf]
  %v34 = vld [vmem:[%s1 + $0x30] sm:$0xf]
  %v35 = vld [vmem:[%s1 + $0x34] sm:$0xf]
  %v36 = vld [vmem:[%s1 + $0x38] sm:$0xf]
  %v37 = vld [vmem:[%s1 + $0x3c] sm:$0xf]
  %v38 = vld [vmem:[%s1 + $0x40] sm:$0xf]
  %v39 = vld [vmem:[%s1 + $0x44] sm:$0xf]
  %v40 = vld [vmem:[%s1 + $0x48] sm:$0xf]
  %v41 = vld [vmem:[%s1 + $0x4c] sm:$0xf]
  %v42 = vld [vmem:[%s1 + $0x50] sm:$0xf]
  %v43 = vld [vmem:[%s1 + $0x54] sm:$0xf]
  %v44 = vld [vmem:[%s1 + $0x58] sm:$0xf]
  %v45 = vld [vmem:[%s1 + $0x5c] sm:$0xf]
  %v46 = vld [vmem:[%s1 + $0x60] sm:$0xf]
  %v47 = vld [vmem:[%s1 + $0x64] sm:$0xf]
  %v48 = vld [vmem:[%s1 + $0x68] sm:$0xf]
  %v49 = vld [vmem:[%s1 + $0x6c] sm:$0xf]
  %v50 = vld [vmem:[%s1 + $0x70] sm:$0xf]
  %v51 = vld [vmem:[%s1 + $0x74] sm:$0xf]
  %v52 = vld [vmem:[%s1 + $0x78] sm:$0xf]
  %v53 = vld [vmem:[%s1 + $0x7c] sm:$0xf]
  %v58 = vunpack.c.l.b16 %v18
  %v59 = vunpack.c.h.b16 %v18
  %v60 = vunpack.c.l.b16 %v19
  %v61 = vunpack.c.h.b16 %v19
  %v62 = vunpack.c.l.b16 %v20
  %v63 = vunpack.c.h.b16 %v20
  %v64 = vunpack.c.l.b16 %v21
  %v65 = vunpack.c.h.b16 %v21
  %v66 = vpack.c.b16 %v60, %v58
  %v67 = vpack.c.b16 %v61, %v59
  %v68 = vpack.c.b16 %v64, %v62
  %v69 = vpack.c.b16 %v65, %v63
  %v106 = vunpack.c.l.b16 %v22
  %v107 = vunpack.c.l.b16 %v23
  %v108 = vunpack.c.l.b16 %v24
  %v109 = vunpack.c.l.b16 %v25
  %v110 = vunpack.c.l.b16 %v26
  %v111 = vunpack.c.l.b16 %v27
  %v112 = vunpack.c.l.b16 %v28
  %v113 = vunpack.c.l.b16 %v29
  %v114 = vunpack.c.l.b16 %v30
  %v115 = vunpack.c.l.b16 %v31
  %v116 = vunpack.c.l.b16 %v32
  %v117 = vunpack.c.l.b16 %v33
  %v118 = vunpack.c.l.b16 %v34
  %v119 = vunpack.c.l.b16 %v35
  %v120 = vunpack.c.l.b16 %v36
  %v121 = vunpack.c.l.b16 %v37
  %v122 = vunpack.c.l.b16 %v38
  %v123 = vunpack.c.l.b16 %v39
  %v124 = vunpack.c.l.b16 %v40
  %v125 = vunpack.c.l.b16 %v41
  %v126 = vunpack.c.l.b16 %v42
  %v127 = vunpack.c.l.b16 %v43
  %v128 = vunpack.c.l.b16 %v44
  %v129 = vunpack.c.l.b16 %v45
  %v130 = vunpack.c.l.b16 %v46
  %v131 = vunpack.c.l.b16 %v47
  %v132 = vunpack.c.l.b16 %v48
  %v133 = vunpack.c.l.b16 %v49
  %v134 = vunpack.c.l.b16 %v50
  %v135 = vunpack.c.l.b16 %v51
  %v136 = vunpack.c.l.b16 %v52
  %v137 = vunpack.c.l.b16 %v53
  %v138 = vpack.c.b16 %v107, %v106
  %v139 = vpack.c.b16 %v109, %v108
  %v140 = vpack.c.b16 %v111, %v110
  %v141 = vpack.c.b16 %v113, %v112
  %v142 = vpack.c.b16 %v115, %v114
  %v143 = vpack.c.b16 %v117, %v116
  %v144 = vpack.c.b16 %v119, %v118
  %v145 = vpack.c.b16 %v121, %v120
  %v146 = vpack.c.b16 %v123, %v122
  %v147 = vpack.c.b16 %v125, %v124
  %v148 = vpack.c.b16 %v127, %v126
  %v149 = vpack.c.b16 %v129, %v128
  %v150 = vpack.c.b16 %v131, %v130
  %v151 = vpack.c.b16 %v133, %v132
  %v152 = vpack.c.b16 %v135, %v134
  %v153 = vpack.c.b16 %v137, %v136
  %170 = vmatprep.subr.bf16.mxu0 0
  %171 = vmatpush1.bf16.msra.mxu0 %v138
  %172 = vmatprep.subr.bf16.mxu0 0
  %173 = vmatpush1.bf16.msra.mxu0 %v139
  %174 = vmatprep.subr.bf16.mxu0 0
  %175 = vmatpush1.bf16.msra.mxu0 %v140
  %176 = vmatprep.subr.bf16.mxu0 0
  %177 = vmatpush1.bf16.msra.mxu0 %v141
  %178 = vmatprep.subr.bf16.mxu0 0
  %179 = vmatpush1.bf16.msra.mxu0 %v142
  %180 = vmatprep.subr.bf16.mxu0 0
  %181 = vmatpush1.bf16.msra.mxu0 %v143
  %182 = vmatprep.subr.bf16.mxu0 0
  %183 = vmatpush1.bf16.msra.mxu0 %v144
  %184 = vmatprep.subr.bf16.mxu0 0
  %185 = vmatpush1.bf16.msra.mxu0 %v145
  %186 = vmatprep.subr.bf16.mxu0 0
  %187 = vmatpush1.bf16.msra.mxu0 %v146
  %188 = vmatprep.subr.bf16.mxu0 0
  %189 = vmatpush1.bf16.msra.mxu0 %v147
  %190 = vmatprep.subr.bf16.mxu0 0
  %191 = vmatpush1.bf16.msra.mxu0 %v148
  %192 = vmatprep.subr.bf16.mxu0 0
  %193 = vmatpush1.bf16.msra.mxu0 %v149
  %194 = vmatprep.subr.bf16.mxu0 0
  %195 = vmatpush1.bf16.msra.mxu0 %v150
  %196 = vmatprep.subr.bf16.mxu0 0
  %197 = vmatpush1.bf16.msra.mxu0 %v151
  %198 = vmatprep.subr.bf16.mxu0 0
  %199 = vmatpush1.bf16.msra.mxu0 %v152
  %200 = vmatprep.subr.bf16.mxu0 0
  %201 = vmatpush1.bf16.msra.mxu0 %v153
  %202 = vmatprep.mubr.bf16.mxu0 %v67
  %203 = vmatmul.mubr.bf16.gmra.mrb[0].mxu0 %v66
  %v204 = vpop.f32.mrb[0].mxu0
  %v205 = vadd.f32 0.0, %v204
  %v206 = vpop.f32.mrb[0].mxu0
  %v207 = vpop.f32.mrb[0].mxu0
  %v208 = vadd.f32 0.0, %v207
  %v209 = vpop.f32.mrb[0].mxu0
  %210 = vmatprep.mubr.bf16.mxu0 %v69
  %211 = vmatmul.mubr.bf16.gmra.mrb[0].mxu0 %v68
  %v212 = vpop.f32.mrb[0].mxu0
  %v213 = vadd.f32 0.0, %v212
  %v214 = vpop.f32.mrb[0].mxu0
  %v215 = vpop.f32.mrb[0].mxu0
  %v216 = vadd.f32 0.0, %v215
  %v217 = vpop.f32.mrb[0].mxu0
  %218 = vdwg.mxu0
  %v219 = vadd.f32 %v205, %v208
  %v220 = vadd.f32 %v219, %v213
  %v221 = vadd.f32 %v220, %v216
  %v222 = vrot.slane %v221, 4
  %v223 = vadd.f32 %v221, %v222
  %v224 = vrot.slane %v223, 2
  %v225 = vadd.f32 %v223, %v224
  %v226 = vrot.slane %v225, 1
  %v227 = vadd.f32 %v225, %v226
  %v228 = vadd.f32 %v227, 0.0
  %v229 = vmul.f32 %v228, 0.03125
  %v230 = vsub.f32 %v205, %v229
  %v231 = vsub.f32 %v208, %v229
  %v232 = vsub.f32 %v213, %v229
  %v233 = vsub.f32 %v216, %v229
  %v234 = vmul.f32 %v230, %v230
  %v235 = vmul.f32 %v231, %v231
  %v236 = vmul.f32 %v232, %v232
  %v237 = vmul.f32 %v233, %v233
  %v238 = vadd.f32 %v234, %v235
  %v239 = vadd.f32 %v238, %v236
  %v240 = vadd.f32 %v239, %v237
  %v241 = vrot.slane %v240, 4
  %v242 = vadd.f32 %v240, %v241
  %v243 = vrot.slane %v242, 2
  %v244 = vadd.f32 %v242, %v243
  %v245 = vrot.slane %v244, 1
  %v246 = vadd.f32 %v244, %v245
  %v247 = vadd.f32 %v246, 0.0
  %v248 = vmul.f32 %v247, 0.03125
  %v249 = vadd.f32 %v248, 1e-05
  %v250 = vrsqrt.pop %v249
  %v251 = vld [vmem:[%s2] sm:$0x1]
  %v252 = vmul.f32 %v250, %v251
  %v253 = vlaneseq
  %v254 = vshrl.u32 %v253, 7
  %v255 = vsub.s32 0, %v254
  %v256 = vrot.slane %v252, %v255
  %v257 = vmul.f32 %v230, %v256
  %v258 = vmul.f32 %v231, %v256
  %v259 = vmul.f32 %v232, %v256
  %v260 = vmul.f32 %v233, %v256
  %v261 = vld [vmem:[%s3] sm:$0x1]
  %v263 = vlaneseq
  %v264 = vshrl.u32 %v263, 7
  %v265 = vsub.s32 0, %v264
  %v266 = vrot.slane %v261, %v265
  %v268 = vadd.f32 %v257, %v266
  %v269 = vadd.f32 %v258, %v266
  %v270 = vadd.f32 %v259, %v266
  %v271 = vadd.f32 %v260, %v266
  %vm272 = vcmp.gt.f32.partialorder %v268, 0.0
  %vm273 = vcmp.gt.f32.partialorder %v269, 0.0
  %vm274 = vcmp.gt.f32.partialorder %v270, 0.0
  %vm275 = vcmp.gt.f32.partialorder %v271, 0.0
  %v276 = vmul.f32 %v268, 0.2
  %v277 = vmul.f32 %v269, 0.2
  %v278 = vmul.f32 %v270, 0.2
  %v279 = vmul.f32 %v271, 0.2
  %v280 = vsel %vm272, %v268, %v276
  %v281 = vsel %vm273, %v269, %v277
  %v282 = vsel %vm274, %v270, %v278
  %v283 = vsel %vm275, %v271, %v279
  %v284 = vpack.c.bf16 %v281, %v280
  %v285 = vpack.c.bf16 %v283, %v282
  %v288 = vunpack.c.l.b16 %v284
  %v289 = vunpack.c.h.b16 %v284
  %v290 = vunpack.c.l.b16 %v285
  %v291 = vunpack.c.h.b16 %v285
  %v292 = vpack.c.b16 %v288, %v288
  %v293 = vpack.c.b16 %v289, %v289
  %v294 = vpack.c.b16 %v290, %v290
  %v295 = vpack.c.b16 %v291, %v291
  %300 = vst [vmem:[%s4] sm:$0xf] %v292
  %301 = vst [vmem:[%s4 + $0x4] sm:$0xf] %v293
  %302 = vst [vmem:[%s4 + $0x8] sm:$0xf] %v294
  %303 = vst [vmem:[%s4 + $0xc] sm:$0xf] %v295
  // Predicated region
  $region18: #{cnn_vae_forward.12} parent=0 // pred_check
    _
  $region19: #{cnn_vae_forward.12} parent=0 // pred_check_branch
    %305 = sbr.rel (0) target = $region21
  $region20: #{cnn_vae_forward.12} parent=0 // pred_region
    _
  $region21: #{cnn_vae_forward.12} parent=0 // pred_fallthru
    _
  // Predicated region
  $region22: #{cnn_vae_forward.12} parent=0 // pred_check
    _
  $region23: #{cnn_vae_forward.12} parent=0 // pred_check_branch
    %307 = sbr.rel (0) target = $region25
  $region24: #{cnn_vae_forward.12} parent=0 // pred_region
    _
  $region25: #{cnn_vae_forward.12} parent=0 // pred_fallthru
    _

// kernel: cnn_vae_forward.13
$region0: #{cnn_vae_forward.13}
  #allocation0 [shape = 'u32[]', space=smem, size = 0x4, offset = 0x4, fixed_abs, tag = 'smem constant byte address 0x4 - core index']
  #allocation1 [shape = 'u32[144,128]{1,0:T(1,128)}', space=vmem, size = 0x12000, scoped, tag = 'internal scratch']
  %s0 = inlined_call_operand.vmem [shape: bf16[8,512], index: 0, kind: input, shape index: {}]
  %s1 = inlined_call_operand.vmem [shape: bf16[512,128], index: 1, kind: input, shape index: {}]
  %s2 = inlined_call_operand.vmem [shape: f32[1,128], index: 2, kind: input, shape index: {}]
  %s3 = inlined_call_operand.vmem [shape: f32[1,128], index: 3, kind: input, shape index: {}]
  %s4 = inlined_call_operand.vmem [shape: bf16[8,128], index: 4, kind: output, shape index: {}]
  %s5 = sld [smem:[#allocation0]]
  $region26: #{cnn_vae_forward.13} parent=0
    _
  %s7 = ssub.s32 1, %s5
  %s8 = scalar_select 0, %s7, %s5
  // Predicated region
  $region2: #{cnn_vae_forward.13} parent=0 // pred_check
    _
  $region3: #{cnn_vae_forward.13} parent=0 // pred_check_branch
    %10 = sbr.rel (0) target = $region5
  $region4: #{cnn_vae_forward.13} parent=0 // pred_region
    _
  $region5: #{cnn_vae_forward.13} parent=0 // pred_fallthru
    _
  // Predicated region
  $region6: #{cnn_vae_forward.13} parent=0 // pred_check
    _
  $region7: #{cnn_vae_forward.13} parent=0 // pred_check_branch
    %12 = sbr.rel (0) target = $region9
  $region8: #{cnn_vae_forward.13} parent=0 // pred_region
    _
  $region9: #{cnn_vae_forward.13} parent=0 // pred_fallthru
    _
  // Predicated region
  $region10: #{cnn_vae_forward.13} parent=0 // pred_check
    _
  $region11: #{cnn_vae_forward.13} parent=0 // pred_check_branch
    %14 = sbr.rel (0) target = $region13
  $region12: #{cnn_vae_forward.13} parent=0 // pred_region
    _
  $region13: #{cnn_vae_forward.13} parent=0 // pred_fallthru
    _
  // Predicated region
  $region14: #{cnn_vae_forward.13} parent=0 // pred_check
    _
  $region15: #{cnn_vae_forward.13} parent=0 // pred_check_branch
    %16 = sbr.rel (0) target = $region17
  $region16: #{cnn_vae_forward.13} parent=0 // pred_region
    _
  $region17: #{cnn_vae_forward.13} parent=0 // pred_fallthru
    _
  %v18 = vld [vmem:[%s0] sm:$0xff]
  %v19 = vld [vmem:[%s0 + $0x8] sm:$0xff]
  %v20 = vld [vmem:[%s1] sm:$0xf]
  %v21 = vld [vmem:[%s1 + $0x4] sm:$0xf]
  %v22 = vld [vmem:[%s1 + $0x8] sm:$0xf]
  %v23 = vld [vmem:[%s1 + $0xc] sm:$0xf]
  %v24 = vld [vmem:[%s1 + $0x10] sm:$0xf]
  %v25 = vld [vmem:[%s1 + $0x14] sm:$0xf]
  %v26 = vld [vmem:[%s1 + $0x18] sm:$0xf]
  %v27 = vld [vmem:[%s1 + $0x1c] sm:$0xf]
  %v28 = vld [vmem:[%s1 + $0x20] sm:$0xf]
  %v29 = vld [vmem:[%s1 + $0x24] sm:$0xf]
  %v30 = vld [vmem:[%s1 + $0x28] sm:$0xf]
  %v31 = vld [vmem:[%s1 + $0x2c] sm:$0xf]
  %v32 = vld [vmem:[%s1 + $0x30] sm:$0xf]
  %v33 = vld [vmem:[%s1 + $0x34] sm:$0xf]
  %v34 = vld [vmem:[%s1 + $0x38] sm:$0xf]
  %v35 = vld [vmem:[%s1 + $0x3c] sm:$0xf]
  %v36 = vld [vmem:[%s1 + $0x40] sm:$0xf]
  %v37 = vld [vmem:[%s1 + $0x44] sm:$0xf]
  %v38 = vld [vmem:[%s1 + $0x48] sm:$0xf]
  %v39 = vld [vmem:[%s1 + $0x4c] sm:$0xf]
  %v40 = vld [vmem:[%s1 + $0x50] sm:$0xf]
  %v41 = vld [vmem:[%s1 + $0x54] sm:$0xf]
  %v42 = vld [vmem:[%s1 + $0x58] sm:$0xf]
  %v43 = vld [vmem:[%s1 + $0x5c] sm:$0xf]
  %v44 = vld [vmem:[%s1 + $0x60] sm:$0xf]
  %v45 = vld [vmem:[%s1 + $0x64] sm:$0xf]
  %v46 = vld [vmem:[%s1 + $0x68] sm:$0xf]
  %v47 = vld [vmem:[%s1 + $0x6c] sm:$0xf]
  %v48 = vld [vmem:[%s1 + $0x70] sm:$0xf]
  %v49 = vld [vmem:[%s1 + $0x74] sm:$0xf]
  %v50 = vld [vmem:[%s1 + $0x78] sm:$0xf]
  %v51 = vld [vmem:[%s1 + $0x7c] sm:$0xf]
  %v52 = vld [vmem:[%s1 + $0x80] sm:$0xf]
  %v53 = vld [vmem:[%s1 + $0x84] sm:$0xf]
  %v54 = vld [vmem:[%s1 + $0x88] sm:$0xf]
  %v55 = vld [vmem:[%s1 + $0x8c] sm:$0xf]
  %v56 = vld [vmem:[%s1 + $0x90] sm:$0xf]
  %v57 = vld [vmem:[%s1 + $0x94] sm:$0xf]
  %v58 = vld [vmem:[%s1 + $0x98] sm:$0xf]
  %v59 = vld [vmem:[%s1 + $0x9c] sm:$0xf]
  %v60 = vld [vmem:[%s1 + $0xa0] sm:$0xf]
  %v61 = vld [vmem:[%s1 + $0xa4] sm:$0xf]
  %v62 = vld [vmem:[%s1 + $0xa8] sm:$0xf]
  %v63 = vld [vmem:[%s1 + $0xac] sm:$0xf]
  %v64 = vld [vmem:[%s1 + $0xb0] sm:$0xf]
  %v65 = vld [vmem:[%s1 + $0xb4] sm:$0xf]
  %v66 = vld [vmem:[%s1 + $0xb8] sm:$0xf]
  %v67 = vld [vmem:[%s1 + $0xbc] sm:$0xf]
  %v68 = vld [vmem:[%s1 + $0xc0] sm:$0xf]
  %v69 = vld [vmem:[%s1 + $0xc4] sm:$0xf]
  %v70 = vld [vmem:[%s1 + $0xc8] sm:$0xf]
  %v71 = vld [vmem:[%s1 + $0xcc] sm:$0xf]
  %v72 = vld [vmem:[%s1 + $0xd0] sm:$0xf]
  %v73 = vld [vmem:[%s1 + $0xd4] sm:$0xf]
  %v74 = vld [vmem:[%s1 + $0xd8] sm:$0xf]
  %v75 = vld [vmem:[%s1 + $0xdc] sm:$0xf]
  %v76 = vld [vmem:[%s1 + $0xe0] sm:$0xf]
  %v77 = vld [vmem:[%s1 + $0xe4] sm:$0xf]
  %v78 = vld [vmem:[%s1 + $0xe8] sm:$0xf]
  %v79 = vld [vmem:[%s1 + $0xec] sm:$0xf]
  %v80 = vld [vmem:[%s1 + $0xf0] sm:$0xf]
  %v81 = vld [vmem:[%s1 + $0xf4] sm:$0xf]
  %v82 = vld [vmem:[%s1 + $0xf8] sm:$0xf]
  %v83 = vld [vmem:[%s1 + $0xfc] sm:$0xf]
  %v86 = vunpack.c.l.b16 %v18
  %v87 = vunpack.c.h.b16 %v18
  %v88 = vunpack.c.l.b16 %v19
  %v89 = vunpack.c.h.b16 %v19
  %v90 = vpack.c.b16 %v86, %v86
  %v91 = vpack.c.b16 %v87, %v87
  %v92 = vpack.c.b16 %v88, %v88
  %v93 = vpack.c.b16 %v89, %v89
  %v162 = vunpack.c.l.b16 %v20
  %v163 = vunpack.c.l.b16 %v21
  %v164 = vunpack.c.l.b16 %v22
  %v165 = vunpack.c.l.b16 %v23
  %v166 = vunpack.c.l.b16 %v24
  %v167 = vunpack.c.l.b16 %v25
  %v168 = vunpack.c.l.b16 %v26
  %v169 = vunpack.c.l.b16 %v27
  %v170 = vunpack.c.l.b16 %v28
  %v171 = vunpack.c.l.b16 %v29
  %v172 = vunpack.c.l.b16 %v30
  %v173 = vunpack.c.l.b16 %v31
  %v174 = vunpack.c.l.b16 %v32
  %v175 = vunpack.c.l.b16 %v33
  %v176 = vunpack.c.l.b16 %v34
  %v177 = vunpack.c.l.b16 %v35
  %v178 = vunpack.c.l.b16 %v36
  %v179 = vunpack.c.l.b16 %v37
  %v180 = vunpack.c.l.b16 %v38
  %v181 = vunpack.c.l.b16 %v39
  %v182 = vunpack.c.l.b16 %v40
  %v183 = vunpack.c.l.b16 %v41
  %v184 = vunpack.c.l.b16 %v42
  %v185 = vunpack.c.l.b16 %v43
  %v186 = vunpack.c.l.b16 %v44
  %v187 = vunpack.c.l.b16 %v45
  %v188 = vunpack.c.l.b16 %v46
  %v189 = vunpack.c.l.b16 %v47
  %v190 = vunpack.c.l.b16 %v48
  %v191 = vunpack.c.l.b16 %v49
  %v192 = vunpack.c.l.b16 %v50
  %v193 = vunpack.c.l.b16 %v51
  %v194 = vunpack.c.l.b16 %v52
  %v195 = vunpack.c.l.b16 %v53
  %v196 = vunpack.c.l.b16 %v54
  %v197 = vunpack.c.l.b16 %v55
  %v198 = vunpack.c.l.b16 %v56
  %v199 = vunpack.c.l.b16 %v57
  %v200 = vunpack.c.l.b16 %v58
  %v201 = vunpack.c.l.b16 %v59
  %v202 = vunpack.c.l.b16 %v60
  %v203 = vunpack.c.l.b16 %v61
  %v204 = vunpack.c.l.b16 %v62
  %v205 = vunpack.c.l.b16 %v63
  %v206 = vunpack.c.l.b16 %v64
  %v207 = vunpack.c.l.b16 %v65
  %v208 = vunpack.c.l.b16 %v66
  %v209 = vunpack.c.l.b16 %v67
  %v210 = vunpack.c.l.b16 %v68
  %v211 = vunpack.c.l.b16 %v69
  %v212 = vunpack.c.l.b16 %v70
  %v213 = vunpack.c.l.b16 %v71
  %v214 = vunpack.c.l.b16 %v72
  %v215 = vunpack.c.l.b16 %v73
  %v216 = vunpack.c.l.b16 %v74
  %v217 = vunpack.c.l.b16 %v75
  %v218 = vunpack.c.l.b16 %v76
  %v219 = vunpack.c.l.b16 %v77
  %v220 = vunpack.c.l.b16 %v78
  %v221 = vunpack.c.l.b16 %v79
  %v222 = vunpack.c.l.b16 %v80
  %v223 = vunpack.c.l.b16 %v81
  %v224 = vunpack.c.l.b16 %v82
  %v225 = vunpack.c.l.b16 %v83
  %v226 = vpack.c.b16 %v163, %v162
  %v227 = vpack.c.b16 %v165, %v164
  %v228 = vpack.c.b16 %v167, %v166
  %v229 = vpack.c.b16 %v169, %v168
  %v230 = vpack.c.b16 %v171, %v170
  %v231 = vpack.c.b16 %v173, %v172
  %v232 = vpack.c.b16 %v175, %v174
  %v233 = vpack.c.b16 %v177, %v176
  %v234 = vpack.c.b16 %v179, %v178
  %v235 = vpack.c.b16 %v181, %v180
  %v236 = vpack.c.b16 %v183, %v182
  %v237 = vpack.c.b16 %v185, %v184
  %v238 = vpack.c.b16 %v187, %v186
  %v239 = vpack.c.b16 %v189, %v188
  %v240 = vpack.c.b16 %v191, %v190
  %v241 = vpack.c.b16 %v193, %v192
  %v242 = vpack.c.b16 %v195, %v194
  %v243 = vpack.c.b16 %v197, %v196
  %v244 = vpack.c.b16 %v199, %v198
  %v245 = vpack.c.b16 %v201, %v200
  %v246 = vpack.c.b16 %v203, %v202
  %v247 = vpack.c.b16 %v205, %v204
  %v248 = vpack.c.b16 %v207, %v206
  %v249 = vpack.c.b16 %v209, %v208
  %v250 = vpack.c.b16 %v211, %v210
  %v251 = vpack.c.b16 %v213, %v212
  %v252 = vpack.c.b16 %v215, %v214
  %v253 = vpack.c.b16 %v217, %v216
  %v254 = vpack.c.b16 %v219, %v218
  %v255 = vpack.c.b16 %v221, %v220
  %v256 = vpack.c.b16 %v223, %v222
  %v257 = vpack.c.b16 %v225, %v224
  %290 = vmatprep.subr.bf16.mxu0 0
  %291 = vmatpush1.bf16.msra.mxu0 %v226
  %292 = vmatprep.subr.bf16.mxu0 0
  %293 = vmatpush1.bf16.msra.mxu0 %v227
  %294 = vmatprep.subr.bf16.mxu0 0
  %295 = vmatpush1.bf16.msra.mxu0 %v228
  %296 = vmatprep.subr.bf16.mxu0 0
  %297 = vmatpush1.bf16.msra.mxu0 %v229
  %298 = vmatprep.subr.bf16.mxu0 0
  %299 = vmatpush1.bf16.msra.mxu0 %v230
  %300 = vmatprep.subr.bf16.mxu0 0
  %301 = vmatpush1.bf16.msra.mxu0 %v231
  %302 = vmatprep.subr.bf16.mxu0 0
  %303 = vmatpush1.bf16.msra.mxu0 %v232
  %304 = vmatprep.subr.bf16.mxu0 0
  %305 = vmatpush1.bf16.msra.mxu0 %v233
  %306 = vmatprep.subr.bf16.mxu0 0
  %307 = vmatpush1.bf16.msra.mxu0 %v234
  %308 = vmatprep.subr.bf16.mxu0 0
  %309 = vmatpush1.bf16.msra.mxu0 %v235
  %310 = vmatprep.subr.bf16.mxu0 0
  %311 = vmatpush1.bf16.msra.mxu0 %v236
  %312 = vmatprep.subr.bf16.mxu0 0
  %313 = vmatpush1.bf16.msra.mxu0 %v237
  %314 = vmatprep.subr.bf16.mxu0 0
  %315 = vmatpush1.bf16.msra.mxu0 %v238
  %316 = vmatprep.subr.bf16.mxu0 0
  %317 = vmatpush1.bf16.msra.mxu0 %v239
  %318 = vmatprep.subr.bf16.mxu0 0
  %319 = vmatpush1.bf16.msra.mxu0 %v240
  %320 = vmatprep.subr.bf16.mxu0 0
  %321 = vmatpush1.bf16.msra.mxu0 %v241
  %322 = vmatprep.mubr.bf16.mxu0 %v91
  %323 = vmatmul.mubr.bf16.gmra.mrb[0].mxu0 %v90
  %v324 = vpop.f32.mrb[0].mxu0
  %v325 = vadd.f32 0.0, %v324
  %v326 = vpop.f32.mrb[0].mxu0
  %v327 = vpop.f32.mrb[0].mxu0
  %v328 = vpop.f32.mrb[0].mxu0
  %329 = vdwg.mxu0
  %330 = vmatprep.subr.bf16.mxu0 0
  %331 = vmatpush1.bf16.msra.mxu0 %v242
  %332 = vmatprep.subr.bf16.mxu0 0
  %333 = vmatpush1.bf16.msra.mxu0 %v243
  %334 = vmatprep.subr.bf16.mxu0 0
  %335 = vmatpush1.bf16.msra.mxu0 %v244
  %336 = vmatprep.subr.bf16.mxu0 0
  %337 = vmatpush1.bf16.msra.mxu0 %v245
  %338 = vmatprep.subr.bf16.mxu0 0
  %339 = vmatpush1.bf16.msra.mxu0 %v246
  %340 = vmatprep.subr.bf16.mxu0 0
  %341 = vmatpush1.bf16.msra.mxu0 %v247
  %342 = vmatprep.subr.bf16.mxu0 0
  %343 = vmatpush1.bf16.msra.mxu0 %v248
  %344 = vmatprep.subr.bf16.mxu0 0
  %345 = vmatpush1.bf16.msra.mxu0 %v249
  %346 = vmatprep.subr.bf16.mxu0 0
  %347 = vmatpush1.bf16.msra.mxu0 %v250
  %348 = vmatprep.subr.bf16.mxu0 0
  %349 = vmatpush1.bf16.msra.mxu0 %v251
  %350 = vmatprep.subr.bf16.mxu0 0
  %351 = vmatpush1.bf16.msra.mxu0 %v252
  %352 = vmatprep.subr.bf16.mxu0 0
  %353 = vmatpush1.bf16.msra.mxu0 %v253
  %354 = vmatprep.subr.bf16.mxu0 0
  %355 = vmatpush1.bf16.msra.mxu0 %v254
  %356 = vmatprep.subr.bf16.mxu0 0
  %357 = vmatpush1.bf16.msra.mxu0 %v255
  %358 = vmatprep.subr.bf16.mxu0 0
  %359 = vmatpush1.bf16.msra.mxu0 %v256
  %360 = vmatprep.subr.bf16.mxu0 0
  %361 = vmatpush1.bf16.msra.mxu0 %v257
  %362 = vmatprep.mubr.bf16.mxu0 %v93
  %363 = vmatmul.mubr.bf16.gmra.mrb[0].mxu0 %v92
  %v364 = vpop.f32.mrb[0].mxu0
  %v365 = vadd.f32 %v325, %v364
  %v366 = vpop.f32.mrb[0].mxu0
  %v367 = vpop.f32.mrb[0].mxu0
  %v368 = vpop.f32.mrb[0].mxu0
  %369 = vdwg.mxu0
  %v370 = vrot.slane %v365, 4
  %v371 = vadd.f32 %v365, %v370
  %v372 = vrot.slane %v371, 2
  %v373 = vadd.f32 %v371, %v372
  %v374 = vrot.slane %v373, 1
  %v375 = vadd.f32 %v373, %v374
  %v376 = vadd.f32 %v375, 0.0
  %v377 = vmul.f32 %v376, 0.125
  %v378 = vsub.f32 %v365, %v377
  %v379 = vmul.f32 %v378, %v378
  %v380 = vrot.slane %v379, 4
  %v381 = vadd.f32 %v379, %v380
  %v382 = vrot.slane %v381, 2
  %v383 = vadd.f32 %v381, %v382
  %v384 = vrot.slane %v383, 1
  %v385 = vadd.f32 %v383, %v384
  %v386 = vadd.f32 %v385, 0.0
  %v387 = vmul.f32 %v386, 0.125
  %v388 = vadd.f32 %v387, 1e-05
  %v389 = vrsqrt.pop %v388
  %v390 = vld [vmem:[%s2] sm:$0x1]
  %v391 = vmul.f32 %v389, %v390
  %v392 = vlaneseq
  %v393 = vshrl.u32 %v392, 7
  %v394 = vsub.s32 0, %v393
  %v395 = vrot.slane %v391, %v394
  %v396 = vmul.f32 %v378, %v395
  %v397 = vld [vmem:[%s3] sm:$0x1]
  %v399 = vlaneseq
  %v400 = vshrl.u32 %v399, 7
  %v401 = vsub.s32 0, %v400
  %v402 = vrot.slane %v397, %v401
  %v404 = vadd.f32 %v396, %v402
  %vm405 = vcmp.gt.f32.partialorder %v404, 0.0
  %v406 = vmul.f32 %v404, 0.2
  %v407 = vsel %vm405, %v404, %v406
  %v408 = vpack.c.bf16 %v407, %v407
  %409 = vst [vmem:[%s4] sm:$0xf] %v408
  // Predicated region
  $region18: #{cnn_vae_forward.13} parent=0 // pred_check
    _
  $region19: #{cnn_vae_forward.13} parent=0 // pred_check_branch
    %411 = sbr.rel (0) target = $region21
  $region20: #{cnn_vae_forward.13} parent=0 // pred_region
    _
  $region21: #{cnn_vae_forward.13} parent=0 // pred_fallthru
    _
  // Predicated region
  $region22: #{cnn_vae_forward.13} parent=0 // pred_check
    _
  $region23: #{cnn_vae_forward.13} parent=0 // pred_check_branch
    %413 = sbr.rel (0) target = $region25
  $region24: #{cnn_vae_forward.13} parent=0 // pred_region
    _
  $region25: #{cnn_vae_forward.13} parent=0 // pred_fallthru
    _

// kernel: cnn_vae_forward.14
$region0: #{cnn_vae_forward.14}
  #allocation0 [shape = 'u32[]', space=smem, size = 0x4, offset = 0x4, fixed_abs, tag = 'smem constant byte address 0x4 - core index']
  #allocation1 [shape = 'u32[144,128]{1,0:T(1,128)}', space=vmem, size = 0x12000, scoped, tag = 'internal scratch']
  %s0 = inlined_call_operand.vmem [shape: f32[2,128], index: 0, kind: input, shape index: {}]
  %s1 = inlined_call_operand.vmem [shape: f32[128,32], index: 1, kind: input, shape index: {}]
  %s2 = inlined_call_operand.vmem [shape: f32[1,32], index: 2, kind: input, shape index: {}]
  %s3 = inlined_call_operand.vmem [shape: f32[1,32], index: 3, kind: input, shape index: {}]
  %s4 = inlined_call_operand.vmem [shape: f32[32,16], index: 4, kind: input, shape index: {}]
  %s5 = inlined_call_operand.vmem [shape: f32[1,16], index: 5, kind: input, shape index: {}]
  %s6 = inlined_call_operand.vmem [shape: f32[32,16], index: 6, kind: input, shape index: {}]
  %s7 = inlined_call_operand.vmem [shape: f32[1,16], index: 7, kind: input, shape index: {}]
  %s8 = inlined_call_operand.vmem [shape: f32[16,32], index: 8, kind: input, shape index: {}]
  %s9 = inlined_call_operand.vmem [shape: f32[1,32], index: 9, kind: input, shape index: {}]
  %s10 = inlined_call_operand.vmem [shape: f32[2,16], index: 10, kind: input, shape index: {}]
  %s11 = inlined_call_operand.hbm [shape: f32[2,16], index: 11, kind: output, shape index: {0}]
  %s12 = inlined_call_operand.hbm [shape: f32[2,16], index: 12, kind: output, shape index: {1}]
  %s13 = inlined_call_operand.hbm [shape: f32[2,16], index: 13, kind: output, shape index: {2}]
  %s14 = inlined_call_operand.vmem [shape: f32[2,32], index: 14, kind: output, shape index: {3}]
  %15 = xla_tuple %s11, %s12, %s13, %s14
  %s16 = sld [smem:[#allocation0]]
  $region78: #{cnn_vae_forward.14} parent=0
    _
  %s18 = ssub.s32 1, %s16
  %s19 = scalar_select 0, %s18, %s16
  $region1: #{cnn_vae_forward.14} parent=0
    #allocation2 [shape = 'u8[1024]{0}', space=vmem, size = 0x400, scoped, tag = 'output window, operand 0, single buffered']
    #allocation3 [shape = 's32[1]{0}', space=sflag, size = 0x4, scoped, tag = 'scoped memory for cnn_vae_forward.14']
    #allocation4 [shape = 'u8[1024]{0}', space=vmem, size = 0x400, scoped, tag = 'output window, operand 1, single buffered']
    #allocation5 [shape = 's32[1]{0}', space=sflag, size = 0x4, scoped, tag = 'scoped memory for cnn_vae_forward.14']
    #allocation6 [shape = 'u8[1024]{0}', space=vmem, size = 0x400, scoped, tag = 'output window, operand 2, single buffered']
    %20 = vsyncpa [#allocation3], 0
    %21 = vsyncpa [#allocation5], 0
    // Predicated region
    $region2: #{cnn_vae_forward.14} parent=1 // pred_check
      _
    $region3: #{cnn_vae_forward.14} parent=1 // pred_check_branch
      %23 = sbr.rel (0) target = $region5
    $region4: #{cnn_vae_forward.14} parent=1 // pred_region
      _
    $region5: #{cnn_vae_forward.14} parent=1 // pred_fallthru
      _
    // Predicated region
    $region6: #{cnn_vae_forward.14} parent=1 // pred_check
      _
    $region7: #{cnn_vae_forward.14} parent=1 // pred_check_branch
      %25 = sbr.rel (0) target = $region9
    $region8: #{cnn_vae_forward.14} parent=1 // pred_region
      _
    $region9: #{cnn_vae_forward.14} parent=1 // pred_fallthru
      _
    // Predicated region
    $region10: #{cnn_vae_forward.14} parent=1 // pred_check
      _
    $region11: #{cnn_vae_forward.14} parent=1 // pred_check_branch
      %27 = sbr.rel (0) target = $region13
    $region12: #{cnn_vae_forward.14} parent=1 // pred_region
      _
    $region13: #{cnn_vae_forward.14} parent=1 // pred_fallthru
      _
    // Predicated region
    $region14: #{cnn_vae_forward.14} parent=1 // pred_check
      _
    $region15: #{cnn_vae_forward.14} parent=1 // pred_check_branch
      %29 = sbr.rel (0) target = $region17
    $region16: #{cnn_vae_forward.14} parent=1 // pred_region
      _
    $region17: #{cnn_vae_forward.14} parent=1 // pred_fallthru
      _
    // Predicated region
    $region18: #{cnn_vae_forward.14} parent=1 // pred_check
      _
    $region19: #{cnn_vae_forward.14} parent=1 // pred_check_branch
      %31 = sbr.rel (0) target = $region21
    $region20: #{cnn_vae_forward.14} parent=1 // pred_region
      _
    $region21: #{cnn_vae_forward.14} parent=1 // pred_fallthru
      _
    // Predicated region
    $region22: #{cnn_vae_forward.14} parent=1 // pred_check
      _
    $region23: #{cnn_vae_forward.14} parent=1 // pred_check_branch
      %33 = sbr.rel (0) target = $region25
    $region24: #{cnn_vae_forward.14} parent=1 // pred_region
      _
    $region25: #{cnn_vae_forward.14} parent=1 // pred_fallthru
      _
    // Predicated region
    $region26: #{cnn_vae_forward.14} parent=1 // pred_check
      _
    $region27: #{cnn_vae_forward.14} parent=1 // pred_check_branch
      %35 = sbr.rel (0) target = $region29
    $region28: #{cnn_vae_forward.14} parent=1 // pred_region
      _
    $region29: #{cnn_vae_forward.14} parent=1 // pred_fallthru
      _
    // Predicated region
    $region30: #{cnn_vae_forward.14} parent=1 // pred_check
      _
    $region31: #{cnn_vae_forward.14} parent=1 // pred_check_branch
      %37 = sbr.rel (0) target = $region33
    $region32: #{cnn_vae_forward.14} parent=1 // pred_region
      _
    $region33: #{cnn_vae_forward.14} parent=1 // pred_fallthru
      _
    // Predicated region
    $region34: #{cnn_vae_forward.14} parent=1 // pred_check
      _
    $region35: #{cnn_vae_forward.14} parent=1 // pred_check_branch
      %39 = sbr.rel (0) target = $region37
    $region36: #{cnn_vae_forward.14} parent=1 // pred_region
      _
    $region37: #{cnn_vae_forward.14} parent=1 // pred_fallthru
      _
    // Predicated region
    $region38: #{cnn_vae_forward.14} parent=1 // pred_check
      _
    $region39: #{cnn_vae_forward.14} parent=1 // pred_check_branch
      %41 = sbr.rel (0) target = $region41
    $region40: #{cnn_vae_forward.14} parent=1 // pred_region
      _
    $region41: #{cnn_vae_forward.14} parent=1 // pred_fallthru
      _
    // Predicated region
    $region42: #{cnn_vae_forward.14} parent=1 // pred_check
      _
    $region43: #{cnn_vae_forward.14} parent=1 // pred_check_branch
      %43 = sbr.rel (0) target = $region45
    $region44: #{cnn_vae_forward.14} parent=1 // pred_region
      _
    $region45: #{cnn_vae_forward.14} parent=1 // pred_fallthru
      _
    %v44 = vld [vmem:[%s0] sm:$0x3]
    %v45 = vld [vmem:[%s1] sm:$0xff]
    %v46 = vld [vmem:[%s1 + $0x8] sm:$0xff]
    %v47 = vld [vmem:[%s1 + $0x10] sm:$0xff]
    %v48 = vld [vmem:[%s1 + $0x18] sm:$0xff]
    %v49 = vld [vmem:[%s1 + $0x20] sm:$0xff]
    %v50 = vld [vmem:[%s1 + $0x28] sm:$0xff]
    %v51 = vld [vmem:[%s1 + $0x30] sm:$0xff]
    %v52 = vld [vmem:[%s1 + $0x38] sm:$0xff]
    %v53 = vld [vmem:[%s1 + $0x40] sm:$0xff]
    %v54 = vld [vmem:[%s1 + $0x48] sm:$0xff]
    %v55 = vld [vmem:[%s1 + $0x50] sm:$0xff]
    %v56 = vld [vmem:[%s1 + $0x58] sm:$0xff]
    %v57 = vld [vmem:[%s1 + $0x60] sm:$0xff]
    %v58 = vld [vmem:[%s1 + $0x68] sm:$0xff]
    %v59 = vld [vmem:[%s1 + $0x70] sm:$0xff]
    %v60 = vld [vmem:[%s1 + $0x78] sm:$0xff]
    %61 = vmatprep.subr.mxu0 0.0
    %62 = vmatpush1.msra.mxu0 %v45
    %63 = vmatprep.subr.mxu0 0.0
    %64 = vmatpush1.msra.mxu0 %v46
    %65 = vmatprep.subr.mxu0 0.0
    %66 = vmatpush1.msra.mxu0 %v47
    %67 = vmatprep.subr.mxu0 0.0
    %68 = vmatpush1.msra.mxu0 %v48
    %69 = vmatprep.subr.mxu0 0.0
    %70 = vmatpush1.msra.mxu0 %v49
    %71 = vmatprep.subr.mxu0 0.0
    %72 = vmatpush1.msra.mxu0 %v50
    %73 = vmatprep.subr.mxu0 0.0
    %74 = vmatpush1.msra.mxu0 %v51
    %75 = vmatprep.subr.mxu0 0.0
    %76 = vmatpush1.msra.mxu0 %v52
    %77 = vmatprep.subr.mxu0 0.0
    %78 = vmatpush1.msra.mxu0 %v53
    %79 = vmatprep.subr.mxu0 0.0
    %80 = vmatpush1.msra.mxu0 %v54
    %81 = vmatprep.subr.mxu0 0.0
    %82 = vmatpush1.msra.mxu0 %v55
    %83 = vmatprep.subr.mxu0 0.0
    %84 = vmatpush1.msra.mxu0 %v56
    %85 = vmatprep.subr.mxu0 0.0
    %86 = vmatpush1.msra.mxu0 %v57
    %87 = vmatprep.subr.mxu0 0.0
    %88 = vmatpush1.msra.mxu0 %v58
    %89 = vmatprep.subr.mxu0 0.0
    %90 = vmatpush1.msra.mxu0 %v59
    %91 = vmatprep.subr.mxu0 0.0
    %92 = vmatpush1.msra.mxu0 %v60
    %93 = vmatprep.subr.mxu0 0.0
    %94 = vmatpush1.msra.mxu0 0.0
    %95 = vmatprep.subr.mxu0 0.0
    %96 = vmatpush1.msra.mxu0 0.0
    %97 = vmatprep.subr.mxu0 0.0
    %98 = vmatpush1.msra.mxu0 0.0
    %99 = vmatprep.subr.mxu0 0.0
    %100 = vmatpush1.msra.mxu0 0.0
    %101 = vmatprep.subr.mxu0 0.0
    %102 = vmatpush1.msra.mxu0 0.0
    %103 = vmatprep.subr.mxu0 0.0
    %104 = vmatpush1.msra.mxu0 0.0
    %105 = vmatprep.subr.mxu0 0.0
    %106 = vmatpush1.msra.mxu0 0.0
    %107 = vmatprep.subr.mxu0 0.0
    %108 = vmatpush1.msra.mxu0 0.0
    %109 = vmatprep.subr.mxu0 0.0
    %110 = vmatpush1.msra.mxu0 0.0
    %111 = vmatprep.subr.mxu0 0.0
    %112 = vmatpush1.msra.mxu0 0.0
    %113 = vmatprep.subr.mxu0 0.0
    %114 = vmatpush1.msra.mxu0 0.0
    %115 = vmatprep.subr.mxu0 0.0
    %116 = vmatpush1.msra.mxu0 0.0
    %117 = vmatprep.subr.mxu0 0.0
    %118 = vmatpush1.msra.mxu0 0.0
    %119 = vmatprep.subr.mxu0 0.0
    %120 = vmatpush1.msra.mxu0 0.0
    %121 = vmatprep.subr.mxu0 0.0
    %122 = vmatpush1.msra.mxu0 0.0
    %123 = vmatprep.subr.mxu0 0.0
    %124 = vmatpush1.msra.mxu0 0.0
    %125 = vmatprep.mubr.f32.mxu0 0.0
    %126 = vmatmul.mubr.f32.gmra.mrb[0].mxu0 %v44
    %v127 = vpop.f32.mrb[0].mxu0
    %v128 = vadd.f32 0.0, %v127
    %v129 = vpop.f32.mrb[0].mxu0
    %130 = vdwg.mxu0
    %vm131 = vcmask 254976
    %v132 = vsel %vm131, %v128, 0.0
    %v133 = vrot.slane %v132, 4
    %v134 = vadd.f32 %v132, %v133
    %v135 = vrot.slane %v134, 2
    %v136 = vadd.f32 %v134, %v135
    %v137 = vrot.slane %v136, 1
    %v138 = vadd.f32 %v136, %v137
    %v139 = vrcp.pop 2.0
    %v140 = vmul.f32 %v138, %v139
    %v141 = vsub.f32 %v128, %v140
    %v142 = vmul.f32 %v141, %v141
    %v143 = vsel %vm131, %v142, 0.0
    %v144 = vrot.slane %v143, 4
    %v145 = vadd.f32 %v143, %v144
    %v146 = vrot.slane %v145, 2
    %v147 = vadd.f32 %v145, %v146
    %v148 = vrot.slane %v147, 1
    %v149 = vadd.f32 %v147, %v148
    %v150 = vmul.f32 %v149, %v139
    %v151 = vadd.f32 %v150, 1e-05
    %v152 = vrsqrt.pop %v151
    %v153 = vmul.f32 %v141, %v152
    %v154 = vld [vmem:[%s2] sm:$0x1]
    %v156 = vlaneseq
    %v157 = vshrl.u32 %v156, 7
    %v158 = vsub.s32 0, %v157
    %v159 = vrot.slane %v154, %v158
    %v161 = vmul.f32 %v153, %v159
    %v162 = vld [vmem:[%s3] sm:$0x1]
    %v164 = vlaneseq
    %v165 = vshrl.u32 %v164, 7
    %v166 = vsub.s32 0, %v165
    %v167 = vrot.slane %v162, %v166
    %v169 = vadd.f32 %v161, %v167
    %vm170 = vcmp.gt.f32.partialorder %v169, 0.0
    %v171 = vmul.f32 %v169, 0.2
    %v172 = vsel %vm170, %v169, %v171
    %v173 = vld [vmem:[%s4] sm:$0xff]
    %v174 = vld [vmem:[%s4 + $0x8] sm:$0xff]
    %v175 = vld [vmem:[%s4 + $0x10] sm:$0xff]
    %v176 = vld [vmem:[%s4 + $0x18] sm:$0xff]
    %v177 = vld [vmem:[%s5] sm:$0x1]
    %v179 = vlaneseq
    %v180 = vshrl.u32 %v179, 7
    %v181 = vsub.s32 0, %v180
    %v182 = vrot.slane %v177, %v181
    %vm184 = vcmask 261120
    %v186 = vsel %vm184, %v172, 0
    %188 = vmatprep.subr.mxu0 0.0
    %189 = vmatpush1.msra.mxu0 %v173
    %190 = vmatprep.subr.mxu0 0.0
    %191 = vmatpush1.msra.mxu0 %v174
    %192 = vmatprep.subr.mxu0 0.0
    %193 = vmatpush1.msra.mxu0 %v175
    %194 = vmatprep.subr.mxu0 0.0
    %195 = vmatpush1.msra.mxu0 %v176
    %196 = vmatprep.subr.mxu0 0.0
    %197 = vmatpush1.msra.mxu0 0.0
    %198 = vmatprep.subr.mxu0 0.0
    %199 = vmatpush1.msra.mxu0 0.0
    %200 = vmatprep.subr.mxu0 0.0
    %201 = vmatpush1.msra.mxu0 0.0
    %202 = vmatprep.subr.mxu0 0.0
    %203 = vmatpush1.msra.mxu0 0.0
    %204 = vmatprep.subr.mxu0 0.0
    %205 = vmatpush1.msra.mxu0 0.0
    %206 = vmatprep.subr.mxu0 0.0
    %207 = vmatpush1.msra.mxu0 0.0
    %208 = vmatprep.subr.mxu0 0.0
    %209 = vmatpush1.msra.mxu0 0.0
    %210 = vmatprep.subr.mxu0 0.0
    %211 = vmatpush1.msra.mxu0 0.0
    %212 = vmatprep.subr.mxu0 0.0
    %213 = vmatpush1.msra.mxu0 0.0
    %214 = vmatprep.subr.mxu0 0.0
    %215 = vmatpush1.msra.mxu0 0.0
    %216 = vmatprep.subr.mxu0 0.0
    %217 = vmatpush1.msra.mxu0 0.0
    %218 = vmatprep.subr.mxu0 0.0
    %219 = vmatpush1.msra.mxu0 0.0
    %220 = vmatprep.subr.mxu0 0.0
    %221 = vmatpush1.msra.mxu0 0.0
    %222 = vmatprep.subr.mxu0 0.0
    %223 = vmatpush1.msra.mxu0 0.0
    %224 = vmatprep.subr.mxu0 0.0
    %225 = vmatpush1.msra.mxu0 0.0
    %226 = vmatprep.subr.mxu0 0.0
    %227 = vmatpush1.msra.mxu0 0.0
    %228 = vmatprep.subr.mxu0 0.0
    %229 = vmatpush1.msra.mxu0 0.0
    %230 = vmatprep.subr.mxu0 0.0
    %231 = vmatpush1.msra.mxu0 0.0
    %232 = vmatprep.subr.mxu0 0.0
    %233 = vmatpush1.msra.mxu0 0.0
    %234 = vmatprep.subr.mxu0 0.0
    %235 = vmatpush1.msra.mxu0 0.0
    %236 = vmatprep.subr.mxu0 0.0
    %237 = vmatpush1.msra.mxu0 0.0
    %238 = vmatprep.subr.mxu0 0.0
    %239 = vmatpush1.msra.mxu0 0.0
    %240 = vmatprep.subr.mxu0 0.0
    %241 = vmatpush1.msra.mxu0 0.0
    %242 = vmatprep.subr.mxu0 0.0
    %243 = vmatpush1.msra.mxu0 0.0
    %244 = vmatprep.subr.mxu0 0.0
    %245 = vmatpush1.msra.mxu0 0.0
    %246 = vmatprep.subr.mxu0 0.0
    %247 = vmatpush1.msra.mxu0 0.0
    %248 = vmatprep.subr.mxu0 0.0
    %249 = vmatpush1.msra.mxu0 0.0
    %250 = vmatprep.subr.mxu0 0.0
    %251 = vmatpush1.msra.mxu0 0.0
    %252 = vmatprep.mubr.f32.mxu0 0.0
    %253 = vmatmul.mubr.f32.gmra.mrb[0].mxu0 %v186
    %v254 = vpop.f32.mrb[0].mxu0
    %v255 = vadd.f32 %v182, %v254
    %v256 = vpop.f32.mrb[0].mxu0
    %257 = vdwg.mxu0
    %v258 = vld [vmem:[%s6] sm:$0xff]
    %v259 = vld [vmem:[%s6 + $0x8] sm:$0xff]
    %v260 = vld [vmem:[%s6 + $0x10] sm:$0xff]
    %v261 = vld [vmem:[%s6 + $0x18] sm:$0xff]
    %v262 = vld [vmem:[%s7] sm:$0x1]
    %v264 = vlaneseq
    %v265 = vshrl.u32 %v264, 7
    %v266 = vsub.s32 0, %v265
    %v267 = vrot.slane %v262, %v266
    %269 = vmatprep.subr.mxu0 0.0
    %270 = vmatpush1.msra.mxu0 %v258
    %271 = vmatprep.subr.mxu0 0.0
    %272 = vmatpush1.msra.mxu0 %v259
    %273 = vmatprep.subr.mxu0 0.0
    %274 = vmatpush1.msra.mxu0 %v260
    %275 = vmatprep.subr.mxu0 0.0
    %276 = vmatpush1.msra.mxu0 %v261
    %277 = vmatprep.subr.mxu0 0.0
    %278 = vmatpush1.msra.mxu0 0.0
    %279 = vmatprep.subr.mxu0 0.0
    %280 = vmatpush1.msra.mxu0 0.0
    %281 = vmatprep.subr.mxu0 0.0
    %282 = vmatpush1.msra.mxu0 0.0
    %283 = vmatprep.subr.mxu0 0.0
    %284 = vmatpush1.msra.mxu0 0.0
    %285 = vmatprep.subr.mxu0 0.0
    %286 = vmatpush1.msra.mxu0 0.0
    %287 = vmatprep.subr.mxu0 0.0
    %288 = vmatpush1.msra.mxu0 0.0
    %289 = vmatprep.subr.mxu0 0.0
    %290 = vmatpush1.msra.mxu0 0.0
    %291 = vmatprep.subr.mxu0 0.0
    %292 = vmatpush1.msra.mxu0 0.0
    %293 = vmatprep.subr.mxu0 0.0
    %294 = vmatpush1.msra.mxu0 0.0
    %295 = vmatprep.subr.mxu0 0.0
    %296 = vmatpush1.msra.mxu0 0.0
    %297 = vmatprep.subr.mxu0 0.0
    %298 = vmatpush1.msra.mxu0 0.0
    %299 = vmatprep.subr.mxu0 0.0
    %300 = vmatpush1.msra.mxu0 0.0
    %301 = vmatprep.subr.mxu0 0.0
    %302 = vmatpush1.msra.mxu0 0.0
    %303 = vmatprep.subr.mxu0 0.0
    %304 = vmatpush1.msra.mxu0 0.0
    %305 = vmatprep.subr.mxu0 0.0
    %306 = vmatpush1.msra.mxu0 0.0
    %307 = vmatprep.subr.mxu0 0.0
    %308 = vmatpush1.msra.mxu0 0.0
    %309 = vmatprep.subr.mxu0 0.0
    %310 = vmatpush1.msra.mxu0 0.0
    %311 = vmatprep.subr.mxu0 0.0
    %312 = vmatpush1.msra.mxu0 0.0
    %313 = vmatprep.subr.mxu0 0.0
    %314 = vmatpush1.msra.mxu0 0.0
    %315 = vmatprep.subr.mxu0 0.0
    %316 = vmatpush1.msra.mxu0 0.0
    %317 = vmatprep.subr.mxu0 0.0
    %318 = vmatpush1.msra.mxu0 0.0
    %319 = vmatprep.subr.mxu0 0.0
    %320 = vmatpush1.msra.mxu0 0.0
    %321 = vmatprep.subr.mxu0 0.0
    %322 = vmatpush1.msra.mxu0 0.0
    %323 = vmatprep.subr.mxu0 0.0
    %324 = vmatpush1.msra.mxu0 0.0
    %325 = vmatprep.subr.mxu0 0.0
    %326 = vmatpush1.msra.mxu0 0.0
    %327 = vmatprep.subr.mxu0 0.0
    %328 = vmatpush1.msra.mxu0 0.0
    %329 = vmatprep.subr.mxu0 0.0
    %330 = vmatpush1.msra.mxu0 0.0
    %331 = vmatprep.subr.mxu0 0.0
    %332 = vmatpush1.msra.mxu0 0.0
    %333 = vmatprep.mubr.f32.mxu0 0.0
    %334 = vmatmul.mubr.f32.gmra.mrb[0].mxu0 %v186
    %v335 = vpop.f32.mrb[0].mxu0
    %v336 = vadd.f32 %v267, %v335
    %v337 = vpop.f32.mrb[0].mxu0
    %338 = vdwg.mxu0
    %v339 = vld [vmem:[%s10] sm:$0x3]
    %v340 = vmul.f32 %v336, 1.442695
    %v341 = vpow.pop %v340
    %v342 = vmul.f32 %v339, %v341
    %v343 = vadd.f32 %v342, %v255
    %v344 = vld [vmem:[%s8] sm:$0xff]
    %v345 = vld [vmem:[%s8 + $0x8] sm:$0xff]
    %v346 = vld [vmem:[%s9] sm:$0x1]
    %v348 = vlaneseq
    %v349 = vshrl.u32 %v348, 7
    %v350 = vsub.s32 0, %v349
    %v351 = vrot.slane %v346, %v350
    %vm353 = vcmask 130048
    %v355 = vsel %vm353, %v343, 0
    %357 = vmatprep.subr.mxu0 0.0
    %358 = vmatpush1.msra.mxu0 %v344
    %359 = vmatprep.subr.mxu0 0.0
    %360 = vmatpush1.msra.mxu0 %v345
    %361 = vmatprep.subr.mxu0 0.0
    %362 = vmatpush1.msra.mxu0 0.0
    %363 = vmatprep.subr.mxu0 0.0
    %364 = vmatpush1.msra.mxu0 0.0
    %365 = vmatprep.subr.mxu0 0.0
    %366 = vmatpush1.msra.mxu0 0.0
    %367 = vmatprep.subr.mxu0 0.0
    %368 = vmatpush1.msra.mxu0 0.0
    %369 = vmatprep.subr.mxu0 0.0
    %370 = vmatpush1.msra.mxu0 0.0
    %371 = vmatprep.subr.mxu0 0.0
    %372 = vmatpush1.msra.mxu0 0.0
    %373 = vmatprep.subr.mxu0 0.0
    %374 = vmatpush1.msra.mxu0 0.0
    %375 = vmatprep.subr.mxu0 0.0
    %376 = vmatpush1.msra.mxu0 0.0
    %377 = vmatprep.subr.mxu0 0.0
    %378 = vmatpush1.msra.mxu0 0.0
    %379 = vmatprep.subr.mxu0 0.0
    %380 = vmatpush1.msra.mxu0 0.0
    %381 = vmatprep.subr.mxu0 0.0
    %382 = vmatpush1.msra.mxu0 0.0
    %383 = vmatprep.subr.mxu0 0.0
    %384 = vmatpush1.msra.mxu0 0.0
    %385 = vmatprep.subr.mxu0 0.0
    %386 = vmatpush1.msra.mxu0 0.0
    %387 = vmatprep.subr.mxu0 0.0
    %388 = vmatpush1.msra.mxu0 0.0
    %389 = vmatprep.subr.mxu0 0.0
    %390 = vmatpush1.msra.mxu0 0.0
    %391 = vmatprep.subr.mxu0 0.0
    %392 = vmatpush1.msra.mxu0 0.0
    %393 = vmatprep.subr.mxu0 0.0
    %394 = vmatpush1.msra.mxu0 0.0
    %395 = vmatprep.subr.mxu0 0.0
    %396 = vmatpush1.msra.mxu0 0.0
    %397 = vmatprep.subr.mxu0 0.0
    %398 = vmatpush1.msra.mxu0 0.0
    %399 = vmatprep.subr.mxu0 0.0
    %400 = vmatpush1.msra.mxu0 0.0
    %401 = vmatprep.subr.mxu0 0.0
    %402 = vmatpush1.msra.mxu0 0.0
    %403 = vmatprep.subr.mxu0 0.0
    %404 = vmatpush1.msra.mxu0 0.0
    %405 = vmatprep.subr.mxu0 0.0
    %406 = vmatpush1.msra.mxu0 0.0
    %407 = vmatprep.subr.mxu0 0.0
    %408 = vmatpush1.msra.mxu0 0.0
    %409 = vmatprep.subr.mxu0 0.0
    %410 = vmatpush1.msra.mxu0 0.0
    %411 = vmatprep.subr.mxu0 0.0
    %412 = vmatpush1.msra.mxu0 0.0
    %413 = vmatprep.subr.mxu0 0.0
    %414 = vmatpush1.msra.mxu0 0.0
    %415 = vmatprep.subr.mxu0 0.0
    %416 = vmatpush1.msra.mxu0 0.0
    %417 = vmatprep.subr.mxu0 0.0
    %418 = vmatpush1.msra.mxu0 0.0
    %419 = vmatprep.subr.mxu0 0.0
    %420 = vmatpush1.msra.mxu0 0.0
    %421 = vmatprep.mubr.f32.mxu0 0.0
    %422 = vmatmul.mubr.f32.gmra.mrb[0].mxu0 %v355
    %v423 = vpop.f32.mrb[0].mxu0
    %v424 = vadd.f32 %v351, %v423
    %v425 = vpop.f32.mrb[0].mxu0
    %426 = vdwg.mxu0
    %vm427 = vcmask 123904
    %428 = vst.msk [vmem:[#allocation2] sm:$0x3] %vm427, %v255
    %429 = vst.msk [vmem:[#allocation4] sm:$0x3] %vm427, %v336
    %430 = vst.msk [vmem:[#allocation6] sm:$0x3] %vm427, %v343
    %v431 = vmax.f32 %v424, 0.0
    %432 = vst.msk [vmem:[%s14] sm:$0x3] %vm131, %v431
    // Predicated region
    $region46: #{cnn_vae_forward.14} parent=1 // pred_check
      _
    $region47: #{cnn_vae_forward.14} parent=1 // pred_check_branch
      %434 = sbr.rel (0) target = $region49
    $region48: #{cnn_vae_forward.14} parent=1 // pred_region
      %s436 = ssub.s32 32, 32
      %437 = vsyncadd [#allocation3], %s436
      %s439 = sshll.u32 [#allocation2], 4
      %s440 = int_to_ptr.vmem [resolvable:$true] %s439
      %442 = dma.vmem_to_hbm [thread:$0]  %s440, 32, %s11, [#allocation3]
    $region49: #{cnn_vae_forward.14} parent=1 // pred_fallthru
      _
    // Predicated region
    $region50: #{cnn_vae_forward.14} parent=1 // pred_check
      _
    $region51: #{cnn_vae_forward.14} parent=1 // pred_check_branch
      %444 = sbr.rel (0) target = $region53
    $region52: #{cnn_vae_forward.14} parent=1 // pred_region
      %s446 = ssub.s32 32, 32
      %447 = vsyncadd [#allocation5], %s446
      %s449 = sshll.u32 [#allocation4], 4
      %s450 = int_to_ptr.vmem [resolvable:$true] %s449
      %452 = dma.vmem_to_hbm [thread:$0]  %s450, 32, %s12, [#allocation5]
    $region53: #{cnn_vae_forward.14} parent=1 // pred_fallthru
      _
    // Predicated region
    $region54: #{cnn_vae_forward.14} parent=1 // pred_check
      _
    $region55: #{cnn_vae_forward.14} parent=1 // pred_check_branch
      %454 = sbr.rel (0) target = $region57
    $region56: #{cnn_vae_forward.14} parent=1 // pred_region
      %s456 = ssub.s32 32, 32
      %457 = vsyncadd [#allocation5], %s456
      %s459 = sshll.u32 [#allocation6], 4
      %s460 = int_to_ptr.vmem [resolvable:$true] %s459
      %462 = dma.vmem_to_hbm [thread:$0]  %s460, 32, %s13, [#allocation5]
    $region57: #{cnn_vae_forward.14} parent=1 // pred_fallthru
      _
    // Predicated region
    $region58: #{cnn_vae_forward.14} parent=1 // pred_check
      _
    $region59: #{cnn_vae_forward.14} parent=1 // pred_check_branch
      %464 = sbr.rel (0) target = $region61
    $region60: #{cnn_vae_forward.14} parent=1 // pred_region
      _
    $region61: #{cnn_vae_forward.14} parent=1 // pred_fallthru
      _
    // Predicated region
    $region62: #{cnn_vae_forward.14} parent=1 // pred_check
      _
    $region63: #{cnn_vae_forward.14} parent=1 // pred_check_branch
      %466 = sbr.rel (0) target = $region65
    $region64: #{cnn_vae_forward.14} parent=1 // pred_region
      %467 = dma.done [#allocation3], 32
    $region65: #{cnn_vae_forward.14} parent=1 // pred_fallthru
      _
    // Predicated region
    $region66: #{cnn_vae_forward.14} parent=1 // pred_check
      _
    $region67: #{cnn_vae_forward.14} parent=1 // pred_check_branch
      %469 = sbr.rel (0) target = $region69
    $region68: #{cnn_vae_forward.14} parent=1 // pred_region
      %470 = dma.done [#allocation5], 32
    $region69: #{cnn_vae_forward.14} parent=1 // pred_fallthru
      _
    // Predicated region
    $region70: #{cnn_vae_forward.14} parent=1 // pred_check
      _
    $region71: #{cnn_vae_forward.14} parent=1 // pred_check_branch
      %472 = sbr.rel (0) target = $region73
    $region72: #{cnn_vae_forward.14} parent=1 // pred_region
      %473 = dma.done [#allocation5], 32
    $region73: #{cnn_vae_forward.14} parent=1 // pred_fallthru
      _
    // Predicated region
    $region74: #{cnn_vae_forward.14} parent=1 // pred_check
      _
    $region75: #{cnn_vae_forward.14} parent=1 // pred_check_branch
      %475 = sbr.rel (0) target = $region77
    $region76: #{cnn_vae_forward.14} parent=1 // pred_region
      _
    $region77: #{cnn_vae_forward.14} parent=1 // pred_fallthru
      _
    %476 = vsyncpa [#allocation3], 1
    %477 = vsyncpa [#allocation5], 1

// kernel: cnn_vae_forward.15
$region0: #{cnn_vae_forward.15}
  #allocation0 [shape = 'u32[]', space=smem, size = 0x4, offset = 0x4, fixed_abs, tag = 'smem constant byte address 0x4 - core index']
  #allocation1 [shape = 'u32[144,128]{1,0:T(1,128)}', space=vmem, size = 0x12000, scoped, tag = 'internal scratch']
  %s0 = inlined_call_operand.vmem [shape: bf16[2,288], index: 0, kind: input, shape index: {}]
  %s1 = inlined_call_operand.vmem [shape: bf16[288,512], index: 1, kind: input, shape index: {}]
  %s2 = inlined_call_operand.vmem [shape: f32[1,128], index: 2, kind: input, shape index: {}]
  %s3 = inlined_call_operand.vmem [shape: f32[1,128], index: 3, kind: input, shape index: {}]
  %s4 = inlined_call_operand.vmem [shape: bf16[2,512], index: 4, kind: output, shape index: {}]
  %s5 = sld [smem:[#allocation0]]
  $region26: #{cnn_vae_forward.15} parent=0
    _
  %s7 = ssub.s32 1, %s5
  %s8 = scalar_select 0, %s7, %s5
  // Predicated region
  $region2: #{cnn_vae_forward.15} parent=0 // pred_check
    _
  $region3: #{cnn_vae_forward.15} parent=0 // pred_check_branch
    %10 = sbr.rel (0) target = $region5
  $region4: #{cnn_vae_forward.15} parent=0 // pred_region
    _
  $region5: #{cnn_vae_forward.15} parent=0 // pred_fallthru
    _
  // Predicated region
  $region6: #{cnn_vae_forward.15} parent=0 // pred_check
    _
  $region7: #{cnn_vae_forward.15} parent=0 // pred_check_branch
    %12 = sbr.rel (0) target = $region9
  $region8: #{cnn_vae_forward.15} parent=0 // pred_region
    _
  $region9: #{cnn_vae_forward.15} parent=0 // pred_fallthru
    _
  // Predicated region
  $region10: #{cnn_vae_forward.15} parent=0 // pred_check
    _
  $region11: #{cnn_vae_forward.15} parent=0 // pred_check_branch
    %14 = sbr.rel (0) target = $region13
  $region12: #{cnn_vae_forward.15} parent=0 // pred_region
    _
  $region13: #{cnn_vae_forward.15} parent=0 // pred_fallthru
    _
  // Predicated region
  $region14: #{cnn_vae_forward.15} parent=0 // pred_check
    _
  $region15: #{cnn_vae_forward.15} parent=0 // pred_check_branch
    %16 = sbr.rel (0) target = $region17
  $region16: #{cnn_vae_forward.15} parent=0 // pred_region
    _
  $region17: #{cnn_vae_forward.15} parent=0 // pred_fallthru
    _
  %v18 = vld [vmem:[%s0] sm:$0x7]
  %v19 = vld [vmem:[%s1] sm:$0xff]
  %v20 = vld [vmem:[%s1 + $0x8] sm:$0xff]
  %v21 = vld [vmem:[%s1 + $0x10] sm:$0xff]
  %v22 = vld [vmem:[%s1 + $0x18] sm:$0xff]
  %v23 = vld [vmem:[%s1 + $0x20] sm:$0xff]
  %v24 = vld [vmem:[%s1 + $0x28] sm:$0xff]
  %v25 = vld [vmem:[%s1 + $0x30] sm:$0xff]
  %v26 = vld [vmem:[%s1 + $0x38] sm:$0xff]
  %v27 = vld [vmem:[%s1 + $0x40] sm:$0xff]
  %v28 = vld [vmem:[%s1 + $0x48] sm:$0xff]
  %v29 = vld [vmem:[%s1 + $0x50] sm:$0xff]
  %v30 = vld [vmem:[%s1 + $0x58] sm:$0xff]
  %v31 = vld [vmem:[%s1 + $0x60] sm:$0xff]
  %v32 = vld [vmem:[%s1 + $0x68] sm:$0xff]
  %v33 = vld [vmem:[%s1 + $0x70] sm:$0xff]
  %v34 = vld [vmem:[%s1 + $0x78] sm:$0xff]
  %v35 = vld [vmem:[%s1 + $0x80] sm:$0xff]
  %v36 = vld [vmem:[%s1 + $0x88] sm:$0xff]
  %v37 = vld [vmem:[%s1 + $0x90] sm:$0xff]
  %v38 = vld [vmem:[%s1 + $0x98] sm:$0xff]
  %v39 = vld [vmem:[%s1 + $0xa0] sm:$0xff]
  %v40 = vld [vmem:[%s1 + $0xa8] sm:$0xff]
  %v41 = vld [vmem:[%s1 + $0xb0] sm:$0xff]
  %v42 = vld [vmem:[%s1 + $0xb8] sm:$0xff]
  %v43 = vld [vmem:[%s1 + $0xc0] sm:$0xff]
  %v44 = vld [vmem:[%s1 + $0xc8] sm:$0xff]
  %v45 = vld [vmem:[%s1 + $0xd0] sm:$0xff]
  %v46 = vld [vmem:[%s1 + $0xd8] sm:$0xff]
  %v47 = vld [vmem:[%s1 + $0xe0] sm:$0xff]
  %v48 = vld [vmem:[%s1 + $0xe8] sm:$0xff]
  %v49 = vld [vmem:[%s1 + $0xf0] sm:$0xff]
  %v50 = vld [vmem:[%s1 + $0xf8] sm:$0xff]
  %v51 = vld [vmem:[%s1 + $0x100] sm:$0xff]
  %v52 = vld [vmem:[%s1 + $0x108] sm:$0xff]
  %v53 = vld [vmem:[%s1 + $0x110] sm:$0xff]
  %v54 = vld [vmem:[%s1 + $0x118] sm:$0xff]
  %v55 = vld [vmem:[%s1 + $0x120] sm:$0xff]
  %v56 = vld [vmem:[%s1 + $0x128] sm:$0xff]
  %v57 = vld [vmem:[%s1 + $0x130] sm:$0xff]
  %v58 = vld [vmem:[%s1 + $0x138] sm:$0xff]
  %v59 = vld [vmem:[%s1 + $0x140] sm:$0xff]
  %v60 = vld [vmem:[%s1 + $0x148] sm:$0xff]
  %v61 = vld [vmem:[%s1 + $0x150] sm:$0xff]
  %v62 = vld [vmem:[%s1 + $0x158] sm:$0xff]
  %v63 = vld [vmem:[%s1 + $0x160] sm:$0xff]
  %v64 = vld [vmem:[%s1 + $0x168] sm:$0xff]
  %v65 = vld [vmem:[%s1 + $0x170] sm:$0xff]
  %v66 = vld [vmem:[%s1 + $0x178] sm:$0xff]
  %v67 = vld [vmem:[%s1 + $0x180] sm:$0xff]
  %v68 = vld [vmem:[%s1 + $0x188] sm:$0xff]
  %v69 = vld [vmem:[%s1 + $0x190] sm:$0xff]
  %v70 = vld [vmem:[%s1 + $0x198] sm:$0xff]
  %v71 = vld [vmem:[%s1 + $0x1a0] sm:$0xff]
  %v72 = vld [vmem:[%s1 + $0x1a8] sm:$0xff]
  %v73 = vld [vmem:[%s1 + $0x1b0] sm:$0xff]
  %v74 = vld [vmem:[%s1 + $0x1b8] sm:$0xff]
  %v75 = vld [vmem:[%s1 + $0x1c0] sm:$0xff]
  %v76 = vld [vmem:[%s1 + $0x1c8] sm:$0xff]
  %v77 = vld [vmem:[%s1 + $0x1d0] sm:$0xff]
  %v78 = vld [vmem:[%s1 + $0x1d8] sm:$0xff]
  %v79 = vld [vmem:[%s1 + $0x1e0] sm:$0xff]
  %v80 = vld [vmem:[%s1 + $0x1e8] sm:$0xff]
  %v81 = vld [vmem:[%s1 + $0x1f0] sm:$0xff]
  %v82 = vld [vmem:[%s1 + $0x1f8] sm:$0xff]
  %v83 = vld [vmem:[%s1 + $0x200] sm:$0xff]
  %v84 = vld [vmem:[%s1 + $0x208] sm:$0xff]
  %v85 = vld [vmem:[%s1 + $0x210] sm:$0xff]
  %v86 = vld [vmem:[%s1 + $0x218] sm:$0xff]
  %v87 = vld [vmem:[%s1 + $0x220] sm:$0xff]
  %v88 = vld [vmem:[%s1 + $0x228] sm:$0xff]
  %v89 = vld [vmem:[%s1 + $0x230] sm:$0xff]
  %v90 = vld [vmem:[%s1 + $0x238] sm:$0xff]
  %v93 = vunpack.c.l.s4 1966171168
  %v94 = vunpack.c.0.s8 %v93
  %v95 = vlaneseq
  %v96 = vshrl.u32 %v95, 7
  %v97 = vsub.s32 %v94, %v96
  %v98 = vrot.slane %v18, %v97
  %v99 = vcombine.high %v98, %v98
  %v101 = vunpack.c.l.s4 1966171168
  %v102 = vunpack.c.0.s8 %v101
  %v103 = vlaneseq
  %v104 = vshrl.u32 %v103, 7
  %v105 = vsub.s32 %v102, %v104
  %v106 = vrot.slane %v98, %v105
  %v108 = vunpack.c.l.s4 1966171168
  %v109 = vunpack.c.0.s8 %v108
  %v110 = vlaneseq
  %v111 = vshrl.u32 %v110, 7
  %v112 = vsub.s32 %v109, %v111
  %v113 = vrot.slane %v99, %v112
  %v114 = vcombine.high %v106, %v106
  %v189 = vunpack.c.l.b16 %v19
  %v190 = vunpack.c.h.b16 %v19
  %v191 = vunpack.c.l.b16 %v20
  %v192 = vunpack.c.h.b16 %v20
  %v193 = vunpack.c.l.b16 %v21
  %v194 = vunpack.c.h.b16 %v21
  %v195 = vunpack.c.l.b16 %v22
  %v196 = vunpack.c.h.b16 %v22
  %v197 = vunpack.c.l.b16 %v23
  %v198 = vunpack.c.h.b16 %v23
  %v199 = vunpack.c.l.b16 %v24
  %v200 = vunpack.c.h.b16 %v24
  %v201 = vunpack.c.l.b16 %v25
  %v202 = vunpack.c.h.b16 %v25
  %v203 = vunpack.c.l.b16 %v26
  %v204 = vunpack.c.h.b16 %v26
  %v205 = vunpack.c.l.b16 %v27
  %v206 = vunpack.c.h.b16 %v27
  %v207 = vunpack.c.l.b16 %v28
  %v208 = vunpack.c.h.b16 %v28
  %v209 = vunpack.c.l.b16 %v29
  %v210 = vunpack.c.h.b16 %v29
  %v211 = vunpack.c.l.b16 %v30
  %v212 = vunpack.c.h.b16 %v30
  %v213 = vunpack.c.l.b16 %v31
  %v214 = vunpack.c.h.b16 %v31
  %v215 = vunpack.c.l.b16 %v32
  %v216 = vunpack.c.h.b16 %v32
  %v217 = vunpack.c.l.b16 %v33
  %v218 = vunpack.c.h.b16 %v33
  %v219 = vunpack.c.l.b16 %v34
  %v220 = vunpack.c.h.b16 %v34
  %v221 = vunpack.c.l.b16 %v35
  %v222 = vunpack.c.h.b16 %v35
  %v223 = vunpack.c.l.b16 %v36
  %v224 = vunpack.c.h.b16 %v36
  %v225 = vunpack.c.l.b16 %v37
  %v226 = vunpack.c.h.b16 %v37
  %v227 = vunpack.c.l.b16 %v38
  %v228 = vunpack.c.h.b16 %v38
  %v229 = vunpack.c.l.b16 %v39
  %v230 = vunpack.c.h.b16 %v39
  %v231 = vunpack.c.l.b16 %v40
  %v232 = vunpack.c.h.b16 %v40
  %v233 = vunpack.c.l.b16 %v41
  %v234 = vunpack.c.h.b16 %v41
  %v235 = vunpack.c.l.b16 %v42
  %v236 = vunpack.c.h.b16 %v42
  %v237 = vunpack.c.l.b16 %v43
  %v238 = vunpack.c.h.b16 %v43
  %v239 = vunpack.c.l.b16 %v44
  %v240 = vunpack.c.h.b16 %v44
  %v241 = vunpack.c.l.b16 %v45
  %v242 = vunpack.c.h.b16 %v45
  %v243 = vunpack.c.l.b16 %v46
  %v244 = vunpack.c.h.b16 %v46
  %v245 = vunpack.c.l.b16 %v47
  %v246 = vunpack.c.h.b16 %v47
  %v247 = vunpack.c.l.b16 %v48
  %v248 = vunpack.c.h.b16 %v48
  %v249 = vunpack.c.l.b16 %v49
  %v250 = vunpack.c.h.b16 %v49
  %v251 = vunpack.c.l.b16 %v50
  %v252 = vunpack.c.h.b16 %v50
  %v253 = vunpack.c.l.b16 %v51
  %v254 = vunpack.c.h.b16 %v51
  %v255 = vunpack.c.l.b16 %v52
  %v256 = vunpack.c.h.b16 %v52
  %v257 = vunpack.c.l.b16 %v53
  %v258 = vunpack.c.h.b16 %v53
  %v259 = vunpack.c.l.b16 %v54
  %v260 = vunpack.c.h.b16 %v54
  %v261 = vunpack.c.l.b16 %v55
  %v262 = vunpack.c.h.b16 %v55
  %v263 = vunpack.c.l.b16 %v56
  %v264 = vunpack.c.h.b16 %v56
  %v265 = vunpack.c.l.b16 %v57
  %v266 = vunpack.c.h.b16 %v57
  %v267 = vunpack.c.l.b16 %v58
  %v268 = vunpack.c.h.b16 %v58
  %v269 = vunpack.c.l.b16 %v59
  %v270 = vunpack.c.h.b16 %v59
  %v271 = vunpack.c.l.b16 %v60
  %v272 = vunpack.c.h.b16 %v60
  %v273 = vunpack.c.l.b16 %v61
  %v274 = vunpack.c.h.b16 %v61
  %v275 = vunpack.c.l.b16 %v62
  %v276 = vunpack.c.h.b16 %v62
  %v277 = vunpack.c.l.b16 %v63
  %v278 = vunpack.c.h.b16 %v63
  %v279 = vunpack.c.l.b16 %v64
  %v280 = vunpack.c.h.b16 %v64
  %v281 = vunpack.c.l.b16 %v65
  %v282 = vunpack.c.h.b16 %v65
  %v283 = vunpack.c.l.b16 %v66
  %v284 = vunpack.c.h.b16 %v66
  %v285 = vunpack.c.l.b16 %v67
  %v286 = vunpack.c.h.b16 %v67
  %v287 = vunpack.c.l.b16 %v68
  %v288 = vunpack.c.h.b16 %v68
  %v289 = vunpack.c.l.b16 %v69
  %v290 = vunpack.c.h.b16 %v69
  %v291 = vunpack.c.l.b16 %v70
  %v292 = vunpack.c.h.b16 %v70
  %v293 = vunpack.c.l.b16 %v71
  %v294 = vunpack.c.h.b16 %v71
  %v295 = vunpack.c.l.b16 %v72
  %v296 = vunpack.c.h.b16 %v72
  %v297 = vunpack.c.l.b16 %v73
  %v298 = vunpack.c.h.b16 %v73
  %v299 = vunpack.c.l.b16 %v74
  %v300 = vunpack.c.h.b16 %v74
  %v301 = vunpack.c.l.b16 %v75
  %v302 = vunpack.c.h.b16 %v75
  %v303 = vunpack.c.l.b16 %v76
  %v304 = vunpack.c.h.b16 %v76
  %v305 = vunpack.c.l.b16 %v77
  %v306 = vunpack.c.h.b16 %v77
  %v307 = vunpack.c.l.b16 %v78
  %v308 = vunpack.c.h.b16 %v78
  %v309 = vunpack.c.l.b16 %v79
  %v310 = vunpack.c.h.b16 %v79
  %v311 = vunpack.c.l.b16 %v80
  %v312 = vunpack.c.h.b16 %v80
  %v313 = vunpack.c.l.b16 %v81
  %v314 = vunpack.c.h.b16 %v81
  %v315 = vunpack.c.l.b16 %v82
  %v316 = vunpack.c.h.b16 %v82
  %v317 = vunpack.c.l.b16 %v83
  %v318 = vunpack.c.h.b16 %v83
  %v319 = vunpack.c.l.b16 %v84
  %v320 = vunpack.c.h.b16 %v84
  %v321 = vunpack.c.l.b16 %v85
  %v322 = vunpack.c.h.b16 %v85
  %v323 = vunpack.c.l.b16 %v86
  %v324 = vunpack.c.h.b16 %v86
  %v325 = vunpack.c.l.b16 %v87
  %v326 = vunpack.c.h.b16 %v87
  %v327 = vunpack.c.l.b16 %v88
  %v328 = vunpack.c.h.b16 %v88
  %v329 = vunpack.c.l.b16 %v89
  %v330 = vunpack.c.h.b16 %v89
  %v331 = vunpack.c.l.b16 %v90
  %v332 = vunpack.c.h.b16 %v90
  %v333 = vpack.c.b16 %v193, %v189
  %v334 = vpack.c.b16 %v194, %v190
  %v335 = vpack.c.b16 %v195, %v191
  %v336 = vpack.c.b16 %v196, %v192
  %v337 = vpack.c.b16 %v201, %v197
  %v338 = vpack.c.b16 %v202, %v198
  %v339 = vpack.c.b16 %v203, %v199
  %v340 = vpack.c.b16 %v204, %v200
  %v341 = vpack.c.b16 %v209, %v205
  %v342 = vpack.c.b16 %v210, %v206
  %v343 = vpack.c.b16 %v211, %v207
  %v344 = vpack.c.b16 %v212, %v208
  %v345 = vpack.c.b16 %v217, %v213
  %v346 = vpack.c.b16 %v218, %v214
  %v347 = vpack.c.b16 %v219, %v215
  %v348 = vpack.c.b16 %v220, %v216
  %v349 = vpack.c.b16 %v225, %v221
  %v350 = vpack.c.b16 %v226, %v222
  %v351 = vpack.c.b16 %v227, %v223
  %v352 = vpack.c.b16 %v228, %v224
  %v353 = vpack.c.b16 %v233, %v229
  %v354 = vpack.c.b16 %v234, %v230
  %v355 = vpack.c.b16 %v235, %v231
  %v356 = vpack.c.b16 %v236, %v232
  %v357 = vpack.c.b16 %v241, %v237
  %v358 = vpack.c.b16 %v242, %v238
  %v359 = vpack.c.b16 %v243, %v239
  %v360 = vpack.c.b16 %v244, %v240
  %v361 = vpack.c.b16 %v249, %v245
  %v362 = vpack.c.b16 %v250, %v246
  %v363 = vpack.c.b16 %v251, %v247
  %v364 = vpack.c.b16 %v252, %v248
  %v365 = vpack.c.b16 %v257, %v253
  %v366 = vpack.c.b16 %v258, %v254
  %v367 = vpack.c.b16 %v259, %v255
  %v368 = vpack.c.b16 %v260, %v256
  %v369 = vpack.c.b16 %v265, %v261
  %v370 = vpack.c.b16 %v266, %v262
  %v371 = vpack.c.b16 %v267, %v263
  %v372 = vpack.c.b16 %v268, %v264
  %v373 = vpack.c.b16 %v273, %v269
  %v374 = vpack.c.b16 %v274, %v270
  %v375 = vpack.c.b16 %v275, %v271
  %v376 = vpack.c.b16 %v276, %v272
  %v377 = vpack.c.b16 %v281, %v277
  %v378 = vpack.c.b16 %v282, %v278
  %v379 = vpack.c.b16 %v283, %v279
  %v380 = vpack.c.b16 %v284, %v280
  %v381 = vpack.c.b16 %v289, %v285
  %v382 = vpack.c.b16 %v290, %v286
  %v383 = vpack.c.b16 %v291, %v287
  %v384 = vpack.c.b16 %v292, %v288
  %v385 = vpack.c.b16 %v297, %v293
  %v386 = vpack.c.b16 %v298, %v294
  %v387 = vpack.c.b16 %v299, %v295
  %v388 = vpack.c.b16 %v300, %v296
  %v389 = vpack.c.b16 %v305, %v301
  %v390 = vpack.c.b16 %v306, %v302
  %v391 = vpack.c.b16 %v307, %v303
  %v392 = vpack.c.b16 %v308, %v304
  %v393 = vpack.c.b16 %v313, %v309
  %v394 = vpack.c.b16 %v314, %v310
  %v395 = vpack.c.b16 %v315, %v311
  %v396 = vpack.c.b16 %v316, %v312
  %v397 = vpack.c.b16 %v321, %v317
  %v398 = vpack.c.b16 %v322, %v318
  %v399 = vpack.c.b16 %v323, %v319
  %v400 = vpack.c.b16 %v324, %v320
  %v401 = vpack.c.b16 %v329, %v325
  %v402 = vpack.c.b16 %v330, %v326
  %v403 = vpack.c.b16 %v331, %v327
  %v404 = vpack.c.b16 %v332, %v328
  %vm477 = vcmask 261120
  %v479 = vsel %vm477, %v114, 0
  %481 = vmatprep.subr.bf16.mxu0 %v334
  %482 = vmatpush1.bf16.msra.mxu0 %v333
  %483 = vmatprep.subr.bf16.mxu0 %v338
  %484 = vmatpush1.bf16.msra.mxu0 %v337
  %485 = vmatprep.subr.bf16.mxu0 %v342
  %486 = vmatpush1.bf16.msra.mxu0 %v341
  %487 = vmatprep.subr.bf16.mxu0 %v346
  %488 = vmatpush1.bf16.msra.mxu0 %v345
  %489 = vmatprep.subr.bf16.mxu0 %v350
  %490 = vmatpush1.bf16.msra.mxu0 %v349
  %491 = vmatprep.subr.bf16.mxu0 %v354
  %492 = vmatpush1.bf16.msra.mxu0 %v353
  %493 = vmatprep.subr.bf16.mxu0 %v358
  %494 = vmatpush1.bf16.msra.mxu0 %v357
  %495 = vmatprep.subr.bf16.mxu0 %v362
  %496 = vmatpush1.bf16.msra.mxu0 %v361
  %497 = vmatprep.subr.bf16.mxu0 %v366
  %498 = vmatpush1.bf16.msra.mxu0 %v365
  %499 = vmatprep.subr.bf16.mxu0 %v370
  %500 = vmatpush1.bf16.msra.mxu0 %v369
  %501 = vmatprep.subr.bf16.mxu0 %v374
  %502 = vmatpush1.bf16.msra.mxu0 %v373
  %503 = vmatprep.subr.bf16.mxu0 %v378
  %504 = vmatpush1.bf16.msra.mxu0 %v377
  %505 = vmatprep.subr.bf16.mxu0 %v382
  %506 = vmatpush1.bf16.msra.mxu0 %v381
  %507 = vmatprep.subr.bf16.mxu0 %v386
  %508 = vmatpush1.bf16.msra.mxu0 %v385
  %509 = vmatprep.subr.bf16.mxu0 %v390
  %510 = vmatpush1.bf16.msra.mxu0 %v389
  %511 = vmatprep.subr.bf16.mxu0 %v394
  %512 = vmatpush1.bf16.msra.mxu0 %v393
  %513 = vmatprep.mubr.bf16.mxu0 %v113
  %514 = vmatmul.mubr.bf16.gmra.mrb[0].mxu0 %v106
  %v515 = vpop.f32.mrb[0].mxu0
  %v516 = vadd.f32 0.0, %v515
  %v517 = vpop.f32.mrb[0].mxu0
  %v518 = vadd.f32 0.0, %v517
  %v519 = vpop.f32.mrb[0].mxu0
  %v520 = vpop.f32.mrb[0].mxu0
  %521 = vdwg.mxu0
  %522 = vmatprep.subr.bf16.mxu0 %v398
  %523 = vmatpush1.bf16.msra.mxu0 %v397
  %524 = vmatprep.subr.bf16.mxu0 %v402
  %525 = vmatpush1.bf16.msra.mxu0 %v401
  %526 = vmatprep.subr.bf16.mxu0 0
  %527 = vmatpush1.bf16.msra.mxu0 0
  %528 = vmatprep.subr.bf16.mxu0 0
  %529 = vmatpush1.bf16.msra.mxu0 0
  %530 = vmatprep.subr.bf16.mxu0 0
  %531 = vmatpush1.bf16.msra.mxu0 0
  %532 = vmatprep.subr.bf16.mxu0 0
  %533 = vmatpush1.bf16.msra.mxu0 0
  %534 = vmatprep.subr.bf16.mxu0 0
  %535 = vmatpush1.bf16.msra.mxu0 0
  %536 = vmatprep.subr.bf16.mxu0 0
  %537 = vmatpush1.bf16.msra.mxu0 0
  %538 = vmatprep.subr.bf16.mxu0 0
  %539 = vmatpush1.bf16.msra.mxu0 0
  %540 = vmatprep.subr.bf16.mxu0 0
  %541 = vmatpush1.bf16.msra.mxu0 0
  %542 = vmatprep.subr.bf16.mxu0 0
  %543 = vmatpush1.bf16.msra.mxu0 0
  %544 = vmatprep.subr.bf16.mxu0 0
  %545 = vmatpush1.bf16.msra.mxu0 0
  %546 = vmatprep.subr.bf16.mxu0 0
  %547 = vmatpush1.bf16.msra.mxu0 0
  %548 = vmatprep.subr.bf16.mxu0 0
  %549 = vmatpush1.bf16.msra.mxu0 0
  %550 = vmatprep.subr.bf16.mxu0 0
  %551 = vmatpush1.bf16.msra.mxu0 0
  %552 = vmatprep.subr.bf16.mxu0 0
  %553 = vmatpush1.bf16.msra.mxu0 0
  %554 = vmatprep.mubr.bf16.mxu0 0
  %555 = vmatmul.mubr.bf16.gmra.mrb[0].mxu0 %v479
  %v556 = vpop.f32.mrb[0].mxu0
  %v557 = vadd.f32 %v516, %v556
  %v558 = vpop.f32.mrb[0].mxu0
  %v559 = vadd.f32 %v518, %v558
  %v560 = vpop.f32.mrb[0].mxu0
  %v561 = vpop.f32.mrb[0].mxu0
  %562 = vdwg.mxu0
  %563 = vmatprep.subr.bf16.mxu0 %v336
  %564 = vmatpush1.bf16.msra.mxu0 %v335
  %565 = vmatprep.subr.bf16.mxu0 %v340
  %566 = vmatpush1.bf16.msra.mxu0 %v339
  %567 = vmatprep.subr.bf16.mxu0 %v344
  %568 = vmatpush1.bf16.msra.mxu0 %v343
  %569 = vmatprep.subr.bf16.mxu0 %v348
  %570 = vmatpush1.bf16.msra.mxu0 %v347
  %571 = vmatprep.subr.bf16.mxu0 %v352
  %572 = vmatpush1.bf16.msra.mxu0 %v351
  %573 = vmatprep.subr.bf16.mxu0 %v356
  %574 = vmatpush1.bf16.msra.mxu0 %v355
  %575 = vmatprep.subr.bf16.mxu0 %v360
  %576 = vmatpush1.bf16.msra.mxu0 %v359
  %577 = vmatprep.subr.bf16.mxu0 %v364
  %578 = vmatpush1.bf16.msra.mxu0 %v363
  %579 = vmatprep.subr.bf16.mxu0 %v368
  %580 = vmatpush1.bf16.msra.mxu0 %v367
  %581 = vmatprep.subr.bf16.mxu0 %v372
  %582 = vmatpush1.bf16.msra.mxu0 %v371
  %583 = vmatprep.subr.bf16.mxu0 %v376
  %584 = vmatpush1.bf16.msra.mxu0 %v375
  %585 = vmatprep.subr.bf16.mxu0 %v380
  %586 = vmatpush1.bf16.msra.mxu0 %v379
  %587 = vmatprep.subr.bf16.mxu0 %v384
  %588 = vmatpush1.bf16.msra.mxu0 %v383
  %589 = vmatprep.subr.bf16.mxu0 %v388
  %590 = vmatpush1.bf16.msra.mxu0 %v387
  %591 = vmatprep.subr.bf16.mxu0 %v392
  %592 = vmatpush1.bf16.msra.mxu0 %v391
  %593 = vmatprep.subr.bf16.mxu0 %v396
  %594 = vmatpush1.bf16.msra.mxu0 %v395
  %595 = vmatprep.mubr.bf16.mxu0 %v113
  %596 = vmatmul.mubr.bf16.gmra.mrb[0].mxu0 %v106
  %v597 = vpop.f32.mrb[0].mxu0
  %v598 = vadd.f32 0.0, %v597
  %v599 = vpop.f32.mrb[0].mxu0
  %v600 = vadd.f32 0.0, %v599
  %v601 = vpop.f32.mrb[0].mxu0
  %v602 = vpop.f32.mrb[0].mxu0
  %603 = vdwg.mxu0
  %604 = vmatprep.subr.bf16.mxu0 %v400
  %605 = vmatpush1.bf16.msra.mxu0 %v399
  %606 = vmatprep.subr.bf16.mxu0 %v404
  %607 = vmatpush1.bf16.msra.mxu0 %v403
  %608 = vmatprep.subr.bf16.mxu0 0
  %609 = vmatpush1.bf16.msra.mxu0 0
  %610 = vmatprep.subr.bf16.mxu0 0
  %611 = vmatpush1.bf16.msra.mxu0 0
  %612 = vmatprep.subr.bf16.mxu0 0
  %613 = vmatpush1.bf16.msra.mxu0 0
  %614 = vmatprep.subr.bf16.mxu0 0
  %615 = vmatpush1.bf16.msra.mxu0 0
  %616 = vmatprep.subr.bf16.mxu0 0
  %617 = vmatpush1.bf16.msra.mxu0 0
  %618 = vmatprep.subr.bf16.mxu0 0
  %619 = vmatpush1.bf16.msra.mxu0 0
  %620 = vmatprep.subr.bf16.mxu0 0
  %621 = vmatpush1.bf16.msra.mxu0 0
  %622 = vmatprep.subr.bf16.mxu0 0
  %623 = vmatpush1.bf16.msra.mxu0 0
  %624 = vmatprep.subr.bf16.mxu0 0
  %625 = vmatpush1.bf16.msra.mxu0 0
  %626 = vmatprep.subr.bf16.mxu0 0
  %627 = vmatpush1.bf16.msra.mxu0 0
  %628 = vmatprep.subr.bf16.mxu0 0
  %629 = vmatpush1.bf16.msra.mxu0 0
  %630 = vmatprep.subr.bf16.mxu0 0
  %631 = vmatpush1.bf16.msra.mxu0 0
  %632 = vmatprep.subr.bf16.mxu0 0
  %633 = vmatpush1.bf16.msra.mxu0 0
  %634 = vmatprep.subr.bf16.mxu0 0
  %635 = vmatpush1.bf16.msra.mxu0 0
  %636 = vmatprep.mubr.bf16.mxu0 0
  %637 = vmatmul.mubr.bf16.gmra.mrb[0].mxu0 %v479
  %v638 = vpop.f32.mrb[0].mxu0
  %v639 = vadd.f32 %v598, %v638
  %v640 = vpop.f32.mrb[0].mxu0
  %v641 = vadd.f32 %v600, %v640
  %v642 = vpop.f32.mrb[0].mxu0
  %v643 = vpop.f32.mrb[0].mxu0
  %644 = vdwg.mxu0
  %vm645 = vcmask 1041408
  %v646 = vsel %vm645, %v557, 0.0
  %v647 = vrot.slane %v646, 4
  %v648 = vadd.f32 %v646, %v647
  %v649 = vrot.slane %v648, 2
  %v650 = vadd.f32 %v648, %v649
  %v651 = vrot.slane %v650, 1
  %v652 = vadd.f32 %v650, %v651
  %v653 = vadd.f32 %v652, 0.0
  %v654 = vsel %vm645, %v559, 0.0
  %v655 = vrot.slane %v654, 4
  %v656 = vadd.f32 %v654, %v655
  %v657 = vrot.slane %v656, 2
  %v658 = vadd.f32 %v656, %v657
  %v659 = vrot.slane %v658, 1
  %v660 = vadd.f32 %v658, %v659
  %v661 = vadd.f32 %v653, %v660
  %v662 = vsel %vm645, %v639, 0.0
  %v663 = vrot.slane %v662, 4
  %v664 = vadd.f32 %v662, %v663
  %v665 = vrot.slane %v664, 2
  %v666 = vadd.f32 %v664, %v665
  %v667 = vrot.slane %v666, 1
  %v668 = vadd.f32 %v666, %v667
  %v669 = vadd.f32 %v661, %v668
  %v670 = vsel %vm645, %v641, 0.0
  %v671 = vrot.slane %v670, 4
  %v672 = vadd.f32 %v670, %v671
  %v673 = vrot.slane %v672, 2
  %v674 = vadd.f32 %v672, %v673
  %v675 = vrot.slane %v674, 1
  %v676 = vadd.f32 %v674, %v675
  %v677 = vadd.f32 %v669, %v676
  %v678 = vmul.f32 %v677, 0.125
  %v679 = vsub.f32 %v557, %v678
  %v680 = vmul.f32 %v679, %v679
  %v681 = vsel %vm645, %v680, 0.0
  %v682 = vrot.slane %v681, 4
  %v683 = vadd.f32 %v681, %v682
  %v684 = vrot.slane %v683, 2
  %v685 = vadd.f32 %v683, %v684
  %v686 = vrot.slane %v685, 1
  %v687 = vadd.f32 %v685, %v686
  %v688 = vadd.f32 %v687, 0.0
  %v689 = vsub.f32 %v559, %v678
  %v690 = vmul.f32 %v689, %v689
  %v691 = vsel %vm645, %v690, 0.0
  %v692 = vrot.slane %v691, 4
  %v693 = vadd.f32 %v691, %v692
  %v694 = vrot.slane %v693, 2
  %v695 = vadd.f32 %v693, %v694
  %v696 = vrot.slane %v695, 1
  %v697 = vadd.f32 %v695, %v696
  %v698 = vadd.f32 %v688, %v697
  %v699 = vsub.f32 %v639, %v678
  %v700 = vmul.f32 %v699, %v699
  %v701 = vsel %vm645, %v700, 0.0
  %v702 = vrot.slane %v701, 4
  %v703 = vadd.f32 %v701, %v702
  %v704 = vrot.slane %v703, 2
  %v705 = vadd.f32 %v703, %v704
  %v706 = vrot.slane %v705, 1
  %v707 = vadd.f32 %v705, %v706
  %v708 = vadd.f32 %v698, %v707
  %v709 = vsub.f32 %v641, %v678
  %v710 = vmul.f32 %v709, %v709
  %v711 = vsel %vm645, %v710, 0.0
  %v712 = vrot.slane %v711, 4
  %v713 = vadd.f32 %v711, %v712
  %v714 = vrot.slane %v713, 2
  %v715 = vadd.f32 %v713, %v714
  %v716 = vrot.slane %v715, 1
  %v717 = vadd.f32 %v715, %v716
  %v718 = vadd.f32 %v708, %v717
  %v719 = vmul.f32 %v718, 0.125
  %v720 = vadd.f32 %v719, 1e-05
  %v721 = vrsqrt.pop %v720
  %v722 = vld [vmem:[%s2] sm:$0x1]
  %v723 = vmul.f32 %v721, %v722
  %v724 = vlaneseq
  %v725 = vshrl.u32 %v724, 7
  %v726 = vsub.s32 0, %v725
  %v727 = vrot.slane %v723, %v726
  %v728 = vmul.f32 %v679, %v727
  %v729 = vld [vmem:[%s3] sm:$0x1]
  %v731 = vlaneseq
  %v732 = vshrl.u32 %v731, 7
  %v733 = vsub.s32 0, %v732
  %v734 = vrot.slane %v729, %v733
  %v736 = vadd.f32 %v728, %v734
  %vm737 = vcmp.gt.f32.partialorder %v736, 0.0
  %v738 = vmul.f32 %v736, 0.2
  %v739 = vsel %vm737, %v736, %v738
  %v740 = vpack.c.bf16 %v739, %v739
  %741 = vst [vmem:[%s4] sm:$0x1] %v740
  %v742 = vmul.f32 %v689, %v727
  %v743 = vld [vmem:[%s3] sm:$0x1]
  %v745 = vlaneseq
  %v746 = vshrl.u32 %v745, 7
  %v747 = vsub.s32 0, %v746
  %v748 = vrot.slane %v743, %v747
  %v750 = vadd.f32 %v742, %v748
  %vm751 = vcmp.gt.f32.partialorder %v750, 0.0
  %v752 = vmul.f32 %v750, 0.2
  %v753 = vsel %vm751, %v750, %v752
  %v754 = vpack.c.bf16 %v753, %v753
  %755 = vst [vmem:[%s4 + $0x1] sm:$0x1] %v754
  %v756 = vmul.f32 %v699, %v727
  %v757 = vld [vmem:[%s3] sm:$0x1]
  %v759 = vlaneseq
  %v760 = vshrl.u32 %v759, 7
  %v761 = vsub.s32 0, %v760
  %v762 = vrot.slane %v757, %v761
  %v764 = vadd.f32 %v756, %v762
  %vm765 = vcmp.gt.f32.partialorder %v764, 0.0
  %v766 = vmul.f32 %v764, 0.2
  %v767 = vsel %vm765, %v764, %v766
  %v768 = vpack.c.bf16 %v767, %v767
  %769 = vst [vmem:[%s4 + $0x2] sm:$0x1] %v768
  %v770 = vmul.f32 %v709, %v727
  %v771 = vld [vmem:[%s3] sm:$0x1]
  %v773 = vlaneseq
  %v774 = vshrl.u32 %v773, 7
  %v775 = vsub.s32 0, %v774
  %v776 = vrot.slane %v771, %v775
  %v778 = vadd.f32 %v770, %v776
  %vm779 = vcmp.gt.f32.partialorder %v778, 0.0
  %v780 = vmul.f32 %v778, 0.2
  %v781 = vsel %vm779, %v778, %v780
  %v782 = vpack.c.bf16 %v781, %v781
  %783 = vst [vmem:[%s4 + $0x3] sm:$0x1] %v782
  // Predicated region
  $region18: #{cnn_vae_forward.15} parent=0 // pred_check
    _
  $region19: #{cnn_vae_forward.15} parent=0 // pred_check_branch
    %785 = sbr.rel (0) target = $region21
  $region20: #{cnn_vae_forward.15} parent=0 // pred_region
    _
  $region21: #{cnn_vae_forward.15} parent=0 // pred_fallthru
    _
  // Predicated region
  $region22: #{cnn_vae_forward.15} parent=0 // pred_check
    _
  $region23: #{cnn_vae_forward.15} parent=0 // pred_check_branch
    %787 = sbr.rel (0) target = $region25
  $region24: #{cnn_vae_forward.15} parent=0 // pred_region
    _
  $region25: #{cnn_vae_forward.15} parent=0 // pred_fallthru
    _

// kernel: cnn_vae_forward.16
$region0: #{cnn_vae_forward.16}
  #allocation0 [shape = 'u32[]', space=smem, size = 0x4, offset = 0x4, fixed_abs, tag = 'smem constant byte address 0x4 - core index']
  #allocation1 [shape = 'u32[144,128]{1,0:T(1,128)}', space=vmem, size = 0x12000, scoped, tag = 'internal scratch']
  %s0 = inlined_call_operand.vmem [shape: bf16[8,288], index: 0, kind: input, shape index: {}]
  %s1 = inlined_call_operand.vmem [shape: bf16[288,512], index: 1, kind: input, shape index: {}]
  %s2 = inlined_call_operand.vmem [shape: f32[1,128], index: 2, kind: input, shape index: {}]
  %s3 = inlined_call_operand.vmem [shape: f32[1,128], index: 3, kind: input, shape index: {}]
  %s4 = inlined_call_operand.vmem [shape: bf16[8,512], index: 4, kind: output, shape index: {}]
  %s5 = sld [smem:[#allocation0]]
  $region26: #{cnn_vae_forward.16} parent=0
    _
  %s7 = ssub.s32 1, %s5
  %s8 = scalar_select 0, %s7, %s5
  // Predicated region
  $region2: #{cnn_vae_forward.16} parent=0 // pred_check
    _
  $region3: #{cnn_vae_forward.16} parent=0 // pred_check_branch
    %10 = sbr.rel (0) target = $region5
  $region4: #{cnn_vae_forward.16} parent=0 // pred_region
    _
  $region5: #{cnn_vae_forward.16} parent=0 // pred_fallthru
    _
  // Predicated region
  $region6: #{cnn_vae_forward.16} parent=0 // pred_check
    _
  $region7: #{cnn_vae_forward.16} parent=0 // pred_check_branch
    %12 = sbr.rel (0) target = $region9
  $region8: #{cnn_vae_forward.16} parent=0 // pred_region
    _
  $region9: #{cnn_vae_forward.16} parent=0 // pred_fallthru
    _
  // Predicated region
  $region10: #{cnn_vae_forward.16} parent=0 // pred_check
    _
  $region11: #{cnn_vae_forward.16} parent=0 // pred_check_branch
    %14 = sbr.rel (0) target = $region13
  $region12: #{cnn_vae_forward.16} parent=0 // pred_region
    _
  $region13: #{cnn_vae_forward.16} parent=0 // pred_fallthru
    _
  // Predicated region
  $region14: #{cnn_vae_forward.16} parent=0 // pred_check
    _
  $region15: #{cnn_vae_forward.16} parent=0 // pred_check_branch
    %16 = sbr.rel (0) target = $region17
  $region16: #{cnn_vae_forward.16} parent=0 // pred_region
    _
  $region17: #{cnn_vae_forward.16} parent=0 // pred_fallthru
    _
  %v18 = vld [vmem:[%s0] sm:$0xff]
  %v19 = vld [vmem:[%s0 + $0x8] sm:$0xf]
  %v20 = vld [vmem:[%s1] sm:$0xff]
  %v21 = vld [vmem:[%s1 + $0x8] sm:$0xff]
  %v22 = vld [vmem:[%s1 + $0x10] sm:$0xff]
  %v23 = vld [vmem:[%s1 + $0x18] sm:$0xff]
  %v24 = vld [vmem:[%s1 + $0x20] sm:$0xff]
  %v25 = vld [vmem:[%s1 + $0x28] sm:$0xff]
  %v26 = vld [vmem:[%s1 + $0x30] sm:$0xff]
  %v27 = vld [vmem:[%s1 + $0x38] sm:$0xff]
  %v28 = vld [vmem:[%s1 + $0x40] sm:$0xff]
  %v29 = vld [vmem:[%s1 + $0x48] sm:$0xff]
  %v30 = vld [vmem:[%s1 + $0x50] sm:$0xff]
  %v31 = vld [vmem:[%s1 + $0x58] sm:$0xff]
  %v32 = vld [vmem:[%s1 + $0x60] sm:$0xff]
  %v33 = vld [vmem:[%s1 + $0x68] sm:$0xff]
  %v34 = vld [vmem:[%s1 + $0x70] sm:$0xff]
  %v35 = vld [vmem:[%s1 + $0x78] sm:$0xff]
  %v36 = vld [vmem:[%s1 + $0x80] sm:$0xff]
  %v37 = vld [vmem:[%s1 + $0x88] sm:$0xff]
  %v38 = vld [vmem:[%s1 + $0x90] sm:$0xff]
  %v39 = vld [vmem:[%s1 + $0x98] sm:$0xff]
  %v40 = vld [vmem:[%s1 + $0xa0] sm:$0xff]
  %v41 = vld [vmem:[%s1 + $0xa8] sm:$0xff]
  %v42 = vld [vmem:[%s1 + $0xb0] sm:$0xff]
  %v43 = vld [vmem:[%s1 + $0xb8] sm:$0xff]
  %v44 = vld [vmem:[%s1 + $0xc0] sm:$0xff]
  %v45 = vld [vmem:[%s1 + $0xc8] sm:$0xff]
  %v46 = vld [vmem:[%s1 + $0xd0] sm:$0xff]
  %v47 = vld [vmem:[%s1 + $0xd8] sm:$0xff]
  %v48 = vld [vmem:[%s1 + $0xe0] sm:$0xff]
  %v49 = vld [vmem:[%s1 + $0xe8] sm:$0xff]
  %v50 = vld [vmem:[%s1 + $0xf0] sm:$0xff]
  %v51 = vld [vmem:[%s1 + $0xf8] sm:$0xff]
  %v52 = vld [vmem:[%s1 + $0x100] sm:$0xff]
  %v53 = vld [vmem:[%s1 + $0x108] sm:$0xff]
  %v54 = vld [vmem:[%s1 + $0x110] sm:$0xff]
  %v55 = vld [vmem:[%s1 + $0x118] sm:$0xff]
  %v56 = vld [vmem:[%s1 + $0x120] sm:$0xff]
  %v57 = vld [vmem:[%s1 + $0x128] sm:$0xff]
  %v58 = vld [vmem:[%s1 + $0x130] sm:$0xff]
  %v59 = vld [vmem:[%s1 + $0x138] sm:$0xff]
  %v60 = vld [vmem:[%s1 + $0x140] sm:$0xff]
  %v61 = vld [vmem:[%s1 + $0x148] sm:$0xff]
  %v62 = vld [vmem:[%s1 + $0x150] sm:$0xff]
  %v63 = vld [vmem:[%s1 + $0x158] sm:$0xff]
  %v64 = vld [vmem:[%s1 + $0x160] sm:$0xff]
  %v65 = vld [vmem:[%s1 + $0x168] sm:$0xff]
  %v66 = vld [vmem:[%s1 + $0x170] sm:$0xff]
  %v67 = vld [vmem:[%s1 + $0x178] sm:$0xff]
  %v68 = vld [vmem:[%s1 + $0x180] sm:$0xff]
  %v69 = vld [vmem:[%s1 + $0x188] sm:$0xff]
  %v70 = vld [vmem:[%s1 + $0x190] sm:$0xff]
  %v71 = vld [vmem:[%s1 + $0x198] sm:$0xff]
  %v72 = vld [vmem:[%s1 + $0x1a0] sm:$0xff]
  %v73 = vld [vmem:[%s1 + $0x1a8] sm:$0xff]
  %v74 = vld [vmem:[%s1 + $0x1b0] sm:$0xff]
  %v75 = vld [vmem:[%s1 + $0x1b8] sm:$0xff]
  %v76 = vld [vmem:[%s1 + $0x1c0] sm:$0xff]
  %v77 = vld [vmem:[%s1 + $0x1c8] sm:$0xff]
  %v78 = vld [vmem:[%s1 + $0x1d0] sm:$0xff]
  %v79 = vld [vmem:[%s1 + $0x1d8] sm:$0xff]
  %v80 = vld [vmem:[%s1 + $0x1e0] sm:$0xff]
  %v81 = vld [vmem:[%s1 + $0x1e8] sm:$0xff]
  %v82 = vld [vmem:[%s1 + $0x1f0] sm:$0xff]
  %v83 = vld [vmem:[%s1 + $0x1f8] sm:$0xff]
  %v84 = vld [vmem:[%s1 + $0x200] sm:$0xff]
  %v85 = vld [vmem:[%s1 + $0x208] sm:$0xff]
  %v86 = vld [vmem:[%s1 + $0x210] sm:$0xff]
  %v87 = vld [vmem:[%s1 + $0x218] sm:$0xff]
  %v88 = vld [vmem:[%s1 + $0x220] sm:$0xff]
  %v89 = vld [vmem:[%s1 + $0x228] sm:$0xff]
  %v90 = vld [vmem:[%s1 + $0x230] sm:$0xff]
  %v91 = vld [vmem:[%s1 + $0x238] sm:$0xff]
  %v94 = vunpack.c.l.b16 %v18
  %v95 = vunpack.c.h.b16 %v18
  %v96 = vunpack.c.l.b16 %v19
  %v97 = vpack.c.b16 %v94, %v94
  %v98 = vpack.c.b16 %v95, %v95
  %v99 = vpack.c.b16 %v96, %v96
  %v174 = vunpack.c.l.b16 %v20
  %v175 = vunpack.c.h.b16 %v20
  %v176 = vunpack.c.l.b16 %v21
  %v177 = vunpack.c.h.b16 %v21
  %v178 = vunpack.c.l.b16 %v22
  %v179 = vunpack.c.h.b16 %v22
  %v180 = vunpack.c.l.b16 %v23
  %v181 = vunpack.c.h.b16 %v23
  %v182 = vunpack.c.l.b16 %v24
  %v183 = vunpack.c.h.b16 %v24
  %v184 = vunpack.c.l.b16 %v25
  %v185 = vunpack.c.h.b16 %v25
  %v186 = vunpack.c.l.b16 %v26
  %v187 = vunpack.c.h.b16 %v26
  %v188 = vunpack.c.l.b16 %v27
  %v189 = vunpack.c.h.b16 %v27
  %v190 = vunpack.c.l.b16 %v28
  %v191 = vunpack.c.h.b16 %v28
  %v192 = vunpack.c.l.b16 %v29
  %v193 = vunpack.c.h.b16 %v29
  %v194 = vunpack.c.l.b16 %v30
  %v195 = vunpack.c.h.b16 %v30
  %v196 = vunpack.c.l.b16 %v31
  %v197 = vunpack.c.h.b16 %v31
  %v198 = vunpack.c.l.b16 %v32
  %v199 = vunpack.c.h.b16 %v32
  %v200 = vunpack.c.l.b16 %v33
  %v201 = vunpack.c.h.b16 %v33
  %v202 = vunpack.c.l.b16 %v34
  %v203 = vunpack.c.h.b16 %v34
  %v204 = vunpack.c.l.b16 %v35
  %v205 = vunpack.c.h.b16 %v35
  %v206 = vunpack.c.l.b16 %v36
  %v207 = vunpack.c.h.b16 %v36
  %v208 = vunpack.c.l.b16 %v37
  %v209 = vunpack.c.h.b16 %v37
  %v210 = vunpack.c.l.b16 %v38
  %v211 = vunpack.c.h.b16 %v38
  %v212 = vunpack.c.l.b16 %v39
  %v213 = vunpack.c.h.b16 %v39
  %v214 = vunpack.c.l.b16 %v40
  %v215 = vunpack.c.h.b16 %v40
  %v216 = vunpack.c.l.b16 %v41
  %v217 = vunpack.c.h.b16 %v41
  %v218 = vunpack.c.l.b16 %v42
  %v219 = vunpack.c.h.b16 %v42
  %v220 = vunpack.c.l.b16 %v43
  %v221 = vunpack.c.h.b16 %v43
  %v222 = vunpack.c.l.b16 %v44
  %v223 = vunpack.c.h.b16 %v44
  %v224 = vunpack.c.l.b16 %v45
  %v225 = vunpack.c.h.b16 %v45
  %v226 = vunpack.c.l.b16 %v46
  %v227 = vunpack.c.h.b16 %v46
  %v228 = vunpack.c.l.b16 %v47
  %v229 = vunpack.c.h.b16 %v47
  %v230 = vunpack.c.l.b16 %v48
  %v231 = vunpack.c.h.b16 %v48
  %v232 = vunpack.c.l.b16 %v49
  %v233 = vunpack.c.h.b16 %v49
  %v234 = vunpack.c.l.b16 %v50
  %v235 = vunpack.c.h.b16 %v50
  %v236 = vunpack.c.l.b16 %v51
  %v237 = vunpack.c.h.b16 %v51
  %v238 = vunpack.c.l.b16 %v52
  %v239 = vunpack.c.h.b16 %v52
  %v240 = vunpack.c.l.b16 %v53
  %v241 = vunpack.c.h.b16 %v53
  %v242 = vunpack.c.l.b16 %v54
  %v243 = vunpack.c.h.b16 %v54
  %v244 = vunpack.c.l.b16 %v55
  %v245 = vunpack.c.h.b16 %v55
  %v246 = vunpack.c.l.b16 %v56
  %v247 = vunpack.c.h.b16 %v56
  %v248 = vunpack.c.l.b16 %v57
  %v249 = vunpack.c.h.b16 %v57
  %v250 = vunpack.c.l.b16 %v58
  %v251 = vunpack.c.h.b16 %v58
  %v252 = vunpack.c.l.b16 %v59
  %v253 = vunpack.c.h.b16 %v59
  %v254 = vunpack.c.l.b16 %v60
  %v255 = vunpack.c.h.b16 %v60
  %v256 = vunpack.c.l.b16 %v61
  %v257 = vunpack.c.h.b16 %v61
  %v258 = vunpack.c.l.b16 %v62
  %v259 = vunpack.c.h.b16 %v62
  %v260 = vunpack.c.l.b16 %v63
  %v261 = vunpack.c.h.b16 %v63
  %v262 = vunpack.c.l.b16 %v64
  %v263 = vunpack.c.h.b16 %v64
  %v264 = vunpack.c.l.b16 %v65
  %v265 = vunpack.c.h.b16 %v65
  %v266 = vunpack.c.l.b16 %v66
  %v267 = vunpack.c.h.b16 %v66
  %v268 = vunpack.c.l.b16 %v67
  %v269 = vunpack.c.h.b16 %v67
  %v270 = vunpack.c.l.b16 %v68
  %v271 = vunpack.c.h.b16 %v68
  %v272 = vunpack.c.l.b16 %v69
  %v273 = vunpack.c.h.b16 %v69
  %v274 = vunpack.c.l.b16 %v70
  %v275 = vunpack.c.h.b16 %v70
  %v276 = vunpack.c.l.b16 %v71
  %v277 = vunpack.c.h.b16 %v71
  %v278 = vunpack.c.l.b16 %v72
  %v279 = vunpack.c.h.b16 %v72
  %v280 = vunpack.c.l.b16 %v73
  %v281 = vunpack.c.h.b16 %v73
  %v282 = vunpack.c.l.b16 %v74
  %v283 = vunpack.c.h.b16 %v74
  %v284 = vunpack.c.l.b16 %v75
  %v285 = vunpack.c.h.b16 %v75
  %v286 = vunpack.c.l.b16 %v76
  %v287 = vunpack.c.h.b16 %v76
  %v288 = vunpack.c.l.b16 %v77
  %v289 = vunpack.c.h.b16 %v77
  %v290 = vunpack.c.l.b16 %v78
  %v291 = vunpack.c.h.b16 %v78
  %v292 = vunpack.c.l.b16 %v79
  %v293 = vunpack.c.h.b16 %v79
  %v294 = vunpack.c.l.b16 %v80
  %v295 = vunpack.c.h.b16 %v80
  %v296 = vunpack.c.l.b16 %v81
  %v297 = vunpack.c.h.b16 %v81
  %v298 = vunpack.c.l.b16 %v82
  %v299 = vunpack.c.h.b16 %v82
  %v300 = vunpack.c.l.b16 %v83
  %v301 = vunpack.c.h.b16 %v83
  %v302 = vunpack.c.l.b16 %v84
  %v303 = vunpack.c.h.b16 %v84
  %v304 = vunpack.c.l.b16 %v85
  %v305 = vunpack.c.h.b16 %v85
  %v306 = vunpack.c.l.b16 %v86
  %v307 = vunpack.c.h.b16 %v86
  %v308 = vunpack.c.l.b16 %v87
  %v309 = vunpack.c.h.b16 %v87
  %v310 = vunpack.c.l.b16 %v88
  %v311 = vunpack.c.h.b16 %v88
  %v312 = vunpack.c.l.b16 %v89
  %v313 = vunpack.c.h.b16 %v89
  %v314 = vunpack.c.l.b16 %v90
  %v315 = vunpack.c.h.b16 %v90
  %v316 = vunpack.c.l.b16 %v91
  %v317 = vunpack.c.h.b16 %v91
  %v318 = vpack.c.b16 %v178, %v174
  %v319 = vpack.c.b16 %v179, %v175
  %v320 = vpack.c.b16 %v180, %v176
  %v321 = vpack.c.b16 %v181, %v177
  %v322 = vpack.c.b16 %v186, %v182
  %v323 = vpack.c.b16 %v187, %v183
  %v324 = vpack.c.b16 %v188, %v184
  %v325 = vpack.c.b16 %v189, %v185
  %v326 = vpack.c.b16 %v194, %v190
  %v327 = vpack.c.b16 %v195, %v191
  %v328 = vpack.c.b16 %v196, %v192
  %v329 = vpack.c.b16 %v197, %v193
  %v330 = vpack.c.b16 %v202, %v198
  %v331 = vpack.c.b16 %v203, %v199
  %v332 = vpack.c.b16 %v204, %v200
  %v333 = vpack.c.b16 %v205, %v201
  %v334 = vpack.c.b16 %v210, %v206
  %v335 = vpack.c.b16 %v211, %v207
  %v336 = vpack.c.b16 %v212, %v208
  %v337 = vpack.c.b16 %v213, %v209
  %v338 = vpack.c.b16 %v218, %v214
  %v339 = vpack.c.b16 %v219, %v215
  %v340 = vpack.c.b16 %v220, %v216
  %v341 = vpack.c.b16 %v221, %v217
  %v342 = vpack.c.b16 %v226, %v222
  %v343 = vpack.c.b16 %v227, %v223
  %v344 = vpack.c.b16 %v228, %v224
  %v345 = vpack.c.b16 %v229, %v225
  %v346 = vpack.c.b16 %v234, %v230
  %v347 = vpack.c.b16 %v235, %v231
  %v348 = vpack.c.b16 %v236, %v232
  %v349 = vpack.c.b16 %v237, %v233
  %v350 = vpack.c.b16 %v242, %v238
  %v351 = vpack.c.b16 %v243, %v239
  %v352 = vpack.c.b16 %v244, %v240
  %v353 = vpack.c.b16 %v245, %v241
  %v354 = vpack.c.b16 %v250, %v246
  %v355 = vpack.c.b16 %v251, %v247
  %v356 = vpack.c.b16 %v252, %v248
  %v357 = vpack.c.b16 %v253, %v249
  %v358 = vpack.c.b16 %v258, %v254
  %v359 = vpack.c.b16 %v259, %v255
  %v360 = vpack.c.b16 %v260, %v256
  %v361 = vpack.c.b16 %v261, %v257
  %v362 = vpack.c.b16 %v266, %v262
  %v363 = vpack.c.b16 %v267, %v263
  %v364 = vpack.c.b16 %v268, %v264
  %v365 = vpack.c.b16 %v269, %v265
  %v366 = vpack.c.b16 %v274, %v270
  %v367 = vpack.c.b16 %v275, %v271
  %v368 = vpack.c.b16 %v276, %v272
  %v369 = vpack.c.b16 %v277, %v273
  %v370 = vpack.c.b16 %v282, %v278
  %v371 = vpack.c.b16 %v283, %v279
  %v372 = vpack.c.b16 %v284, %v280
  %v373 = vpack.c.b16 %v285, %v281
  %v374 = vpack.c.b16 %v290, %v286
  %v375 = vpack.c.b16 %v291, %v287
  %v376 = vpack.c.b16 %v292, %v288
  %v377 = vpack.c.b16 %v293, %v289
  %v378 = vpack.c.b16 %v298, %v294
  %v379 = vpack.c.b16 %v299, %v295
  %v380 = vpack.c.b16 %v300, %v296
  %v381 = vpack.c.b16 %v301, %v297
  %v382 = vpack.c.b16 %v306, %v302
  %v383 = vpack.c.b16 %v307, %v303
  %v384 = vpack.c.b16 %v308, %v304
  %v385 = vpack.c.b16 %v309, %v305
  %v386 = vpack.c.b16 %v314, %v310
  %v387 = vpack.c.b16 %v315, %v311
  %v388 = vpack.c.b16 %v316, %v312
  %v389 = vpack.c.b16 %v317, %v313
  %vm462 = vcmask 261120
  %v464 = vsel %vm462, %v99, 0
  %466 = vmatprep.subr.bf16.mxu0 %v319
  %467 = vmatpush1.bf16.msra.mxu0 %v318
  %468 = vmatprep.subr.bf16.mxu0 %v323
  %469 = vmatpush1.bf16.msra.mxu0 %v322
  %470 = vmatprep.subr.bf16.mxu0 %v327
  %471 = vmatpush1.bf16.msra.mxu0 %v326
  %472 = vmatprep.subr.bf16.mxu0 %v331
  %473 = vmatpush1.bf16.msra.mxu0 %v330
  %474 = vmatprep.subr.bf16.mxu0 %v335
  %475 = vmatpush1.bf16.msra.mxu0 %v334
  %476 = vmatprep.subr.bf16.mxu0 %v339
  %477 = vmatpush1.bf16.msra.mxu0 %v338
  %478 = vmatprep.subr.bf16.mxu0 %v343
  %479 = vmatpush1.bf16.msra.mxu0 %v342
  %480 = vmatprep.subr.bf16.mxu0 %v347
  %481 = vmatpush1.bf16.msra.mxu0 %v346
  %482 = vmatprep.subr.bf16.mxu0 %v351
  %483 = vmatpush1.bf16.msra.mxu0 %v350
  %484 = vmatprep.subr.bf16.mxu0 %v355
  %485 = vmatpush1.bf16.msra.mxu0 %v354
  %486 = vmatprep.subr.bf16.mxu0 %v359
  %487 = vmatpush1.bf16.msra.mxu0 %v358
  %488 = vmatprep.subr.bf16.mxu0 %v363
  %489 = vmatpush1.bf16.msra.mxu0 %v362
  %490 = vmatprep.subr.bf16.mxu0 %v367
  %491 = vmatpush1.bf16.msra.mxu0 %v366
  %492 = vmatprep.subr.bf16.mxu0 %v371
  %493 = vmatpush1.bf16.msra.mxu0 %v370
  %494 = vmatprep.subr.bf16.mxu0 %v375
  %495 = vmatpush1.bf16.msra.mxu0 %v374
  %496 = vmatprep.subr.bf16.mxu0 %v379
  %497 = vmatpush1.bf16.msra.mxu0 %v378
  %498 = vmatprep.mubr.bf16.mxu0 %v98
  %499 = vmatmul.mubr.bf16.gmra.mrb[0].mxu0 %v97
  %v500 = vpop.f32.mrb[0].mxu0
  %v501 = vadd.f32 0.0, %v500
  %v502 = vpop.f32.mrb[0].mxu0
  %v503 = vadd.f32 0.0, %v502
  %v504 = vpop.f32.mrb[0].mxu0
  %v505 = vpop.f32.mrb[0].mxu0
  %506 = vdwg.mxu0
  %507 = vmatprep.subr.bf16.mxu0 %v383
  %508 = vmatpush1.bf16.msra.mxu0 %v382
  %509 = vmatprep.subr.bf16.mxu0 %v387
  %510 = vmatpush1.bf16.msra.mxu0 %v386
  %511 = vmatprep.subr.bf16.mxu0 0
  %512 = vmatpush1.bf16.msra.mxu0 0
  %513 = vmatprep.subr.bf16.mxu0 0
  %514 = vmatpush1.bf16.msra.mxu0 0
  %515 = vmatprep.subr.bf16.mxu0 0
  %516 = vmatpush1.bf16.msra.mxu0 0
  %517 = vmatprep.subr.bf16.mxu0 0
  %518 = vmatpush1.bf16.msra.mxu0 0
  %519 = vmatprep.subr.bf16.mxu0 0
  %520 = vmatpush1.bf16.msra.mxu0 0
  %521 = vmatprep.subr.bf16.mxu0 0
  %522 = vmatpush1.bf16.msra.mxu0 0
  %523 = vmatprep.subr.bf16.mxu0 0
  %524 = vmatpush1.bf16.msra.mxu0 0
  %525 = vmatprep.subr.bf16.mxu0 0
  %526 = vmatpush1.bf16.msra.mxu0 0
  %527 = vmatprep.subr.bf16.mxu0 0
  %528 = vmatpush1.bf16.msra.mxu0 0
  %529 = vmatprep.subr.bf16.mxu0 0
  %530 = vmatpush1.bf16.msra.mxu0 0
  %531 = vmatprep.subr.bf16.mxu0 0
  %532 = vmatpush1.bf16.msra.mxu0 0
  %533 = vmatprep.subr.bf16.mxu0 0
  %534 = vmatpush1.bf16.msra.mxu0 0
  %535 = vmatprep.subr.bf16.mxu0 0
  %536 = vmatpush1.bf16.msra.mxu0 0
  %537 = vmatprep.subr.bf16.mxu0 0
  %538 = vmatpush1.bf16.msra.mxu0 0
  %539 = vmatprep.mubr.bf16.mxu0 0
  %540 = vmatmul.mubr.bf16.gmra.mrb[0].mxu0 %v464
  %v541 = vpop.f32.mrb[0].mxu0
  %v542 = vadd.f32 %v501, %v541
  %v543 = vpop.f32.mrb[0].mxu0
  %v544 = vadd.f32 %v503, %v543
  %v545 = vpop.f32.mrb[0].mxu0
  %v546 = vpop.f32.mrb[0].mxu0
  %547 = vdwg.mxu0
  %548 = vmatprep.subr.bf16.mxu0 %v321
  %549 = vmatpush1.bf16.msra.mxu0 %v320
  %550 = vmatprep.subr.bf16.mxu0 %v325
  %551 = vmatpush1.bf16.msra.mxu0 %v324
  %552 = vmatprep.subr.bf16.mxu0 %v329
  %553 = vmatpush1.bf16.msra.mxu0 %v328
  %554 = vmatprep.subr.bf16.mxu0 %v333
  %555 = vmatpush1.bf16.msra.mxu0 %v332
  %556 = vmatprep.subr.bf16.mxu0 %v337
  %557 = vmatpush1.bf16.msra.mxu0 %v336
  %558 = vmatprep.subr.bf16.mxu0 %v341
  %559 = vmatpush1.bf16.msra.mxu0 %v340
  %560 = vmatprep.subr.bf16.mxu0 %v345
  %561 = vmatpush1.bf16.msra.mxu0 %v344
  %562 = vmatprep.subr.bf16.mxu0 %v349
  %563 = vmatpush1.bf16.msra.mxu0 %v348
  %564 = vmatprep.subr.bf16.mxu0 %v353
  %565 = vmatpush1.bf16.msra.mxu0 %v352
  %566 = vmatprep.subr.bf16.mxu0 %v357
  %567 = vmatpush1.bf16.msra.mxu0 %v356
  %568 = vmatprep.subr.bf16.mxu0 %v361
  %569 = vmatpush1.bf16.msra.mxu0 %v360
  %570 = vmatprep.subr.bf16.mxu0 %v365
  %571 = vmatpush1.bf16.msra.mxu0 %v364
  %572 = vmatprep.subr.bf16.mxu0 %v369
  %573 = vmatpush1.bf16.msra.mxu0 %v368
  %574 = vmatprep.subr.bf16.mxu0 %v373
  %575 = vmatpush1.bf16.msra.mxu0 %v372
  %576 = vmatprep.subr.bf16.mxu0 %v377
  %577 = vmatpush1.bf16.msra.mxu0 %v376
  %578 = vmatprep.subr.bf16.mxu0 %v381
  %579 = vmatpush1.bf16.msra.mxu0 %v380
  %580 = vmatprep.mubr.bf16.mxu0 %v98
  %581 = vmatmul.mubr.bf16.gmra.mrb[0].mxu0 %v97
  %v582 = vpop.f32.mrb[0].mxu0
  %v583 = vadd.f32 0.0, %v582
  %v584 = vpop.f32.mrb[0].mxu0
  %v585 = vadd.f32 0.0, %v584
  %v586 = vpop.f32.mrb[0].mxu0
  %v587 = vpop.f32.mrb[0].mxu0
  %588 = vdwg.mxu0
  %589 = vmatprep.subr.bf16.mxu0 %v385
  %590 = vmatpush1.bf16.msra.mxu0 %v384
  %591 = vmatprep.subr.bf16.mxu0 %v389
  %592 = vmatpush1.bf16.msra.mxu0 %v388
  %593 = vmatprep.subr.bf16.mxu0 0
  %594 = vmatpush1.bf16.msra.mxu0 0
  %595 = vmatprep.subr.bf16.mxu0 0
  %596 = vmatpush1.bf16.msra.mxu0 0
  %597 = vmatprep.subr.bf16.mxu0 0
  %598 = vmatpush1.bf16.msra.mxu0 0
  %599 = vmatprep.subr.bf16.mxu0 0
  %600 = vmatpush1.bf16.msra.mxu0 0
  %601 = vmatprep.subr.bf16.mxu0 0
  %602 = vmatpush1.bf16.msra.mxu0 0
  %603 = vmatprep.subr.bf16.mxu0 0
  %604 = vmatpush1.bf16.msra.mxu0 0
  %605 = vmatprep.subr.bf16.mxu0 0
  %606 = vmatpush1.bf16.msra.mxu0 0
  %607 = vmatprep.subr.bf16.mxu0 0
  %608 = vmatpush1.bf16.msra.mxu0 0
  %609 = vmatprep.subr.bf16.mxu0 0
  %610 = vmatpush1.bf16.msra.mxu0 0
  %611 = vmatprep.subr.bf16.mxu0 0
  %612 = vmatpush1.bf16.msra.mxu0 0
  %613 = vmatprep.subr.bf16.mxu0 0
  %614 = vmatpush1.bf16.msra.mxu0 0
  %615 = vmatprep.subr.bf16.mxu0 0
  %616 = vmatpush1.bf16.msra.mxu0 0
  %617 = vmatprep.subr.bf16.mxu0 0
  %618 = vmatpush1.bf16.msra.mxu0 0
  %619 = vmatprep.subr.bf16.mxu0 0
  %620 = vmatpush1.bf16.msra.mxu0 0
  %621 = vmatprep.mubr.bf16.mxu0 0
  %622 = vmatmul.mubr.bf16.gmra.mrb[0].mxu0 %v464
  %v623 = vpop.f32.mrb[0].mxu0
  %v624 = vadd.f32 %v583, %v623
  %v625 = vpop.f32.mrb[0].mxu0
  %v626 = vadd.f32 %v585, %v625
  %v627 = vpop.f32.mrb[0].mxu0
  %v628 = vpop.f32.mrb[0].mxu0
  %629 = vdwg.mxu0
  %v630 = vrot.slane %v542, 4
  %v631 = vadd.f32 %v542, %v630
  %v632 = vrot.slane %v631, 2
  %v633 = vadd.f32 %v631, %v632
  %v634 = vrot.slane %v633, 1
  %v635 = vadd.f32 %v633, %v634
  %v636 = vadd.f32 %v635, 0.0
  %v637 = vrot.slane %v544, 4
  %v638 = vadd.f32 %v544, %v637
  %v639 = vrot.slane %v638, 2
  %v640 = vadd.f32 %v638, %v639
  %v641 = vrot.slane %v640, 1
  %v642 = vadd.f32 %v640, %v641
  %v643 = vadd.f32 %v636, %v642
  %v644 = vrot.slane %v624, 4
  %v645 = vadd.f32 %v624, %v644
  %v646 = vrot.slane %v645, 2
  %v647 = vadd.f32 %v645, %v646
  %v648 = vrot.slane %v647, 1
  %v649 = vadd.f32 %v647, %v648
  %v650 = vadd.f32 %v643, %v649
  %v651 = vrot.slane %v626, 4
  %v652 = vadd.f32 %v626, %v651
  %v653 = vrot.slane %v652, 2
  %v654 = vadd.f32 %v652, %v653
  %v655 = vrot.slane %v654, 1
  %v656 = vadd.f32 %v654, %v655
  %v657 = vadd.f32 %v650, %v656
  %v658 = vmul.f32 %v657, 0.03125
  %v659 = vsub.f32 %v542, %v658
  %v660 = vmul.f32 %v659, %v659
  %v661 = vrot.slane %v660, 4
  %v662 = vadd.f32 %v660, %v661
  %v663 = vrot.slane %v662, 2
  %v664 = vadd.f32 %v662, %v663
  %v665 = vrot.slane %v664, 1
  %v666 = vadd.f32 %v664, %v665
  %v667 = vadd.f32 %v666, 0.0
  %v668 = vsub.f32 %v544, %v658
  %v669 = vmul.f32 %v668, %v668
  %v670 = vrot.slane %v669, 4
  %v671 = vadd.f32 %v669, %v670
  %v672 = vrot.slane %v671, 2
  %v673 = vadd.f32 %v671, %v672
  %v674 = vrot.slane %v673, 1
  %v675 = vadd.f32 %v673, %v674
  %v676 = vadd.f32 %v667, %v675
  %v677 = vsub.f32 %v624, %v658
  %v678 = vmul.f32 %v677, %v677
  %v679 = vrot.slane %v678, 4
  %v680 = vadd.f32 %v678, %v679
  %v681 = vrot.slane %v680, 2
  %v682 = vadd.f32 %v680, %v681
  %v683 = vrot.slane %v682, 1
  %v684 = vadd.f32 %v682, %v683
  %v685 = vadd.f32 %v676, %v684
  %v686 = vsub.f32 %v626, %v658
  %v687 = vmul.f32 %v686, %v686
  %v688 = vrot.slane %v687, 4
  %v689 = vadd.f32 %v687, %v688
  %v690 = vrot.slane %v689, 2
  %v691 = vadd.f32 %v689, %v690
  %v692 = vrot.slane %v691, 1
  %v693 = vadd.f32 %v691, %v692
  %v694 = vadd.f32 %v685, %v693
  %v695 = vmul.f32 %v694, 0.03125
  %v696 = vadd.f32 %v695, 1e-05
  %v697 = vrsqrt.pop %v696
  %v698 = vld [vmem:[%s2] sm:$0x1]
  %v699 = vmul.f32 %v697, %v698
  %v700 = vlaneseq
  %v701 = vshrl.u32 %v700, 7
  %v702 = vsub.s32 0, %v701
  %v703 = vrot.slane %v699, %v702
  %v704 = vmul.f32 %v659, %v703
  %v705 = vld [vmem:[%s3] sm:$0x1]
  %v707 = vlaneseq
  %v708 = vshrl.u32 %v707, 7
  %v709 = vsub.s32 0, %v708
  %v710 = vrot.slane %v705, %v709
  %v712 = vadd.f32 %v704, %v710
  %vm713 = vcmp.gt.f32.partialorder %v712, 0.0
  %v714 = vmul.f32 %v712, 0.2
  %v715 = vsel %vm713, %v712, %v714
  %v716 = vpack.c.bf16 %v715, %v715
  %717 = vst [vmem:[%s4] sm:$0xf] %v716
  %v718 = vmul.f32 %v668, %v703
  %v719 = vld [vmem:[%s3] sm:$0x1]
  %v721 = vlaneseq
  %v722 = vshrl.u32 %v721, 7
  %v723 = vsub.s32 0, %v722
  %v724 = vrot.slane %v719, %v723
  %v726 = vadd.f32 %v718, %v724
  %vm727 = vcmp.gt.f32.partialorder %v726, 0.0
  %v728 = vmul.f32 %v726, 0.2
  %v729 = vsel %vm727, %v726, %v728
  %v730 = vpack.c.bf16 %v729, %v729
  %731 = vst [vmem:[%s4 + $0x4] sm:$0xf] %v730
  %v732 = vmul.f32 %v677, %v703
  %v733 = vld [vmem:[%s3] sm:$0x1]
  %v735 = vlaneseq
  %v736 = vshrl.u32 %v735, 7
  %v737 = vsub.s32 0, %v736
  %v738 = vrot.slane %v733, %v737
  %v740 = vadd.f32 %v732, %v738
  %vm741 = vcmp.gt.f32.partialorder %v740, 0.0
  %v742 = vmul.f32 %v740, 0.2
  %v743 = vsel %vm741, %v740, %v742
  %v744 = vpack.c.bf16 %v743, %v743
  %745 = vst [vmem:[%s4 + $0x8] sm:$0xf] %v744
  %v746 = vmul.f32 %v686, %v703
  %v747 = vld [vmem:[%s3] sm:$0x1]
  %v749 = vlaneseq
  %v750 = vshrl.u32 %v749, 7
  %v751 = vsub.s32 0, %v750
  %v752 = vrot.slane %v747, %v751
  %v754 = vadd.f32 %v746, %v752
  %vm755 = vcmp.gt.f32.partialorder %v754, 0.0
  %v756 = vmul.f32 %v754, 0.2
  %v757 = vsel %vm755, %v754, %v756
  %v758 = vpack.c.bf16 %v757, %v757
  %759 = vst [vmem:[%s4 + $0xc] sm:$0xf] %v758
  // Predicated region
  $region18: #{cnn_vae_forward.16} parent=0 // pred_check
    _
  $region19: #{cnn_vae_forward.16} parent=0 // pred_check_branch
    %761 = sbr.rel (0) target = $region21
  $region20: #{cnn_vae_forward.16} parent=0 // pred_region
    _
  $region21: #{cnn_vae_forward.16} parent=0 // pred_fallthru
    _
  // Predicated region
  $region22: #{cnn_vae_forward.16} parent=0 // pred_check
    _
  $region23: #{cnn_vae_forward.16} parent=0 // pred_check_branch
    %763 = sbr.rel (0) target = $region25
  $region24: #{cnn_vae_forward.16} parent=0 // pred_region
    _
  $region25: #{cnn_vae_forward.16} parent=0 // pred_fallthru
    _

// kernel: cnn_vae_forward.17
$region0: #{cnn_vae_forward.17}
  #allocation0 [shape = 'u32[]', space=smem, size = 0x4, offset = 0x4, fixed_abs, tag = 'smem constant byte address 0x4 - core index']
  #allocation1 [shape = 'u32[144,128]{1,0:T(1,128)}', space=vmem, size = 0x12000, scoped, tag = 'internal scratch']
  %s0 = inlined_call_operand.vmem [shape: bf16[32,288], index: 0, kind: input, shape index: {}]
  %s1 = inlined_call_operand.vmem [shape: bf16[288,512], index: 1, kind: input, shape index: {}]
  %s2 = inlined_call_operand.vmem [shape: f32[1,128], index: 2, kind: input, shape index: {}]
  %s3 = inlined_call_operand.vmem [shape: f32[1,128], index: 3, kind: input, shape index: {}]
  %s4 = inlined_call_operand.vmem [shape: bf16[32,512], index: 4, kind: output, shape index: {}]
  %s5 = sld [smem:[#allocation0]]
  $region26: #{cnn_vae_forward.17} parent=0
    _
  %s7 = ssub.s32 1, %s5
  %s8 = scalar_select 0, %s7, %s5
  // Predicated region
  $region2: #{cnn_vae_forward.17} parent=0 // pred_check
    _
  $region3: #{cnn_vae_forward.17} parent=0 // pred_check_branch
    %10 = sbr.rel (0) target = $region5
  $region4: #{cnn_vae_forward.17} parent=0 // pred_region
    _
  $region5: #{cnn_vae_forward.17} parent=0 // pred_fallthru
    _
  // Predicated region
  $region6: #{cnn_vae_forward.17} parent=0 // pred_check
    _
  $region7: #{cnn_vae_forward.17} parent=0 // pred_check_branch
    %12 = sbr.rel (0) target = $region9
  $region8: #{cnn_vae_forward.17} parent=0 // pred_region
    _
  $region9: #{cnn_vae_forward.17} parent=0 // pred_fallthru
    _
  // Predicated region
  $region10: #{cnn_vae_forward.17} parent=0 // pred_check
    _
  $region11: #{cnn_vae_forward.17} parent=0 // pred_check_branch
    %14 = sbr.rel (0) target = $region13
  $region12: #{cnn_vae_forward.17} parent=0 // pred_region
    _
  $region13: #{cnn_vae_forward.17} parent=0 // pred_fallthru
    _
  // Predicated region
  $region14: #{cnn_vae_forward.17} parent=0 // pred_check
    _
  $region15: #{cnn_vae_forward.17} parent=0 // pred_check_branch
    %16 = sbr.rel (0) target = $region17
  $region16: #{cnn_vae_forward.17} parent=0 // pred_region
    _
  $region17: #{cnn_vae_forward.17} parent=0 // pred_fallthru
    _
  %v18 = vld [vmem:[%s0] sm:$0xff]
  %v19 = vld [vmem:[%s0 + $0x8] sm:$0xf]
  %v20 = vld [vmem:[%s0 + $0xc] sm:$0xff]
  %v21 = vld [vmem:[%s0 + $0x14] sm:$0xf]
  %v22 = vld [vmem:[%s0 + $0x18] sm:$0xff]
  %v23 = vld [vmem:[%s0 + $0x20] sm:$0xf]
  %v24 = vld [vmem:[%s0 + $0x24] sm:$0xff]
  %v25 = vld [vmem:[%s0 + $0x2c] sm:$0xf]
  %v26 = vld [vmem:[%s1] sm:$0xff]
  %v27 = vld [vmem:[%s1 + $0x8] sm:$0xff]
  %v28 = vld [vmem:[%s1 + $0x10] sm:$0xff]
  %v29 = vld [vmem:[%s1 + $0x18] sm:$0xff]
  %v30 = vld [vmem:[%s1 + $0x20] sm:$0xff]
  %v31 = vld [vmem:[%s1 + $0x28] sm:$0xff]
  %v32 = vld [vmem:[%s1 + $0x30] sm:$0xff]
  %v33 = vld [vmem:[%s1 + $0x38] sm:$0xff]
  %v34 = vld [vmem:[%s1 + $0x40] sm:$0xff]
  %v35 = vld [vmem:[%s1 + $0x48] sm:$0xff]
  %v36 = vld [vmem:[%s1 + $0x50] sm:$0xff]
  %v37 = vld [vmem:[%s1 + $0x58] sm:$0xff]
  %v38 = vld [vmem:[%s1 + $0x60] sm:$0xff]
  %v39 = vld [vmem:[%s1 + $0x68] sm:$0xff]
  %v40 = vld [vmem:[%s1 + $0x70] sm:$0xff]
  %v41 = vld [vmem:[%s1 + $0x78] sm:$0xff]
  %v42 = vld [vmem:[%s1 + $0x80] sm:$0xff]
  %v43 = vld [vmem:[%s1 + $0x88] sm:$0xff]
  %v44 = vld [vmem:[%s1 + $0x90] sm:$0xff]
  %v45 = vld [vmem:[%s1 + $0x98] sm:$0xff]
  %v46 = vld [vmem:[%s1 + $0xa0] sm:$0xff]
  %v47 = vld [vmem:[%s1 + $0xa8] sm:$0xff]
  %v48 = vld [vmem:[%s1 + $0xb0] sm:$0xff]
  %v49 = vld [vmem:[%s1 + $0xb8] sm:$0xff]
  %v50 = vld [vmem:[%s1 + $0xc0] sm:$0xff]
  %v51 = vld [vmem:[%s1 + $0xc8] sm:$0xff]
  %v52 = vld [vmem:[%s1 + $0xd0] sm:$0xff]
  %v53 = vld [vmem:[%s1 + $0xd8] sm:$0xff]
  %v54 = vld [vmem:[%s1 + $0xe0] sm:$0xff]
  %v55 = vld [vmem:[%s1 + $0xe8] sm:$0xff]
  %v56 = vld [vmem:[%s1 + $0xf0] sm:$0xff]
  %v57 = vld [vmem:[%s1 + $0xf8] sm:$0xff]
  %v58 = vld [vmem:[%s1 + $0x100] sm:$0xff]
  %v59 = vld [vmem:[%s1 + $0x108] sm:$0xff]
  %v60 = vld [vmem:[%s1 + $0x110] sm:$0xff]
  %v61 = vld [vmem:[%s1 + $0x118] sm:$0xff]
  %v62 = vld [vmem:[%s1 + $0x120] sm:$0xff]
  %v63 = vld [vmem:[%s1 + $0x128] sm:$0xff]
  %v64 = vld [vmem:[%s1 + $0x130] sm:$0xff]
  %v65 = vld [vmem:[%s1 + $0x138] sm:$0xff]
  %v66 = vld [vmem:[%s1 + $0x140] sm:$0xff]
  %v67 = vld [vmem:[%s1 + $0x148] sm:$0xff]
  %v68 = vld [vmem:[%s1 + $0x150] sm:$0xff]
  %v69 = vld [vmem:[%s1 + $0x158] sm:$0xff]
  %v70 = vld [vmem:[%s1 + $0x160] sm:$0xff]
  %v71 = vld [vmem:[%s1 + $0x168] sm:$0xff]
  %v72 = vld [vmem:[%s1 + $0x170] sm:$0xff]
  %v73 = vld [vmem:[%s1 + $0x178] sm:$0xff]
  %v74 = vld [vmem:[%s1 + $0x180] sm:$0xff]
  %v75 = vld [vmem:[%s1 + $0x188] sm:$0xff]
  %v76 = vld [vmem:[%s1 + $0x190] sm:$0xff]
  %v77 = vld [vmem:[%s1 + $0x198] sm:$0xff]
  %v78 = vld [vmem:[%s1 + $0x1a0] sm:$0xff]
  %v79 = vld [vmem:[%s1 + $0x1a8] sm:$0xff]
  %v80 = vld [vmem:[%s1 + $0x1b0] sm:$0xff]
  %v81 = vld [vmem:[%s1 + $0x1b8] sm:$0xff]
  %v82 = vld [vmem:[%s1 + $0x1c0] sm:$0xff]
  %v83 = vld [vmem:[%s1 + $0x1c8] sm:$0xff]
  %v84 = vld [vmem:[%s1 + $0x1d0] sm:$0xff]
  %v85 = vld [vmem:[%s1 + $0x1d8] sm:$0xff]
  %v86 = vld [vmem:[%s1 + $0x1e0] sm:$0xff]
  %v87 = vld [vmem:[%s1 + $0x1e8] sm:$0xff]
  %v88 = vld [vmem:[%s1 + $0x1f0] sm:$0xff]
  %v89 = vld [vmem:[%s1 + $0x1f8] sm:$0xff]
  %v90 = vld [vmem:[%s1 + $0x200] sm:$0xff]
  %v91 = vld [vmem:[%s1 + $0x208] sm:$0xff]
  %v92 = vld [vmem:[%s1 + $0x210] sm:$0xff]
  %v93 = vld [vmem:[%s1 + $0x218] sm:$0xff]
  %v94 = vld [vmem:[%s1 + $0x220] sm:$0xff]
  %v95 = vld [vmem:[%s1 + $0x228] sm:$0xff]
  %v96 = vld [vmem:[%s1 + $0x230] sm:$0xff]
  %v97 = vld [vmem:[%s1 + $0x238] sm:$0xff]
  %v106 = vunpack.c.l.b16 %v18
  %v107 = vunpack.c.h.b16 %v18
  %v108 = vunpack.c.l.b16 %v19
  %v109 = vunpack.c.l.b16 %v20
  %v110 = vunpack.c.h.b16 %v20
  %v111 = vunpack.c.l.b16 %v21
  %v112 = vunpack.c.l.b16 %v22
  %v113 = vunpack.c.h.b16 %v22
  %v114 = vunpack.c.l.b16 %v23
  %v115 = vunpack.c.l.b16 %v24
  %v116 = vunpack.c.h.b16 %v24
  %v117 = vunpack.c.l.b16 %v25
  %v118 = vpack.c.b16 %v109, %v106
  %v119 = vpack.c.b16 %v110, %v107
  %v120 = vpack.c.b16 %v111, %v108
  %v121 = vpack.c.b16 %v115, %v112
  %v122 = vpack.c.b16 %v116, %v113
  %v123 = vpack.c.b16 %v117, %v114
  %v200 = vunpack.c.l.b16 %v26
  %v201 = vunpack.c.h.b16 %v26
  %v202 = vunpack.c.l.b16 %v27
  %v203 = vunpack.c.h.b16 %v27
  %v204 = vunpack.c.l.b16 %v28
  %v205 = vunpack.c.h.b16 %v28
  %v206 = vunpack.c.l.b16 %v29
  %v207 = vunpack.c.h.b16 %v29
  %v208 = vunpack.c.l.b16 %v30
  %v209 = vunpack.c.h.b16 %v30
  %v210 = vunpack.c.l.b16 %v31
  %v211 = vunpack.c.h.b16 %v31
  %v212 = vunpack.c.l.b16 %v32
  %v213 = vunpack.c.h.b16 %v32
  %v214 = vunpack.c.l.b16 %v33
  %v215 = vunpack.c.h.b16 %v33
  %v216 = vunpack.c.l.b16 %v34
  %v217 = vunpack.c.h.b16 %v34
  %v218 = vunpack.c.l.b16 %v35
  %v219 = vunpack.c.h.b16 %v35
  %v220 = vunpack.c.l.b16 %v36
  %v221 = vunpack.c.h.b16 %v36
  %v222 = vunpack.c.l.b16 %v37
  %v223 = vunpack.c.h.b16 %v37
  %v224 = vunpack.c.l.b16 %v38
  %v225 = vunpack.c.h.b16 %v38
  %v226 = vunpack.c.l.b16 %v39
  %v227 = vunpack.c.h.b16 %v39
  %v228 = vunpack.c.l.b16 %v40
  %v229 = vunpack.c.h.b16 %v40
  %v230 = vunpack.c.l.b16 %v41
  %v231 = vunpack.c.h.b16 %v41
  %v232 = vunpack.c.l.b16 %v42
  %v233 = vunpack.c.h.b16 %v42
  %v234 = vunpack.c.l.b16 %v43
  %v235 = vunpack.c.h.b16 %v43
  %v236 = vunpack.c.l.b16 %v44
  %v237 = vunpack.c.h.b16 %v44
  %v238 = vunpack.c.l.b16 %v45
  %v239 = vunpack.c.h.b16 %v45
  %v240 = vunpack.c.l.b16 %v46
  %v241 = vunpack.c.h.b16 %v46
  %v242 = vunpack.c.l.b16 %v47
  %v243 = vunpack.c.h.b16 %v47
  %v244 = vunpack.c.l.b16 %v48
  %v245 = vunpack.c.h.b16 %v48
  %v246 = vunpack.c.l.b16 %v49
  %v247 = vunpack.c.h.b16 %v49
  %v248 = vunpack.c.l.b16 %v50
  %v249 = vunpack.c.h.b16 %v50
  %v250 = vunpack.c.l.b16 %v51
  %v251 = vunpack.c.h.b16 %v51
  %v252 = vunpack.c.l.b16 %v52
  %v253 = vunpack.c.h.b16 %v52
  %v254 = vunpack.c.l.b16 %v53
  %v255 = vunpack.c.h.b16 %v53
  %v256 = vunpack.c.l.b16 %v54
  %v257 = vunpack.c.h.b16 %v54
  %v258 = vunpack.c.l.b16 %v55
  %v259 = vunpack.c.h.b16 %v55
  %v260 = vunpack.c.l.b16 %v56
  %v261 = vunpack.c.h.b16 %v56
  %v262 = vunpack.c.l.b16 %v57
  %v263 = vunpack.c.h.b16 %v57
  %v264 = vunpack.c.l.b16 %v58
  %v265 = vunpack.c.h.b16 %v58
  %v266 = vunpack.c.l.b16 %v59
  %v267 = vunpack.c.h.b16 %v59
  %v268 = vunpack.c.l.b16 %v60
  %v269 = vunpack.c.h.b16 %v60
  %v270 = vunpack.c.l.b16 %v61
  %v271 = vunpack.c.h.b16 %v61
  %v272 = vunpack.c.l.b16 %v62
  %v273 = vunpack.c.h.b16 %v62
  %v274 = vunpack.c.l.b16 %v63
  %v275 = vunpack.c.h.b16 %v63
  %v276 = vunpack.c.l.b16 %v64
  %v277 = vunpack.c.h.b16 %v64
  %v278 = vunpack.c.l.b16 %v65
  %v279 = vunpack.c.h.b16 %v65
  %v280 = vunpack.c.l.b16 %v66
  %v281 = vunpack.c.h.b16 %v66
  %v282 = vunpack.c.l.b16 %v67
  %v283 = vunpack.c.h.b16 %v67
  %v284 = vunpack.c.l.b16 %v68
  %v285 = vunpack.c.h.b16 %v68
  %v286 = vunpack.c.l.b16 %v69
  %v287 = vunpack.c.h.b16 %v69
  %v288 = vunpack.c.l.b16 %v70
  %v289 = vunpack.c.h.b16 %v70
  %v290 = vunpack.c.l.b16 %v71
  %v291 = vunpack.c.h.b16 %v71
  %v292 = vunpack.c.l.b16 %v72
  %v293 = vunpack.c.h.b16 %v72
  %v294 = vunpack.c.l.b16 %v73
  %v295 = vunpack.c.h.b16 %v73
  %v296 = vunpack.c.l.b16 %v74
  %v297 = vunpack.c.h.b16 %v74
  %v298 = vunpack.c.l.b16 %v75
  %v299 = vunpack.c.h.b16 %v75
  %v300 = vunpack.c.l.b16 %v76
  %v301 = vunpack.c.h.b16 %v76
  %v302 = vunpack.c.l.b16 %v77
  %v303 = vunpack.c.h.b16 %v77
  %v304 = vunpack.c.l.b16 %v78
  %v305 = vunpack.c.h.b16 %v78
  %v306 = vunpack.c.l.b16 %v79
  %v307 = vunpack.c.h.b16 %v79
  %v308 = vunpack.c.l.b16 %v80
  %v309 = vunpack.c.h.b16 %v80
  %v310 = vunpack.c.l.b16 %v81
  %v311 = vunpack.c.h.b16 %v81
  %v312 = vunpack.c.l.b16 %v82
  %v313 = vunpack.c.h.b16 %v82
  %v314 = vunpack.c.l.b16 %v83
  %v315 = vunpack.c.h.b16 %v83
  %v316 = vunpack.c.l.b16 %v84
  %v317 = vunpack.c.h.b16 %v84
  %v318 = vunpack.c.l.b16 %v85
  %v319 = vunpack.c.h.b16 %v85
  %v320 = vunpack.c.l.b16 %v86
  %v321 = vunpack.c.h.b16 %v86
  %v322 = vunpack.c.l.b16 %v87
  %v323 = vunpack.c.h.b16 %v87
  %v324 = vunpack.c.l.b16 %v88
  %v325 = vunpack.c.h.b16 %v88
  %v326 = vunpack.c.l.b16 %v89
  %v327 = vunpack.c.h.b16 %v89
  %v328 = vunpack.c.l.b16 %v90
  %v329 = vunpack.c.h.b16 %v90
  %v330 = vunpack.c.l.b16 %v91
  %v331 = vunpack.c.h.b16 %v91
  %v332 = vunpack.c.l.b16 %v92
  %v333 = vunpack.c.h.b16 %v92
  %v334 = vunpack.c.l.b16 %v93
  %v335 = vunpack.c.h.b16 %v93
  %v336 = vunpack.c.l.b16 %v94
  %v337 = vunpack.c.h.b16 %v94
  %v338 = vunpack.c.l.b16 %v95
  %v339 = vunpack.c.h.b16 %v95
  %v340 = vunpack.c.l.b16 %v96
  %v341 = vunpack.c.h.b16 %v96
  %v342 = vunpack.c.l.b16 %v97
  %v343 = vunpack.c.h.b16 %v97
  %v344 = vpack.c.b16 %v204, %v200
  %v345 = vpack.c.b16 %v205, %v201
  %v346 = vpack.c.b16 %v206, %v202
  %v347 = vpack.c.b16 %v207, %v203
  %v348 = vpack.c.b16 %v212, %v208
  %v349 = vpack.c.b16 %v213, %v209
  %v350 = vpack.c.b16 %v214, %v210
  %v351 = vpack.c.b16 %v215, %v211
  %v352 = vpack.c.b16 %v220, %v216
  %v353 = vpack.c.b16 %v221, %v217
  %v354 = vpack.c.b16 %v222, %v218
  %v355 = vpack.c.b16 %v223, %v219
  %v356 = vpack.c.b16 %v228, %v224
  %v357 = vpack.c.b16 %v229, %v225
  %v358 = vpack.c.b16 %v230, %v226
  %v359 = vpack.c.b16 %v231, %v227
  %v360 = vpack.c.b16 %v236, %v232
  %v361 = vpack.c.b16 %v237, %v233
  %v362 = vpack.c.b16 %v238, %v234
  %v363 = vpack.c.b16 %v239, %v235
  %v364 = vpack.c.b16 %v244, %v240
  %v365 = vpack.c.b16 %v245, %v241
  %v366 = vpack.c.b16 %v246, %v242
  %v367 = vpack.c.b16 %v247, %v243
  %v368 = vpack.c.b16 %v252, %v248
  %v369 = vpack.c.b16 %v253, %v249
  %v370 = vpack.c.b16 %v254, %v250
  %v371 = vpack.c.b16 %v255, %v251
  %v372 = vpack.c.b16 %v260, %v256
  %v373 = vpack.c.b16 %v261, %v257
  %v374 = vpack.c.b16 %v262, %v258
  %v375 = vpack.c.b16 %v263, %v259
  %v376 = vpack.c.b16 %v268, %v264
  %v377 = vpack.c.b16 %v269, %v265
  %v378 = vpack.c.b16 %v270, %v266
  %v379 = vpack.c.b16 %v271, %v267
  %v380 = vpack.c.b16 %v276, %v272
  %v381 = vpack.c.b16 %v277, %v273
  %v382 = vpack.c.b16 %v278, %v274
  %v383 = vpack.c.b16 %v279, %v275
  %v384 = vpack.c.b16 %v284, %v280
  %v385 = vpack.c.b16 %v285, %v281
  %v386 = vpack.c.b16 %v286, %v282
  %v387 = vpack.c.b16 %v287, %v283
  %v388 = vpack.c.b16 %v292, %v288
  %v389 = vpack.c.b16 %v293, %v289
  %v390 = vpack.c.b16 %v294, %v290
  %v391 = vpack.c.b16 %v295, %v291
  %v392 = vpack.c.b16 %v300, %v296
  %v393 = vpack.c.b16 %v301, %v297
  %v394 = vpack.c.b16 %v302, %v298
  %v395 = vpack.c.b16 %v303, %v299
  %v396 = vpack.c.b16 %v308, %v304
  %v397 = vpack.c.b16 %v309, %v305
  %v398 = vpack.c.b16 %v310, %v306
  %v399 = vpack.c.b16 %v311, %v307
  %v400 = vpack.c.b16 %v316, %v312
  %v401 = vpack.c.b16 %v317, %v313
  %v402 = vpack.c.b16 %v318, %v314
  %v403 = vpack.c.b16 %v319, %v315
  %v404 = vpack.c.b16 %v324, %v320
  %v405 = vpack.c.b16 %v325, %v321
  %v406 = vpack.c.b16 %v326, %v322
  %v407 = vpack.c.b16 %v327, %v323
  %v408 = vpack.c.b16 %v332, %v328
  %v409 = vpack.c.b16 %v333, %v329
  %v410 = vpack.c.b16 %v334, %v330
  %v411 = vpack.c.b16 %v335, %v331
  %v412 = vpack.c.b16 %v340, %v336
  %v413 = vpack.c.b16 %v341, %v337
  %v414 = vpack.c.b16 %v342, %v338
  %v415 = vpack.c.b16 %v343, %v339
  %vm488 = vcmask 261120
  %v490 = vsel %vm488, %v120, 0
  %v493 = vsel %vm488, %v123, 0
  %495 = vmatprep.subr.bf16.mxu0 %v345
  %496 = vmatpush1.bf16.msra.mxu0 %v344
  %497 = vmatprep.subr.bf16.mxu0 %v349
  %498 = vmatpush1.bf16.msra.mxu0 %v348
  %499 = vmatprep.subr.bf16.mxu0 %v353
  %500 = vmatpush1.bf16.msra.mxu0 %v352
  %501 = vmatprep.subr.bf16.mxu0 %v357
  %502 = vmatpush1.bf16.msra.mxu0 %v356
  %503 = vmatprep.subr.bf16.mxu0 %v361
  %504 = vmatpush1.bf16.msra.mxu0 %v360
  %505 = vmatprep.subr.bf16.mxu0 %v365
  %506 = vmatpush1.bf16.msra.mxu0 %v364
  %507 = vmatprep.subr.bf16.mxu0 %v369
  %508 = vmatpush1.bf16.msra.mxu0 %v368
  %509 = vmatprep.subr.bf16.mxu0 %v373
  %510 = vmatpush1.bf16.msra.mxu0 %v372
  %511 = vmatprep.subr.bf16.mxu0 %v377
  %512 = vmatpush1.bf16.msra.mxu0 %v376
  %513 = vmatprep.subr.bf16.mxu0 %v381
  %514 = vmatpush1.bf16.msra.mxu0 %v380
  %515 = vmatprep.subr.bf16.mxu0 %v385
  %516 = vmatpush1.bf16.msra.mxu0 %v384
  %517 = vmatprep.subr.bf16.mxu0 %v389
  %518 = vmatpush1.bf16.msra.mxu0 %v388
  %519 = vmatprep.subr.bf16.mxu0 %v393
  %520 = vmatpush1.bf16.msra.mxu0 %v392
  %521 = vmatprep.subr.bf16.mxu0 %v397
  %522 = vmatpush1.bf16.msra.mxu0 %v396
  %523 = vmatprep.subr.bf16.mxu0 %v401
  %524 = vmatpush1.bf16.msra.mxu0 %v400
  %525 = vmatprep.subr.bf16.mxu0 %v405
  %526 = vmatpush1.bf16.msra.mxu0 %v404
  %527 = vmatprep.mubr.bf16.mxu0 %v119
  %528 = vmatmul.mubr.bf16.gmra.mrb[0].mxu0 %v118
  %v529 = vpop.f32.mrb[0].mxu0
  %v530 = vadd.f32 0.0, %v529
  %v531 = vpop.f32.mrb[0].mxu0
  %v532 = vadd.f32 0.0, %v531
  %v533 = vpop.f32.mrb[0].mxu0
  %v534 = vadd.f32 0.0, %v533
  %v535 = vpop.f32.mrb[0].mxu0
  %v536 = vadd.f32 0.0, %v535
  %537 = vmatprep.mubr.bf16.mxu0 %v122
  %538 = vmatmul.mubr.bf16.gmra.mrb[0].mxu0 %v121
  %v539 = vpop.f32.mrb[0].mxu0
  %v540 = vadd.f32 0.0, %v539
  %v541 = vpop.f32.mrb[0].mxu0
  %v542 = vadd.f32 0.0, %v541
  %v543 = vpop.f32.mrb[0].mxu0
  %v544 = vadd.f32 0.0, %v543
  %v545 = vpop.f32.mrb[0].mxu0
  %v546 = vadd.f32 0.0, %v545
  %547 = vdwg.mxu0
  %548 = vmatprep.subr.bf16.mxu0 %v409
  %549 = vmatpush1.bf16.msra.mxu0 %v408
  %550 = vmatprep.subr.bf16.mxu0 %v413
  %551 = vmatpush1.bf16.msra.mxu0 %v412
  %552 = vmatprep.subr.bf16.mxu0 0
  %553 = vmatpush1.bf16.msra.mxu0 0
  %554 = vmatprep.subr.bf16.mxu0 0
  %555 = vmatpush1.bf16.msra.mxu0 0
  %556 = vmatprep.subr.bf16.mxu0 0
  %557 = vmatpush1.bf16.msra.mxu0 0
  %558 = vmatprep.subr.bf16.mxu0 0
  %559 = vmatpush1.bf16.msra.mxu0 0
  %560 = vmatprep.subr.bf16.mxu0 0
  %561 = vmatpush1.bf16.msra.mxu0 0
  %562 = vmatprep.subr.bf16.mxu0 0
  %563 = vmatpush1.bf16.msra.mxu0 0
  %564 = vmatprep.subr.bf16.mxu0 0
  %565 = vmatpush1.bf16.msra.mxu0 0
  %566 = vmatprep.subr.bf16.mxu0 0
  %567 = vmatpush1.bf16.msra.mxu0 0
  %568 = vmatprep.subr.bf16.mxu0 0
  %569 = vmatpush1.bf16.msra.mxu0 0
  %570 = vmatprep.subr.bf16.mxu0 0
  %571 = vmatpush1.bf16.msra.mxu0 0
  %572 = vmatprep.subr.bf16.mxu0 0
  %573 = vmatpush1.bf16.msra.mxu0 0
  %574 = vmatprep.subr.bf16.mxu0 0
  %575 = vmatpush1.bf16.msra.mxu0 0
  %576 = vmatprep.subr.bf16.mxu0 0
  %577 = vmatpush1.bf16.msra.mxu0 0
  %578 = vmatprep.subr.bf16.mxu0 0
  %579 = vmatpush1.bf16.msra.mxu0 0
  %580 = vmatprep.mubr.bf16.mxu0 0
  %581 = vmatmul.mubr.bf16.gmra.mrb[0].mxu0 %v490
  %v582 = vpop.f32.mrb[0].mxu0
  %v583 = vadd.f32 %v530, %v582
  %v584 = vpop.f32.mrb[0].mxu0
  %v585 = vadd.f32 %v532, %v584
  %v586 = vpop.f32.mrb[0].mxu0
  %v587 = vadd.f32 %v534, %v586
  %v588 = vpop.f32.mrb[0].mxu0
  %v589 = vadd.f32 %v536, %v588
  %590 = vmatprep.mubr.bf16.mxu0 0
  %591 = vmatmul.mubr.bf16.gmra.mrb[0].mxu0 %v493
  %v592 = vpop.f32.mrb[0].mxu0
  %v593 = vadd.f32 %v540, %v592
  %v594 = vpop.f32.mrb[0].mxu0
  %v595 = vadd.f32 %v542, %v594
  %v596 = vpop.f32.mrb[0].mxu0
  %v597 = vadd.f32 %v544, %v596
  %v598 = vpop.f32.mrb[0].mxu0
  %v599 = vadd.f32 %v546, %v598
  %600 = vdwg.mxu0
  %601 = vmatprep.subr.bf16.mxu0 %v347
  %602 = vmatpush1.bf16.msra.mxu0 %v346
  %603 = vmatprep.subr.bf16.mxu0 %v351
  %604 = vmatpush1.bf16.msra.mxu0 %v350
  %605 = vmatprep.subr.bf16.mxu0 %v355
  %606 = vmatpush1.bf16.msra.mxu0 %v354
  %607 = vmatprep.subr.bf16.mxu0 %v359
  %608 = vmatpush1.bf16.msra.mxu0 %v358
  %609 = vmatprep.subr.bf16.mxu0 %v363
  %610 = vmatpush1.bf16.msra.mxu0 %v362
  %611 = vmatprep.subr.bf16.mxu0 %v367
  %612 = vmatpush1.bf16.msra.mxu0 %v366
  %613 = vmatprep.subr.bf16.mxu0 %v371
  %614 = vmatpush1.bf16.msra.mxu0 %v370
  %615 = vmatprep.subr.bf16.mxu0 %v375
  %616 = vmatpush1.bf16.msra.mxu0 %v374
  %617 = vmatprep.subr.bf16.mxu0 %v379
  %618 = vmatpush1.bf16.msra.mxu0 %v378
  %619 = vmatprep.subr.bf16.mxu0 %v383
  %620 = vmatpush1.bf16.msra.mxu0 %v382
  %621 = vmatprep.subr.bf16.mxu0 %v387
  %622 = vmatpush1.bf16.msra.mxu0 %v386
  %623 = vmatprep.subr.bf16.mxu0 %v391
  %624 = vmatpush1.bf16.msra.mxu0 %v390
  %625 = vmatprep.subr.bf16.mxu0 %v395
  %626 = vmatpush1.bf16.msra.mxu0 %v394
  %627 = vmatprep.subr.bf16.mxu0 %v399
  %628 = vmatpush1.bf16.msra.mxu0 %v398
  %629 = vmatprep.subr.bf16.mxu0 %v403
  %630 = vmatpush1.bf16.msra.mxu0 %v402
  %631 = vmatprep.subr.bf16.mxu0 %v407
  %632 = vmatpush1.bf16.msra.mxu0 %v406
  %633 = vmatprep.mubr.bf16.mxu0 %v119
  %634 = vmatmul.mubr.bf16.gmra.mrb[0].mxu0 %v118
  %v635 = vpop.f32.mrb[0].mxu0
  %v636 = vadd.f32 0.0, %v635
  %v637 = vpop.f32.mrb[0].mxu0
  %v638 = vadd.f32 0.0, %v637
  %v639 = vpop.f32.mrb[0].mxu0
  %v640 = vadd.f32 0.0, %v639
  %v641 = vpop.f32.mrb[0].mxu0
  %v642 = vadd.f32 0.0, %v641
  %643 = vmatprep.mubr.bf16.mxu0 %v122
  %644 = vmatmul.mubr.bf16.gmra.mrb[0].mxu0 %v121
  %v645 = vpop.f32.mrb[0].mxu0
  %v646 = vadd.f32 0.0, %v645
  %v647 = vpop.f32.mrb[0].mxu0
  %v648 = vadd.f32 0.0, %v647
  %v649 = vpop.f32.mrb[0].mxu0
  %v650 = vadd.f32 0.0, %v649
  %v651 = vpop.f32.mrb[0].mxu0
  %v652 = vadd.f32 0.0, %v651
  %653 = vdwg.mxu0
  %654 = vmatprep.subr.bf16.mxu0 %v411
  %655 = vmatpush1.bf16.msra.mxu0 %v410
  %656 = vmatprep.subr.bf16.mxu0 %v415
  %657 = vmatpush1.bf16.msra.mxu0 %v414
  %658 = vmatprep.subr.bf16.mxu0 0
  %659 = vmatpush1.bf16.msra.mxu0 0
  %660 = vmatprep.subr.bf16.mxu0 0
  %661 = vmatpush1.bf16.msra.mxu0 0
  %662 = vmatprep.subr.bf16.mxu0 0
  %663 = vmatpush1.bf16.msra.mxu0 0
  %664 = vmatprep.subr.bf16.mxu0 0
  %665 = vmatpush1.bf16.msra.mxu0 0
  %666 = vmatprep.subr.bf16.mxu0 0
  %667 = vmatpush1.bf16.msra.mxu0 0
  %668 = vmatprep.subr.bf16.mxu0 0
  %669 = vmatpush1.bf16.msra.mxu0 0
  %670 = vmatprep.subr.bf16.mxu0 0
  %671 = vmatpush1.bf16.msra.mxu0 0
  %672 = vmatprep.subr.bf16.mxu0 0
  %673 = vmatpush1.bf16.msra.mxu0 0
  %674 = vmatprep.subr.bf16.mxu0 0
  %675 = vmatpush1.bf16.msra.mxu0 0
  %676 = vmatprep.subr.bf16.mxu0 0
  %677 = vmatpush1.bf16.msra.mxu0 0
  %678 = vmatprep.subr.bf16.mxu0 0
  %679 = vmatpush1.bf16.msra.mxu0 0
  %680 = vmatprep.subr.bf16.mxu0 0
  %681 = vmatpush1.bf16.msra.mxu0 0
  %682 = vmatprep.subr.bf16.mxu0 0
  %683 = vmatpush1.bf16.msra.mxu0 0
  %684 = vmatprep.subr.bf16.mxu0 0
  %685 = vmatpush1.bf16.msra.mxu0 0
  %686 = vmatprep.mubr.bf16.mxu0 0
  %687 = vmatmul.mubr.bf16.gmra.mrb[0].mxu0 %v490
  %v688 = vpop.f32.mrb[0].mxu0
  %v689 = vadd.f32 %v636, %v688
  %v690 = vpop.f32.mrb[0].mxu0
  %v691 = vadd.f32 %v638, %v690
  %v692 = vpop.f32.mrb[0].mxu0
  %v693 = vadd.f32 %v640, %v692
  %v694 = vpop.f32.mrb[0].mxu0
  %v695 = vadd.f32 %v642, %v694
  %696 = vmatprep.mubr.bf16.mxu0 0
  %697 = vmatmul.mubr.bf16.gmra.mrb[0].mxu0 %v493
  %v698 = vpop.f32.mrb[0].mxu0
  %v699 = vadd.f32 %v646, %v698
  %v700 = vpop.f32.mrb[0].mxu0
  %v701 = vadd.f32 %v648, %v700
  %v702 = vpop.f32.mrb[0].mxu0
  %v703 = vadd.f32 %v650, %v702
  %v704 = vpop.f32.mrb[0].mxu0
  %v705 = vadd.f32 %v652, %v704
  %706 = vdwg.mxu0
  %v707 = vadd.f32 %v583, %v587
  %v708 = vadd.f32 %v707, %v593
  %v709 = vadd.f32 %v708, %v597
  %v710 = vrot.slane %v709, 4
  %v711 = vadd.f32 %v709, %v710
  %v712 = vrot.slane %v711, 2
  %v713 = vadd.f32 %v711, %v712
  %v714 = vrot.slane %v713, 1
  %v715 = vadd.f32 %v713, %v714
  %v716 = vadd.f32 %v715, 0.0
  %v717 = vadd.f32 %v585, %v589
  %v718 = vadd.f32 %v717, %v595
  %v719 = vadd.f32 %v718, %v599
  %v720 = vrot.slane %v719, 4
  %v721 = vadd.f32 %v719, %v720
  %v722 = vrot.slane %v721, 2
  %v723 = vadd.f32 %v721, %v722
  %v724 = vrot.slane %v723, 1
  %v725 = vadd.f32 %v723, %v724
  %v726 = vadd.f32 %v716, %v725
  %v727 = vadd.f32 %v689, %v693
  %v728 = vadd.f32 %v727, %v699
  %v729 = vadd.f32 %v728, %v703
  %v730 = vrot.slane %v729, 4
  %v731 = vadd.f32 %v729, %v730
  %v732 = vrot.slane %v731, 2
  %v733 = vadd.f32 %v731, %v732
  %v734 = vrot.slane %v733, 1
  %v735 = vadd.f32 %v733, %v734
  %v736 = vadd.f32 %v726, %v735
  %v737 = vadd.f32 %v691, %v695
  %v738 = vadd.f32 %v737, %v701
  %v739 = vadd.f32 %v738, %v705
  %v740 = vrot.slane %v739, 4
  %v741 = vadd.f32 %v739, %v740
  %v742 = vrot.slane %v741, 2
  %v743 = vadd.f32 %v741, %v742
  %v744 = vrot.slane %v743, 1
  %v745 = vadd.f32 %v743, %v744
  %v746 = vadd.f32 %v736, %v745
  %v747 = vmul.f32 %v746, 0.0078125
  %v748 = vsub.f32 %v583, %v747
  %v749 = vsub.f32 %v587, %v747
  %v750 = vsub.f32 %v593, %v747
  %v751 = vsub.f32 %v597, %v747
  %v752 = vmul.f32 %v748, %v748
  %v753 = vmul.f32 %v749, %v749
  %v754 = vmul.f32 %v750, %v750
  %v755 = vmul.f32 %v751, %v751
  %v756 = vadd.f32 %v752, %v753
  %v757 = vadd.f32 %v756, %v754
  %v758 = vadd.f32 %v757, %v755
  %v759 = vrot.slane %v758, 4
  %v760 = vadd.f32 %v758, %v759
  %v761 = vrot.slane %v760, 2
  %v762 = vadd.f32 %v760, %v761
  %v763 = vrot.slane %v762, 1
  %v764 = vadd.f32 %v762, %v763
  %v765 = vadd.f32 %v764, 0.0
  %v766 = vsub.f32 %v585, %v747
  %v767 = vsub.f32 %v589, %v747
  %v768 = vsub.f32 %v595, %v747
  %v769 = vsub.f32 %v599, %v747
  %v770 = vmul.f32 %v766, %v766
  %v771 = vmul.f32 %v767, %v767
  %v772 = vmul.f32 %v768, %v768
  %v773 = vmul.f32 %v769, %v769
  %v774 = vadd.f32 %v770, %v771
  %v775 = vadd.f32 %v774, %v772
  %v776 = vadd.f32 %v775, %v773
  %v777 = vrot.slane %v776, 4
  %v778 = vadd.f32 %v776, %v777
  %v779 = vrot.slane %v778, 2
  %v780 = vadd.f32 %v778, %v779
  %v781 = vrot.slane %v780, 1
  %v782 = vadd.f32 %v780, %v781
  %v783 = vadd.f32 %v765, %v782
  %v784 = vsub.f32 %v689, %v747
  %v785 = vsub.f32 %v693, %v747
  %v786 = vsub.f32 %v699, %v747
  %v787 = vsub.f32 %v703, %v747
  %v788 = vmul.f32 %v784, %v784
  %v789 = vmul.f32 %v785, %v785
  %v790 = vmul.f32 %v786, %v786
  %v791 = vmul.f32 %v787, %v787
  %v792 = vadd.f32 %v788, %v789
  %v793 = vadd.f32 %v792, %v790
  %v794 = vadd.f32 %v793, %v791
  %v795 = vrot.slane %v794, 4
  %v796 = vadd.f32 %v794, %v795
  %v797 = vrot.slane %v796, 2
  %v798 = vadd.f32 %v796, %v797
  %v799 = vrot.slane %v798, 1
  %v800 = vadd.f32 %v798, %v799
  %v801 = vadd.f32 %v783, %v800
  %v802 = vsub.f32 %v691, %v747
  %v803 = vsub.f32 %v695, %v747
  %v804 = vsub.f32 %v701, %v747
  %v805 = vsub.f32 %v705, %v747
  %v806 = vmul.f32 %v802, %v802
  %v807 = vmul.f32 %v803, %v803
  %v808 = vmul.f32 %v804, %v804
  %v809 = vmul.f32 %v805, %v805
  %v810 = vadd.f32 %v806, %v807
  %v811 = vadd.f32 %v810, %v808
  %v812 = vadd.f32 %v811, %v809
  %v813 = vrot.slane %v812, 4
  %v814 = vadd.f32 %v812, %v813
  %v815 = vrot.slane %v814, 2
  %v816 = vadd.f32 %v814, %v815
  %v817 = vrot.slane %v816, 1
  %v818 = vadd.f32 %v816, %v817
  %v819 = vadd.f32 %v801, %v818
  %v820 = vmul.f32 %v819, 0.0078125
  %v821 = vadd.f32 %v820, 1e-05
  %v822 = vrsqrt.pop %v821
  %v823 = vld [vmem:[%s2] sm:$0x1]
  %v824 = vmul.f32 %v822, %v823
  %v825 = vlaneseq
  %v826 = vshrl.u32 %v825, 7
  %v827 = vsub.s32 0, %v826
  %v828 = vrot.slane %v824, %v827
  %v829 = vmul.f32 %v748, %v828
  %v830 = vmul.f32 %v749, %v828
  %v831 = vmul.f32 %v750, %v828
  %v832 = vmul.f32 %v751, %v828
  %v833 = vld [vmem:[%s3] sm:$0x1]
  %v835 = vlaneseq
  %v836 = vshrl.u32 %v835, 7
  %v837 = vsub.s32 0, %v836
  %v838 = vrot.slane %v833, %v837
  %v840 = vadd.f32 %v829, %v838
  %v841 = vadd.f32 %v830, %v838
  %v842 = vadd.f32 %v831, %v838
  %v843 = vadd.f32 %v832, %v838
  %vm844 = vcmp.gt.f32.partialorder %v840, 0.0
  %vm845 = vcmp.gt.f32.partialorder %v841, 0.0
  %vm846 = vcmp.gt.f32.partialorder %v842, 0.0
  %vm847 = vcmp.gt.f32.partialorder %v843, 0.0
  %v848 = vmul.f32 %v840, 0.2
  %v849 = vmul.f32 %v841, 0.2
  %v850 = vmul.f32 %v842, 0.2
  %v851 = vmul.f32 %v843, 0.2
  %v852 = vsel %vm844, %v840, %v848
  %v853 = vsel %vm845, %v841, %v849
  %v854 = vsel %vm846, %v842, %v850
  %v855 = vsel %vm847, %v843, %v851
  %v856 = vpack.c.bf16 %v853, %v852
  %v857 = vpack.c.bf16 %v855, %v854
  %v860 = vunpack.c.l.b16 %v856
  %v861 = vunpack.c.h.b16 %v856
  %v862 = vunpack.c.l.b16 %v857
  %v863 = vunpack.c.h.b16 %v857
  %v864 = vpack.c.b16 %v860, %v860
  %v865 = vpack.c.b16 %v861, %v861
  %v866 = vpack.c.b16 %v862, %v862
  %v867 = vpack.c.b16 %v863, %v863
  %872 = vst [vmem:[%s4] sm:$0xf] %v864
  %873 = vst [vmem:[%s4 + $0x10] sm:$0xf] %v865
  %874 = vst [vmem:[%s4 + $0x20] sm:$0xf] %v866
  %875 = vst [vmem:[%s4 + $0x30] sm:$0xf] %v867
  %v876 = vmul.f32 %v766, %v828
  %v877 = vmul.f32 %v767, %v828
  %v878 = vmul.f32 %v768, %v828
  %v879 = vmul.f32 %v769, %v828
  %v880 = vld [vmem:[%s3] sm:$0x1]
  %v882 = vlaneseq
  %v883 = vshrl.u32 %v882, 7
  %v884 = vsub.s32 0, %v883
  %v885 = vrot.slane %v880, %v884
  %v887 = vadd.f32 %v876, %v885
  %v888 = vadd.f32 %v877, %v885
  %v889 = vadd.f32 %v878, %v885
  %v890 = vadd.f32 %v879, %v885
  %vm891 = vcmp.gt.f32.partialorder %v887, 0.0
  %vm892 = vcmp.gt.f32.partialorder %v888, 0.0
  %vm893 = vcmp.gt.f32.partialorder %v889, 0.0
  %vm894 = vcmp.gt.f32.partialorder %v890, 0.0
  %v895 = vmul.f32 %v887, 0.2
  %v896 = vmul.f32 %v888, 0.2
  %v897 = vmul.f32 %v889, 0.2
  %v898 = vmul.f32 %v890, 0.2
  %v899 = vsel %vm891, %v887, %v895
  %v900 = vsel %vm892, %v888, %v896
  %v901 = vsel %vm893, %v889, %v897
  %v902 = vsel %vm894, %v890, %v898
  %v903 = vpack.c.bf16 %v900, %v899
  %v904 = vpack.c.bf16 %v902, %v901
  %v907 = vunpack.c.l.b16 %v903
  %v908 = vunpack.c.h.b16 %v903
  %v909 = vunpack.c.l.b16 %v904
  %v910 = vunpack.c.h.b16 %v904
  %v911 = vpack.c.b16 %v907, %v907
  %v912 = vpack.c.b16 %v908, %v908
  %v913 = vpack.c.b16 %v909, %v909
  %v914 = vpack.c.b16 %v910, %v910
  %919 = vst [vmem:[%s4 + $0x4] sm:$0xf] %v911
  %920 = vst [vmem:[%s4 + $0x14] sm:$0xf] %v912
  %921 = vst [vmem:[%s4 + $0x24] sm:$0xf] %v913
  %922 = vst [vmem:[%s4 + $0x34] sm:$0xf] %v914
  %v923 = vmul.f32 %v784, %v828
  %v924 = vmul.f32 %v785, %v828
  %v925 = vmul.f32 %v786, %v828
  %v926 = vmul.f32 %v787, %v828
  %v927 = vld [vmem:[%s3] sm:$0x1]
  %v929 = vlaneseq
  %v930 = vshrl.u32 %v929, 7
  %v931 = vsub.s32 0, %v930
  %v932 = vrot.slane %v927, %v931
  %v934 = vadd.f32 %v923, %v932
  %v935 = vadd.f32 %v924, %v932
  %v936 = vadd.f32 %v925, %v932
  %v937 = vadd.f32 %v926, %v932
  %vm938 = vcmp.gt.f32.partialorder %v934, 0.0
  %vm939 = vcmp.gt.f32.partialorder %v935, 0.0
  %vm940 = vcmp.gt.f32.partialorder %v936, 0.0
  %vm941 = vcmp.gt.f32.partialorder %v937, 0.0
  %v942 = vmul.f32 %v934, 0.2
  %v943 = vmul.f32 %v935, 0.2
  %v944 = vmul.f32 %v936, 0.2
  %v945 = vmul.f32 %v937, 0.2
  %v946 = vsel %vm938, %v934, %v942
  %v947 = vsel %vm939, %v935, %v943
  %v948 = vsel %vm940, %v936, %v944
  %v949 = vsel %vm941, %v937, %v945
  %v950 = vpack.c.bf16 %v947, %v946
  %v951 = vpack.c.bf16 %v949, %v948
  %v954 = vunpack.c.l.b16 %v950
  %v955 = vunpack.c.h.b16 %v950
  %v956 = vunpack.c.l.b16 %v951
  %v957 = vunpack.c.h.b16 %v951
  %v958 = vpack.c.b16 %v954, %v954
  %v959 = vpack.c.b16 %v955, %v955
  %v960 = vpack.c.b16 %v956, %v956
  %v961 = vpack.c.b16 %v957, %v957
  %966 = vst [vmem:[%s4 + $0x8] sm:$0xf] %v958
  %967 = vst [vmem:[%s4 + $0x18] sm:$0xf] %v959
  %968 = vst [vmem:[%s4 + $0x28] sm:$0xf] %v960
  %969 = vst [vmem:[%s4 + $0x38] sm:$0xf] %v961
  %v970 = vmul.f32 %v802, %v828
  %v971 = vmul.f32 %v803, %v828
  %v972 = vmul.f32 %v804, %v828
  %v973 = vmul.f32 %v805, %v828
  %v974 = vld [vmem:[%s3] sm:$0x1]
  %v976 = vlaneseq
  %v977 = vshrl.u32 %v976, 7
  %v978 = vsub.s32 0, %v977
  %v979 = vrot.slane %v974, %v978
  %v981 = vadd.f32 %v970, %v979
  %v982 = vadd.f32 %v971, %v979
  %v983 = vadd.f32 %v972, %v979
  %v984 = vadd.f32 %v973, %v979
  %vm985 = vcmp.gt.f32.partialorder %v981, 0.0
  %vm986 = vcmp.gt.f32.partialorder %v982, 0.0
  %vm987 = vcmp.gt.f32.partialorder %v983, 0.0
  %vm988 = vcmp.gt.f32.partialorder %v984, 0.0
  %v989 = vmul.f32 %v981, 0.2
  %v990 = vmul.f32 %v982, 0.2
  %v991 = vmul.f32 %v983, 0.2
  %v992 = vmul.f32 %v984, 0.2
  %v993 = vsel %vm985, %v981, %v989
  %v994 = vsel %vm986, %v982, %v990
  %v995 = vsel %vm987, %v983, %v991
  %v996 = vsel %vm988, %v984, %v992
  %v997 = vpack.c.bf16 %v994, %v993
  %v998 = vpack.c.bf16 %v996, %v995
  %v1001 = vunpack.c.l.b16 %v997
  %v1002 = vunpack.c.h.b16 %v997
  %v1003 = vunpack.c.l.b16 %v998
  %v1004 = vunpack.c.h.b16 %v998
  %v1005 = vpack.c.b16 %v1001, %v1001
  %v1006 = vpack.c.b16 %v1002, %v1002
  %v1007 = vpack.c.b16 %v1003, %v1003
  %v1008 = vpack.c.b16 %v1004, %v1004
  %1013 = vst [vmem:[%s4 + $0xc] sm:$0xf] %v1005
  %1014 = vst [vmem:[%s4 + $0x1c] sm:$0xf] %v1006
  %1015 = vst [vmem:[%s4 + $0x2c] sm:$0xf] %v1007
  %1016 = vst [vmem:[%s4 + $0x3c] sm:$0xf] %v1008
  // Predicated region
  $region18: #{cnn_vae_forward.17} parent=0 // pred_check
    _
  $region19: #{cnn_vae_forward.17} parent=0 // pred_check_branch
    %1018 = sbr.rel (0) target = $region21
  $region20: #{cnn_vae_forward.17} parent=0 // pred_region
    _
  $region21: #{cnn_vae_forward.17} parent=0 // pred_fallthru
    _
  // Predicated region
  $region22: #{cnn_vae_forward.17} parent=0 // pred_check
    _
  $region23: #{cnn_vae_forward.17} parent=0 // pred_check_branch
    %1020 = sbr.rel (0) target = $region25
  $region24: #{cnn_vae_forward.17} parent=0 // pred_region
    _
  $region25: #{cnn_vae_forward.17} parent=0 // pred_fallthru
    _

// kernel: cnn_vae_forward.18
$region0: #{cnn_vae_forward.18}
  #allocation0 [shape = 'u32[]', space=smem, size = 0x4, offset = 0x4, fixed_abs, tag = 'smem constant byte address 0x4 - core index']
  #allocation1 [shape = 'u32[144,128]{1,0:T(1,128)}', space=vmem, size = 0x12000, scoped, tag = 'internal scratch']
  %s0 = inlined_call_operand.vmem [shape: bf16[128,144], index: 0, kind: input, shape index: {}]
  %s1 = inlined_call_operand.vmem [shape: bf16[144,512], index: 1, kind: input, shape index: {}]
  %s2 = inlined_call_operand.vmem [shape: f32[1,128], index: 2, kind: input, shape index: {}]
  %s3 = inlined_call_operand.vmem [shape: f32[1,128], index: 3, kind: input, shape index: {}]
  %s4 = inlined_call_operand.vmem [shape: bf16[128,512], index: 4, kind: output, shape index: {}]
  %s5 = sld [smem:[#allocation0]]
  $region26: #{cnn_vae_forward.18} parent=0
    _
  %s7 = ssub.s32 1, %s5
  %s8 = scalar_select 0, %s7, %s5
  // Predicated region
  $region2: #{cnn_vae_forward.18} parent=0 // pred_check
    _
  $region3: #{cnn_vae_forward.18} parent=0 // pred_check_branch
    %10 = sbr.rel (0) target = $region5
  $region4: #{cnn_vae_forward.18} parent=0 // pred_region
    _
  $region5: #{cnn_vae_forward.18} parent=0 // pred_fallthru
    _
  // Predicated region
  $region6: #{cnn_vae_forward.18} parent=0 // pred_check
    _
  $region7: #{cnn_vae_forward.18} parent=0 // pred_check_branch
    %12 = sbr.rel (0) target = $region9
  $region8: #{cnn_vae_forward.18} parent=0 // pred_region
    _
  $region9: #{cnn_vae_forward.18} parent=0 // pred_fallthru
    _
  // Predicated region
  $region10: #{cnn_vae_forward.18} parent=0 // pred_check
    _
  $region11: #{cnn_vae_forward.18} parent=0 // pred_check_branch
    %14 = sbr.rel (0) target = $region13
  $region12: #{cnn_vae_forward.18} parent=0 // pred_region
    _
  $region13: #{cnn_vae_forward.18} parent=0 // pred_fallthru
    _
  // Predicated region
  $region14: #{cnn_vae_forward.18} parent=0 // pred_check
    _
  $region15: #{cnn_vae_forward.18} parent=0 // pred_check_branch
    %16 = sbr.rel (0) target = $region17
  $region16: #{cnn_vae_forward.18} parent=0 // pred_region
    _
  $region17: #{cnn_vae_forward.18} parent=0 // pred_fallthru
    _
  %v18 = vld [vmem:[%s0] sm:$0xff]
  %v19 = vld [vmem:[%s0 + $0x8] sm:$0xff]
  %v20 = vld [vmem:[%s0 + $0x10] sm:$0xff]
  %v21 = vld [vmem:[%s0 + $0x18] sm:$0xff]
  %v22 = vld [vmem:[%s0 + $0x20] sm:$0xff]
  %v23 = vld [vmem:[%s0 + $0x28] sm:$0xff]
  %v24 = vld [vmem:[%s0 + $0x30] sm:$0xff]
  %v25 = vld [vmem:[%s0 + $0x38] sm:$0xff]
  %v26 = vld [vmem:[%s0 + $0x40] sm:$0xff]
  %v27 = vld [vmem:[%s0 + $0x48] sm:$0xff]
  %v28 = vld [vmem:[%s0 + $0x50] sm:$0xff]
  %v29 = vld [vmem:[%s0 + $0x58] sm:$0xff]
  %v30 = vld [vmem:[%s0 + $0x60] sm:$0xff]
  %v31 = vld [vmem:[%s0 + $0x68] sm:$0xff]
  %v32 = vld [vmem:[%s0 + $0x70] sm:$0xff]
  %v33 = vld [vmem:[%s0 + $0x78] sm:$0xff]
  %v34 = vld [vmem:[%s1] sm:$0xff]
  %v35 = vld [vmem:[%s1 + $0x8] sm:$0xff]
  %v36 = vld [vmem:[%s1 + $0x10] sm:$0xff]
  %v37 = vld [vmem:[%s1 + $0x18] sm:$0xff]
  %v38 = vld [vmem:[%s1 + $0x20] sm:$0xff]
  %v39 = vld [vmem:[%s1 + $0x28] sm:$0xff]
  %v40 = vld [vmem:[%s1 + $0x30] sm:$0xff]
  %v41 = vld [vmem:[%s1 + $0x38] sm:$0xff]
  %v42 = vld [vmem:[%s1 + $0x40] sm:$0xff]
  %v43 = vld [vmem:[%s1 + $0x48] sm:$0xff]
  %v44 = vld [vmem:[%s1 + $0x50] sm:$0xff]
  %v45 = vld [vmem:[%s1 + $0x58] sm:$0xff]
  %v46 = vld [vmem:[%s1 + $0x60] sm:$0xff]
  %v47 = vld [vmem:[%s1 + $0x68] sm:$0xff]
  %v48 = vld [vmem:[%s1 + $0x70] sm:$0xff]
  %v49 = vld [vmem:[%s1 + $0x78] sm:$0xff]
  %v50 = vld [vmem:[%s1 + $0x80] sm:$0xff]
  %v51 = vld [vmem:[%s1 + $0x88] sm:$0xff]
  %v52 = vld [vmem:[%s1 + $0x90] sm:$0xff]
  %v53 = vld [vmem:[%s1 + $0x98] sm:$0xff]
  %v54 = vld [vmem:[%s1 + $0xa0] sm:$0xff]
  %v55 = vld [vmem:[%s1 + $0xa8] sm:$0xff]
  %v56 = vld [vmem:[%s1 + $0xb0] sm:$0xff]
  %v57 = vld [vmem:[%s1 + $0xb8] sm:$0xff]
  %v58 = vld [vmem:[%s1 + $0xc0] sm:$0xff]
  %v59 = vld [vmem:[%s1 + $0xc8] sm:$0xff]
  %v60 = vld [vmem:[%s1 + $0xd0] sm:$0xff]
  %v61 = vld [vmem:[%s1 + $0xd8] sm:$0xff]
  %v62 = vld [vmem:[%s1 + $0xe0] sm:$0xff]
  %v63 = vld [vmem:[%s1 + $0xe8] sm:$0xff]
  %v64 = vld [vmem:[%s1 + $0xf0] sm:$0xff]
  %v65 = vld [vmem:[%s1 + $0xf8] sm:$0xff]
  %v66 = vld [vmem:[%s1 + $0x100] sm:$0xff]
  %v67 = vld [vmem:[%s1 + $0x108] sm:$0xff]
  %v68 = vld [vmem:[%s1 + $0x110] sm:$0xff]
  %v69 = vld [vmem:[%s1 + $0x118] sm:$0xff]
  %v86 = vunpack.c.l.b16 %v18
  %v87 = vunpack.c.h.b16 %v18
  %v88 = vunpack.c.l.b16 %v19
  %v89 = vunpack.c.h.b16 %v19
  %v90 = vunpack.c.l.b16 %v20
  %v91 = vunpack.c.h.b16 %v20
  %v92 = vunpack.c.l.b16 %v21
  %v93 = vunpack.c.h.b16 %v21
  %v94 = vunpack.c.l.b16 %v22
  %v95 = vunpack.c.h.b16 %v22
  %v96 = vunpack.c.l.b16 %v23
  %v97 = vunpack.c.h.b16 %v23
  %v98 = vunpack.c.l.b16 %v24
  %v99 = vunpack.c.h.b16 %v24
  %v100 = vunpack.c.l.b16 %v25
  %v101 = vunpack.c.h.b16 %v25
  %v102 = vunpack.c.l.b16 %v26
  %v103 = vunpack.c.h.b16 %v26
  %v104 = vunpack.c.l.b16 %v27
  %v105 = vunpack.c.h.b16 %v27
  %v106 = vunpack.c.l.b16 %v28
  %v107 = vunpack.c.h.b16 %v28
  %v108 = vunpack.c.l.b16 %v29
  %v109 = vunpack.c.h.b16 %v29
  %v110 = vunpack.c.l.b16 %v30
  %v111 = vunpack.c.h.b16 %v30
  %v112 = vunpack.c.l.b16 %v31
  %v113 = vunpack.c.h.b16 %v31
  %v114 = vunpack.c.l.b16 %v32
  %v115 = vunpack.c.h.b16 %v32
  %v116 = vunpack.c.l.b16 %v33
  %v117 = vunpack.c.h.b16 %v33
  %v118 = vpack.c.b16 %v88, %v86
  %v119 = vpack.c.b16 %v89, %v87
  %v120 = vpack.c.b16 %v92, %v90
  %v121 = vpack.c.b16 %v93, %v91
  %v122 = vpack.c.b16 %v96, %v94
  %v123 = vpack.c.b16 %v97, %v95
  %v124 = vpack.c.b16 %v100, %v98
  %v125 = vpack.c.b16 %v101, %v99
  %v126 = vpack.c.b16 %v104, %v102
  %v127 = vpack.c.b16 %v105, %v103
  %v128 = vpack.c.b16 %v108, %v106
  %v129 = vpack.c.b16 %v109, %v107
  %v130 = vpack.c.b16 %v112, %v110
  %v131 = vpack.c.b16 %v113, %v111
  %v132 = vpack.c.b16 %v116, %v114
  %v133 = vpack.c.b16 %v117, %v115
  %v178 = vunpack.c.l.b16 %v34
  %v179 = vunpack.c.h.b16 %v34
  %v180 = vunpack.c.l.b16 %v35
  %v181 = vunpack.c.h.b16 %v35
  %v182 = vunpack.c.l.b16 %v36
  %v183 = vunpack.c.h.b16 %v36
  %v184 = vunpack.c.l.b16 %v37
  %v185 = vunpack.c.h.b16 %v37
  %v186 = vunpack.c.l.b16 %v38
  %v187 = vunpack.c.h.b16 %v38
  %v188 = vunpack.c.l.b16 %v39
  %v189 = vunpack.c.h.b16 %v39
  %v190 = vunpack.c.l.b16 %v40
  %v191 = vunpack.c.h.b16 %v40
  %v192 = vunpack.c.l.b16 %v41
  %v193 = vunpack.c.h.b16 %v41
  %v194 = vunpack.c.l.b16 %v42
  %v195 = vunpack.c.h.b16 %v42
  %v196 = vunpack.c.l.b16 %v43
  %v197 = vunpack.c.h.b16 %v43
  %v198 = vunpack.c.l.b16 %v44
  %v199 = vunpack.c.h.b16 %v44
  %v200 = vunpack.c.l.b16 %v45
  %v201 = vunpack.c.h.b16 %v45
  %v202 = vunpack.c.l.b16 %v46
  %v203 = vunpack.c.h.b16 %v46
  %v204 = vunpack.c.l.b16 %v47
  %v205 = vunpack.c.h.b16 %v47
  %v206 = vunpack.c.l.b16 %v48
  %v207 = vunpack.c.h.b16 %v48
  %v208 = vunpack.c.l.b16 %v49
  %v209 = vunpack.c.h.b16 %v49
  %v210 = vunpack.c.l.b16 %v50
  %v211 = vunpack.c.h.b16 %v50
  %v212 = vunpack.c.l.b16 %v51
  %v213 = vunpack.c.h.b16 %v51
  %v214 = vunpack.c.l.b16 %v52
  %v215 = vunpack.c.h.b16 %v52
  %v216 = vunpack.c.l.b16 %v53
  %v217 = vunpack.c.h.b16 %v53
  %v218 = vunpack.c.l.b16 %v54
  %v219 = vunpack.c.h.b16 %v54
  %v220 = vunpack.c.l.b16 %v55
  %v221 = vunpack.c.h.b16 %v55
  %v222 = vunpack.c.l.b16 %v56
  %v223 = vunpack.c.h.b16 %v56
  %v224 = vunpack.c.l.b16 %v57
  %v225 = vunpack.c.h.b16 %v57
  %v226 = vunpack.c.l.b16 %v58
  %v227 = vunpack.c.h.b16 %v58
  %v228 = vunpack.c.l.b16 %v59
  %v229 = vunpack.c.h.b16 %v59
  %v230 = vunpack.c.l.b16 %v60
  %v231 = vunpack.c.h.b16 %v60
  %v232 = vunpack.c.l.b16 %v61
  %v233 = vunpack.c.h.b16 %v61
  %v234 = vunpack.c.l.b16 %v62
  %v235 = vunpack.c.h.b16 %v62
  %v236 = vunpack.c.l.b16 %v63
  %v237 = vunpack.c.h.b16 %v63
  %v238 = vunpack.c.l.b16 %v64
  %v239 = vunpack.c.h.b16 %v64
  %v240 = vunpack.c.l.b16 %v65
  %v241 = vunpack.c.h.b16 %v65
  %v242 = vunpack.c.l.b16 %v66
  %v243 = vunpack.c.h.b16 %v66
  %v244 = vunpack.c.l.b16 %v67
  %v245 = vunpack.c.h.b16 %v67
  %v246 = vunpack.c.l.b16 %v68
  %v247 = vunpack.c.h.b16 %v68
  %v248 = vunpack.c.l.b16 %v69
  %v249 = vunpack.c.h.b16 %v69
  %v250 = vpack.c.b16 %v182, %v178
  %v251 = vpack.c.b16 %v183, %v179
  %v252 = vpack.c.b16 %v184, %v180
  %v253 = vpack.c.b16 %v185, %v181
  %v254 = vpack.c.b16 %v190, %v186
  %v255 = vpack.c.b16 %v191, %v187
  %v256 = vpack.c.b16 %v192, %v188
  %v257 = vpack.c.b16 %v193, %v189
  %v258 = vpack.c.b16 %v198, %v194
  %v259 = vpack.c.b16 %v199, %v195
  %v260 = vpack.c.b16 %v200, %v196
  %v261 = vpack.c.b16 %v201, %v197
  %v262 = vpack.c.b16 %v206, %v202
  %v263 = vpack.c.b16 %v207, %v203
  %v264 = vpack.c.b16 %v208, %v204
  %v265 = vpack.c.b16 %v209, %v205
  %v266 = vpack.c.b16 %v214, %v210
  %v267 = vpack.c.b16 %v215, %v211
  %v268 = vpack.c.b16 %v216, %v212
  %v269 = vpack.c.b16 %v217, %v213
  %v270 = vpack.c.b16 %v222, %v218
  %v271 = vpack.c.b16 %v223, %v219
  %v272 = vpack.c.b16 %v224, %v220
  %v273 = vpack.c.b16 %v225, %v221
  %v274 = vpack.c.b16 %v230, %v226
  %v275 = vpack.c.b16 %v231, %v227
  %v276 = vpack.c.b16 %v232, %v228
  %v277 = vpack.c.b16 %v233, %v229
  %v278 = vpack.c.b16 %v238, %v234
  %v279 = vpack.c.b16 %v239, %v235
  %v280 = vpack.c.b16 %v240, %v236
  %v281 = vpack.c.b16 %v241, %v237
  %v282 = vpack.c.b16 %v246, %v242
  %v283 = vpack.c.b16 %v247, %v243
  %v284 = vpack.c.b16 %v248, %v244
  %v285 = vpack.c.b16 %v249, %v245
  %vm322 = vcmask 130048
  %v324 = vsel %vm322, %v119, 0
  %v327 = vsel %vm322, %v121, 0
  %v330 = vsel %vm322, %v123, 0
  %v333 = vsel %vm322, %v125, 0
  %v336 = vsel %vm322, %v127, 0
  %v339 = vsel %vm322, %v129, 0
  %v342 = vsel %vm322, %v131, 0
  %v345 = vsel %vm322, %v133, 0
  %347 = vmatprep.subr.bf16.mxu0 %v251
  %348 = vmatpush1.bf16.msra.mxu0 %v250
  %349 = vmatprep.subr.bf16.mxu0 %v255
  %350 = vmatpush1.bf16.msra.mxu0 %v254
  %351 = vmatprep.subr.bf16.mxu0 %v259
  %352 = vmatpush1.bf16.msra.mxu0 %v258
  %353 = vmatprep.subr.bf16.mxu0 %v263
  %354 = vmatpush1.bf16.msra.mxu0 %v262
  %355 = vmatprep.subr.bf16.mxu0 %v267
  %356 = vmatpush1.bf16.msra.mxu0 %v266
  %357 = vmatprep.subr.bf16.mxu0 %v271
  %358 = vmatpush1.bf16.msra.mxu0 %v270
  %359 = vmatprep.subr.bf16.mxu0 %v275
  %360 = vmatpush1.bf16.msra.mxu0 %v274
  %361 = vmatprep.subr.bf16.mxu0 %v279
  %362 = vmatpush1.bf16.msra.mxu0 %v278
  %363 = vmatprep.subr.bf16.mxu0 %v283
  %364 = vmatpush1.bf16.msra.mxu0 %v282
  %365 = vmatprep.subr.bf16.mxu0 0
  %366 = vmatpush1.bf16.msra.mxu0 0
  %367 = vmatprep.subr.bf16.mxu0 0
  %368 = vmatpush1.bf16.msra.mxu0 0
  %369 = vmatprep.subr.bf16.mxu0 0
  %370 = vmatpush1.bf16.msra.mxu0 0
  %371 = vmatprep.subr.bf16.mxu0 0
  %372 = vmatpush1.bf16.msra.mxu0 0
  %373 = vmatprep.subr.bf16.mxu0 0
  %374 = vmatpush1.bf16.msra.mxu0 0
  %375 = vmatprep.subr.bf16.mxu0 0
  %376 = vmatpush1.bf16.msra.mxu0 0
  %377 = vmatprep.subr.bf16.mxu0 0
  %378 = vmatpush1.bf16.msra.mxu0 0
  %379 = vmatprep.mubr.bf16.mxu0 %v324
  %380 = vmatmul.mubr.bf16.gmra.mrb[0].mxu0 %v118
  %v381 = vpop.f32.mrb[0].mxu0
  %v382 = vadd.f32 0.0, %v381
  %v383 = vpop.f32.mrb[0].mxu0
  %v384 = vadd.f32 0.0, %v383
  %v385 = vpop.f32.mrb[0].mxu0
  %v386 = vadd.f32 0.0, %v385
  %v387 = vpop.f32.mrb[0].mxu0
  %v388 = vadd.f32 0.0, %v387
  %389 = vmatprep.mubr.bf16.mxu0 %v327
  %390 = vmatmul.mubr.bf16.gmra.mrb[0].mxu0 %v120
  %v391 = vpop.f32.mrb[0].mxu0
  %v392 = vadd.f32 0.0, %v391
  %v393 = vpop.f32.mrb[0].mxu0
  %v394 = vadd.f32 0.0, %v393
  %v395 = vpop.f32.mrb[0].mxu0
  %v396 = vadd.f32 0.0, %v395
  %v397 = vpop.f32.mrb[0].mxu0
  %v398 = vadd.f32 0.0, %v397
  %399 = vmatprep.mubr.bf16.mxu0 %v330
  %400 = vmatmul.mubr.bf16.gmra.mrb[0].mxu0 %v122
  %v401 = vpop.f32.mrb[0].mxu0
  %v402 = vadd.f32 0.0, %v401
  %v403 = vpop.f32.mrb[0].mxu0
  %v404 = vadd.f32 0.0, %v403
  %v405 = vpop.f32.mrb[0].mxu0
  %v406 = vadd.f32 0.0, %v405
  %v407 = vpop.f32.mrb[0].mxu0
  %v408 = vadd.f32 0.0, %v407
  %409 = vmatprep.mubr.bf16.mxu0 %v333
  %410 = vmatmul.mubr.bf16.gmra.mrb[0].mxu0 %v124
  %v411 = vpop.f32.mrb[0].mxu0
  %v412 = vadd.f32 0.0, %v411
  %v413 = vpop.f32.mrb[0].mxu0
  %v414 = vadd.f32 0.0, %v413
  %v415 = vpop.f32.mrb[0].mxu0
  %v416 = vadd.f32 0.0, %v415
  %v417 = vpop.f32.mrb[0].mxu0
  %v418 = vadd.f32 0.0, %v417
  %419 = vmatprep.mubr.bf16.mxu0 %v336
  %420 = vmatmul.mubr.bf16.gmra.mrb[0].mxu0 %v126
  %v421 = vpop.f32.mrb[0].mxu0
  %v422 = vadd.f32 0.0, %v421
  %v423 = vpop.f32.mrb[0].mxu0
  %v424 = vadd.f32 0.0, %v423
  %v425 = vpop.f32.mrb[0].mxu0
  %v426 = vadd.f32 0.0, %v425
  %v427 = vpop.f32.mrb[0].mxu0
  %v428 = vadd.f32 0.0, %v427
  %429 = vmatprep.mubr.bf16.mxu0 %v339
  %430 = vmatmul.mubr.bf16.gmra.mrb[0].mxu0 %v128
  %v431 = vpop.f32.mrb[0].mxu0
  %v432 = vadd.f32 0.0, %v431
  %v433 = vpop.f32.mrb[0].mxu0
  %v434 = vadd.f32 0.0, %v433
  %v435 = vpop.f32.mrb[0].mxu0
  %v436 = vadd.f32 0.0, %v435
  %v437 = vpop.f32.mrb[0].mxu0
  %v438 = vadd.f32 0.0, %v437
  %439 = vmatprep.mubr.bf16.mxu0 %v342
  %440 = vmatmul.mubr.bf16.gmra.mrb[0].mxu0 %v130
  %v441 = vpop.f32.mrb[0].mxu0
  %v442 = vadd.f32 0.0, %v441
  %v443 = vpop.f32.mrb[0].mxu0
  %v444 = vadd.f32 0.0, %v443
  %v445 = vpop.f32.mrb[0].mxu0
  %v446 = vadd.f32 0.0, %v445
  %v447 = vpop.f32.mrb[0].mxu0
  %v448 = vadd.f32 0.0, %v447
  %449 = vmatprep.mubr.bf16.mxu0 %v345
  %450 = vmatmul.mubr.bf16.gmra.mrb[0].mxu0 %v132
  %v451 = vpop.f32.mrb[0].mxu0
  %v452 = vadd.f32 0.0, %v451
  %v453 = vpop.f32.mrb[0].mxu0
  %v454 = vadd.f32 0.0, %v453
  %v455 = vpop.f32.mrb[0].mxu0
  %v456 = vadd.f32 0.0, %v455
  %v457 = vpop.f32.mrb[0].mxu0
  %v458 = vadd.f32 0.0, %v457
  %459 = vdwg.mxu0
  %460 = vmatprep.subr.bf16.mxu0 %v253
  %461 = vmatpush1.bf16.msra.mxu0 %v252
  %462 = vmatprep.subr.bf16.mxu0 %v257
  %463 = vmatpush1.bf16.msra.mxu0 %v256
  %464 = vmatprep.subr.bf16.mxu0 %v261
  %465 = vmatpush1.bf16.msra.mxu0 %v260
  %466 = vmatprep.subr.bf16.mxu0 %v265
  %467 = vmatpush1.bf16.msra.mxu0 %v264
  %468 = vmatprep.subr.bf16.mxu0 %v269
  %469 = vmatpush1.bf16.msra.mxu0 %v268
  %470 = vmatprep.subr.bf16.mxu0 %v273
  %471 = vmatpush1.bf16.msra.mxu0 %v272
  %472 = vmatprep.subr.bf16.mxu0 %v277
  %473 = vmatpush1.bf16.msra.mxu0 %v276
  %474 = vmatprep.subr.bf16.mxu0 %v281
  %475 = vmatpush1.bf16.msra.mxu0 %v280
  %476 = vmatprep.subr.bf16.mxu0 %v285
  %477 = vmatpush1.bf16.msra.mxu0 %v284
  %478 = vmatprep.subr.bf16.mxu0 0
  %479 = vmatpush1.bf16.msra.mxu0 0
  %480 = vmatprep.subr.bf16.mxu0 0
  %481 = vmatpush1.bf16.msra.mxu0 0
  %482 = vmatprep.subr.bf16.mxu0 0
  %483 = vmatpush1.bf16.msra.mxu0 0
  %484 = vmatprep.subr.bf16.mxu0 0
  %485 = vmatpush1.bf16.msra.mxu0 0
  %486 = vmatprep.subr.bf16.mxu0 0
  %487 = vmatpush1.bf16.msra.mxu0 0
  %488 = vmatprep.subr.bf16.mxu0 0
  %489 = vmatpush1.bf16.msra.mxu0 0
  %490 = vmatprep.subr.bf16.mxu0 0
  %491 = vmatpush1.bf16.msra.mxu0 0
  %492 = vmatprep.mubr.bf16.mxu0 %v324
  %493 = vmatmul.mubr.bf16.gmra.mrb[0].mxu0 %v118
  %v494 = vpop.f32.mrb[0].mxu0
  %v495 = vadd.f32 0.0, %v494
  %v496 = vpop.f32.mrb[0].mxu0
  %v497 = vadd.f32 0.0, %v496
  %v498 = vpop.f32.mrb[0].mxu0
  %v499 = vadd.f32 0.0, %v498
  %v500 = vpop.f32.mrb[0].mxu0
  %v501 = vadd.f32 0.0, %v500
  %502 = vmatprep.mubr.bf16.mxu0 %v327
  %503 = vmatmul.mubr.bf16.gmra.mrb[0].mxu0 %v120
  %v504 = vpop.f32.mrb[0].mxu0
  %v505 = vadd.f32 0.0, %v504
  %v506 = vpop.f32.mrb[0].mxu0
  %v507 = vadd.f32 0.0, %v506
  %v508 = vpop.f32.mrb[0].mxu0
  %v509 = vadd.f32 0.0, %v508
  %v510 = vpop.f32.mrb[0].mxu0
  %v511 = vadd.f32 0.0, %v510
  %512 = vmatprep.mubr.bf16.mxu0 %v330
  %513 = vmatmul.mubr.bf16.gmra.mrb[0].mxu0 %v122
  %v514 = vpop.f32.mrb[0].mxu0
  %v515 = vadd.f32 0.0, %v514
  %v516 = vpop.f32.mrb[0].mxu0
  %v517 = vadd.f32 0.0, %v516
  %v518 = vpop.f32.mrb[0].mxu0
  %v519 = vadd.f32 0.0, %v518
  %v520 = vpop.f32.mrb[0].mxu0
  %v521 = vadd.f32 0.0, %v520
  %522 = vmatprep.mubr.bf16.mxu0 %v333
  %523 = vmatmul.mubr.bf16.gmra.mrb[0].mxu0 %v124
  %v524 = vpop.f32.mrb[0].mxu0
  %v525 = vadd.f32 0.0, %v524
  %v526 = vpop.f32.mrb[0].mxu0
  %v527 = vadd.f32 0.0, %v526
  %v528 = vpop.f32.mrb[0].mxu0
  %v529 = vadd.f32 0.0, %v528
  %v530 = vpop.f32.mrb[0].mxu0
  %v531 = vadd.f32 0.0, %v530
  %532 = vmatprep.mubr.bf16.mxu0 %v336
  %533 = vmatmul.mubr.bf16.gmra.mrb[0].mxu0 %v126
  %v534 = vpop.f32.mrb[0].mxu0
  %v535 = vadd.f32 0.0, %v534
  %v536 = vpop.f32.mrb[0].mxu0
  %v537 = vadd.f32 0.0, %v536
  %v538 = vpop.f32.mrb[0].mxu0
  %v539 = vadd.f32 0.0, %v538
  %v540 = vpop.f32.mrb[0].mxu0
  %v541 = vadd.f32 0.0, %v540
  %542 = vmatprep.mubr.bf16.mxu0 %v339
  %543 = vmatmul.mubr.bf16.gmra.mrb[0].mxu0 %v128
  %v544 = vpop.f32.mrb[0].mxu0
  %v545 = vadd.f32 0.0, %v544
  %v546 = vpop.f32.mrb[0].mxu0
  %v547 = vadd.f32 0.0, %v546
  %v548 = vpop.f32.mrb[0].mxu0
  %v549 = vadd.f32 0.0, %v548
  %v550 = vpop.f32.mrb[0].mxu0
  %v551 = vadd.f32 0.0, %v550
  %552 = vmatprep.mubr.bf16.mxu0 %v342
  %553 = vmatmul.mubr.bf16.gmra.mrb[0].mxu0 %v130
  %v554 = vpop.f32.mrb[0].mxu0
  %v555 = vadd.f32 0.0, %v554
  %v556 = vpop.f32.mrb[0].mxu0
  %v557 = vadd.f32 0.0, %v556
  %v558 = vpop.f32.mrb[0].mxu0
  %v559 = vadd.f32 0.0, %v558
  %v560 = vpop.f32.mrb[0].mxu0
  %v561 = vadd.f32 0.0, %v560
  %562 = vmatprep.mubr.bf16.mxu0 %v345
  %563 = vmatmul.mubr.bf16.gmra.mrb[0].mxu0 %v132
  %v564 = vpop.f32.mrb[0].mxu0
  %v565 = vadd.f32 0.0, %v564
  %v566 = vpop.f32.mrb[0].mxu0
  %v567 = vadd.f32 0.0, %v566
  %v568 = vpop.f32.mrb[0].mxu0
  %v569 = vadd.f32 0.0, %v568
  %v570 = vpop.f32.mrb[0].mxu0
  %v571 = vadd.f32 0.0, %v570
  %572 = vdwg.mxu0
  %v573 = vadd.f32 %v382, %v386
  %v574 = vadd.f32 %v573, %v392
  %v575 = vadd.f32 %v574, %v396
  %v576 = vadd.f32 %v575, %v402
  %v577 = vadd.f32 %v576, %v406
  %v578 = vadd.f32 %v577, %v412
  %v579 = vadd.f32 %v578, %v416
  %v580 = vadd.f32 %v579, %v422
  %v581 = vadd.f32 %v580, %v426
  %v582 = vadd.f32 %v581, %v432
  %v583 = vadd.f32 %v582, %v436
  %v584 = vadd.f32 %v583, %v442
  %v585 = vadd.f32 %v584, %v446
  %v586 = vadd.f32 %v585, %v452
  %v587 = vadd.f32 %v586, %v456
  %v588 = vrot.slane %v587, 4
  %v589 = vadd.f32 %v587, %v588
  %v590 = vrot.slane %v589, 2
  %v591 = vadd.f32 %v589, %v590
  %v592 = vrot.slane %v591, 1
  %v593 = vadd.f32 %v591, %v592
  %v594 = vadd.f32 %v593, 0.0
  %v595 = vadd.f32 %v384, %v388
  %v596 = vadd.f32 %v595, %v394
  %v597 = vadd.f32 %v596, %v398
  %v598 = vadd.f32 %v597, %v404
  %v599 = vadd.f32 %v598, %v408
  %v600 = vadd.f32 %v599, %v414
  %v601 = vadd.f32 %v600, %v418
  %v602 = vadd.f32 %v601, %v424
  %v603 = vadd.f32 %v602, %v428
  %v604 = vadd.f32 %v603, %v434
  %v605 = vadd.f32 %v604, %v438
  %v606 = vadd.f32 %v605, %v444
  %v607 = vadd.f32 %v606, %v448
  %v608 = vadd.f32 %v607, %v454
  %v609 = vadd.f32 %v608, %v458
  %v610 = vrot.slane %v609, 4
  %v611 = vadd.f32 %v609, %v610
  %v612 = vrot.slane %v611, 2
  %v613 = vadd.f32 %v611, %v612
  %v614 = vrot.slane %v613, 1
  %v615 = vadd.f32 %v613, %v614
  %v616 = vadd.f32 %v594, %v615
  %v617 = vadd.f32 %v495, %v499
  %v618 = vadd.f32 %v617, %v505
  %v619 = vadd.f32 %v618, %v509
  %v620 = vadd.f32 %v619, %v515
  %v621 = vadd.f32 %v620, %v519
  %v622 = vadd.f32 %v621, %v525
  %v623 = vadd.f32 %v622, %v529
  %v624 = vadd.f32 %v623, %v535
  %v625 = vadd.f32 %v624, %v539
  %v626 = vadd.f32 %v625, %v545
  %v627 = vadd.f32 %v626, %v549
  %v628 = vadd.f32 %v627, %v555
  %v629 = vadd.f32 %v628, %v559
  %v630 = vadd.f32 %v629, %v565
  %v631 = vadd.f32 %v630, %v569
  %v632 = vrot.slane %v631, 4
  %v633 = vadd.f32 %v631, %v632
  %v634 = vrot.slane %v633, 2
  %v635 = vadd.f32 %v633, %v634
  %v636 = vrot.slane %v635, 1
  %v637 = vadd.f32 %v635, %v636
  %v638 = vadd.f32 %v616, %v637
  %v639 = vadd.f32 %v497, %v501
  %v640 = vadd.f32 %v639, %v507
  %v641 = vadd.f32 %v640, %v511
  %v642 = vadd.f32 %v641, %v517
  %v643 = vadd.f32 %v642, %v521
  %v644 = vadd.f32 %v643, %v527
  %v645 = vadd.f32 %v644, %v531
  %v646 = vadd.f32 %v645, %v537
  %v647 = vadd.f32 %v646, %v541
  %v648 = vadd.f32 %v647, %v547
  %v649 = vadd.f32 %v648, %v551
  %v650 = vadd.f32 %v649, %v557
  %v651 = vadd.f32 %v650, %v561
  %v652 = vadd.f32 %v651, %v567
  %v653 = vadd.f32 %v652, %v571
  %v654 = vrot.slane %v653, 4
  %v655 = vadd.f32 %v653, %v654
  %v656 = vrot.slane %v655, 2
  %v657 = vadd.f32 %v655, %v656
  %v658 = vrot.slane %v657, 1
  %v659 = vadd.f32 %v657, %v658
  %v660 = vadd.f32 %v638, %v659
  %v661 = vmul.f32 %v660, 0.001953125
  %v662 = vsub.f32 %v382, %v661
  %v663 = vsub.f32 %v386, %v661
  %v664 = vsub.f32 %v392, %v661
  %v665 = vsub.f32 %v396, %v661
  %v666 = vsub.f32 %v402, %v661
  %v667 = vsub.f32 %v406, %v661
  %v668 = vsub.f32 %v412, %v661
  %v669 = vsub.f32 %v416, %v661
  %v670 = vsub.f32 %v422, %v661
  %v671 = vsub.f32 %v426, %v661
  %v672 = vsub.f32 %v432, %v661
  %v673 = vsub.f32 %v436, %v661
  %v674 = vsub.f32 %v442, %v661
  %v675 = vsub.f32 %v446, %v661
  %v676 = vsub.f32 %v452, %v661
  %v677 = vsub.f32 %v456, %v661
  %v678 = vmul.f32 %v662, %v662
  %v679 = vmul.f32 %v663, %v663
  %v680 = vmul.f32 %v664, %v664
  %v681 = vmul.f32 %v665, %v665
  %v682 = vmul.f32 %v666, %v666
  %v683 = vmul.f32 %v667, %v667
  %v684 = vmul.f32 %v668, %v668
  %v685 = vmul.f32 %v669, %v669
  %v686 = vmul.f32 %v670, %v670
  %v687 = vmul.f32 %v671, %v671
  %v688 = vmul.f32 %v672, %v672
  %v689 = vmul.f32 %v673, %v673
  %v690 = vmul.f32 %v674, %v674
  %v691 = vmul.f32 %v675, %v675
  %v692 = vmul.f32 %v676, %v676
  %v693 = vmul.f32 %v677, %v677
  %v694 = vadd.f32 %v678, %v679
  %v695 = vadd.f32 %v694, %v680
  %v696 = vadd.f32 %v695, %v681
  %v697 = vadd.f32 %v696, %v682
  %v698 = vadd.f32 %v697, %v683
  %v699 = vadd.f32 %v698, %v684
  %v700 = vadd.f32 %v699, %v685
  %v701 = vadd.f32 %v700, %v686
  %v702 = vadd.f32 %v701, %v687
  %v703 = vadd.f32 %v702, %v688
  %v704 = vadd.f32 %v703, %v689
  %v705 = vadd.f32 %v704, %v690
  %v706 = vadd.f32 %v705, %v691
  %v707 = vadd.f32 %v706, %v692
  %v708 = vadd.f32 %v707, %v693
  %v709 = vrot.slane %v708, 4
  %v710 = vadd.f32 %v708, %v709
  %v711 = vrot.slane %v710, 2
  %v712 = vadd.f32 %v710, %v711
  %v713 = vrot.slane %v712, 1
  %v714 = vadd.f32 %v712, %v713
  %v715 = vadd.f32 %v714, 0.0
  %v716 = vsub.f32 %v384, %v661
  %v717 = vsub.f32 %v388, %v661
  %v718 = vsub.f32 %v394, %v661
  %v719 = vsub.f32 %v398, %v661
  %v720 = vsub.f32 %v404, %v661
  %v721 = vsub.f32 %v408, %v661
  %v722 = vsub.f32 %v414, %v661
  %v723 = vsub.f32 %v418, %v661
  %v724 = vsub.f32 %v424, %v661
  %v725 = vsub.f32 %v428, %v661
  %v726 = vsub.f32 %v434, %v661
  %v727 = vsub.f32 %v438, %v661
  %v728 = vsub.f32 %v444, %v661
  %v729 = vsub.f32 %v448, %v661
  %v730 = vsub.f32 %v454, %v661
  %v731 = vsub.f32 %v458, %v661
  %v732 = vmul.f32 %v716, %v716
  %v733 = vmul.f32 %v717, %v717
  %v734 = vmul.f32 %v718, %v718
  %v735 = vmul.f32 %v719, %v719
  %v736 = vmul.f32 %v720, %v720
  %v737 = vmul.f32 %v721, %v721
  %v738 = vmul.f32 %v722, %v722
  %v739 = vmul.f32 %v723, %v723
  %v740 = vmul.f32 %v724, %v724
  %v741 = vmul.f32 %v725, %v725
  %v742 = vmul.f32 %v726, %v726
  %v743 = vmul.f32 %v727, %v727
  %v744 = vmul.f32 %v728, %v728
  %v745 = vmul.f32 %v729, %v729
  %v746 = vmul.f32 %v730, %v730
  %v747 = vmul.f32 %v731, %v731
  %v748 = vadd.f32 %v732, %v733
  %v749 = vadd.f32 %v748, %v734
  %v750 = vadd.f32 %v749, %v735
  %v751 = vadd.f32 %v750, %v736
  %v752 = vadd.f32 %v751, %v737
  %v753 = vadd.f32 %v752, %v738
  %v754 = vadd.f32 %v753, %v739
  %v755 = vadd.f32 %v754, %v740
  %v756 = vadd.f32 %v755, %v741
  %v757 = vadd.f32 %v756, %v742
  %v758 = vadd.f32 %v757, %v743
  %v759 = vadd.f32 %v758, %v744
  %v760 = vadd.f32 %v759, %v745
  %v761 = vadd.f32 %v760, %v746
  %v762 = vadd.f32 %v761, %v747
  %v763 = vrot.slane %v762, 4
  %v764 = vadd.f32 %v762, %v763
  %v765 = vrot.slane %v764, 2
  %v766 = vadd.f32 %v764, %v765
  %v767 = vrot.slane %v766, 1
  %v768 = vadd.f32 %v766, %v767
  %v769 = vadd.f32 %v715, %v768
  %v770 = vsub.f32 %v495, %v661
  %v771 = vsub.f32 %v499, %v661
  %v772 = vsub.f32 %v505, %v661
  %v773 = vsub.f32 %v509, %v661
  %v774 = vsub.f32 %v515, %v661
  %v775 = vsub.f32 %v519, %v661
  %v776 = vsub.f32 %v525, %v661
  %v777 = vsub.f32 %v529, %v661
  %v778 = vsub.f32 %v535, %v661
  %v779 = vsub.f32 %v539, %v661
  %v780 = vsub.f32 %v545, %v661
  %v781 = vsub.f32 %v549, %v661
  %v782 = vsub.f32 %v555, %v661
  %v783 = vsub.f32 %v559, %v661
  %v784 = vsub.f32 %v565, %v661
  %v785 = vsub.f32 %v569, %v661
  %v786 = vmul.f32 %v770, %v770
  %v787 = vmul.f32 %v771, %v771
  %v788 = vmul.f32 %v772, %v772
  %v789 = vmul.f32 %v773, %v773
  %v790 = vmul.f32 %v774, %v774
  %v791 = vmul.f32 %v775, %v775
  %v792 = vmul.f32 %v776, %v776
  %v793 = vmul.f32 %v777, %v777
  %v794 = vmul.f32 %v778, %v778
  %v795 = vmul.f32 %v779, %v779
  %v796 = vmul.f32 %v780, %v780
  %v797 = vmul.f32 %v781, %v781
  %v798 = vmul.f32 %v782, %v782
  %v799 = vmul.f32 %v783, %v783
  %v800 = vmul.f32 %v784, %v784
  %v801 = vmul.f32 %v785, %v785
  %v802 = vadd.f32 %v786, %v787
  %v803 = vadd.f32 %v802, %v788
  %v804 = vadd.f32 %v803, %v789
  %v805 = vadd.f32 %v804, %v790
  %v806 = vadd.f32 %v805, %v791
  %v807 = vadd.f32 %v806, %v792
  %v808 = vadd.f32 %v807, %v793
  %v809 = vadd.f32 %v808, %v794
  %v810 = vadd.f32 %v809, %v795
  %v811 = vadd.f32 %v810, %v796
  %v812 = vadd.f32 %v811, %v797
  %v813 = vadd.f32 %v812, %v798
  %v814 = vadd.f32 %v813, %v799
  %v815 = vadd.f32 %v814, %v800
  %v816 = vadd.f32 %v815, %v801
  %v817 = vrot.slane %v816, 4
  %v818 = vadd.f32 %v816, %v817
  %v819 = vrot.slane %v818, 2
  %v820 = vadd.f32 %v818, %v819
  %v821 = vrot.slane %v820, 1
  %v822 = vadd.f32 %v820, %v821
  %v823 = vadd.f32 %v769, %v822
  %v824 = vsub.f32 %v497, %v661
  %v825 = vsub.f32 %v501, %v661
  %v826 = vsub.f32 %v507, %v661
  %v827 = vsub.f32 %v511, %v661
  %v828 = vsub.f32 %v517, %v661
  %v829 = vsub.f32 %v521, %v661
  %v830 = vsub.f32 %v527, %v661
  %v831 = vsub.f32 %v531, %v661
  %v832 = vsub.f32 %v537, %v661
  %v833 = vsub.f32 %v541, %v661
  %v834 = vsub.f32 %v547, %v661
  %v835 = vsub.f32 %v551, %v661
  %v836 = vsub.f32 %v557, %v661
  %v837 = vsub.f32 %v561, %v661
  %v838 = vsub.f32 %v567, %v661
  %v839 = vsub.f32 %v571, %v661
  %v840 = vmul.f32 %v824, %v824
  %v841 = vmul.f32 %v825, %v825
  %v842 = vmul.f32 %v826, %v826
  %v843 = vmul.f32 %v827, %v827
  %v844 = vmul.f32 %v828, %v828
  %v845 = vmul.f32 %v829, %v829
  %v846 = vmul.f32 %v830, %v830
  %v847 = vmul.f32 %v831, %v831
  %v848 = vmul.f32 %v832, %v832
  %v849 = vmul.f32 %v833, %v833
  %v850 = vmul.f32 %v834, %v834
  %v851 = vmul.f32 %v835, %v835
  %v852 = vmul.f32 %v836, %v836
  %v853 = vmul.f32 %v837, %v837
  %v854 = vmul.f32 %v838, %v838
  %v855 = vmul.f32 %v839, %v839
  %v856 = vadd.f32 %v840, %v841
  %v857 = vadd.f32 %v856, %v842
  %v858 = vadd.f32 %v857, %v843
  %v859 = vadd.f32 %v858, %v844
  %v860 = vadd.f32 %v859, %v845
  %v861 = vadd.f32 %v860, %v846
  %v862 = vadd.f32 %v861, %v847
  %v863 = vadd.f32 %v862, %v848
  %v864 = vadd.f32 %v863, %v849
  %v865 = vadd.f32 %v864, %v850
  %v866 = vadd.f32 %v865, %v851
  %v867 = vadd.f32 %v866, %v852
  %v868 = vadd.f32 %v867, %v853
  %v869 = vadd.f32 %v868, %v854
  %v870 = vadd.f32 %v869, %v855
  %v871 = vrot.slane %v870, 4
  %v872 = vadd.f32 %v870, %v871
  %v873 = vrot.slane %v872, 2
  %v874 = vadd.f32 %v872, %v873
  %v875 = vrot.slane %v874, 1
  %v876 = vadd.f32 %v874, %v875
  %v877 = vadd.f32 %v823, %v876
  %v878 = vmul.f32 %v877, 0.001953125
  %v879 = vadd.f32 %v878, 1e-05
  %v880 = vrsqrt.pop %v879
  %v881 = vld [vmem:[%s2] sm:$0x1]
  %v882 = vmul.f32 %v880, %v881
  %v883 = vlaneseq
  %v884 = vshrl.u32 %v883, 7
  %v885 = vsub.s32 0, %v884
  %v886 = vrot.slane %v882, %v885
  %v887 = vmul.f32 %v662, %v886
  %v888 = vmul.f32 %v663, %v886
  %v889 = vmul.f32 %v664, %v886
  %v890 = vmul.f32 %v665, %v886
  %v891 = vmul.f32 %v666, %v886
  %v892 = vmul.f32 %v667, %v886
  %v893 = vmul.f32 %v668, %v886
  %v894 = vmul.f32 %v669, %v886
  %v895 = vmul.f32 %v670, %v886
  %v896 = vmul.f32 %v671, %v886
  %v897 = vmul.f32 %v672, %v886
  %v898 = vmul.f32 %v673, %v886
  %v899 = vmul.f32 %v674, %v886
  %v900 = vmul.f32 %v675, %v886
  %v901 = vmul.f32 %v676, %v886
  %v902 = vmul.f32 %v677, %v886
  %v903 = vld [vmem:[%s3] sm:$0x1]
  %v905 = vlaneseq
  %v906 = vshrl.u32 %v905, 7
  %v907 = vsub.s32 0, %v906
  %v908 = vrot.slane %v903, %v907
  %v910 = vadd.f32 %v887, %v908
  %v911 = vadd.f32 %v888, %v908
  %v912 = vadd.f32 %v889, %v908
  %v913 = vadd.f32 %v890, %v908
  %v914 = vadd.f32 %v891, %v908
  %v915 = vadd.f32 %v892, %v908
  %v916 = vadd.f32 %v893, %v908
  %v917 = vadd.f32 %v894, %v908
  %v918 = vadd.f32 %v895, %v908
  %v919 = vadd.f32 %v896, %v908
  %v920 = vadd.f32 %v897, %v908
  %v921 = vadd.f32 %v898, %v908
  %v922 = vadd.f32 %v899, %v908
  %v923 = vadd.f32 %v900, %v908
  %v924 = vadd.f32 %v901, %v908
  %v925 = vadd.f32 %v902, %v908
  %vm926 = vcmp.gt.f32.partialorder %v910, 0.0
  %vm927 = vcmp.gt.f32.partialorder %v911, 0.0
  %vm928 = vcmp.gt.f32.partialorder %v912, 0.0
  %vm929 = vcmp.gt.f32.partialorder %v913, 0.0
  %vm930 = vcmp.gt.f32.partialorder %v914, 0.0
  %vm931 = vcmp.gt.f32.partialorder %v915, 0.0
  %vm932 = vcmp.gt.f32.partialorder %v916, 0.0
  %vm933 = vcmp.gt.f32.partialorder %v917, 0.0
  %vm934 = vcmp.gt.f32.partialorder %v918, 0.0
  %vm935 = vcmp.gt.f32.partialorder %v919, 0.0
  %vm936 = vcmp.gt.f32.partialorder %v920, 0.0
  %vm937 = vcmp.gt.f32.partialorder %v921, 0.0
  %vm938 = vcmp.gt.f32.partialorder %v922, 0.0
  %vm939 = vcmp.gt.f32.partialorder %v923, 0.0
  %vm940 = vcmp.gt.f32.partialorder %v924, 0.0
  %vm941 = vcmp.gt.f32.partialorder %v925, 0.0
  %v942 = vmul.f32 %v910, 0.2
  %v943 = vmul.f32 %v911, 0.2
  %v944 = vmul.f32 %v912, 0.2
  %v945 = vmul.f32 %v913, 0.2
  %v946 = vmul.f32 %v914, 0.2
  %v947 = vmul.f32 %v915, 0.2
  %v948 = vmul.f32 %v916, 0.2
  %v949 = vmul.f32 %v917, 0.2
  %v950 = vmul.f32 %v918, 0.2
  %v951 = vmul.f32 %v919, 0.2
  %v952 = vmul.f32 %v920, 0.2
  %v953 = vmul.f32 %v921, 0.2
  %v954 = vmul.f32 %v922, 0.2
  %v955 = vmul.f32 %v923, 0.2
  %v956 = vmul.f32 %v924, 0.2
  %v957 = vmul.f32 %v925, 0.2
  %v958 = vsel %vm926, %v910, %v942
  %v959 = vsel %vm927, %v911, %v943
  %v960 = vsel %vm928, %v912, %v944
  %v961 = vsel %vm929, %v913, %v945
  %v962 = vsel %vm930, %v914, %v946
  %v963 = vsel %vm931, %v915, %v947
  %v964 = vsel %vm932, %v916, %v948
  %v965 = vsel %vm933, %v917, %v949
  %v966 = vsel %vm934, %v918, %v950
  %v967 = vsel %vm935, %v919, %v951
  %v968 = vsel %vm936, %v920, %v952
  %v969 = vsel %vm937, %v921, %v953
  %v970 = vsel %vm938, %v922, %v954
  %v971 = vsel %vm939, %v923, %v955
  %v972 = vsel %vm940, %v924, %v956
  %v973 = vsel %vm941, %v925, %v957
  %v974 = vpack.c.bf16 %v959, %v958
  %v975 = vpack.c.bf16 %v961, %v960
  %v976 = vpack.c.bf16 %v963, %v962
  %v977 = vpack.c.bf16 %v965, %v964
  %v978 = vpack.c.bf16 %v967, %v966
  %v979 = vpack.c.bf16 %v969, %v968
  %v980 = vpack.c.bf16 %v971, %v970
  %v981 = vpack.c.bf16 %v973, %v972
  %v990 = vunpack.c.l.b16 %v974
  %v991 = vunpack.c.h.b16 %v974
  %v992 = vunpack.c.l.b16 %v975
  %v993 = vunpack.c.h.b16 %v975
  %v994 = vunpack.c.l.b16 %v976
  %v995 = vunpack.c.h.b16 %v976
  %v996 = vunpack.c.l.b16 %v977
  %v997 = vunpack.c.h.b16 %v977
  %v998 = vunpack.c.l.b16 %v978
  %v999 = vunpack.c.h.b16 %v978
  %v1000 = vunpack.c.l.b16 %v979
  %v1001 = vunpack.c.h.b16 %v979
  %v1002 = vunpack.c.l.b16 %v980
  %v1003 = vunpack.c.h.b16 %v980
  %v1004 = vunpack.c.l.b16 %v981
  %v1005 = vunpack.c.h.b16 %v981
  %v1006 = vpack.c.b16 %v990, %v990
  %v1007 = vpack.c.b16 %v991, %v991
  %v1008 = vpack.c.b16 %v992, %v992
  %v1009 = vpack.c.b16 %v993, %v993
  %v1010 = vpack.c.b16 %v994, %v994
  %v1011 = vpack.c.b16 %v995, %v995
  %v1012 = vpack.c.b16 %v996, %v996
  %v1013 = vpack.c.b16 %v997, %v997
  %v1014 = vpack.c.b16 %v998, %v998
  %v1015 = vpack.c.b16 %v999, %v999
  %v1016 = vpack.c.b16 %v1000, %v1000
  %v1017 = vpack.c.b16 %v1001, %v1001
  %v1018 = vpack.c.b16 %v1002, %v1002
  %v1019 = vpack.c.b16 %v1003, %v1003
  %v1020 = vpack.c.b16 %v1004, %v1004
  %v1021 = vpack.c.b16 %v1005, %v1005
  %1038 = vst [vmem:[%s4] sm:$0xf] %v1006
  %1039 = vst [vmem:[%s4 + $0x10] sm:$0xf] %v1007
  %1040 = vst [vmem:[%s4 + $0x20] sm:$0xf] %v1008
  %1041 = vst [vmem:[%s4 + $0x30] sm:$0xf] %v1009
  %1042 = vst [vmem:[%s4 + $0x40] sm:$0xf] %v1010
  %1043 = vst [vmem:[%s4 + $0x50] sm:$0xf] %v1011
  %1044 = vst [vmem:[%s4 + $0x60] sm:$0xf] %v1012
  %1045 = vst [vmem:[%s4 + $0x70] sm:$0xf] %v1013
  %1046 = vst [vmem:[%s4 + $0x80] sm:$0xf] %v1014
  %1047 = vst [vmem:[%s4 + $0x90] sm:$0xf] %v1015
  %1048 = vst [vmem:[%s4 + $0xa0] sm:$0xf] %v1016
  %1049 = vst [vmem:[%s4 + $0xb0] sm:$0xf] %v1017
  %1050 = vst [vmem:[%s4 + $0xc0] sm:$0xf] %v1018
  %1051 = vst [vmem:[%s4 + $0xd0] sm:$0xf] %v1019
  %1052 = vst [vmem:[%s4 + $0xe0] sm:$0xf] %v1020
  %1053 = vst [vmem:[%s4 + $0xf0] sm:$0xf] %v1021
  %v1054 = vmul.f32 %v716, %v886
  %v1055 = vmul.f32 %v717, %v886
  %v1056 = vmul.f32 %v718, %v886
  %v1057 = vmul.f32 %v719, %v886
  %v1058 = vmul.f32 %v720, %v886
  %v1059 = vmul.f32 %v721, %v886
  %v1060 = vmul.f32 %v722, %v886
  %v1061 = vmul.f32 %v723, %v886
  %v1062 = vmul.f32 %v724, %v886
  %v1063 = vmul.f32 %v725, %v886
  %v1064 = vmul.f32 %v726, %v886
  %v1065 = vmul.f32 %v727, %v886
  %v1066 = vmul.f32 %v728, %v886
  %v1067 = vmul.f32 %v729, %v886
  %v1068 = vmul.f32 %v730, %v886
  %v1069 = vmul.f32 %v731, %v886
  %v1070 = vld [vmem:[%s3] sm:$0x1]
  %v1072 = vlaneseq
  %v1073 = vshrl.u32 %v1072, 7
  %v1074 = vsub.s32 0, %v1073
  %v1075 = vrot.slane %v1070, %v1074
  %v1077 = vadd.f32 %v1054, %v1075
  %v1078 = vadd.f32 %v1055, %v1075
  %v1079 = vadd.f32 %v1056, %v1075
  %v1080 = vadd.f32 %v1057, %v1075
  %v1081 = vadd.f32 %v1058, %v1075
  %v1082 = vadd.f32 %v1059, %v1075
  %v1083 = vadd.f32 %v1060, %v1075
  %v1084 = vadd.f32 %v1061, %v1075
  %v1085 = vadd.f32 %v1062, %v1075
  %v1086 = vadd.f32 %v1063, %v1075
  %v1087 = vadd.f32 %v1064, %v1075
  %v1088 = vadd.f32 %v1065, %v1075
  %v1089 = vadd.f32 %v1066, %v1075
  %v1090 = vadd.f32 %v1067, %v1075
  %v1091 = vadd.f32 %v1068, %v1075
  %v1092 = vadd.f32 %v1069, %v1075
  %vm1093 = vcmp.gt.f32.partialorder %v1077, 0.0
  %vm1094 = vcmp.gt.f32.partialorder %v1078, 0.0
  %vm1095 = vcmp.gt.f32.partialorder %v1079, 0.0
  %vm1096 = vcmp.gt.f32.partialorder %v1080, 0.0
  %vm1097 = vcmp.gt.f32.partialorder %v1081, 0.0
  %vm1098 = vcmp.gt.f32.partialorder %v1082, 0.0
  %vm1099 = vcmp.gt.f32.partialorder %v1083, 0.0
  %vm1100 = vcmp.gt.f32.partialorder %v1084, 0.0
  %vm1101 = vcmp.gt.f32.partialorder %v1085, 0.0
  %vm1102 = vcmp.gt.f32.partialorder %v1086, 0.0
  %vm1103 = vcmp.gt.f32.partialorder %v1087, 0.0
  %vm1104 = vcmp.gt.f32.partialorder %v1088, 0.0
  %vm1105 = vcmp.gt.f32.partialorder %v1089, 0.0
  %vm1106 = vcmp.gt.f32.partialorder %v1090, 0.0
  %vm1107 = vcmp.gt.f32.partialorder %v1091, 0.0
  %vm1108 = vcmp.gt.f32.partialorder %v1092, 0.0
  %v1109 = vmul.f32 %v1077, 0.2
  %v1110 = vmul.f32 %v1078, 0.2
  %v1111 = vmul.f32 %v1079, 0.2
  %v1112 = vmul.f32 %v1080, 0.2
  %v1113 = vmul.f32 %v1081, 0.2
  %v1114 = vmul.f32 %v1082, 0.2
  %v1115 = vmul.f32 %v1083, 0.2
  %v1116 = vmul.f32 %v1084, 0.2
  %v1117 = vmul.f32 %v1085, 0.2
  %v1118 = vmul.f32 %v1086, 0.2
  %v1119 = vmul.f32 %v1087, 0.2
  %v1120 = vmul.f32 %v1088, 0.2
  %v1121 = vmul.f32 %v1089, 0.2
  %v1122 = vmul.f32 %v1090, 0.2
  %v1123 = vmul.f32 %v1091, 0.2
  %v1124 = vmul.f32 %v1092, 0.2
  %v1125 = vsel %vm1093, %v1077, %v1109
  %v1126 = vsel %vm1094, %v1078, %v1110
  %v1127 = vsel %vm1095, %v1079, %v1111
  %v1128 = vsel %vm1096, %v1080, %v1112
  %v1129 = vsel %vm1097, %v1081, %v1113
  %v1130 = vsel %vm1098, %v1082, %v1114
  %v1131 = vsel %vm1099, %v1083, %v1115
  %v1132 = vsel %vm1100, %v1084, %v1116
  %v1133 = vsel %vm1101, %v1085, %v1117
  %v1134 = vsel %vm1102, %v1086, %v1118
  %v1135 = vsel %vm1103, %v1087, %v1119
  %v1136 = vsel %vm1104, %v1088, %v1120
  %v1137 = vsel %vm1105, %v1089, %v1121
  %v1138 = vsel %vm1106, %v1090, %v1122
  %v1139 = vsel %vm1107, %v1091, %v1123
  %v1140 = vsel %vm1108, %v1092, %v1124
  %v1141 = vpack.c.bf16 %v1126, %v1125
  %v1142 = vpack.c.bf16 %v1128, %v1127
  %v1143 = vpack.c.bf16 %v1130, %v1129
  %v1144 = vpack.c.bf16 %v1132, %v1131
  %v1145 = vpack.c.bf16 %v1134, %v1133
  %v1146 = vpack.c.bf16 %v1136, %v1135
  %v1147 = vpack.c.bf16 %v1138, %v1137
  %v1148 = vpack.c.bf16 %v1140, %v1139
  %v1157 = vunpack.c.l.b16 %v1141
  %v1158 = vunpack.c.h.b16 %v1141
  %v1159 = vunpack.c.l.b16 %v1142
  %v1160 = vunpack.c.h.b16 %v1142
  %v1161 = vunpack.c.l.b16 %v1143
  %v1162 = vunpack.c.h.b16 %v1143
  %v1163 = vunpack.c.l.b16 %v1144
  %v1164 = vunpack.c.h.b16 %v1144
  %v1165 = vunpack.c.l.b16 %v1145
  %v1166 = vunpack.c.h.b16 %v1145
  %v1167 = vunpack.c.l.b16 %v1146
  %v1168 = vunpack.c.h.b16 %v1146
  %v1169 = vunpack.c.l.b16 %v1147
  %v1170 = vunpack.c.h.b16 %v1147
  %v1171 = vunpack.c.l.b16 %v1148
  %v1172 = vunpack.c.h.b16 %v1148
  %v1173 = vpack.c.b16 %v1157, %v1157
  %v1174 = vpack.c.b16 %v1158, %v1158
  %v1175 = vpack.c.b16 %v1159, %v1159
  %v1176 = vpack.c.b16 %v1160, %v1160
  %v1177 = vpack.c.b16 %v1161, %v1161
  %v1178 = vpack.c.b16 %v1162, %v1162
  %v1179 = vpack.c.b16 %v1163, %v1163
  %v1180 = vpack.c.b16 %v1164, %v1164
  %v1181 = vpack.c.b16 %v1165, %v1165
  %v1182 = vpack.c.b16 %v1166, %v1166
  %v1183 = vpack.c.b16 %v1167, %v1167
  %v1184 = vpack.c.b16 %v1168, %v1168
  %v1185 = vpack.c.b16 %v1169, %v1169
  %v1186 = vpack.c.b16 %v1170, %v1170
  %v1187 = vpack.c.b16 %v1171, %v1171
  %v1188 = vpack.c.b16 %v1172, %v1172
  %1205 = vst [vmem:[%s4 + $0x4] sm:$0xf] %v1173
  %1206 = vst [vmem:[%s4 + $0x14] sm:$0xf] %v1174
  %1207 = vst [vmem:[%s4 + $0x24] sm:$0xf] %v1175
  %1208 = vst [vmem:[%s4 + $0x34] sm:$0xf] %v1176
  %1209 = vst [vmem:[%s4 + $0x44] sm:$0xf] %v1177
  %1210 = vst [vmem:[%s4 + $0x54] sm:$0xf] %v1178
  %1211 = vst [vmem:[%s4 + $0x64] sm:$0xf] %v1179
  %1212 = vst [vmem:[%s4 + $0x74] sm:$0xf] %v1180
  %1213 = vst [vmem:[%s4 + $0x84] sm:$0xf] %v1181
  %1214 = vst [vmem:[%s4 + $0x94] sm:$0xf] %v1182
  %1215 = vst [vmem:[%s4 + $0xa4] sm:$0xf] %v1183
  %1216 = vst [vmem:[%s4 + $0xb4] sm:$0xf] %v1184
  %1217 = vst [vmem:[%s4 + $0xc4] sm:$0xf] %v1185
  %1218 = vst [vmem:[%s4 + $0xd4] sm:$0xf] %v1186
  %1219 = vst [vmem:[%s4 + $0xe4] sm:$0xf] %v1187
  %1220 = vst [vmem:[%s4 + $0xf4] sm:$0xf] %v1188
  %v1221 = vmul.f32 %v770, %v886
  %v1222 = vmul.f32 %v771, %v886
  %v1223 = vmul.f32 %v772, %v886
  %v1224 = vmul.f32 %v773, %v886
  %v1225 = vmul.f32 %v774, %v886
  %v1226 = vmul.f32 %v775, %v886
  %v1227 = vmul.f32 %v776, %v886
  %v1228 = vmul.f32 %v777, %v886
  %v1229 = vmul.f32 %v778, %v886
  %v1230 = vmul.f32 %v779, %v886
  %v1231 = vmul.f32 %v780, %v886
  %v1232 = vmul.f32 %v781, %v886
  %v1233 = vmul.f32 %v782, %v886
  %v1234 = vmul.f32 %v783, %v886
  %v1235 = vmul.f32 %v784, %v886
  %v1236 = vmul.f32 %v785, %v886
  %v1237 = vld [vmem:[%s3] sm:$0x1]
  %v1239 = vlaneseq
  %v1240 = vshrl.u32 %v1239, 7
  %v1241 = vsub.s32 0, %v1240
  %v1242 = vrot.slane %v1237, %v1241
  %v1244 = vadd.f32 %v1221, %v1242
  %v1245 = vadd.f32 %v1222, %v1242
  %v1246 = vadd.f32 %v1223, %v1242
  %v1247 = vadd.f32 %v1224, %v1242
  %v1248 = vadd.f32 %v1225, %v1242
  %v1249 = vadd.f32 %v1226, %v1242
  %v1250 = vadd.f32 %v1227, %v1242
  %v1251 = vadd.f32 %v1228, %v1242
  %v1252 = vadd.f32 %v1229, %v1242
  %v1253 = vadd.f32 %v1230, %v1242
  %v1254 = vadd.f32 %v1231, %v1242
  %v1255 = vadd.f32 %v1232, %v1242
  %v1256 = vadd.f32 %v1233, %v1242
  %v1257 = vadd.f32 %v1234, %v1242
  %v1258 = vadd.f32 %v1235, %v1242
  %v1259 = vadd.f32 %v1236, %v1242
  %vm1260 = vcmp.gt.f32.partialorder %v1244, 0.0
  %vm1261 = vcmp.gt.f32.partialorder %v1245, 0.0
  %vm1262 = vcmp.gt.f32.partialorder %v1246, 0.0
  %vm1263 = vcmp.gt.f32.partialorder %v1247, 0.0
  %vm1264 = vcmp.gt.f32.partialorder %v1248, 0.0
  %vm1265 = vcmp.gt.f32.partialorder %v1249, 0.0
  %vm1266 = vcmp.gt.f32.partialorder %v1250, 0.0
  %vm1267 = vcmp.gt.f32.partialorder %v1251, 0.0
  %vm1268 = vcmp.gt.f32.partialorder %v1252, 0.0
  %vm1269 = vcmp.gt.f32.partialorder %v1253, 0.0
  %vm1270 = vcmp.gt.f32.partialorder %v1254, 0.0
  %vm1271 = vcmp.gt.f32.partialorder %v1255, 0.0
  %vm1272 = vcmp.gt.f32.partialorder %v1256, 0.0
  %vm1273 = vcmp.gt.f32.partialorder %v1257, 0.0
  %vm1274 = vcmp.gt.f32.partialorder %v1258, 0.0
  %vm1275 = vcmp.gt.f32.partialorder %v1259, 0.0
  %v1276 = vmul.f32 %v1244, 0.2
  %v1277 = vmul.f32 %v1245, 0.2
  %v1278 = vmul.f32 %v1246, 0.2
  %v1279 = vmul.f32 %v1247, 0.2
  %v1280 = vmul.f32 %v1248, 0.2
  %v1281 = vmul.f32 %v1249, 0.2
  %v1282 = vmul.f32 %v1250, 0.2
  %v1283 = vmul.f32 %v1251, 0.2
  %v1284 = vmul.f32 %v1252, 0.2
  %v1285 = vmul.f32 %v1253, 0.2
  %v1286 = vmul.f32 %v1254, 0.2
  %v1287 = vmul.f32 %v1255, 0.2
  %v1288 = vmul.f32 %v1256, 0.2
  %v1289 = vmul.f32 %v1257, 0.2
  %v1290 = vmul.f32 %v1258, 0.2
  %v1291 = vmul.f32 %v1259, 0.2
  %v1292 = vsel %vm1260, %v1244, %v1276
  %v1293 = vsel %vm1261, %v1245, %v1277
  %v1294 = vsel %vm1262, %v1246, %v1278
  %v1295 = vsel %vm1263, %v1247, %v1279
  %v1296 = vsel %vm1264, %v1248, %v1280
  %v1297 = vsel %vm1265, %v1249, %v1281
  %v1298 = vsel %vm1266, %v1250, %v1282
  %v1299 = vsel %vm1267, %v1251, %v1283
  %v1300 = vsel %vm1268, %v1252, %v1284
  %v1301 = vsel %vm1269, %v1253, %v1285
  %v1302 = vsel %vm1270, %v1254, %v1286
  %v1303 = vsel %vm1271, %v1255, %v1287
  %v1304 = vsel %vm1272, %v1256, %v1288
  %v1305 = vsel %vm1273, %v1257, %v1289
  %v1306 = vsel %vm1274, %v1258, %v1290
  %v1307 = vsel %vm1275, %v1259, %v1291
  %v1308 = vpack.c.bf16 %v1293, %v1292
  %v1309 = vpack.c.bf16 %v1295, %v1294
  %v1310 = vpack.c.bf16 %v1297, %v1296
  %v1311 = vpack.c.bf16 %v1299, %v1298
  %v1312 = vpack.c.bf16 %v1301, %v1300
  %v1313 = vpack.c.bf16 %v1303, %v1302
  %v1314 = vpack.c.bf16 %v1305, %v1304
  %v1315 = vpack.c.bf16 %v1307, %v1306
  %v1324 = vunpack.c.l.b16 %v1308
  %v1325 = vunpack.c.h.b16 %v1308
  %v1326 = vunpack.c.l.b16 %v1309
  %v1327 = vunpack.c.h.b16 %v1309
  %v1328 = vunpack.c.l.b16 %v1310
  %v1329 = vunpack.c.h.b16 %v1310
  %v1330 = vunpack.c.l.b16 %v1311
  %v1331 = vunpack.c.h.b16 %v1311
  %v1332 = vunpack.c.l.b16 %v1312
  %v1333 = vunpack.c.h.b16 %v1312
  %v1334 = vunpack.c.l.b16 %v1313
  %v1335 = vunpack.c.h.b16 %v1313
  %v1336 = vunpack.c.l.b16 %v1314
  %v1337 = vunpack.c.h.b16 %v1314
  %v1338 = vunpack.c.l.b16 %v1315
  %v1339 = vunpack.c.h.b16 %v1315
  %v1340 = vpack.c.b16 %v1324, %v1324
  %v1341 = vpack.c.b16 %v1325, %v1325
  %v1342 = vpack.c.b16 %v1326, %v1326
  %v1343 = vpack.c.b16 %v1327, %v1327
  %v1344 = vpack.c.b16 %v1328, %v1328
  %v1345 = vpack.c.b16 %v1329, %v1329
  %v1346 = vpack.c.b16 %v1330, %v1330
  %v1347 = vpack.c.b16 %v1331, %v1331
  %v1348 = vpack.c.b16 %v1332, %v1332
  %v1349 = vpack.c.b16 %v1333, %v1333
  %v1350 = vpack.c.b16 %v1334, %v1334
  %v1351 = vpack.c.b16 %v1335, %v1335
  %v1352 = vpack.c.b16 %v1336, %v1336
  %v1353 = vpack.c.b16 %v1337, %v1337
  %v1354 = vpack.c.b16 %v1338, %v1338
  %v1355 = vpack.c.b16 %v1339, %v1339
  %1372 = vst [vmem:[%s4 + $0x8] sm:$0xf] %v1340
  %1373 = vst [vmem:[%s4 + $0x18] sm:$0xf] %v1341
  %1374 = vst [vmem:[%s4 + $0x28] sm:$0xf] %v1342
  %1375 = vst [vmem:[%s4 + $0x38] sm:$0xf] %v1343
  %1376 = vst [vmem:[%s4 + $0x48] sm:$0xf] %v1344
  %1377 = vst [vmem:[%s4 + $0x58] sm:$0xf] %v1345
  %1378 = vst [vmem:[%s4 + $0x68] sm:$0xf] %v1346
  %1379 = vst [vmem:[%s4 + $0x78] sm:$0xf] %v1347
  %1380 = vst [vmem:[%s4 + $0x88] sm:$0xf] %v1348
  %1381 = vst [vmem:[%s4 + $0x98] sm:$0xf] %v1349
  %1382 = vst [vmem:[%s4 + $0xa8] sm:$0xf] %v1350
  %1383 = vst [vmem:[%s4 + $0xb8] sm:$0xf] %v1351
  %1384 = vst [vmem:[%s4 + $0xc8] sm:$0xf] %v1352
  %1385 = vst [vmem:[%s4 + $0xd8] sm:$0xf] %v1353
  %1386 = vst [vmem:[%s4 + $0xe8] sm:$0xf] %v1354
  %1387 = vst [vmem:[%s4 + $0xf8] sm:$0xf] %v1355
  %v1388 = vmul.f32 %v824, %v886
  %v1389 = vmul.f32 %v825, %v886
  %v1390 = vmul.f32 %v826, %v886
  %v1391 = vmul.f32 %v827, %v886
  %v1392 = vmul.f32 %v828, %v886
  %v1393 = vmul.f32 %v829, %v886
  %v1394 = vmul.f32 %v830, %v886
  %v1395 = vmul.f32 %v831, %v886
  %v1396 = vmul.f32 %v832, %v886
  %v1397 = vmul.f32 %v833, %v886
  %v1398 = vmul.f32 %v834, %v886
  %v1399 = vmul.f32 %v835, %v886
  %v1400 = vmul.f32 %v836, %v886
  %v1401 = vmul.f32 %v837, %v886
  %v1402 = vmul.f32 %v838, %v886
  %v1403 = vmul.f32 %v839, %v886
  %v1404 = vld [vmem:[%s3] sm:$0x1]
  %v1406 = vlaneseq
  %v1407 = vshrl.u32 %v1406, 7
  %v1408 = vsub.s32 0, %v1407
  %v1409 = vrot.slane %v1404, %v1408
  %v1411 = vadd.f32 %v1388, %v1409
  %v1412 = vadd.f32 %v1389, %v1409
  %v1413 = vadd.f32 %v1390, %v1409
  %v1414 = vadd.f32 %v1391, %v1409
  %v1415 = vadd.f32 %v1392, %v1409
  %v1416 = vadd.f32 %v1393, %v1409
  %v1417 = vadd.f32 %v1394, %v1409
  %v1418 = vadd.f32 %v1395, %v1409
  %v1419 = vadd.f32 %v1396, %v1409
  %v1420 = vadd.f32 %v1397, %v1409
  %v1421 = vadd.f32 %v1398, %v1409
  %v1422 = vadd.f32 %v1399, %v1409
  %v1423 = vadd.f32 %v1400, %v1409
  %v1424 = vadd.f32 %v1401, %v1409
  %v1425 = vadd.f32 %v1402, %v1409
  %v1426 = vadd.f32 %v1403, %v1409
  %vm1427 = vcmp.gt.f32.partialorder %v1411, 0.0
  %vm1428 = vcmp.gt.f32.partialorder %v1412, 0.0
  %vm1429 = vcmp.gt.f32.partialorder %v1413, 0.0
  %vm1430 = vcmp.gt.f32.partialorder %v1414, 0.0
  %vm1431 = vcmp.gt.f32.partialorder %v1415, 0.0
  %vm1432 = vcmp.gt.f32.partialorder %v1416, 0.0
  %vm1433 = vcmp.gt.f32.partialorder %v1417, 0.0
  %vm1434 = vcmp.gt.f32.partialorder %v1418, 0.0
  %vm1435 = vcmp.gt.f32.partialorder %v1419, 0.0
  %vm1436 = vcmp.gt.f32.partialorder %v1420, 0.0
  %vm1437 = vcmp.gt.f32.partialorder %v1421, 0.0
  %vm1438 = vcmp.gt.f32.partialorder %v1422, 0.0
  %vm1439 = vcmp.gt.f32.partialorder %v1423, 0.0
  %vm1440 = vcmp.gt.f32.partialorder %v1424, 0.0
  %vm1441 = vcmp.gt.f32.partialorder %v1425, 0.0
  %vm1442 = vcmp.gt.f32.partialorder %v1426, 0.0
  %v1443 = vmul.f32 %v1411, 0.2
  %v1444 = vmul.f32 %v1412, 0.2
  %v1445 = vmul.f32 %v1413, 0.2
  %v1446 = vmul.f32 %v1414, 0.2
  %v1447 = vmul.f32 %v1415, 0.2
  %v1448 = vmul.f32 %v1416, 0.2
  %v1449 = vmul.f32 %v1417, 0.2
  %v1450 = vmul.f32 %v1418, 0.2
  %v1451 = vmul.f32 %v1419, 0.2
  %v1452 = vmul.f32 %v1420, 0.2
  %v1453 = vmul.f32 %v1421, 0.2
  %v1454 = vmul.f32 %v1422, 0.2
  %v1455 = vmul.f32 %v1423, 0.2
  %v1456 = vmul.f32 %v1424, 0.2
  %v1457 = vmul.f32 %v1425, 0.2
  %v1458 = vmul.f32 %v1426, 0.2
  %v1459 = vsel %vm1427, %v1411, %v1443
  %v1460 = vsel %vm1428, %v1412, %v1444
  %v1461 = vsel %vm1429, %v1413, %v1445
  %v1462 = vsel %vm1430, %v1414, %v1446
  %v1463 = vsel %vm1431, %v1415, %v1447
  %v1464 = vsel %vm1432, %v1416, %v1448
  %v1465 = vsel %vm1433, %v1417, %v1449
  %v1466 = vsel %vm1434, %v1418, %v1450
  %v1467 = vsel %vm1435, %v1419, %v1451
  %v1468 = vsel %vm1436, %v1420, %v1452
  %v1469 = vsel %vm1437, %v1421, %v1453
  %v1470 = vsel %vm1438, %v1422, %v1454
  %v1471 = vsel %vm1439, %v1423, %v1455
  %v1472 = vsel %vm1440, %v1424, %v1456
  %v1473 = vsel %vm1441, %v1425, %v1457
  %v1474 = vsel %vm1442, %v1426, %v1458
  %v1475 = vpack.c.bf16 %v1460, %v1459
  %v1476 = vpack.c.bf16 %v1462, %v1461
  %v1477 = vpack.c.bf16 %v1464, %v1463
  %v1478 = vpack.c.bf16 %v1466, %v1465
  %v1479 = vpack.c.bf16 %v1468, %v1467
  %v1480 = vpack.c.bf16 %v1470, %v1469
  %v1481 = vpack.c.bf16 %v1472, %v1471
  %v1482 = vpack.c.bf16 %v1474, %v1473
  %v1491 = vunpack.c.l.b16 %v1475
  %v1492 = vunpack.c.h.b16 %v1475
  %v1493 = vunpack.c.l.b16 %v1476
  %v1494 = vunpack.c.h.b16 %v1476
  %v1495 = vunpack.c.l.b16 %v1477
  %v1496 = vunpack.c.h.b16 %v1477
  %v1497 = vunpack.c.l.b16 %v1478
  %v1498 = vunpack.c.h.b16 %v1478
  %v1499 = vunpack.c.l.b16 %v1479
  %v1500 = vunpack.c.h.b16 %v1479
  %v1501 = vunpack.c.l.b16 %v1480
  %v1502 = vunpack.c.h.b16 %v1480
  %v1503 = vunpack.c.l.b16 %v1481
  %v1504 = vunpack.c.h.b16 %v1481
  %v1505 = vunpack.c.l.b16 %v1482
  %v1506 = vunpack.c.h.b16 %v1482
  %v1507 = vpack.c.b16 %v1491, %v1491
  %v1508 = vpack.c.b16 %v1492, %v1492
  %v1509 = vpack.c.b16 %v1493, %v1493
  %v1510 = vpack.c.b16 %v1494, %v1494
  %v1511 = vpack.c.b16 %v1495, %v1495
  %v1512 = vpack.c.b16 %v1496, %v1496
  %v1513 = vpack.c.b16 %v1497, %v1497
  %v1514 = vpack.c.b16 %v1498, %v1498
  %v1515 = vpack.c.b16 %v1499, %v1499
  %v1516 = vpack.c.b16 %v1500, %v1500
  %v1517 = vpack.c.b16 %v1501, %v1501
  %v1518 = vpack.c.b16 %v1502, %v1502
  %v1519 = vpack.c.b16 %v1503, %v1503
  %v1520 = vpack.c.b16 %v1504, %v1504
  %v1521 = vpack.c.b16 %v1505, %v1505
  %v1522 = vpack.c.b16 %v1506, %v1506
  %1539 = vst [vmem:[%s4 + $0xc] sm:$0xf] %v1507
  %1540 = vst [vmem:[%s4 + $0x1c] sm:$0xf] %v1508
  %1541 = vst [vmem:[%s4 + $0x2c] sm:$0xf] %v1509
  %1542 = vst [vmem:[%s4 + $0x3c] sm:$0xf] %v1510
  %1543 = vst [vmem:[%s4 + $0x4c] sm:$0xf] %v1511
  %1544 = vst [vmem:[%s4 + $0x5c] sm:$0xf] %v1512
  %1545 = vst [vmem:[%s4 + $0x6c] sm:$0xf] %v1513
  %1546 = vst [vmem:[%s4 + $0x7c] sm:$0xf] %v1514
  %1547 = vst [vmem:[%s4 + $0x8c] sm:$0xf] %v1515
  %1548 = vst [vmem:[%s4 + $0x9c] sm:$0xf] %v1516
  %1549 = vst [vmem:[%s4 + $0xac] sm:$0xf] %v1517
  %1550 = vst [vmem:[%s4 + $0xbc] sm:$0xf] %v1518
  %1551 = vst [vmem:[%s4 + $0xcc] sm:$0xf] %v1519
  %1552 = vst [vmem:[%s4 + $0xdc] sm:$0xf] %v1520
  %1553 = vst [vmem:[%s4 + $0xec] sm:$0xf] %v1521
  %1554 = vst [vmem:[%s4 + $0xfc] sm:$0xf] %v1522
  // Predicated region
  $region18: #{cnn_vae_forward.18} parent=0 // pred_check
    _
  $region19: #{cnn_vae_forward.18} parent=0 // pred_check_branch
    %1556 = sbr.rel (0) target = $region21
  $region20: #{cnn_vae_forward.18} parent=0 // pred_region
    _
  $region21: #{cnn_vae_forward.18} parent=0 // pred_fallthru
    _
  // Predicated region
  $region22: #{cnn_vae_forward.18} parent=0 // pred_check
    _
  $region23: #{cnn_vae_forward.18} parent=0 // pred_check_branch
    %1558 = sbr.rel (0) target = $region25
  $region24: #{cnn_vae_forward.18} parent=0 // pred_region
    _
  $region25: #{cnn_vae_forward.18} parent=0 // pred_fallthru
    _

// kernel: cnn_vae_forward.19
$region0: #{cnn_vae_forward.19}
  #allocation0 [shape = 'u32[]', space=smem, size = 0x4, offset = 0x4, fixed_abs, tag = 'smem constant byte address 0x4 - core index']
  #allocation1 [shape = 'u32[144,128]{1,0:T(1,128)}', space=vmem, size = 0x12000, scoped, tag = 'internal scratch']
  %s0 = inlined_call_operand.vmem [shape: bf16[512,72], index: 0, kind: input, shape index: {}]
  %s1 = inlined_call_operand.vmem [shape: bf16[72,512], index: 1, kind: input, shape index: {}]
  %s2 = inlined_call_operand.vmem [shape: f32[512,512], index: 2, kind: output, shape index: {}]
  %s3 = sld [smem:[#allocation0]]
  $region41: #{cnn_vae_forward.19} parent=0
    _
  %s5 = ssub.s32 1, %s3
  %s6 = scalar_select 0, %s5, %s3
  loop: start=0, step=1, limit=4
  $region2: #{cnn_vae_forward.19} parent=0 // loop_pre_header
    _
  $region3: #{cnn_vae_forward.19} parent=0 // loop_header
    %s8 = sphi 0, %s12
    %p9 = scmp.ge.s32.totalorder %s8, 4
    %s18 = sphi 0, %s20
    %s21 = sphi 0, %s18
    %s22 = sphi 0, %s21
    %s38 = sphi 0, %s22
    %s42 = sphi 0, %s42
    %s44 = sphi 0, %s42
    %s45 = sphi 0, %s44
    %s59 = sphi 0, %s45
    %s65 = sphi 0, %s67
    %s68 = sphi 0, %s65
    %s69 = sphi 0, %s68
    %s85 = sphi 0, %s69
  $region4: #{cnn_vae_forward.19} parent=0 // loop_header_branch
    %11 = sbr.rel (%p9) target = $region8
  $region5: #{cnn_vae_forward.19} parent=0 // loop_body
    %s13 = ssub.s32 %s8, 1
    %s14 = ssub.s32 %s8, 2
    %s15 = sadd.s32 %s8, 1
    %s16 = ssub.s32 %s8, %s15
    %p17 = scmp.eq.s32.totalorder %s16, 0
    %s19 = sadd.s32 %s18, 1
    %s20 = scalar_select %p17, %s18, %s19
    %p23 = pneg %p17
    %p24 = scmp.eq.s32.totalorder %s8, 1
    %p25 = por %p23, %p24
    %p26 = scmp.ne.s32.totalorder %s18, %s21
    %p27 = scmp.eq.s32.totalorder %s8, 0
    %p28 = por %p26, %p27
    %p29 = scmp.ne.s32.totalorder %s18, %s21
    %p30 = scmp.eq.s32.totalorder %s13, 1
    %p31 = por %p29, %p30
    %p32 = scmp.ne.s32.totalorder %s21, %s22
    %p33 = scmp.eq.s32.totalorder %s13, 0
    %p34 = por %p32, %p33
    %p35 = scmp.ne.s32.totalorder %s21, %s22
    %p36 = scmp.eq.s32.totalorder %s14, 1
    %p37 = por %p35, %p36
    %p39 = scmp.ne.s32.totalorder %s22, %s38
    %p40 = scmp.eq.s32.totalorder %s14, 0
    %p41 = por %p39, %p40
    %s43 = sadd.s32 %s42, 1
    %p46 = scmp.eq.s32.totalorder %s8, 1
    %p47 = scmp.ne.s32.totalorder %s42, %s44
    %p48 = scmp.eq.s32.totalorder %s8, 0
    %p49 = por %p47, %p48
    %p50 = scmp.ne.s32.totalorder %s42, %s44
    %p51 = scmp.eq.s32.totalorder %s13, 1
    %p52 = por %p50, %p51
    %p53 = scmp.ne.s32.totalorder %s44, %s45
    %p54 = scmp.eq.s32.totalorder %s13, 0
    %p55 = por %p53, %p54
    %p56 = scmp.ne.s32.totalorder %s44, %s45
    %p57 = scmp.eq.s32.totalorder %s14, 1
    %p58 = por %p56, %p57
    %p60 = scmp.ne.s32.totalorder %s45, %s59
    %p61 = scmp.eq.s32.totalorder %s14, 0
    %p62 = por %p60, %p61
    %s63 = ssub.s32 %s8, %s15
    %p64 = scmp.eq.s32.totalorder %s63, 0
    %s66 = sadd.s32 %s65, 1
    %s67 = scalar_select %p64, %s65, %s66
    %p70 = pneg %p64
    %p71 = scmp.eq.s32.totalorder %s8, 1
    %p72 = por %p70, %p71
    %p73 = scmp.ne.s32.totalorder %s65, %s68
    %p74 = scmp.eq.s32.totalorder %s8, 0
    %p75 = por %p73, %p74
    %p76 = scmp.ne.s32.totalorder %s65, %s68
    %p77 = scmp.eq.s32.totalorder %s13, 1
    %p78 = por %p76, %p77
    %p79 = scmp.ne.s32.totalorder %s68, %s69
    %p80 = scmp.eq.s32.totalorder %s13, 0
    %p81 = por %p79, %p80
    %p82 = scmp.ne.s32.totalorder %s68, %s69
    %p83 = scmp.eq.s32.totalorder %s14, 1
    %p84 = por %p82, %p83
    %p86 = scmp.ne.s32.totalorder %s69, %s85
    %p87 = scmp.eq.s32.totalorder %s14, 0
    %p88 = por %p86, %p87
    %p89 = scmp.le.s32.totalorder 1, %s8
    %p90 = scmp.lt.s32.totalorder %s8, 3
    %p91 = pnand %p89, %p90
    %p92 = pneg %p91
    // Predicated region
    $region9: #{cnn_vae_forward.19} parent=5 // pred_check
      _
    $region10: #{cnn_vae_forward.19} parent=5 // pred_check_branch
      %94 = sbr.rel (%p91) target = $region12
    $region11: #{cnn_vae_forward.19} parent=5 // pred_region
      %s95 = ssub.s32 %s8, 1
      // Predicated region
      $region13: #{cnn_vae_forward.19} parent=11 // pred_check
        %p96 = pneg %p55
      $region14: #{cnn_vae_forward.19} parent=11 // pred_check_branch
        %98 = sbr.rel (%p96) target = $region16
      $region15: #{cnn_vae_forward.19} parent=11 // pred_region
        _
      $region16: #{cnn_vae_forward.19} parent=11 // pred_fallthru
        _
    $region12: #{cnn_vae_forward.19} parent=5 // pred_fallthru
      _
    %p99 = scmp.lt.s32.totalorder %s8, 2
    // Predicated region
    $region17: #{cnn_vae_forward.19} parent=5 // pred_check
      %p100 = pneg %p99
    $region18: #{cnn_vae_forward.19} parent=5 // pred_check_branch
      %102 = sbr.rel (%p100) target = $region20
    $region19: #{cnn_vae_forward.19} parent=5 // pred_region
      // Predicated region
      $region21: #{cnn_vae_forward.19} parent=19 // pred_check
        %p103 = pneg %p28
      $region22: #{cnn_vae_forward.19} parent=19 // pred_check_branch
        %105 = sbr.rel (%p103) target = $region24
      $region23: #{cnn_vae_forward.19} parent=19 // pred_region
        %s106 = smul.u32 32, %s8
        %p107 = scmp.lt.s32.totalorder %s106, 63
        %s108 = scalar_select %p107, %s106, 63
        %s109 = smul.addr %s108, 4
        %s110 = scalar_lea.vmem %s0, %s109
        %s111 = smul.u32 32, %s8
      $region24: #{cnn_vae_forward.19} parent=19 // pred_fallthru
        _
    $region20: #{cnn_vae_forward.19} parent=5 // pred_fallthru
      _
    %p112 = scmp.le.s32.totalorder 1, %s8
    %p113 = scmp.lt.s32.totalorder %s8, 3
    %p114 = pnand %p112, %p113
    %p115 = pneg %p114
    // Predicated region
    $region25: #{cnn_vae_forward.19} parent=5 // pred_check
      _
    $region26: #{cnn_vae_forward.19} parent=5 // pred_check_branch
      %117 = sbr.rel (%p114) target = $region28
    $region27: #{cnn_vae_forward.19} parent=5 // pred_region
      %s118 = ssub.s32 %s8, 1
      %s119 = smul.u32 32, %s13
      %p120 = scmp.lt.s32.totalorder %s119, 63
      %s121 = scalar_select %p120, %s119, 63
      %s122 = smul.addr %s121, 4
      %s123 = scalar_lea.vmem %s0, %s122
      %p124 = pneg %p34
      %p125 = pneg %p31
      %p126 = pneg %p55
      %p127 = pneg %p52
      %p128 = pneg %p81
      %p129 = pneg %p78
      %s130 = smul.u32 32, %s13
      %p131 = scmp.lt.s32.totalorder %s130, 63
      %s132 = scalar_select %p131, %s130, 63
      %s133 = smul.addr %s132, 4
      %s134 = smul.addr %s133, 8
      %s135 = scalar_lea.vmem %s2, %s134
      %s136 = smul.u32 32, %s13
      %p137 = scmp.lt.s32.totalorder %s136, 63
      %s138 = scalar_select %p137, %s136, 63
      %s139 = smul.addr %s138, 4
      %s140 = scalar_lea.vmem %s0, %s139
      %s141 = smul.u32 32, %s13
      %s142 = smul.u32 32, %s13
      %p143 = scmp.lt.s32.totalorder %s142, 63
      %s144 = scalar_select %p143, %s142, 63
      %s145 = smul.addr %s144, 4
      %s146 = smul.addr %s145, 8
      %s147 = scalar_lea.vmem %s2, %s146
      %s148 = smul.u32 32, %s13
      %v150 = vld [vmem:[%s140] sm:$0xf]
      %v151 = vld [vmem:[%s140 + $0x4] sm:$0xf]
      %v152 = vld [vmem:[%s140 + $0x8] sm:$0xf]
      %v153 = vld [vmem:[%s140 + $0xc] sm:$0xf]
      %v154 = vld [vmem:[%s140 + $0x10] sm:$0xf]
      %v155 = vld [vmem:[%s140 + $0x14] sm:$0xf]
      %v156 = vld [vmem:[%s140 + $0x18] sm:$0xf]
      %v157 = vld [vmem:[%s140 + $0x1c] sm:$0xf]
      %v158 = vld [vmem:[%s140 + $0x20] sm:$0xf]
      %v159 = vld [vmem:[%s140 + $0x24] sm:$0xf]
      %v160 = vld [vmem:[%s140 + $0x28] sm:$0xf]
      %v161 = vld [vmem:[%s140 + $0x2c] sm:$0xf]
      %v162 = vld [vmem:[%s140 + $0x30] sm:$0xf]
      %v163 = vld [vmem:[%s140 + $0x34] sm:$0xf]
      %v164 = vld [vmem:[%s140 + $0x38] sm:$0xf]
      %v165 = vld [vmem:[%s140 + $0x3c] sm:$0xf]
      %v166 = vld [vmem:[%s140 + $0x40] sm:$0xf]
      %v167 = vld [vmem:[%s140 + $0x44] sm:$0xf]
      %v168 = vld [vmem:[%s140 + $0x48] sm:$0xf]
      %v169 = vld [vmem:[%s140 + $0x4c] sm:$0xf]
      %v170 = vld [vmem:[%s140 + $0x50] sm:$0xf]
      %v171 = vld [vmem:[%s140 + $0x54] sm:$0xf]
      %v172 = vld [vmem:[%s140 + $0x58] sm:$0xf]
      %v173 = vld [vmem:[%s140 + $0x5c] sm:$0xf]
      %v174 = vld [vmem:[%s140 + $0x60] sm:$0xf]
      %v175 = vld [vmem:[%s140 + $0x64] sm:$0xf]
      %v176 = vld [vmem:[%s140 + $0x68] sm:$0xf]
      %v177 = vld [vmem:[%s140 + $0x6c] sm:$0xf]
      %v178 = vld [vmem:[%s140 + $0x70] sm:$0xf]
      %v179 = vld [vmem:[%s140 + $0x74] sm:$0xf]
      %v180 = vld [vmem:[%s140 + $0x78] sm:$0xf]
      %v181 = vld [vmem:[%s140 + $0x7c] sm:$0xf]
      %v182 = vld [vmem:[%s1] sm:$0xff]
      %v183 = vld [vmem:[%s1 + $0x8] sm:$0xff]
      %v184 = vld [vmem:[%s1 + $0x10] sm:$0xff]
      %v185 = vld [vmem:[%s1 + $0x18] sm:$0xff]
      %v186 = vld [vmem:[%s1 + $0x20] sm:$0xff]
      %v187 = vld [vmem:[%s1 + $0x28] sm:$0xff]
      %v188 = vld [vmem:[%s1 + $0x30] sm:$0xff]
      %v189 = vld [vmem:[%s1 + $0x38] sm:$0xff]
      %v190 = vld [vmem:[%s1 + $0x40] sm:$0xff]
      %v191 = vld [vmem:[%s1 + $0x48] sm:$0xff]
      %v192 = vld [vmem:[%s1 + $0x50] sm:$0xff]
      %v193 = vld [vmem:[%s1 + $0x58] sm:$0xff]
      %v194 = vld [vmem:[%s1 + $0x60] sm:$0xff]
      %v195 = vld [vmem:[%s1 + $0x68] sm:$0xff]
      %v196 = vld [vmem:[%s1 + $0x70] sm:$0xff]
      %v197 = vld [vmem:[%s1 + $0x78] sm:$0xff]
      %v198 = vld [vmem:[%s1 + $0x80] sm:$0xff]
      %v199 = vld [vmem:[%s1 + $0x88] sm:$0xff]
      %v232 = vunpack.c.l.b16 %v150
      %v233 = vunpack.c.l.b16 %v151
      %v234 = vunpack.c.l.b16 %v152
      %v235 = vunpack.c.l.b16 %v153
      %v236 = vunpack.c.l.b16 %v154
      %v237 = vunpack.c.l.b16 %v155
      %v238 = vunpack.c.l.b16 %v156
      %v239 = vunpack.c.l.b16 %v157
      %v240 = vunpack.c.l.b16 %v158
      %v241 = vunpack.c.l.b16 %v159
      %v242 = vunpack.c.l.b16 %v160
      %v243 = vunpack.c.l.b16 %v161
      %v244 = vunpack.c.l.b16 %v162
      %v245 = vunpack.c.l.b16 %v163
      %v246 = vunpack.c.l.b16 %v164
      %v247 = vunpack.c.l.b16 %v165
      %v248 = vunpack.c.l.b16 %v166
      %v249 = vunpack.c.l.b16 %v167
      %v250 = vunpack.c.l.b16 %v168
      %v251 = vunpack.c.l.b16 %v169
      %v252 = vunpack.c.l.b16 %v170
      %v253 = vunpack.c.l.b16 %v171
      %v254 = vunpack.c.l.b16 %v172
      %v255 = vunpack.c.l.b16 %v173
      %v256 = vunpack.c.l.b16 %v174
      %v257 = vunpack.c.l.b16 %v175
      %v258 = vunpack.c.l.b16 %v176
      %v259 = vunpack.c.l.b16 %v177
      %v260 = vunpack.c.l.b16 %v178
      %v261 = vunpack.c.l.b16 %v179
      %v262 = vunpack.c.l.b16 %v180
      %v263 = vunpack.c.l.b16 %v181
      %v264 = vpack.c.b16 %v233, %v232
      %v265 = vpack.c.b16 %v235, %v234
      %v266 = vpack.c.b16 %v237, %v236
      %v267 = vpack.c.b16 %v239, %v238
      %v268 = vpack.c.b16 %v241, %v240
      %v269 = vpack.c.b16 %v243, %v242
      %v270 = vpack.c.b16 %v245, %v244
      %v271 = vpack.c.b16 %v247, %v246
      %v272 = vpack.c.b16 %v249, %v248
      %v273 = vpack.c.b16 %v251, %v250
      %v274 = vpack.c.b16 %v253, %v252
      %v275 = vpack.c.b16 %v255, %v254
      %v276 = vpack.c.b16 %v257, %v256
      %v277 = vpack.c.b16 %v259, %v258
      %v278 = vpack.c.b16 %v261, %v260
      %v279 = vpack.c.b16 %v263, %v262
      %v298 = vunpack.c.l.b16 %v182
      %v299 = vunpack.c.h.b16 %v182
      %v300 = vunpack.c.l.b16 %v183
      %v301 = vunpack.c.h.b16 %v183
      %v302 = vunpack.c.l.b16 %v184
      %v303 = vunpack.c.h.b16 %v184
      %v304 = vunpack.c.l.b16 %v185
      %v305 = vunpack.c.h.b16 %v185
      %v306 = vunpack.c.l.b16 %v186
      %v307 = vunpack.c.h.b16 %v186
      %v308 = vunpack.c.l.b16 %v187
      %v309 = vunpack.c.h.b16 %v187
      %v310 = vunpack.c.l.b16 %v188
      %v311 = vunpack.c.h.b16 %v188
      %v312 = vunpack.c.l.b16 %v189
      %v313 = vunpack.c.h.b16 %v189
      %v314 = vunpack.c.l.b16 %v190
      %v315 = vunpack.c.h.b16 %v190
      %v316 = vunpack.c.l.b16 %v191
      %v317 = vunpack.c.h.b16 %v191
      %v318 = vunpack.c.l.b16 %v192
      %v319 = vunpack.c.h.b16 %v192
      %v320 = vunpack.c.l.b16 %v193
      %v321 = vunpack.c.h.b16 %v193
      %v322 = vunpack.c.l.b16 %v194
      %v323 = vunpack.c.h.b16 %v194
      %v324 = vunpack.c.l.b16 %v195
      %v325 = vunpack.c.h.b16 %v195
      %v326 = vunpack.c.l.b16 %v196
      %v327 = vunpack.c.h.b16 %v196
      %v328 = vunpack.c.l.b16 %v197
      %v329 = vunpack.c.h.b16 %v197
      %v330 = vunpack.c.l.b16 %v198
      %v331 = vunpack.c.h.b16 %v198
      %v332 = vunpack.c.l.b16 %v199
      %v333 = vunpack.c.h.b16 %v199
      %v334 = vpack.c.b16 %v302, %v298
      %v335 = vpack.c.b16 %v303, %v299
      %v336 = vpack.c.b16 %v304, %v300
      %v337 = vpack.c.b16 %v305, %v301
      %v338 = vpack.c.b16 %v310, %v306
      %v339 = vpack.c.b16 %v311, %v307
      %v340 = vpack.c.b16 %v312, %v308
      %v341 = vpack.c.b16 %v313, %v309
      %v342 = vpack.c.b16 %v318, %v314
      %v343 = vpack.c.b16 %v319, %v315
      %v344 = vpack.c.b16 %v320, %v316
      %v345 = vpack.c.b16 %v321, %v317
      %v346 = vpack.c.b16 %v326, %v322
      %v347 = vpack.c.b16 %v327, %v323
      %v348 = vpack.c.b16 %v328, %v324
      %v349 = vpack.c.b16 %v329, %v325
      %v350 = vpack.c.b16 %v330, %v330
      %v351 = vpack.c.b16 %v331, %v331
      %v352 = vpack.c.b16 %v332, %v332
      %v353 = vpack.c.b16 %v333, %v333
      %vm370 = vcmask 588800
      %v372 = vsel %vm370, %v264, 0
      %v375 = vsel %vm370, %v265, 0
      %v378 = vsel %vm370, %v266, 0
      %v381 = vsel %vm370, %v267, 0
      %v384 = vsel %vm370, %v268, 0
      %v387 = vsel %vm370, %v269, 0
      %v390 = vsel %vm370, %v270, 0
      %v393 = vsel %vm370, %v271, 0
      %v396 = vsel %vm370, %v272, 0
      %v399 = vsel %vm370, %v273, 0
      %v402 = vsel %vm370, %v274, 0
      %v405 = vsel %vm370, %v275, 0
      %v408 = vsel %vm370, %v276, 0
      %v411 = vsel %vm370, %v277, 0
      %v414 = vsel %vm370, %v278, 0
      %v417 = vsel %vm370, %v279, 0
      %vm419 = vcmask 1043456
      %v421 = vsel %vm419, %v350, 0
      %v424 = vsel %vm419, %v351, 0
      %v427 = vsel %vm419, %v352, 0
      %v430 = vsel %vm419, %v353, 0
      %432 = vmatprep.subr.bf16.mxu0 %v335
      %433 = vmatpush1.bf16.msra.mxu0 %v334
      %434 = vmatprep.subr.bf16.mxu0 %v339
      %435 = vmatpush1.bf16.msra.mxu0 %v338
      %436 = vmatprep.subr.bf16.mxu0 %v343
      %437 = vmatpush1.bf16.msra.mxu0 %v342
      %438 = vmatprep.subr.bf16.mxu0 %v347
      %439 = vmatpush1.bf16.msra.mxu0 %v346
      %440 = vmatprep.subr.bf16.mxu0 %v424
      %441 = vmatpush1.bf16.msra.mxu0 %v421
      %442 = vmatprep.subr.bf16.mxu0 0
      %443 = vmatpush1.bf16.msra.mxu0 0
      %444 = vmatprep.subr.bf16.mxu0 0
      %445 = vmatpush1.bf16.msra.mxu0 0
      %446 = vmatprep.subr.bf16.mxu0 0
      %447 = vmatpush1.bf16.msra.mxu0 0
      %448 = vmatprep.subr.bf16.mxu0 0
      %449 = vmatpush1.bf16.msra.mxu0 0
      %450 = vmatprep.subr.bf16.mxu0 0
      %451 = vmatpush1.bf16.msra.mxu0 0
      %452 = vmatprep.subr.bf16.mxu0 0
      %453 = vmatpush1.bf16.msra.mxu0 0
      %454 = vmatprep.subr.bf16.mxu0 0
      %455 = vmatpush1.bf16.msra.mxu0 0
      %456 = vmatprep.subr.bf16.mxu0 0
      %457 = vmatpush1.bf16.msra.mxu0 0
      %458 = vmatprep.subr.bf16.mxu0 0
      %459 = vmatpush1.bf16.msra.mxu0 0
      %460 = vmatprep.subr.bf16.mxu0 0
      %461 = vmatpush1.bf16.msra.mxu0 0
      %462 = vmatprep.subr.bf16.mxu0 0
      %463 = vmatpush1.bf16.msra.mxu0 0
      %464 = vmatprep.mubr.bf16.mxu0 0
      %465 = vmatmul.mubr.bf16.gmra.mrb[0].mxu0 %v372
      %v466 = vpop.f32.mrb[0].mxu0
      %v467 = vadd.f32 0.0, %v466
      %v468 = vpop.f32.mrb[0].mxu0
      %v469 = vadd.f32 0.0, %v468
      %v470 = vpop.f32.mrb[0].mxu0
      %v471 = vadd.f32 0.0, %v470
      %v472 = vpop.f32.mrb[0].mxu0
      %v473 = vadd.f32 0.0, %v472
      %474 = vmatprep.mubr.bf16.mxu0 0
      %475 = vmatmul.mubr.bf16.gmra.mrb[0].mxu0 %v375
      %v476 = vpop.f32.mrb[0].mxu0
      %v477 = vadd.f32 0.0, %v476
      %v478 = vpop.f32.mrb[0].mxu0
      %v479 = vadd.f32 0.0, %v478
      %v480 = vpop.f32.mrb[0].mxu0
      %v481 = vadd.f32 0.0, %v480
      %v482 = vpop.f32.mrb[0].mxu0
      %v483 = vadd.f32 0.0, %v482
      %484 = vmatprep.mubr.bf16.mxu0 0
      %485 = vmatmul.mubr.bf16.gmra.mrb[0].mxu0 %v378
      %v486 = vpop.f32.mrb[0].mxu0
      %v487 = vadd.f32 0.0, %v486
      %v488 = vpop.f32.mrb[0].mxu0
      %v489 = vadd.f32 0.0, %v488
      %v490 = vpop.f32.mrb[0].mxu0
      %v491 = vadd.f32 0.0, %v490
      %v492 = vpop.f32.mrb[0].mxu0
      %v493 = vadd.f32 0.0, %v492
      %494 = vmatprep.mubr.bf16.mxu0 0
      %495 = vmatmul.mubr.bf16.gmra.mrb[0].mxu0 %v381
      %v496 = vpop.f32.mrb[0].mxu0
      %v497 = vadd.f32 0.0, %v496
      %v498 = vpop.f32.mrb[0].mxu0
      %v499 = vadd.f32 0.0, %v498
      %v500 = vpop.f32.mrb[0].mxu0
      %v501 = vadd.f32 0.0, %v500
      %v502 = vpop.f32.mrb[0].mxu0
      %v503 = vadd.f32 0.0, %v502
      %504 = vmatprep.mubr.bf16.mxu0 0
      %505 = vmatmul.mubr.bf16.gmra.mrb[0].mxu0 %v384
      %v506 = vpop.f32.mrb[0].mxu0
      %v507 = vadd.f32 0.0, %v506
      %v508 = vpop.f32.mrb[0].mxu0
      %v509 = vadd.f32 0.0, %v508
      %v510 = vpop.f32.mrb[0].mxu0
      %v511 = vadd.f32 0.0, %v510
      %v512 = vpop.f32.mrb[0].mxu0
      %v513 = vadd.f32 0.0, %v512
      %514 = vmatprep.mubr.bf16.mxu0 0
      %515 = vmatmul.mubr.bf16.gmra.mrb[0].mxu0 %v387
      %v516 = vpop.f32.mrb[0].mxu0
      %v517 = vadd.f32 0.0, %v516
      %v518 = vpop.f32.mrb[0].mxu0
      %v519 = vadd.f32 0.0, %v518
      %v520 = vpop.f32.mrb[0].mxu0
      %v521 = vadd.f32 0.0, %v520
      %v522 = vpop.f32.mrb[0].mxu0
      %v523 = vadd.f32 0.0, %v522
      %524 = vmatprep.mubr.bf16.mxu0 0
      %525 = vmatmul.mubr.bf16.gmra.mrb[0].mxu0 %v390
      %v526 = vpop.f32.mrb[0].mxu0
      %v527 = vadd.f32 0.0, %v526
      %v528 = vpop.f32.mrb[0].mxu0
      %v529 = vadd.f32 0.0, %v528
      %v530 = vpop.f32.mrb[0].mxu0
      %v531 = vadd.f32 0.0, %v530
      %v532 = vpop.f32.mrb[0].mxu0
      %v533 = vadd.f32 0.0, %v532
      %534 = vmatprep.mubr.bf16.mxu0 0
      %535 = vmatmul.mubr.bf16.gmra.mrb[0].mxu0 %v393
      %v536 = vpop.f32.mrb[0].mxu0
      %v537 = vadd.f32 0.0, %v536
      %v538 = vpop.f32.mrb[0].mxu0
      %v539 = vadd.f32 0.0, %v538
      %v540 = vpop.f32.mrb[0].mxu0
      %v541 = vadd.f32 0.0, %v540
      %v542 = vpop.f32.mrb[0].mxu0
      %v543 = vadd.f32 0.0, %v542
      %544 = vmatprep.mubr.bf16.mxu0 0
      %545 = vmatmul.mubr.bf16.gmra.mrb[0].mxu0 %v396
      %v546 = vpop.f32.mrb[0].mxu0
      %v547 = vadd.f32 0.0, %v546
      %v548 = vpop.f32.mrb[0].mxu0
      %v549 = vadd.f32 0.0, %v548
      %v550 = vpop.f32.mrb[0].mxu0
      %v551 = vadd.f32 0.0, %v550
      %v552 = vpop.f32.mrb[0].mxu0
      %v553 = vadd.f32 0.0, %v552
      %554 = vmatprep.mubr.bf16.mxu0 0
      %555 = vmatmul.mubr.bf16.gmra.mrb[0].mxu0 %v399
      %v556 = vpop.f32.mrb[0].mxu0
      %v557 = vadd.f32 0.0, %v556
      %v558 = vpop.f32.mrb[0].mxu0
      %v559 = vadd.f32 0.0, %v558
      %v560 = vpop.f32.mrb[0].mxu0
      %v561 = vadd.f32 0.0, %v560
      %v562 = vpop.f32.mrb[0].mxu0
      %v563 = vadd.f32 0.0, %v562
      %564 = vmatprep.mubr.bf16.mxu0 0
      %565 = vmatmul.mubr.bf16.gmra.mrb[0].mxu0 %v402
      %v566 = vpop.f32.mrb[0].mxu0
      %v567 = vadd.f32 0.0, %v566
      %v568 = vpop.f32.mrb[0].mxu0
      %v569 = vadd.f32 0.0, %v568
      %v570 = vpop.f32.mrb[0].mxu0
      %v571 = vadd.f32 0.0, %v570
      %v572 = vpop.f32.mrb[0].mxu0
      %v573 = vadd.f32 0.0, %v572
      %574 = vmatprep.mubr.bf16.mxu0 0
      %575 = vmatmul.mubr.bf16.gmra.mrb[0].mxu0 %v405
      %v576 = vpop.f32.mrb[0].mxu0
      %v577 = vadd.f32 0.0, %v576
      %v578 = vpop.f32.mrb[0].mxu0
      %v579 = vadd.f32 0.0, %v578
      %v580 = vpop.f32.mrb[0].mxu0
      %v581 = vadd.f32 0.0, %v580
      %v582 = vpop.f32.mrb[0].mxu0
      %v583 = vadd.f32 0.0, %v582
      %584 = vmatprep.mubr.bf16.mxu0 0
      %585 = vmatmul.mubr.bf16.gmra.mrb[0].mxu0 %v408
      %v586 = vpop.f32.mrb[0].mxu0
      %v587 = vadd.f32 0.0, %v586
      %v588 = vpop.f32.mrb[0].mxu0
      %v589 = vadd.f32 0.0, %v588
      %v590 = vpop.f32.mrb[0].mxu0
      %v591 = vadd.f32 0.0, %v590
      %v592 = vpop.f32.mrb[0].mxu0
      %v593 = vadd.f32 0.0, %v592
      %594 = vmatprep.mubr.bf16.mxu0 0
      %595 = vmatmul.mubr.bf16.gmra.mrb[0].mxu0 %v411
      %v596 = vpop.f32.mrb[0].mxu0
      %v597 = vadd.f32 0.0, %v596
      %v598 = vpop.f32.mrb[0].mxu0
      %v599 = vadd.f32 0.0, %v598
      %v600 = vpop.f32.mrb[0].mxu0
      %v601 = vadd.f32 0.0, %v600
      %v602 = vpop.f32.mrb[0].mxu0
      %v603 = vadd.f32 0.0, %v602
      %604 = vmatprep.mubr.bf16.mxu0 0
      %605 = vmatmul.mubr.bf16.gmra.mrb[0].mxu0 %v414
      %v606 = vpop.f32.mrb[0].mxu0
      %v607 = vadd.f32 0.0, %v606
      %v608 = vpop.f32.mrb[0].mxu0
      %v609 = vadd.f32 0.0, %v608
      %v610 = vpop.f32.mrb[0].mxu0
      %v611 = vadd.f32 0.0, %v610
      %v612 = vpop.f32.mrb[0].mxu0
      %v613 = vadd.f32 0.0, %v612
      %614 = vmatprep.mubr.bf16.mxu0 0
      %615 = vmatmul.mubr.bf16.gmra.mrb[0].mxu0 %v417
      %v616 = vpop.f32.mrb[0].mxu0
      %v617 = vadd.f32 0.0, %v616
      %v618 = vpop.f32.mrb[0].mxu0
      %v619 = vadd.f32 0.0, %v618
      %v620 = vpop.f32.mrb[0].mxu0
      %v621 = vadd.f32 0.0, %v620
      %v622 = vpop.f32.mrb[0].mxu0
      %v623 = vadd.f32 0.0, %v622
      %624 = vdwg.mxu0
      %625 = vmatprep.subr.bf16.mxu0 %v337
      %626 = vmatpush1.bf16.msra.mxu0 %v336
      %627 = vmatprep.subr.bf16.mxu0 %v341
      %628 = vmatpush1.bf16.msra.mxu0 %v340
      %629 = vmatprep.subr.bf16.mxu0 %v345
      %630 = vmatpush1.bf16.msra.mxu0 %v344
      %631 = vmatprep.subr.bf16.mxu0 %v349
      %632 = vmatpush1.bf16.msra.mxu0 %v348
      %633 = vmatprep.subr.bf16.mxu0 %v430
      %634 = vmatpush1.bf16.msra.mxu0 %v427
      %635 = vmatprep.subr.bf16.mxu0 0
      %636 = vmatpush1.bf16.msra.mxu0 0
      %637 = vmatprep.subr.bf16.mxu0 0
      %638 = vmatpush1.bf16.msra.mxu0 0
      %639 = vmatprep.subr.bf16.mxu0 0
      %640 = vmatpush1.bf16.msra.mxu0 0
      %641 = vmatprep.subr.bf16.mxu0 0
      %642 = vmatpush1.bf16.msra.mxu0 0
      %643 = vmatprep.subr.bf16.mxu0 0
      %644 = vmatpush1.bf16.msra.mxu0 0
      %645 = vmatprep.subr.bf16.mxu0 0
      %646 = vmatpush1.bf16.msra.mxu0 0
      %647 = vmatprep.subr.bf16.mxu0 0
      %648 = vmatpush1.bf16.msra.mxu0 0
      %649 = vmatprep.subr.bf16.mxu0 0
      %650 = vmatpush1.bf16.msra.mxu0 0
      %651 = vmatprep.subr.bf16.mxu0 0
      %652 = vmatpush1.bf16.msra.mxu0 0
      %653 = vmatprep.subr.bf16.mxu0 0
      %654 = vmatpush1.bf16.msra.mxu0 0
      %655 = vmatprep.subr.bf16.mxu0 0
      %656 = vmatpush1.bf16.msra.mxu0 0
      %657 = vmatprep.mubr.bf16.mxu0 0
      %658 = vmatmul.mubr.bf16.gmra.mrb[0].mxu0 %v372
      %v659 = vpop.f32.mrb[0].mxu0
      %v660 = vadd.f32 0.0, %v659
      %v661 = vpop.f32.mrb[0].mxu0
      %v662 = vadd.f32 0.0, %v661
      %v663 = vpop.f32.mrb[0].mxu0
      %v664 = vadd.f32 0.0, %v663
      %v665 = vpop.f32.mrb[0].mxu0
      %v666 = vadd.f32 0.0, %v665
      %667 = vmatprep.mubr.bf16.mxu0 0
      %668 = vmatmul.mubr.bf16.gmra.mrb[0].mxu0 %v375
      %v669 = vpop.f32.mrb[0].mxu0
      %v670 = vadd.f32 0.0, %v669
      %v671 = vpop.f32.mrb[0].mxu0
      %v672 = vadd.f32 0.0, %v671
      %v673 = vpop.f32.mrb[0].mxu0
      %v674 = vadd.f32 0.0, %v673
      %v675 = vpop.f32.mrb[0].mxu0
      %v676 = vadd.f32 0.0, %v675
      %677 = vmatprep.mubr.bf16.mxu0 0
      %678 = vmatmul.mubr.bf16.gmra.mrb[0].mxu0 %v378
      %v679 = vpop.f32.mrb[0].mxu0
      %v680 = vadd.f32 0.0, %v679
      %v681 = vpop.f32.mrb[0].mxu0
      %v682 = vadd.f32 0.0, %v681
      %v683 = vpop.f32.mrb[0].mxu0
      %v684 = vadd.f32 0.0, %v683
      %v685 = vpop.f32.mrb[0].mxu0
      %v686 = vadd.f32 0.0, %v685
      %687 = vmatprep.mubr.bf16.mxu0 0
      %688 = vmatmul.mubr.bf16.gmra.mrb[0].mxu0 %v381
      %v689 = vpop.f32.mrb[0].mxu0
      %v690 = vadd.f32 0.0, %v689
      %v691 = vpop.f32.mrb[0].mxu0
      %v692 = vadd.f32 0.0, %v691
      %v693 = vpop.f32.mrb[0].mxu0
      %v694 = vadd.f32 0.0, %v693
      %v695 = vpop.f32.mrb[0].mxu0
      %v696 = vadd.f32 0.0, %v695
      %697 = vmatprep.mubr.bf16.mxu0 0
      %698 = vmatmul.mubr.bf16.gmra.mrb[0].mxu0 %v384
      %v699 = vpop.f32.mrb[0].mxu0
      %v700 = vadd.f32 0.0, %v699
      %v701 = vpop.f32.mrb[0].mxu0
      %v702 = vadd.f32 0.0, %v701
      %v703 = vpop.f32.mrb[0].mxu0
      %v704 = vadd.f32 0.0, %v703
      %v705 = vpop.f32.mrb[0].mxu0
      %v706 = vadd.f32 0.0, %v705
      %707 = vmatprep.mubr.bf16.mxu0 0
      %708 = vmatmul.mubr.bf16.gmra.mrb[0].mxu0 %v387
      %v709 = vpop.f32.mrb[0].mxu0
      %v710 = vadd.f32 0.0, %v709
      %v711 = vpop.f32.mrb[0].mxu0
      %v712 = vadd.f32 0.0, %v711
      %v713 = vpop.f32.mrb[0].mxu0
      %v714 = vadd.f32 0.0, %v713
      %v715 = vpop.f32.mrb[0].mxu0
      %v716 = vadd.f32 0.0, %v715
      %717 = vmatprep.mubr.bf16.mxu0 0
      %718 = vmatmul.mubr.bf16.gmra.mrb[0].mxu0 %v390
      %v719 = vpop.f32.mrb[0].mxu0
      %v720 = vadd.f32 0.0, %v719
      %v721 = vpop.f32.mrb[0].mxu0
      %v722 = vadd.f32 0.0, %v721
      %v723 = vpop.f32.mrb[0].mxu0
      %v724 = vadd.f32 0.0, %v723
      %v725 = vpop.f32.mrb[0].mxu0
      %v726 = vadd.f32 0.0, %v725
      %727 = vmatprep.mubr.bf16.mxu0 0
      %728 = vmatmul.mubr.bf16.gmra.mrb[0].mxu0 %v393
      %v729 = vpop.f32.mrb[0].mxu0
      %v730 = vadd.f32 0.0, %v729
      %v731 = vpop.f32.mrb[0].mxu0
      %v732 = vadd.f32 0.0, %v731
      %v733 = vpop.f32.mrb[0].mxu0
      %v734 = vadd.f32 0.0, %v733
      %v735 = vpop.f32.mrb[0].mxu0
      %v736 = vadd.f32 0.0, %v735
      %737 = vmatprep.mubr.bf16.mxu0 0
      %738 = vmatmul.mubr.bf16.gmra.mrb[0].mxu0 %v396
      %v739 = vpop.f32.mrb[0].mxu0
      %v740 = vadd.f32 0.0, %v739
      %v741 = vpop.f32.mrb[0].mxu0
      %v742 = vadd.f32 0.0, %v741
      %v743 = vpop.f32.mrb[0].mxu0
      %v744 = vadd.f32 0.0, %v743
      %v745 = vpop.f32.mrb[0].mxu0
      %v746 = vadd.f32 0.0, %v745
      %747 = vmatprep.mubr.bf16.mxu0 0
      %748 = vmatmul.mubr.bf16.gmra.mrb[0].mxu0 %v399
      %v749 = vpop.f32.mrb[0].mxu0
      %v750 = vadd.f32 0.0, %v749
      %v751 = vpop.f32.mrb[0].mxu0
      %v752 = vadd.f32 0.0, %v751
      %v753 = vpop.f32.mrb[0].mxu0
      %v754 = vadd.f32 0.0, %v753
      %v755 = vpop.f32.mrb[0].mxu0
      %v756 = vadd.f32 0.0, %v755
      %757 = vmatprep.mubr.bf16.mxu0 0
      %758 = vmatmul.mubr.bf16.gmra.mrb[0].mxu0 %v402
      %v759 = vpop.f32.mrb[0].mxu0
      %v760 = vadd.f32 0.0, %v759
      %v761 = vpop.f32.mrb[0].mxu0
      %v762 = vadd.f32 0.0, %v761
      %v763 = vpop.f32.mrb[0].mxu0
      %v764 = vadd.f32 0.0, %v763
      %v765 = vpop.f32.mrb[0].mxu0
      %v766 = vadd.f32 0.0, %v765
      %767 = vmatprep.mubr.bf16.mxu0 0
      %768 = vmatmul.mubr.bf16.gmra.mrb[0].mxu0 %v405
      %v769 = vpop.f32.mrb[0].mxu0
      %v770 = vadd.f32 0.0, %v769
      %v771 = vpop.f32.mrb[0].mxu0
      %v772 = vadd.f32 0.0, %v771
      %v773 = vpop.f32.mrb[0].mxu0
      %v774 = vadd.f32 0.0, %v773
      %v775 = vpop.f32.mrb[0].mxu0
      %v776 = vadd.f32 0.0, %v775
      %777 = vmatprep.mubr.bf16.mxu0 0
      %778 = vmatmul.mubr.bf16.gmra.mrb[0].mxu0 %v408
      %v779 = vpop.f32.mrb[0].mxu0
      %v780 = vadd.f32 0.0, %v779
      %v781 = vpop.f32.mrb[0].mxu0
      %v782 = vadd.f32 0.0, %v781
      %v783 = vpop.f32.mrb[0].mxu0
      %v784 = vadd.f32 0.0, %v783
      %v785 = vpop.f32.mrb[0].mxu0
      %v786 = vadd.f32 0.0, %v785
      %787 = vmatprep.mubr.bf16.mxu0 0
      %788 = vmatmul.mubr.bf16.gmra.mrb[0].mxu0 %v411
      %v789 = vpop.f32.mrb[0].mxu0
      %v790 = vadd.f32 0.0, %v789
      %v791 = vpop.f32.mrb[0].mxu0
      %v792 = vadd.f32 0.0, %v791
      %v793 = vpop.f32.mrb[0].mxu0
      %v794 = vadd.f32 0.0, %v793
      %v795 = vpop.f32.mrb[0].mxu0
      %v796 = vadd.f32 0.0, %v795
      %797 = vmatprep.mubr.bf16.mxu0 0
      %798 = vmatmul.mubr.bf16.gmra.mrb[0].mxu0 %v414
      %v799 = vpop.f32.mrb[0].mxu0
      %v800 = vadd.f32 0.0, %v799
      %v801 = vpop.f32.mrb[0].mxu0
      %v802 = vadd.f32 0.0, %v801
      %v803 = vpop.f32.mrb[0].mxu0
      %v804 = vadd.f32 0.0, %v803
      %v805 = vpop.f32.mrb[0].mxu0
      %v806 = vadd.f32 0.0, %v805
      %807 = vmatprep.mubr.bf16.mxu0 0
      %808 = vmatmul.mubr.bf16.gmra.mrb[0].mxu0 %v417
      %v809 = vpop.f32.mrb[0].mxu0
      %v810 = vadd.f32 0.0, %v809
      %v811 = vpop.f32.mrb[0].mxu0
      %v812 = vadd.f32 0.0, %v811
      %v813 = vpop.f32.mrb[0].mxu0
      %v814 = vadd.f32 0.0, %v813
      %v815 = vpop.f32.mrb[0].mxu0
      %v816 = vadd.f32 0.0, %v815
      %817 = vdwg.mxu0
      %v818 = vsub.f32 0.0, %v467
      %v819 = vsub.f32 0.0, %v469
      %v820 = vsub.f32 0.0, %v660
      %v821 = vsub.f32 0.0, %v662
      %v822 = vsub.f32 0.0, %v471
      %v823 = vsub.f32 0.0, %v473
      %v824 = vsub.f32 0.0, %v664
      %v825 = vsub.f32 0.0, %v666
      %v826 = vsub.f32 0.0, %v477
      %v827 = vsub.f32 0.0, %v479
      %v828 = vsub.f32 0.0, %v670
      %v829 = vsub.f32 0.0, %v672
      %v830 = vsub.f32 0.0, %v481
      %v831 = vsub.f32 0.0, %v483
      %v832 = vsub.f32 0.0, %v674
      %v833 = vsub.f32 0.0, %v676
      %v834 = vsub.f32 0.0, %v487
      %v835 = vsub.f32 0.0, %v489
      %v836 = vsub.f32 0.0, %v680
      %v837 = vsub.f32 0.0, %v682
      %v838 = vsub.f32 0.0, %v491
      %v839 = vsub.f32 0.0, %v493
      %v840 = vsub.f32 0.0, %v684
      %v841 = vsub.f32 0.0, %v686
      %v842 = vsub.f32 0.0, %v497
      %v843 = vsub.f32 0.0, %v499
      %v844 = vsub.f32 0.0, %v690
      %v845 = vsub.f32 0.0, %v692
      %v846 = vsub.f32 0.0, %v501
      %v847 = vsub.f32 0.0, %v503
      %v848 = vsub.f32 0.0, %v694
      %v849 = vsub.f32 0.0, %v696
      %v850 = vsub.f32 0.0, %v507
      %v851 = vsub.f32 0.0, %v509
      %v852 = vsub.f32 0.0, %v700
      %v853 = vsub.f32 0.0, %v702
      %v854 = vsub.f32 0.0, %v511
      %v855 = vsub.f32 0.0, %v513
      %v856 = vsub.f32 0.0, %v704
      %v857 = vsub.f32 0.0, %v706
      %v858 = vsub.f32 0.0, %v517
      %v859 = vsub.f32 0.0, %v519
      %v860 = vsub.f32 0.0, %v710
      %v861 = vsub.f32 0.0, %v712
      %v862 = vsub.f32 0.0, %v521
      %v863 = vsub.f32 0.0, %v523
      %v864 = vsub.f32 0.0, %v714
      %v865 = vsub.f32 0.0, %v716
      %v866 = vsub.f32 0.0, %v527
      %v867 = vsub.f32 0.0, %v529
      %v868 = vsub.f32 0.0, %v720
      %v869 = vsub.f32 0.0, %v722
      %v870 = vsub.f32 0.0, %v531
      %v871 = vsub.f32 0.0, %v533
      %v872 = vsub.f32 0.0, %v724
      %v873 = vsub.f32 0.0, %v726
      %v874 = vsub.f32 0.0, %v537
      %v875 = vsub.f32 0.0, %v539
      %v876 = vsub.f32 0.0, %v730
      %v877 = vsub.f32 0.0, %v732
      %v878 = vsub.f32 0.0, %v541
      %v879 = vsub.f32 0.0, %v543
      %v880 = vsub.f32 0.0, %v734
      %v881 = vsub.f32 0.0, %v736
      %v882 = vsub.f32 0.0, %v547
      %v883 = vsub.f32 0.0, %v549
      %v884 = vsub.f32 0.0, %v740
      %v885 = vsub.f32 0.0, %v742
      %v886 = vsub.f32 0.0, %v551
      %v887 = vsub.f32 0.0, %v553
      %v888 = vsub.f32 0.0, %v744
      %v889 = vsub.f32 0.0, %v746
      %v890 = vsub.f32 0.0, %v557
      %v891 = vsub.f32 0.0, %v559
      %v892 = vsub.f32 0.0, %v750
      %v893 = vsub.f32 0.0, %v752
      %v894 = vsub.f32 0.0, %v561
      %v895 = vsub.f32 0.0, %v563
      %v896 = vsub.f32 0.0, %v754
      %v897 = vsub.f32 0.0, %v756
      %v898 = vsub.f32 0.0, %v567
      %v899 = vsub.f32 0.0, %v569
      %v900 = vsub.f32 0.0, %v760
      %v901 = vsub.f32 0.0, %v762
      %v902 = vsub.f32 0.0, %v571
      %v903 = vsub.f32 0.0, %v573
      %v904 = vsub.f32 0.0, %v764
      %v905 = vsub.f32 0.0, %v766
      %v906 = vsub.f32 0.0, %v577
      %v907 = vsub.f32 0.0, %v579
      %v908 = vsub.f32 0.0, %v770
      %v909 = vsub.f32 0.0, %v772
      %v910 = vsub.f32 0.0, %v581
      %v911 = vsub.f32 0.0, %v583
      %v912 = vsub.f32 0.0, %v774
      %v913 = vsub.f32 0.0, %v776
      %v914 = vsub.f32 0.0, %v587
      %v915 = vsub.f32 0.0, %v589
      %v916 = vsub.f32 0.0, %v780
      %v917 = vsub.f32 0.0, %v782
      %v918 = vsub.f32 0.0, %v591
      %v919 = vsub.f32 0.0, %v593
      %v920 = vsub.f32 0.0, %v784
      %v921 = vsub.f32 0.0, %v786
      %v922 = vsub.f32 0.0, %v597
      %v923 = vsub.f32 0.0, %v599
      %v924 = vsub.f32 0.0, %v790
      %v925 = vsub.f32 0.0, %v792
      %v926 = vsub.f32 0.0, %v601
      %v927 = vsub.f32 0.0, %v603
      %v928 = vsub.f32 0.0, %v794
      %v929 = vsub.f32 0.0, %v796
      %v930 = vsub.f32 0.0, %v607
      %v931 = vsub.f32 0.0, %v609
      %v932 = vsub.f32 0.0, %v800
      %v933 = vsub.f32 0.0, %v802
      %v934 = vsub.f32 0.0, %v611
      %v935 = vsub.f32 0.0, %v613
      %v936 = vsub.f32 0.0, %v804
      %v937 = vsub.f32 0.0, %v806
      %v938 = vsub.f32 0.0, %v617
      %v939 = vsub.f32 0.0, %v619
      %v940 = vsub.f32 0.0, %v810
      %v941 = vsub.f32 0.0, %v812
      %v942 = vsub.f32 0.0, %v621
      %v943 = vsub.f32 0.0, %v623
      %v944 = vsub.f32 0.0, %v814
      %v945 = vsub.f32 0.0, %v816
      %v946 = vmul.f32 %v818, 1.442695
      %v947 = vpow.pop %v946
      %v948 = vmul.f32 %v819, 1.442695
      %v949 = vpow.pop %v948
      %v950 = vmul.f32 %v820, 1.442695
      %v951 = vpow.pop %v950
      %v952 = vmul.f32 %v821, 1.442695
      %v953 = vpow.pop %v952
      %v954 = vmul.f32 %v822, 1.442695
      %v955 = vpow.pop %v954
      %v956 = vmul.f32 %v823, 1.442695
      %v957 = vpow.pop %v956
      %v958 = vmul.f32 %v824, 1.442695
      %v959 = vpow.pop %v958
      %v960 = vmul.f32 %v825, 1.442695
      %v961 = vpow.pop %v960
      %v962 = vmul.f32 %v826, 1.442695
      %v963 = vpow.pop %v962
      %v964 = vmul.f32 %v827, 1.442695
      %v965 = vpow.pop %v964
      %v966 = vmul.f32 %v828, 1.442695
      %v967 = vpow.pop %v966
      %v968 = vmul.f32 %v829, 1.442695
      %v969 = vpow.pop %v968
      %v970 = vmul.f32 %v830, 1.442695
      %v971 = vpow.pop %v970
      %v972 = vmul.f32 %v831, 1.442695
      %v973 = vpow.pop %v972
      %v974 = vmul.f32 %v832, 1.442695
      %v975 = vpow.pop %v974
      %v976 = vmul.f32 %v833, 1.442695
      %v977 = vpow.pop %v976
      %v978 = vmul.f32 %v834, 1.442695
      %v979 = vpow.pop %v978
      %v980 = vmul.f32 %v835, 1.442695
      %v981 = vpow.pop %v980
      %v982 = vmul.f32 %v836, 1.442695
      %v983 = vpow.pop %v982
      %v984 = vmul.f32 %v837, 1.442695
      %v985 = vpow.pop %v984
      %v986 = vmul.f32 %v838, 1.442695
      %v987 = vpow.pop %v986
      %v988 = vmul.f32 %v839, 1.442695
      %v989 = vpow.pop %v988
      %v990 = vmul.f32 %v840, 1.442695
      %v991 = vpow.pop %v990
      %v992 = vmul.f32 %v841, 1.442695
      %v993 = vpow.pop %v992
      %v994 = vmul.f32 %v842, 1.442695
      %v995 = vpow.pop %v994
      %v996 = vmul.f32 %v843, 1.442695
      %v997 = vpow.pop %v996
      %v998 = vmul.f32 %v844, 1.442695
      %v999 = vpow.pop %v998
      %v1000 = vmul.f32 %v845, 1.442695
      %v1001 = vpow.pop %v1000
      %v1002 = vmul.f32 %v846, 1.442695
      %v1003 = vpow.pop %v1002
      %v1004 = vmul.f32 %v847, 1.442695
      %v1005 = vpow.pop %v1004
      %v1006 = vmul.f32 %v848, 1.442695
      %v1007 = vpow.pop %v1006
      %v1008 = vmul.f32 %v849, 1.442695
      %v1009 = vpow.pop %v1008
      %v1010 = vmul.f32 %v850, 1.442695
      %v1011 = vpow.pop %v1010
      %v1012 = vmul.f32 %v851, 1.442695
      %v1013 = vpow.pop %v1012
      %v1014 = vmul.f32 %v852, 1.442695
      %v1015 = vpow.pop %v1014
      %v1016 = vmul.f32 %v853, 1.442695
      %v1017 = vpow.pop %v1016
      %v1018 = vmul.f32 %v854, 1.442695
      %v1019 = vpow.pop %v1018
      %v1020 = vmul.f32 %v855, 1.442695
      %v1021 = vpow.pop %v1020
      %v1022 = vmul.f32 %v856, 1.442695
      %v1023 = vpow.pop %v1022
      %v1024 = vmul.f32 %v857, 1.442695
      %v1025 = vpow.pop %v1024
      %v1026 = vmul.f32 %v858, 1.442695
      %v1027 = vpow.pop %v1026
      %v1028 = vmul.f32 %v859, 1.442695
      %v1029 = vpow.pop %v1028
      %v1030 = vmul.f32 %v860, 1.442695
      %v1031 = vpow.pop %v1030
      %v1032 = vmul.f32 %v861, 1.442695
      %v1033 = vpow.pop %v1032
      %v1034 = vmul.f32 %v862, 1.442695
      %v1035 = vpow.pop %v1034
      %v1036 = vmul.f32 %v863, 1.442695
      %v1037 = vpow.pop %v1036
      %v1038 = vmul.f32 %v864, 1.442695
      %v1039 = vpow.pop %v1038
      %v1040 = vmul.f32 %v865, 1.442695
      %v1041 = vpow.pop %v1040
      %v1042 = vmul.f32 %v866, 1.442695
      %v1043 = vpow.pop %v1042
      %v1044 = vmul.f32 %v867, 1.442695
      %v1045 = vpow.pop %v1044
      %v1046 = vmul.f32 %v868, 1.442695
      %v1047 = vpow.pop %v1046
      %v1048 = vmul.f32 %v869, 1.442695
      %v1049 = vpow.pop %v1048
      %v1050 = vmul.f32 %v870, 1.442695
      %v1051 = vpow.pop %v1050
      %v1052 = vmul.f32 %v871, 1.442695
      %v1053 = vpow.pop %v1052
      %v1054 = vmul.f32 %v872, 1.442695
      %v1055 = vpow.pop %v1054
      %v1056 = vmul.f32 %v873, 1.442695
      %v1057 = vpow.pop %v1056
      %v1058 = vmul.f32 %v874, 1.442695
      %v1059 = vpow.pop %v1058
      %v1060 = vmul.f32 %v875, 1.442695
      %v1061 = vpow.pop %v1060
      %v1062 = vmul.f32 %v876, 1.442695
      %v1063 = vpow.pop %v1062
      %v1064 = vmul.f32 %v877, 1.442695
      %v1065 = vpow.pop %v1064
      %v1066 = vmul.f32 %v878, 1.442695
      %v1067 = vpow.pop %v1066
      %v1068 = vmul.f32 %v879, 1.442695
      %v1069 = vpow.pop %v1068
      %v1070 = vmul.f32 %v880, 1.442695
      %v1071 = vpow.pop %v1070
      %v1072 = vmul.f32 %v881, 1.442695
      %v1073 = vpow.pop %v1072
      %v1074 = vmul.f32 %v882, 1.442695
      %v1075 = vpow.pop %v1074
      %v1076 = vmul.f32 %v883, 1.442695
      %v1077 = vpow.pop %v1076
      %v1078 = vmul.f32 %v884, 1.442695
      %v1079 = vpow.pop %v1078
      %v1080 = vmul.f32 %v885, 1.442695
      %v1081 = vpow.pop %v1080
      %v1082 = vmul.f32 %v886, 1.442695
      %v1083 = vpow.pop %v1082
      %v1084 = vmul.f32 %v887, 1.442695
      %v1085 = vpow.pop %v1084
      %v1086 = vmul.f32 %v888, 1.442695
      %v1087 = vpow.pop %v1086
      %v1088 = vmul.f32 %v889, 1.442695
      %v1089 = vpow.pop %v1088
      %v1090 = vmul.f32 %v890, 1.442695
      %v1091 = vpow.pop %v1090
      %v1092 = vmul.f32 %v891, 1.442695
      %v1093 = vpow.pop %v1092
      %v1094 = vmul.f32 %v892, 1.442695
      %v1095 = vpow.pop %v1094
      %v1096 = vmul.f32 %v893, 1.442695
      %v1097 = vpow.pop %v1096
      %v1098 = vmul.f32 %v894, 1.442695
      %v1099 = vpow.pop %v1098
      %v1100 = vmul.f32 %v895, 1.442695
      %v1101 = vpow.pop %v1100
      %v1102 = vmul.f32 %v896, 1.442695
      %v1103 = vpow.pop %v1102
      %v1104 = vmul.f32 %v897, 1.442695
      %v1105 = vpow.pop %v1104
      %v1106 = vmul.f32 %v898, 1.442695
      %v1107 = vpow.pop %v1106
      %v1108 = vmul.f32 %v899, 1.442695
      %v1109 = vpow.pop %v1108
      %v1110 = vmul.f32 %v900, 1.442695
      %v1111 = vpow.pop %v1110
      %v1112 = vmul.f32 %v901, 1.442695
      %v1113 = vpow.pop %v1112
      %v1114 = vmul.f32 %v902, 1.442695
      %v1115 = vpow.pop %v1114
      %v1116 = vmul.f32 %v903, 1.442695
      %v1117 = vpow.pop %v1116
      %v1118 = vmul.f32 %v904, 1.442695
      %v1119 = vpow.pop %v1118
      %v1120 = vmul.f32 %v905, 1.442695
      %v1121 = vpow.pop %v1120
      %v1122 = vmul.f32 %v906, 1.442695
      %v1123 = vpow.pop %v1122
      %v1124 = vmul.f32 %v907, 1.442695
      %v1125 = vpow.pop %v1124
      %v1126 = vmul.f32 %v908, 1.442695
      %v1127 = vpow.pop %v1126
      %v1128 = vmul.f32 %v909, 1.442695
      %v1129 = vpow.pop %v1128
      %v1130 = vmul.f32 %v910, 1.442695
      %v1131 = vpow.pop %v1130
      %v1132 = vmul.f32 %v911, 1.442695
      %v1133 = vpow.pop %v1132
      %v1134 = vmul.f32 %v912, 1.442695
      %v1135 = vpow.pop %v1134
      %v1136 = vmul.f32 %v913, 1.442695
      %v1137 = vpow.pop %v1136
      %v1138 = vmul.f32 %v914, 1.442695
      %v1139 = vpow.pop %v1138
      %v1140 = vmul.f32 %v915, 1.442695
      %v1141 = vpow.pop %v1140
      %v1142 = vmul.f32 %v916, 1.442695
      %v1143 = vpow.pop %v1142
      %v1144 = vmul.f32 %v917, 1.442695
      %v1145 = vpow.pop %v1144
      %v1146 = vmul.f32 %v918, 1.442695
      %v1147 = vpow.pop %v1146
      %v1148 = vmul.f32 %v919, 1.442695
      %v1149 = vpow.pop %v1148
      %v1150 = vmul.f32 %v920, 1.442695
      %v1151 = vpow.pop %v1150
      %v1152 = vmul.f32 %v921, 1.442695
      %v1153 = vpow.pop %v1152
      %v1154 = vmul.f32 %v922, 1.442695
      %v1155 = vpow.pop %v1154
      %v1156 = vmul.f32 %v923, 1.442695
      %v1157 = vpow.pop %v1156
      %v1158 = vmul.f32 %v924, 1.442695
      %v1159 = vpow.pop %v1158
      %v1160 = vmul.f32 %v925, 1.442695
      %v1161 = vpow.pop %v1160
      %v1162 = vmul.f32 %v926, 1.442695
      %v1163 = vpow.pop %v1162
      %v1164 = vmul.f32 %v927, 1.442695
      %v1165 = vpow.pop %v1164
      %v1166 = vmul.f32 %v928, 1.442695
      %v1167 = vpow.pop %v1166
      %v1168 = vmul.f32 %v929, 1.442695
      %v1169 = vpow.pop %v1168
      %v1170 = vmul.f32 %v930, 1.442695
      %v1171 = vpow.pop %v1170
      %v1172 = vmul.f32 %v931, 1.442695
      %v1173 = vpow.pop %v1172
      %v1174 = vmul.f32 %v932, 1.442695
      %v1175 = vpow.pop %v1174
      %v1176 = vmul.f32 %v933, 1.442695
      %v1177 = vpow.pop %v1176
      %v1178 = vmul.f32 %v934, 1.442695
      %v1179 = vpow.pop %v1178
      %v1180 = vmul.f32 %v935, 1.442695
      %v1181 = vpow.pop %v1180
      %v1182 = vmul.f32 %v936, 1.442695
      %v1183 = vpow.pop %v1182
      %v1184 = vmul.f32 %v937, 1.442695
      %v1185 = vpow.pop %v1184
      %v1186 = vmul.f32 %v938, 1.442695
      %v1187 = vpow.pop %v1186
      %v1188 = vmul.f32 %v939, 1.442695
      %v1189 = vpow.pop %v1188
      %v1190 = vmul.f32 %v940, 1.442695
      %v1191 = vpow.pop %v1190
      %v1192 = vmul.f32 %v941, 1.442695
      %v1193 = vpow.pop %v1192
      %v1194 = vmul.f32 %v942, 1.442695
      %v1195 = vpow.pop %v1194
      %v1196 = vmul.f32 %v943, 1.442695
      %v1197 = vpow.pop %v1196
      %v1198 = vmul.f32 %v944, 1.442695
      %v1199 = vpow.pop %v1198
      %v1200 = vmul.f32 %v945, 1.442695
      %v1201 = vpow.pop %v1200
      %v1202 = vadd.f32 %v947, 1.0
      %v1203 = vadd.f32 %v949, 1.0
      %v1204 = vadd.f32 %v951, 1.0
      %v1205 = vadd.f32 %v953, 1.0
      %v1206 = vadd.f32 %v955, 1.0
      %v1207 = vadd.f32 %v957, 1.0
      %v1208 = vadd.f32 %v959, 1.0
      %v1209 = vadd.f32 %v961, 1.0
      %v1210 = vadd.f32 %v963, 1.0
      %v1211 = vadd.f32 %v965, 1.0
      %v1212 = vadd.f32 %v967, 1.0
      %v1213 = vadd.f32 %v969, 1.0
      %v1214 = vadd.f32 %v971, 1.0
      %v1215 = vadd.f32 %v973, 1.0
      %v1216 = vadd.f32 %v975, 1.0
      %v1217 = vadd.f32 %v977, 1.0
      %v1218 = vadd.f32 %v979, 1.0
      %v1219 = vadd.f32 %v981, 1.0
      %v1220 = vadd.f32 %v983, 1.0
      %v1221 = vadd.f32 %v985, 1.0
      %v1222 = vadd.f32 %v987, 1.0
      %v1223 = vadd.f32 %v989, 1.0
      %v1224 = vadd.f32 %v991, 1.0
      %v1225 = vadd.f32 %v993, 1.0
      %v1226 = vadd.f32 %v995, 1.0
      %v1227 = vadd.f32 %v997, 1.0
      %v1228 = vadd.f32 %v999, 1.0
      %v1229 = vadd.f32 %v1001, 1.0
      %v1230 = vadd.f32 %v1003, 1.0
      %v1231 = vadd.f32 %v1005, 1.0
      %v1232 = vadd.f32 %v1007, 1.0
      %v1233 = vadd.f32 %v1009, 1.0
      %v1234 = vadd.f32 %v1011, 1.0
      %v1235 = vadd.f32 %v1013, 1.0
      %v1236 = vadd.f32 %v1015, 1.0
      %v1237 = vadd.f32 %v1017, 1.0
      %v1238 = vadd.f32 %v1019, 1.0
      %v1239 = vadd.f32 %v1021, 1.0
      %v1240 = vadd.f32 %v1023, 1.0
      %v1241 = vadd.f32 %v1025, 1.0
      %v1242 = vadd.f32 %v1027, 1.0
      %v1243 = vadd.f32 %v1029, 1.0
      %v1244 = vadd.f32 %v1031, 1.0
      %v1245 = vadd.f32 %v1033, 1.0
      %v1246 = vadd.f32 %v1035, 1.0
      %v1247 = vadd.f32 %v1037, 1.0
      %v1248 = vadd.f32 %v1039, 1.0
      %v1249 = vadd.f32 %v1041, 1.0
      %v1250 = vadd.f32 %v1043, 1.0
      %v1251 = vadd.f32 %v1045, 1.0
      %v1252 = vadd.f32 %v1047, 1.0
      %v1253 = vadd.f32 %v1049, 1.0
      %v1254 = vadd.f32 %v1051, 1.0
      %v1255 = vadd.f32 %v1053, 1.0
      %v1256 = vadd.f32 %v1055, 1.0
      %v1257 = vadd.f32 %v1057, 1.0
      %v1258 = vadd.f32 %v1059, 1.0
      %v1259 = vadd.f32 %v1061, 1.0
      %v1260 = vadd.f32 %v1063, 1.0
      %v1261 = vadd.f32 %v1065, 1.0
      %v1262 = vadd.f32 %v1067, 1.0
      %v1263 = vadd.f32 %v1069, 1.0
      %v1264 = vadd.f32 %v1071, 1.0
      %v1265 = vadd.f32 %v1073, 1.0
      %v1266 = vadd.f32 %v1075, 1.0
      %v1267 = vadd.f32 %v1077, 1.0
      %v1268 = vadd.f32 %v1079, 1.0
      %v1269 = vadd.f32 %v1081, 1.0
      %v1270 = vadd.f32 %v1083, 1.0
      %v1271 = vadd.f32 %v1085, 1.0
      %v1272 = vadd.f32 %v1087, 1.0
      %v1273 = vadd.f32 %v1089, 1.0
      %v1274 = vadd.f32 %v1091, 1.0
      %v1275 = vadd.f32 %v1093, 1.0
      %v1276 = vadd.f32 %v1095, 1.0
      %v1277 = vadd.f32 %v1097, 1.0
      %v1278 = vadd.f32 %v1099, 1.0
      %v1279 = vadd.f32 %v1101, 1.0
      %v1280 = vadd.f32 %v1103, 1.0
      %v1281 = vadd.f32 %v1105, 1.0
      %v1282 = vadd.f32 %v1107, 1.0
      %v1283 = vadd.f32 %v1109, 1.0
      %v1284 = vadd.f32 %v1111, 1.0
      %v1285 = vadd.f32 %v1113, 1.0
      %v1286 = vadd.f32 %v1115, 1.0
      %v1287 = vadd.f32 %v1117, 1.0
      %v1288 = vadd.f32 %v1119, 1.0
      %v1289 = vadd.f32 %v1121, 1.0
      %v1290 = vadd.f32 %v1123, 1.0
      %v1291 = vadd.f32 %v1125, 1.0
      %v1292 = vadd.f32 %v1127, 1.0
      %v1293 = vadd.f32 %v1129, 1.0
      %v1294 = vadd.f32 %v1131, 1.0
      %v1295 = vadd.f32 %v1133, 1.0
      %v1296 = vadd.f32 %v1135, 1.0
      %v1297 = vadd.f32 %v1137, 1.0
      %v1298 = vadd.f32 %v1139, 1.0
      %v1299 = vadd.f32 %v1141, 1.0
      %v1300 = vadd.f32 %v1143, 1.0
      %v1301 = vadd.f32 %v1145, 1.0
      %v1302 = vadd.f32 %v1147, 1.0
      %v1303 = vadd.f32 %v1149, 1.0
      %v1304 = vadd.f32 %v1151, 1.0
      %v1305 = vadd.f32 %v1153, 1.0
      %v1306 = vadd.f32 %v1155, 1.0
      %v1307 = vadd.f32 %v1157, 1.0
      %v1308 = vadd.f32 %v1159, 1.0
      %v1309 = vadd.f32 %v1161, 1.0
      %v1310 = vadd.f32 %v1163, 1.0
      %v1311 = vadd.f32 %v1165, 1.0
      %v1312 = vadd.f32 %v1167, 1.0
      %v1313 = vadd.f32 %v1169, 1.0
      %v1314 = vadd.f32 %v1171, 1.0
      %v1315 = vadd.f32 %v1173, 1.0
      %v1316 = vadd.f32 %v1175, 1.0
      %v1317 = vadd.f32 %v1177, 1.0
      %v1318 = vadd.f32 %v1179, 1.0
      %v1319 = vadd.f32 %v1181, 1.0
      %v1320 = vadd.f32 %v1183, 1.0
      %v1321 = vadd.f32 %v1185, 1.0
      %v1322 = vadd.f32 %v1187, 1.0
      %v1323 = vadd.f32 %v1189, 1.0
      %v1324 = vadd.f32 %v1191, 1.0
      %v1325 = vadd.f32 %v1193, 1.0
      %v1326 = vadd.f32 %v1195, 1.0
      %v1327 = vadd.f32 %v1197, 1.0
      %v1328 = vadd.f32 %v1199, 1.0
      %v1329 = vadd.f32 %v1201, 1.0
      %v1330 = vrcp.pop %v1202
      %v1331 = vmul.f32 1.0, %v1330
      %v1332 = vrcp.pop %v1203
      %v1333 = vmul.f32 1.0, %v1332
      %v1334 = vrcp.pop %v1204
      %v1335 = vmul.f32 1.0, %v1334
      %v1336 = vrcp.pop %v1205
      %v1337 = vmul.f32 1.0, %v1336
      %v1338 = vrcp.pop %v1206
      %v1339 = vmul.f32 1.0, %v1338
      %v1340 = vrcp.pop %v1207
      %v1341 = vmul.f32 1.0, %v1340
      %v1342 = vrcp.pop %v1208
      %v1343 = vmul.f32 1.0, %v1342
      %v1344 = vrcp.pop %v1209
      %v1345 = vmul.f32 1.0, %v1344
      %v1346 = vrcp.pop %v1210
      %v1347 = vmul.f32 1.0, %v1346
      %v1348 = vrcp.pop %v1211
      %v1349 = vmul.f32 1.0, %v1348
      %v1350 = vrcp.pop %v1212
      %v1351 = vmul.f32 1.0, %v1350
      %v1352 = vrcp.pop %v1213
      %v1353 = vmul.f32 1.0, %v1352
      %v1354 = vrcp.pop %v1214
      %v1355 = vmul.f32 1.0, %v1354
      %v1356 = vrcp.pop %v1215
      %v1357 = vmul.f32 1.0, %v1356
      %v1358 = vrcp.pop %v1216
      %v1359 = vmul.f32 1.0, %v1358
      %v1360 = vrcp.pop %v1217
      %v1361 = vmul.f32 1.0, %v1360
      %v1362 = vrcp.pop %v1218
      %v1363 = vmul.f32 1.0, %v1362
      %v1364 = vrcp.pop %v1219
      %v1365 = vmul.f32 1.0, %v1364
      %v1366 = vrcp.pop %v1220
      %v1367 = vmul.f32 1.0, %v1366
      %v1368 = vrcp.pop %v1221
      %v1369 = vmul.f32 1.0, %v1368
      %v1370 = vrcp.pop %v1222
      %v1371 = vmul.f32 1.0, %v1370
      %v1372 = vrcp.pop %v1223
      %v1373 = vmul.f32 1.0, %v1372
      %v1374 = vrcp.pop %v1224
      %v1375 = vmul.f32 1.0, %v1374
      %v1376 = vrcp.pop %v1225
      %v1377 = vmul.f32 1.0, %v1376
      %v1378 = vrcp.pop %v1226
      %v1379 = vmul.f32 1.0, %v1378
      %v1380 = vrcp.pop %v1227
      %v1381 = vmul.f32 1.0, %v1380
      %v1382 = vrcp.pop %v1228
      %v1383 = vmul.f32 1.0, %v1382
      %v1384 = vrcp.pop %v1229
      %v1385 = vmul.f32 1.0, %v1384
      %v1386 = vrcp.pop %v1230
      %v1387 = vmul.f32 1.0, %v1386
      %v1388 = vrcp.pop %v1231
      %v1389 = vmul.f32 1.0, %v1388
      %v1390 = vrcp.pop %v1232
      %v1391 = vmul.f32 1.0, %v1390
      %v1392 = vrcp.pop %v1233
      %v1393 = vmul.f32 1.0, %v1392
      %v1394 = vrcp.pop %v1234
      %v1395 = vmul.f32 1.0, %v1394
      %v1396 = vrcp.pop %v1235
      %v1397 = vmul.f32 1.0, %v1396
      %v1398 = vrcp.pop %v1236
      %v1399 = vmul.f32 1.0, %v1398
      %v1400 = vrcp.pop %v1237
      %v1401 = vmul.f32 1.0, %v1400
      %v1402 = vrcp.pop %v1238
      %v1403 = vmul.f32 1.0, %v1402
      %v1404 = vrcp.pop %v1239
      %v1405 = vmul.f32 1.0, %v1404
      %v1406 = vrcp.pop %v1240
      %v1407 = vmul.f32 1.0, %v1406
      %v1408 = vrcp.pop %v1241
      %v1409 = vmul.f32 1.0, %v1408
      %v1410 = vrcp.pop %v1242
      %v1411 = vmul.f32 1.0, %v1410
      %v1412 = vrcp.pop %v1243
      %v1413 = vmul.f32 1.0, %v1412
      %v1414 = vrcp.pop %v1244
      %v1415 = vmul.f32 1.0, %v1414
      %v1416 = vrcp.pop %v1245
      %v1417 = vmul.f32 1.0, %v1416
      %v1418 = vrcp.pop %v1246
      %v1419 = vmul.f32 1.0, %v1418
      %v1420 = vrcp.pop %v1247
      %v1421 = vmul.f32 1.0, %v1420
      %v1422 = vrcp.pop %v1248
      %v1423 = vmul.f32 1.0, %v1422
      %v1424 = vrcp.pop %v1249
      %v1425 = vmul.f32 1.0, %v1424
      %v1426 = vrcp.pop %v1250
      %v1427 = vmul.f32 1.0, %v1426
      %v1428 = vrcp.pop %v1251
      %v1429 = vmul.f32 1.0, %v1428
      %v1430 = vrcp.pop %v1252
      %v1431 = vmul.f32 1.0, %v1430
      %v1432 = vrcp.pop %v1253
      %v1433 = vmul.f32 1.0, %v1432
      %v1434 = vrcp.pop %v1254
      %v1435 = vmul.f32 1.0, %v1434
      %v1436 = vrcp.pop %v1255
      %v1437 = vmul.f32 1.0, %v1436
      %v1438 = vrcp.pop %v1256
      %v1439 = vmul.f32 1.0, %v1438
      %v1440 = vrcp.pop %v1257
      %v1441 = vmul.f32 1.0, %v1440
      %v1442 = vrcp.pop %v1258
      %v1443 = vmul.f32 1.0, %v1442
      %v1444 = vrcp.pop %v1259
      %v1445 = vmul.f32 1.0, %v1444
      %v1446 = vrcp.pop %v1260
      %v1447 = vmul.f32 1.0, %v1446
      %v1448 = vrcp.pop %v1261
      %v1449 = vmul.f32 1.0, %v1448
      %v1450 = vrcp.pop %v1262
      %v1451 = vmul.f32 1.0, %v1450
      %v1452 = vrcp.pop %v1263
      %v1453 = vmul.f32 1.0, %v1452
      %v1454 = vrcp.pop %v1264
      %v1455 = vmul.f32 1.0, %v1454
      %v1456 = vrcp.pop %v1265
      %v1457 = vmul.f32 1.0, %v1456
      %v1458 = vrcp.pop %v1266
      %v1459 = vmul.f32 1.0, %v1458
      %v1460 = vrcp.pop %v1267
      %v1461 = vmul.f32 1.0, %v1460
      %v1462 = vrcp.pop %v1268
      %v1463 = vmul.f32 1.0, %v1462
      %v1464 = vrcp.pop %v1269
      %v1465 = vmul.f32 1.0, %v1464
      %v1466 = vrcp.pop %v1270
      %v1467 = vmul.f32 1.0, %v1466
      %v1468 = vrcp.pop %v1271
      %v1469 = vmul.f32 1.0, %v1468
      %v1470 = vrcp.pop %v1272
      %v1471 = vmul.f32 1.0, %v1470
      %v1472 = vrcp.pop %v1273
      %v1473 = vmul.f32 1.0, %v1472
      %v1474 = vrcp.pop %v1274
      %v1475 = vmul.f32 1.0, %v1474
      %v1476 = vrcp.pop %v1275
      %v1477 = vmul.f32 1.0, %v1476
      %v1478 = vrcp.pop %v1276
      %v1479 = vmul.f32 1.0, %v1478
      %v1480 = vrcp.pop %v1277
      %v1481 = vmul.f32 1.0, %v1480
      %v1482 = vrcp.pop %v1278
      %v1483 = vmul.f32 1.0, %v1482
      %v1484 = vrcp.pop %v1279
      %v1485 = vmul.f32 1.0, %v1484
      %v1486 = vrcp.pop %v1280
      %v1487 = vmul.f32 1.0, %v1486
      %v1488 = vrcp.pop %v1281
      %v1489 = vmul.f32 1.0, %v1488
      %v1490 = vrcp.pop %v1282
      %v1491 = vmul.f32 1.0, %v1490
      %v1492 = vrcp.pop %v1283
      %v1493 = vmul.f32 1.0, %v1492
      %v1494 = vrcp.pop %v1284
      %v1495 = vmul.f32 1.0, %v1494
      %v1496 = vrcp.pop %v1285
      %v1497 = vmul.f32 1.0, %v1496
      %v1498 = vrcp.pop %v1286
      %v1499 = vmul.f32 1.0, %v1498
      %v1500 = vrcp.pop %v1287
      %v1501 = vmul.f32 1.0, %v1500
      %v1502 = vrcp.pop %v1288
      %v1503 = vmul.f32 1.0, %v1502
      %v1504 = vrcp.pop %v1289
      %v1505 = vmul.f32 1.0, %v1504
      %v1506 = vrcp.pop %v1290
      %v1507 = vmul.f32 1.0, %v1506
      %v1508 = vrcp.pop %v1291
      %v1509 = vmul.f32 1.0, %v1508
      %v1510 = vrcp.pop %v1292
      %v1511 = vmul.f32 1.0, %v1510
      %v1512 = vrcp.pop %v1293
      %v1513 = vmul.f32 1.0, %v1512
      %v1514 = vrcp.pop %v1294
      %v1515 = vmul.f32 1.0, %v1514
      %v1516 = vrcp.pop %v1295
      %v1517 = vmul.f32 1.0, %v1516
      %v1518 = vrcp.pop %v1296
      %v1519 = vmul.f32 1.0, %v1518
      %v1520 = vrcp.pop %v1297
      %v1521 = vmul.f32 1.0, %v1520
      %v1522 = vrcp.pop %v1298
      %v1523 = vmul.f32 1.0, %v1522
      %v1524 = vrcp.pop %v1299
      %v1525 = vmul.f32 1.0, %v1524
      %v1526 = vrcp.pop %v1300
      %v1527 = vmul.f32 1.0, %v1526
      %v1528 = vrcp.pop %v1301
      %v1529 = vmul.f32 1.0, %v1528
      %v1530 = vrcp.pop %v1302
      %v1531 = vmul.f32 1.0, %v1530
      %v1532 = vrcp.pop %v1303
      %v1533 = vmul.f32 1.0, %v1532
      %v1534 = vrcp.pop %v1304
      %v1535 = vmul.f32 1.0, %v1534
      %v1536 = vrcp.pop %v1305
      %v1537 = vmul.f32 1.0, %v1536
      %v1538 = vrcp.pop %v1306
      %v1539 = vmul.f32 1.0, %v1538
      %v1540 = vrcp.pop %v1307
      %v1541 = vmul.f32 1.0, %v1540
      %v1542 = vrcp.pop %v1308
      %v1543 = vmul.f32 1.0, %v1542
      %v1544 = vrcp.pop %v1309
      %v1545 = vmul.f32 1.0, %v1544
      %v1546 = vrcp.pop %v1310
      %v1547 = vmul.f32 1.0, %v1546
      %v1548 = vrcp.pop %v1311
      %v1549 = vmul.f32 1.0, %v1548
      %v1550 = vrcp.pop %v1312
      %v1551 = vmul.f32 1.0, %v1550
      %v1552 = vrcp.pop %v1313
      %v1553 = vmul.f32 1.0, %v1552
      %v1554 = vrcp.pop %v1314
      %v1555 = vmul.f32 1.0, %v1554
      %v1556 = vrcp.pop %v1315
      %v1557 = vmul.f32 1.0, %v1556
      %v1558 = vrcp.pop %v1316
      %v1559 = vmul.f32 1.0, %v1558
      %v1560 = vrcp.pop %v1317
      %v1561 = vmul.f32 1.0, %v1560
      %v1562 = vrcp.pop %v1318
      %v1563 = vmul.f32 1.0, %v1562
      %v1564 = vrcp.pop %v1319
      %v1565 = vmul.f32 1.0, %v1564
      %v1566 = vrcp.pop %v1320
      %v1567 = vmul.f32 1.0, %v1566
      %v1568 = vrcp.pop %v1321
      %v1569 = vmul.f32 1.0, %v1568
      %v1570 = vrcp.pop %v1322
      %v1571 = vmul.f32 1.0, %v1570
      %v1572 = vrcp.pop %v1323
      %v1573 = vmul.f32 1.0, %v1572
      %v1574 = vrcp.pop %v1324
      %v1575 = vmul.f32 1.0, %v1574
      %v1576 = vrcp.pop %v1325
      %v1577 = vmul.f32 1.0, %v1576
      %v1578 = vrcp.pop %v1326
      %v1579 = vmul.f32 1.0, %v1578
      %v1580 = vrcp.pop %v1327
      %v1581 = vmul.f32 1.0, %v1580
      %v1582 = vrcp.pop %v1328
      %v1583 = vmul.f32 1.0, %v1582
      %v1584 = vrcp.pop %v1329
      %v1585 = vmul.f32 1.0, %v1584
      %1586 = vst [vmem:[%s147] sm:$0xff] %v1331
      %1587 = vst [vmem:[%s147 + $0x8] sm:$0xff] %v1333
      %1588 = vst [vmem:[%s147 + $0x10] sm:$0xff] %v1335
      %1589 = vst [vmem:[%s147 + $0x18] sm:$0xff] %v1337
      %1590 = vst [vmem:[%s147 + $0x20] sm:$0xff] %v1339
      %1591 = vst [vmem:[%s147 + $0x28] sm:$0xff] %v1341
      %1592 = vst [vmem:[%s147 + $0x30] sm:$0xff] %v1343
      %1593 = vst [vmem:[%s147 + $0x38] sm:$0xff] %v1345
      %1594 = vst [vmem:[%s147 + $0x40] sm:$0xff] %v1347
      %1595 = vst [vmem:[%s147 + $0x48] sm:$0xff] %v1349
      %1596 = vst [vmem:[%s147 + $0x50] sm:$0xff] %v1351
      %1597 = vst [vmem:[%s147 + $0x58] sm:$0xff] %v1353
      %1598 = vst [vmem:[%s147 + $0x60] sm:$0xff] %v1355
      %1599 = vst [vmem:[%s147 + $0x68] sm:$0xff] %v1357
      %1600 = vst [vmem:[%s147 + $0x70] sm:$0xff] %v1359
      %1601 = vst [vmem:[%s147 + $0x78] sm:$0xff] %v1361
      %1602 = vst [vmem:[%s147 + $0x80] sm:$0xff] %v1363
      %1603 = vst [vmem:[%s147 + $0x88] sm:$0xff] %v1365
      %1604 = vst [vmem:[%s147 + $0x90] sm:$0xff] %v1367
      %1605 = vst [vmem:[%s147 + $0x98] sm:$0xff] %v1369
      %1606 = vst [vmem:[%s147 + $0xa0] sm:$0xff] %v1371
      %1607 = vst [vmem:[%s147 + $0xa8] sm:$0xff] %v1373
      %1608 = vst [vmem:[%s147 + $0xb0] sm:$0xff] %v1375
      %1609 = vst [vmem:[%s147 + $0xb8] sm:$0xff] %v1377
      %1610 = vst [vmem:[%s147 + $0xc0] sm:$0xff] %v1379
      %1611 = vst [vmem:[%s147 + $0xc8] sm:$0xff] %v1381
      %1612 = vst [vmem:[%s147 + $0xd0] sm:$0xff] %v1383
      %1613 = vst [vmem:[%s147 + $0xd8] sm:$0xff] %v1385
      %1614 = vst [vmem:[%s147 + $0xe0] sm:$0xff] %v1387
      %1615 = vst [vmem:[%s147 + $0xe8] sm:$0xff] %v1389
      %1616 = vst [vmem:[%s147 + $0xf0] sm:$0xff] %v1391
      %1617 = vst [vmem:[%s147 + $0xf8] sm:$0xff] %v1393
      %1618 = vst [vmem:[%s147 + $0x100] sm:$0xff] %v1395
      %1619 = vst [vmem:[%s147 + $0x108] sm:$0xff] %v1397
      %1620 = vst [vmem:[%s147 + $0x110] sm:$0xff] %v1399
      %1621 = vst [vmem:[%s147 + $0x118] sm:$0xff] %v1401
      %1622 = vst [vmem:[%s147 + $0x120] sm:$0xff] %v1403
      %1623 = vst [vmem:[%s147 + $0x128] sm:$0xff] %v1405
      %1624 = vst [vmem:[%s147 + $0x130] sm:$0xff] %v1407
      %1625 = vst [vmem:[%s147 + $0x138] sm:$0xff] %v1409
      %1626 = vst [vmem:[%s147 + $0x140] sm:$0xff] %v1411
      %1627 = vst [vmem:[%s147 + $0x148] sm:$0xff] %v1413
      %1628 = vst [vmem:[%s147 + $0x150] sm:$0xff] %v1415
      %1629 = vst [vmem:[%s147 + $0x158] sm:$0xff] %v1417
      %1630 = vst [vmem:[%s147 + $0x160] sm:$0xff] %v1419
      %1631 = vst [vmem:[%s147 + $0x168] sm:$0xff] %v1421
      %1632 = vst [vmem:[%s147 + $0x170] sm:$0xff] %v1423
      %1633 = vst [vmem:[%s147 + $0x178] sm:$0xff] %v1425
      %1634 = vst [vmem:[%s147 + $0x180] sm:$0xff] %v1427
      %1635 = vst [vmem:[%s147 + $0x188] sm:$0xff] %v1429
      %1636 = vst [vmem:[%s147 + $0x190] sm:$0xff] %v1431
      %1637 = vst [vmem:[%s147 + $0x198] sm:$0xff] %v1433
      %1638 = vst [vmem:[%s147 + $0x1a0] sm:$0xff] %v1435
      %1639 = vst [vmem:[%s147 + $0x1a8] sm:$0xff] %v1437
      %1640 = vst [vmem:[%s147 + $0x1b0] sm:$0xff] %v1439
      %1641 = vst [vmem:[%s147 + $0x1b8] sm:$0xff] %v1441
      %1642 = vst [vmem:[%s147 + $0x1c0] sm:$0xff] %v1443
      %1643 = vst [vmem:[%s147 + $0x1c8] sm:$0xff] %v1445
      %1644 = vst [vmem:[%s147 + $0x1d0] sm:$0xff] %v1447
      %1645 = vst [vmem:[%s147 + $0x1d8] sm:$0xff] %v1449
      %1646 = vst [vmem:[%s147 + $0x1e0] sm:$0xff] %v1451
      %1647 = vst [vmem:[%s147 + $0x1e8] sm:$0xff] %v1453
      %1648 = vst [vmem:[%s147 + $0x1f0] sm:$0xff] %v1455
      %1649 = vst [vmem:[%s147 + $0x1f8] sm:$0xff] %v1457
      %1650 = vst [vmem:[%s147 + $0x200] sm:$0xff] %v1459
      %1651 = vst [vmem:[%s147 + $0x208] sm:$0xff] %v1461
      %1652 = vst [vmem:[%s147 + $0x210] sm:$0xff] %v1463
      %1653 = vst [vmem:[%s147 + $0x218] sm:$0xff] %v1465
      %1654 = vst [vmem:[%s147 + $0x220] sm:$0xff] %v1467
      %1655 = vst [vmem:[%s147 + $0x228] sm:$0xff] %v1469
      %1656 = vst [vmem:[%s147 + $0x230] sm:$0xff] %v1471
      %1657 = vst [vmem:[%s147 + $0x238] sm:$0xff] %v1473
      %1658 = vst [vmem:[%s147 + $0x240] sm:$0xff] %v1475
      %1659 = vst [vmem:[%s147 + $0x248] sm:$0xff] %v1477
      %1660 = vst [vmem:[%s147 + $0x250] sm:$0xff] %v1479
      %1661 = vst [vmem:[%s147 + $0x258] sm:$0xff] %v1481
      %1662 = vst [vmem:[%s147 + $0x260] sm:$0xff] %v1483
      %1663 = vst [vmem:[%s147 + $0x268] sm:$0xff] %v1485
      %1664 = vst [vmem:[%s147 + $0x270] sm:$0xff] %v1487
      %1665 = vst [vmem:[%s147 + $0x278] sm:$0xff] %v1489
      %1666 = vst [vmem:[%s147 + $0x280] sm:$0xff] %v1491
      %1667 = vst [vmem:[%s147 + $0x288] sm:$0xff] %v1493
      %1668 = vst [vmem:[%s147 + $0x290] sm:$0xff] %v1495
      %1669 = vst [vmem:[%s147 + $0x298] sm:$0xff] %v1497
      %1670 = vst [vmem:[%s147 + $0x2a0] sm:$0xff] %v1499
      %1671 = vst [vmem:[%s147 + $0x2a8] sm:$0xff] %v1501
      %1672 = vst [vmem:[%s147 + $0x2b0] sm:$0xff] %v1503
      %1673 = vst [vmem:[%s147 + $0x2b8] sm:$0xff] %v1505
      %1674 = vst [vmem:[%s147 + $0x2c0] sm:$0xff] %v1507
      %1675 = vst [vmem:[%s147 + $0x2c8] sm:$0xff] %v1509
      %1676 = vst [vmem:[%s147 + $0x2d0] sm:$0xff] %v1511
      %1677 = vst [vmem:[%s147 + $0x2d8] sm:$0xff] %v1513
      %1678 = vst [vmem:[%s147 + $0x2e0] sm:$0xff] %v1515
      %1679 = vst [vmem:[%s147 + $0x2e8] sm:$0xff] %v1517
      %1680 = vst [vmem:[%s147 + $0x2f0] sm:$0xff] %v1519
      %1681 = vst [vmem:[%s147 + $0x2f8] sm:$0xff] %v1521
      %1682 = vst [vmem:[%s147 + $0x300] sm:$0xff] %v1523
      %1683 = vst [vmem:[%s147 + $0x308] sm:$0xff] %v1525
      %1684 = vst [vmem:[%s147 + $0x310] sm:$0xff] %v1527
      %1685 = vst [vmem:[%s147 + $0x318] sm:$0xff] %v1529
      %1686 = vst [vmem:[%s147 + $0x320] sm:$0xff] %v1531
      %1687 = vst [vmem:[%s147 + $0x328] sm:$0xff] %v1533
      %1688 = vst [vmem:[%s147 + $0x330] sm:$0xff] %v1535
      %1689 = vst [vmem:[%s147 + $0x338] sm:$0xff] %v1537
      %1690 = vst [vmem:[%s147 + $0x340] sm:$0xff] %v1539
      %1691 = vst [vmem:[%s147 + $0x348] sm:$0xff] %v1541
      %1692 = vst [vmem:[%s147 + $0x350] sm:$0xff] %v1543
      %1693 = vst [vmem:[%s147 + $0x358] sm:$0xff] %v1545
      %1694 = vst [vmem:[%s147 + $0x360] sm:$0xff] %v1547
      %1695 = vst [vmem:[%s147 + $0x368] sm:$0xff] %v1549
      %1696 = vst [vmem:[%s147 + $0x370] sm:$0xff] %v1551
      %1697 = vst [vmem:[%s147 + $0x378] sm:$0xff] %v1553
      %1698 = vst [vmem:[%s147 + $0x380] sm:$0xff] %v1555
      %1699 = vst [vmem:[%s147 + $0x388] sm:$0xff] %v1557
      %1700 = vst [vmem:[%s147 + $0x390] sm:$0xff] %v1559
      %1701 = vst [vmem:[%s147 + $0x398] sm:$0xff] %v1561
      %1702 = vst [vmem:[%s147 + $0x3a0] sm:$0xff] %v1563
      %1703 = vst [vmem:[%s147 + $0x3a8] sm:$0xff] %v1565
      %1704 = vst [vmem:[%s147 + $0x3b0] sm:$0xff] %v1567
      %1705 = vst [vmem:[%s147 + $0x3b8] sm:$0xff] %v1569
      %1706 = vst [vmem:[%s147 + $0x3c0] sm:$0xff] %v1571
      %1707 = vst [vmem:[%s147 + $0x3c8] sm:$0xff] %v1573
      %1708 = vst [vmem:[%s147 + $0x3d0] sm:$0xff] %v1575
      %1709 = vst [vmem:[%s147 + $0x3d8] sm:$0xff] %v1577
      %1710 = vst [vmem:[%s147 + $0x3e0] sm:$0xff] %v1579
      %1711 = vst [vmem:[%s147 + $0x3e8] sm:$0xff] %v1581
      %1712 = vst [vmem:[%s147 + $0x3f0] sm:$0xff] %v1583
      %1713 = vst [vmem:[%s147 + $0x3f8] sm:$0xff] %v1585
      %s1714 = smul.u32 32, %s13
      %p1715 = scmp.lt.s32.totalorder %s1714, 63
      %s1716 = scalar_select %p1715, %s1714, 63
      %s1717 = smul.addr %s1716, 4
      %s1718 = smul.addr %s1717, 8
      %s1719 = scalar_lea.vmem %s2, %s1718
      // Predicated region
      $region29: #{cnn_vae_forward.19} parent=27 // pred_check
        %p1720 = pneg %p78
      $region30: #{cnn_vae_forward.19} parent=27 // pred_check_branch
        %1722 = sbr.rel (%p1720) target = $region32
      $region31: #{cnn_vae_forward.19} parent=27 // pred_region
        %s1723 = smul.u32 32, %s13
      $region32: #{cnn_vae_forward.19} parent=27 // pred_fallthru
        _
    $region28: #{cnn_vae_forward.19} parent=5 // pred_fallthru
      _
    %p1724 = scmp.le.s32.totalorder 2, %s8
    // Predicated region
    $region33: #{cnn_vae_forward.19} parent=5 // pred_check
      %p1725 = pneg %p1724
    $region34: #{cnn_vae_forward.19} parent=5 // pred_check_branch
      %1727 = sbr.rel (%p1725) target = $region36
    $region35: #{cnn_vae_forward.19} parent=5 // pred_region
      %s1728 = ssub.s32 %s8, 2
      // Predicated region
      $region37: #{cnn_vae_forward.19} parent=35 // pred_check
        %p1729 = pneg %p84
      $region38: #{cnn_vae_forward.19} parent=35 // pred_check_branch
        %1731 = sbr.rel (%p1729) target = $region40
      $region39: #{cnn_vae_forward.19} parent=35 // pred_region
        %s1732 = smul.u32 32, %s14
        %p1733 = scmp.lt.s32.totalorder %s1732, 63
        %s1734 = scalar_select %p1733, %s1732, 63
        %s1735 = smul.addr %s1734, 4
        %s1736 = smul.addr %s1735, 8
        %s1737 = scalar_lea.vmem %s2, %s1736
      $region40: #{cnn_vae_forward.19} parent=35 // pred_fallthru
        _
    $region36: #{cnn_vae_forward.19} parent=5 // pred_fallthru
      _
  $region6: #{cnn_vae_forward.19} parent=0 // loop_footer
    %s12 = sadd.s32 1, %s8
  $region7: #{cnn_vae_forward.19} parent=0 // loop_footer_branch
    %7 = sbr.rel target = $region3
  $region8: #{cnn_vae_forward.19} parent=0 // loop_exit
    _

</llo_original>
